<compile_context>
chip_gen: v5e
topology: v5e:2x2
jax: 0.10.0
libtpu: 0.0.40
codegen_flags: <defaults>
</compile_context>

<pallas_src>
import jax
import jax.numpy as jnp
import numpy as np
from jax.experimental import pallas as pl
from jax.experimental.pallas import tpu as pltpu


# ----------------------------------------------------------------------------
# Pallas kernel: per (batch, out-depth) slice, build the im2col LHS in VMEM and
# do one deep matmul, then fused bias + ReLU + active-mask epilogue.
#   x_refs[kd] : (1, 1, H_in, W_in, C_eff) bf16   padded input depth slice (kd-th offset)
#   w_ref      : (K*Cin, Cout)             bf16   BN-scale-folded weights (VMEM-resident)
#   b_ref      : (1, Cout)                 f32    folded BN bias
#   m_ref      : (1, 1, R, 1)              f32    output active mask (R = Ho*Wo)
#   o_ref      : (1, 1, R, Cout)           bf16
#   lhs_ref    : (R, K*Cin)                bf16   VMEM scratch for the im2col LHS
# ----------------------------------------------------------------------------
def _make_conv_kernel(KD, KH, KW, Ho, Wo, C_eff, Cout):
    R = Ho * Wo
    KC = KD * KH * KW * C_eff

    def kernel(*refs):
        x_refs = refs[:KD]
        w_ref, b_ref, m_ref, o_ref, lhs_ref = refs[KD:KD + 5]

        # Build the (R, K*C_eff) im2col LHS with static slices only: for every kernel
        # offset, copy Wo-wide row windows of the depth slice into the scratch columns.
        col = 0
        for kd in range(KD):
            xr = x_refs[kd]
            for kh in range(KH):
                for kw in range(KW):
                    for ho in range(Ho):
                        lhs_ref[ho * Wo:(ho + 1) * Wo, col:col + C_eff] = (
                            xr[0, 0, kh + ho, kw:kw + Wo, :])
                    col += C_eff

        # One deep MXU matmul (contraction over K*Cin), f32 accumulation.
        y = jnp.dot(lhs_ref[...], w_ref[...], preferred_element_type=jnp.float32)
        y = jnp.maximum(y + b_ref[...], 0.0)               # folded-BN bias + ReLU
        o_ref[0, 0, :, :] = (y * m_ref[0, 0]).astype(o_ref.dtype)

    return kernel


def sparse_conv_bn_relu(x, mask, w, scale, bias, *, stride, padding, subm):
    """One spconv block (conv -> folded BN -> ReLU -> mask) on the dense NDHWC tensor.

    x    : (B, D, H, W, Cin)  bf16 zero-filled dense features
    mask : (B, D, H, W)       f32 {0,1} active-voxel mask
    w    : (KD, KH, KW, Cin, Cout) f32
    """
    B, D, H, W, Cin = x.shape
    KD, KH, KW, _, Cout = w.shape
    sD, sH, sW = stride
    pD, pH, pW = padding
    Do = (D + 2 * pD - KD) // sD + 1
    Ho = (H + 2 * pH - KH) // sH + 1
    Wo = (W + 2 * pW - KW) // sW + 1

    x_pad = jnp.pad(x, ((0, 0), (pD, pD), (pH, pH), (pW, pW), (0, 0)))

    # ---- output active mask (pure XLA glue on small tensors) -------------------------
    if subm:
        out_mask = mask                              # SubMConv3d: output sites == input sites
    else:
        m_pad = jnp.pad(mask, ((0, 0), (pD, pD), (pH, pH), (pW, pW)))
        out_mask = None
        for kd in range(KD):
            for kh in range(KH):
                for kw in range(KW):
                    s = m_pad[:, kd:kd + sD * (Do - 1) + 1:sD,
                              kh:kh + sH * (Ho - 1) + 1:sH,
                              kw:kw + sW * (Wo - 1) + 1:sW]
                    out_mask = s if out_mask is None else jnp.maximum(out_mask, s)

    # ---- fold the H/W shift+stride into channels for the stride-2 layers --------------
    if sH == 1 and sW == 1:
        x_in = x_pad                                 # (B, Dp, H+2pH, W+2pW, Cin)
        kh_n, kw_n, C_eff = KH, KW, Cin
    else:
        slabs = [x_pad[:, :, kh:kh + sH * (Ho - 1) + 1:sH,
                       kw:kw + sW * (Wo - 1) + 1:sW, :]
                 for kh in range(KH) for kw in range(KW)]
        x_in = jnp.concatenate(slabs, axis=-1)       # (B, Dp, Ho, Wo, KH*KW*Cin)
        kh_n, kw_n, C_eff = 1, 1, KH * KW * Cin

    H_in, W_in = x_in.shape[2], x_in.shape[3]
    R = Ho * Wo
    KC = KD * KH * KW * Cin                          # == KD * kh_n * kw_n * C_eff

    # BN scale folded into the weight columns (bf16); bias stays f32 for the epilogue.
    w2 = (w.reshape(KC, Cout) * scale.reshape(1, Cout)).astype(jnp.bfloat16)
    b2 = bias.reshape(1, Cout).astype(jnp.float32)
    m2 = out_mask.reshape(B, Do, R, 1).astype(jnp.float32)

    # KD operands = KD depth offsets of the same padded array (block size 1 along depth,
    # so the block index *is* the element index d*sD + kd).
    in_specs = [
        pl.BlockSpec((1, 1, H_in, W_in, C_eff),
                     lambda b, d, kd=kd: (b, d * sD + kd, 0, 0, 0))
        for kd in range(KD)
    ]
    in_specs += [
        pl.BlockSpec((KC, Cout), lambda b, d: (0, 0)),        # weights stay VMEM-resident
        pl.BlockSpec((1, Cout), lambda b, d: (0, 0)),         # bias
        pl.BlockSpec((1, 1, R, 1), lambda b, d: (b, d, 0, 0)),
    ]
    out_spec = pl.BlockSpec((1, 1, R, Cout), lambda b, d: (b, d, 0, 0))

    # Right-sized VMEM budget: double-buffered ins/outs + resident weights + LHS scratch.
    est = (2 * KD * H_in * W_in * C_eff * 2       # input slabs (double buffered, bf16)
           + 2 * R * Cout * 2                      # output tile (double buffered, bf16)
           + KC * Cout * 2                         # weights (bf16)
           + R * KC * 2                            # im2col scratch (bf16)
           + R * Cout * 4 + 2 * R * 4 + (1 << 20)) # f32 epilogue values, mask, slack
    vmem_limit = int(min(max(4 * est, 16 * 2 ** 20), 64 * 2 ** 20))

    out = pl.pallas_call(
        _make_conv_kernel(KD, kh_n, kw_n, Ho, Wo, C_eff, Cout),
        out_shape=jax.ShapeDtypeStruct((B, Do, R, Cout), jnp.bfloat16),
        grid_spec=pltpu.PrefetchScalarGridSpec(
            num_scalar_prefetch=0,
            grid=(B, Do),
            in_specs=in_specs,
            out_specs=out_spec,
            scratch_shapes=[pltpu.VMEM((R, KC), jnp.bfloat16)],
        ),
        compiler_params=pltpu.CompilerParams(
            dimension_semantics=("parallel", "parallel"),
            vmem_limit_bytes=vmem_limit),
    )(*([x_in] * KD + [w2, b2, m2]))

    return out.reshape(B, Do, Ho, Wo, Cout), out_mask


# ----------------------------------------------------------------------------
# Pure-XLA dense reference with the same bf16 quantization as the kernel path
# (used only for the small numerical self-checks in __main__).
# ----------------------------------------------------------------------------
def _reference_conv_bn_relu(x, w, scale, bias, *, stride, padding):
    Cout = w.shape[-1]
    wf = (w * scale.reshape(1, 1, 1, 1, Cout)).astype(jnp.bfloat16).astype(jnp.float32)
    y = jax.lax.conv_general_dilated(
        x.astype(jnp.float32), wf,
        window_strides=tuple(stride),
        padding=[(p, p) for p in padding],
        dimension_numbers=("NDHWC", "DHWIO", "NDHWC"))
    return jnp.maximum(y + bias.reshape(1, 1, 1, 1, Cout), 0.0)


# ----------------------------------------------------------------------------
# Deterministic parameter construction (shapes from VoxelBackBone8x.__init__)
# ----------------------------------------------------------------------------
def _make_block_params(key, cin, cout, ksize):
    KD, KH, KW = ksize
    fan_in = cin * KD * KH * KW
    kw_, kg, kb = jax.random.split(key, 3)
    w = jax.random.normal(kw_, (KD, KH, KW, cin, cout), jnp.float32) * (2.0 / fan_in) ** 0.5
    # BatchNorm1d(eps=1e-3), inference form with deterministic running stats
    gamma = 1.0 + 0.1 * jax.random.normal(kg, (cout,), jnp.float32)
    beta = 0.05 * jax.random.normal(kb, (cout,), jnp.float32)
    running_mean = jnp.zeros((cout,), jnp.float32)
    running_var = jnp.ones((cout,), jnp.float32)
    eps = 1e-3
    scale = gamma / jnp.sqrt(running_var + eps)
    bias = beta - running_mean * scale
    return w, scale, bias


def _t3(v):
    return (v, v, v) if isinstance(v, int) else tuple(v)


class VoxelBackBone8xPallas:
    def __init__(self, key, input_channels, grid_size, last_pad=0):
        # sparse_shape = grid_size[::-1] + [1, 0, 0]  ->  (z+1, y, x)
        self.sparse_shape = (grid_size[2] + 1, grid_size[1], grid_size[0])

        # (name, [(cin, cout, ksize, stride, padding, subm), ...])
        stage_defs = [
            ("conv_input", [(input_channels, 16, 3, 1, 1, True)]),
            ("x_conv1",    [(16, 16, 3, 1, 1, True)]),
            ("x_conv2",    [(16, 32, 3, 2, 1, False),
                            (32, 32, 3, 1, 1, True),
                            (32, 32, 3, 1, 1, True)]),
            ("x_conv3",    [(32, 64, 3, 2, 1, False),
                            (64, 64, 3, 1, 1, True),
                            (64, 64, 3, 1, 1, True)]),
            ("x_conv4",    [(64, 64, 3, 2, (0, 1, 1), False),
                            (64, 64, 3, 1, 1, True),
                            (64, 64, 3, 1, 1, True)]),
            ("conv_out",   [(64, 128, (3, 1, 1), (2, 1, 1), last_pad, False)]),
        ]
        n_layers = sum(len(ls) for _, ls in stage_defs)
        keys = iter(jax.random.split(key, n_layers))

        self.stages = []
        for name, layer_defs in stage_defs:
            layers = []
            for cin, cout, ksz, st, pad, subm in layer_defs:
                ksz, st, pad = _t3(ksz), _t3(st), _t3(pad)
                w, s, b = _make_block_params(next(keys), cin, cout, ksz)
                layers.append(dict(w=w, scale=s, bias=b,
                                   stride=st, padding=pad, subm=subm))
            self.stages.append((name, layers))
        self.num_point_features = 128
        self.backbone_channels = {'x_conv1': 16, 'x_conv2': 32,
                                  'x_conv3': 64, 'x_conv4': 64}

    def forward(self, voxel_features, voxel_coords, batch_size):
        D, H, W = self.sparse_shape
        C = voxel_features.shape[-1]
        b = voxel_coords[:, 0]
        z = voxel_coords[:, 1]
        y = voxel_coords[:, 2]
        xx = voxel_coords[:, 3]
        # bf16 dense features end-to-end (f32 accumulation happens inside the kernel)
        x = jnp.zeros((batch_size, D, H, W, C), jnp.bfloat16).at[b, z, y, xx].set(
            voxel_features.astype(jnp.bfloat16))
        mask = jnp.zeros((batch_size, D, H, W), jnp.float32).at[b, z, y, xx].set(1.0)

        batch_dict = {'multi_scale_3d_features': {},
                      'multi_scale_3d_strides': {'x_conv1': 1, 'x_conv2': 2,
                                                 'x_conv3': 4, 'x_conv4': 8}}
        h, m = x, mask
        for name, layers in self.stages:
            for p in layers:
                h, m = sparse_conv_bn_relu(h, m, p['w'], p['scale'], p['bias'],
                                           stride=p['stride'],
                                           padding=p['padding'],
                                           subm=p['subm'])
            if name == "conv_out":
                batch_dict['encoded_spconv_tensor'] = h        # dense NDHWC, 128 ch
                batch_dict['encoded_spconv_tensor_mask'] = m
                batch_dict['encoded_spconv_tensor_stride'] = 8
            elif name != "conv_input":
                batch_dict['multi_scale_3d_features'][name] = (h, m)
        return batch_dict


if __name__ == "__main__":
    key = jax.random.PRNGKey(0)
    k_coord, k_feat, k_param = jax.random.split(key, 3)

    # ---------- standalone numerical self-checks of the Pallas block ----------
    kt1, kt2, kt3, kt4 = jax.random.split(jax.random.PRNGKey(42), 4)
    B_t, D_t, H_t, W_t, Cin_t, Cout_t = 2, 6, 8, 8, 16, 32
    mt = (jax.random.uniform(kt2, (B_t, D_t, H_t, W_t)) < 0.3).astype(jnp.float32)
    xt = (jax.random.normal(kt1, (B_t, D_t, H_t, W_t, Cin_t), jnp.float32)
          * mt[..., None]).astype(jnp.bfloat16)
    wt_a, st_a, bt_a = _make_block_params(kt3, Cin_t, Cout_t, (3, 3, 3))
    wt_b, st_b, bt_b = _make_block_params(kt4, Cin_t, Cout_t, (3, 1, 1))
    test_cfgs = [
        (wt_a, st_a, bt_a, (1, 1, 1), (1, 1, 1), True),    # SubMConv3d-style
        (wt_a, st_a, bt_a, (2, 2, 2), (1, 1, 1), False),   # stride-2 SparseConv3d-style
        (wt_b, st_b, bt_b, (2, 1, 1), (0, 0, 0), False),   # conv_out-style (3,1,1)/(2,1,1)
    ]
    for w_c, s_c, b_c, st_c, pd_c, subm_c in test_cfgs:
        y_p, m_o = sparse_conv_bn_relu(xt, mt, w_c, s_c, b_c,
                                       stride=st_c, padding=pd_c, subm=subm_c)
        y_r = _reference_conv_bn_relu(xt, w_c, s_c, b_c, stride=st_c, padding=pd_c)
        y_r = y_r * m_o[..., None]
        np.testing.assert_allclose(np.asarray(y_p.astype(jnp.float32)),
                                   np.asarray(y_r), atol=5e-2, rtol=5e-2)

    # ---------- full backbone on small but valid shapes ----------
    # grid_size = (x, y, z) = (16, 16, 24) -> sparse_shape (z+1, y, x) = (25, 16, 16)
    # depth chain: 25 -> 13 -> 7 -> 3 -> 1 ; y/x downsampled 8x: 16 -> 8 -> 4 -> 2 -> 2
    grid_size = (16, 16, 24)
    input_channels = 4
    batch_size = 2
    D, H, W = grid_size[2] + 1, grid_size[1], grid_size[0]

    num_voxels = 256
    total = batch_size * D * H * W
    flat = jax.random.permutation(k_coord, total)[:num_voxels]  # unique active voxels
    b = (flat // (D * H * W)).astype(jnp.int32)
    rem = flat % (D * H * W)
    z = (rem // (H * W)).astype(jnp.int32)
    rem = rem % (H * W)
    y = (rem // W).astype(jnp.int32)
    xx = (rem % W).astype(jnp.int32)
    voxel_coords = jnp.stack([b, z, y, xx], axis=1)                      # (N, 4) [b,z,y,x]
    voxel_features = jax.random.normal(k_feat, (num_voxels, input_channels), jnp.float32)

    model = VoxelBackBone8xPallas(k_param, input_channels, grid_size)
    out = model.forward(voxel_features, voxel_coords, batch_size)
    jax.block_until_ready(out)

    enc, enc_mask = out['encoded_spconv_tensor'], out['encoded_spconv_tensor_mask']
    # y/x downsampled by 8 (16 -> 2), depth 25 -> 1 after the (3,1,1) stride-(2,1,1) conv_out
    assert enc.shape == (batch_size, 1, H // 8, W // 8, 128), enc.shape
    # inactive output voxels must stay exactly zero (sparse semantics)
    inactive = (1.0 - enc_mask)[..., None]
    assert float(jnp.max(jnp.abs(enc * inactive))) == 0.0
    expected = {
        'x_conv1': (batch_size, 25, 16, 16, 16),
        'x_conv2': (batch_size, 13, 8, 8, 32),
        'x_conv3': (batch_size, 7, 4, 4, 64),
        'x_conv4': (batch_size, 3, 2, 2, 64),
    }
    for name, shp in expected.items():
        f, fm = out['multi_scale_3d_features'][name]
        assert f.shape == shp, (name, f.shape)
        assert float(jnp.max(jnp.abs(f * (1.0 - fm)[..., None]))) == 0.0
    print("KERNEL_OK")
</pallas_src>

<mosaic_0001>
module attributes {stable_mosaic.version = 11 : i64} {
  func.func @kernel(%arg0: i32, %arg1: i32, %arg2: memref<1x1x10x10x16xbf16, #tpu.memory_space<vmem>>, %arg3: memref<1x1x10x10x16xbf16, #tpu.memory_space<vmem>>, %arg4: memref<1x1x10x10x16xbf16, #tpu.memory_space<vmem>>, %arg5: memref<432x32xbf16, #tpu.memory_space<vmem>>, %arg6: memref<1x32xf32, #tpu.memory_space<vmem>>, %arg7: memref<1x1x64x1xf32, #tpu.memory_space<vmem>>, %arg8: memref<1x1x64x32xbf16, #tpu.memory_space<vmem>>, %arg9: memref<64x432xbf16, #tpu.memory_space<vmem>>) attributes {dimension_semantics = [#tpu.dimension_semantics<parallel>, #tpu.dimension_semantics<parallel>], iteration_bounds = array<i64: 2, 6>, scalar_prefetch = 0 : i64, scratch_operands = 1 : i64, tpu.core_type = #tpu.core_type<tc>, window_params = [{transform_indices = @transform_0, window_bounds = array<i64: 1, 1, 10, 10, 16>}, {transform_indices = @transform_1, window_bounds = array<i64: 1, 1, 10, 10, 16>}, {transform_indices = @transform_2, window_bounds = array<i64: 1, 1, 10, 10, 16>}, {pipeline_mode = #tpu.pipeline_mode<synchronous>, transform_indices = @transform_3, window_bounds = array<i64: 432, 32>}, {pipeline_mode = #tpu.pipeline_mode<synchronous>, transform_indices = @transform_4, window_bounds = array<i64: 1, 32>}, {transform_indices = @transform_5, window_bounds = array<i64: 1, 1, 64, 1>}, {transform_indices = @transform_6, window_bounds = array<i64: 1, 1, 64, 32>}]} {
    %c0 = arith.constant 0 : index
    %c0_0 = arith.constant 0 : index
    %c0_1 = arith.constant 0 : index
    %c0_2 = arith.constant 0 : index
    %c0_3 = arith.constant 0 : index
    %0 = vector.load %arg2[%c0, %c0_0, %c0_1, %c0_2, %c0_3] : memref<1x1x10x10x16xbf16, #tpu.memory_space<vmem>>, vector<1x1x1x8x16xbf16>
    %1 = vector.shape_cast %0 : vector<1x1x1x8x16xbf16> to vector<8x16xbf16>
    %c0_4 = arith.constant 0 : index
    %c0_5 = arith.constant 0 : index
    %2 = vector.load %arg9[%c0_4, %c0_5] : memref<64x432xbf16, #tpu.memory_space<vmem>>, vector<8x16xbf16>
    tpu.vector_store %arg9[%c0_4, %c0_5], %1 {strides = array<i32>} : memref<64x432xbf16, #tpu.memory_space<vmem>>, vector<8x16xbf16>,
    %c0_6 = arith.constant 0 : index
    %c0_7 = arith.constant 0 : index
    %c1 = arith.constant 1 : index
    %c0_8 = arith.constant 0 : index
    %c0_9 = arith.constant 0 : index
    %3 = vector.load %arg2[%c0_6, %c0_7, %c1, %c0_8, %c0_9] : memref<1x1x10x10x16xbf16, #tpu.memory_space<vmem>>, vector<1x1x1x8x16xbf16>
    %4 = vector.shape_cast %3 : vector<1x1x1x8x16xbf16> to vector<8x16xbf16>
    %c8 = arith.constant 8 : index
    %c0_10 = arith.constant 0 : index
    %5 = vector.load %arg9[%c8, %c0_10] : memref<64x432xbf16, #tpu.memory_space<vmem>>, vector<8x16xbf16>
    tpu.vector_store %arg9[%c8, %c0_10], %4 {strides = array<i32>} : memref<64x432xbf16, #tpu.memory_space<vmem>>, vector<8x16xbf16>,
    %c0_11 = arith.constant 0 : index
    %c0_12 = arith.constant 0 : index
    %c2 = arith.constant 2 : index
    %c0_13 = arith.constant 0 : index
    %c0_14 = arith.constant 0 : index
    %6 = vector.load %arg2[%c0_11, %c0_12, %c2, %c0_13, %c0_14] : memref<1x1x10x10x16xbf16, #tpu.memory_space<vmem>>, vector<1x1x1x8x16xbf16>
    %7 = vector.shape_cast %6 : vector<1x1x1x8x16xbf16> to vector<8x16xbf16>
    %c16 = arith.constant 16 : index
    %c0_15 = arith.constant 0 : index
    %8 = vector.load %arg9[%c16, %c0_15] : memref<64x432xbf16, #tpu.memory_space<vmem>>, vector<8x16xbf16>
    tpu.vector_store %arg9[%c16, %c0_15], %7 {strides = array<i32>} : memref<64x432xbf16, #tpu.memory_space<vmem>>, vector<8x16xbf16>,
    %c0_16 = arith.constant 0 : index
    %c0_17 = arith.constant 0 : index
    %c3 = arith.constant 3 : index
    %c0_18 = arith.constant 0 : index
    %c0_19 = arith.constant 0 : index
    %9 = vector.load %arg2[%c0_16, %c0_17, %c3, %c0_18, %c0_19] : memref<1x1x10x10x16xbf16, #tpu.memory_space<vmem>>, vector<1x1x1x8x16xbf16>
    %10 = vector.shape_cast %9 : vector<1x1x1x8x16xbf16> to vector<8x16xbf16>
    %c24 = arith.constant 24 : index
    %c0_20 = arith.constant 0 : index
    %11 = vector.load %arg9[%c24, %c0_20] : memref<64x432xbf16, #tpu.memory_space<vmem>>, vector<8x16xbf16>
    tpu.vector_store %arg9[%c24, %c0_20], %10 {strides = array<i32>} : memref<64x432xbf16, #tpu.memory_space<vmem>>, vector<8x16xbf16>,
    %c0_21 = arith.constant 0 : index
    %c0_22 = arith.constant 0 : index
    %c4 = arith.constant 4 : index
    %c0_23 = arith.constant 0 : index
    %c0_24 = arith.constant 0 : index
    %12 = vector.load %arg2[%c0_21, %c0_22, %c4, %c0_23, %c0_24] : memref<1x1x10x10x16xbf16, #tpu.memory_space<vmem>>, vector<1x1x1x8x16xbf16>
    %13 = vector.shape_cast %12 : vector<1x1x1x8x16xbf16> to vector<8x16xbf16>
    %c32 = arith.constant 32 : index
    %c0_25 = arith.constant 0 : index
    %14 = vector.load %arg9[%c32, %c0_25] : memref<64x432xbf16, #tpu.memory_space<vmem>>, vector<8x16xbf16>
    tpu.vector_store %arg9[%c32, %c0_25], %13 {strides = array<i32>} : memref<64x432xbf16, #tpu.memory_space<vmem>>, vector<8x16xbf16>,
    %c0_26 = arith.constant 0 : index
    %c0_27 = arith.constant 0 : index
    %c5 = arith.constant 5 : index
    %c0_28 = arith.constant 0 : index
    %c0_29 = arith.constant 0 : index
    %15 = vector.load %arg2[%c0_26, %c0_27, %c5, %c0_28, %c0_29] : memref<1x1x10x10x16xbf16, #tpu.memory_space<vmem>>, vector<1x1x1x8x16xbf16>
    %16 = vector.shape_cast %15 : vector<1x1x1x8x16xbf16> to vector<8x16xbf16>
    %c40 = arith.constant 40 : index
    %c0_30 = arith.constant 0 : index
    %17 = vector.load %arg9[%c40, %c0_30] : memref<64x432xbf16, #tpu.memory_space<vmem>>, vector<8x16xbf16>
    tpu.vector_store %arg9[%c40, %c0_30], %16 {strides = array<i32>} : memref<64x432xbf16, #tpu.memory_space<vmem>>, vector<8x16xbf16>,
    %c0_31 = arith.constant 0 : index
    %c0_32 = arith.constant 0 : index
    %c6 = arith.constant 6 : index
    %c0_33 = arith.constant 0 : index
    %c0_34 = arith.constant 0 : index
    %18 = vector.load %arg2[%c0_31, %c0_32, %c6, %c0_33, %c0_34] : memref<1x1x10x10x16xbf16, #tpu.memory_space<vmem>>, vector<1x1x1x8x16xbf16>
    %19 = vector.shape_cast %18 : vector<1x1x1x8x16xbf16> to vector<8x16xbf16>
    %c48 = arith.constant 48 : index
    %c0_35 = arith.constant 0 : index
    %20 = vector.load %arg9[%c48, %c0_35] : memref<64x432xbf16, #tpu.memory_space<vmem>>, vector<8x16xbf16>
    tpu.vector_store %arg9[%c48, %c0_35], %19 {strides = array<i32>} : memref<64x432xbf16, #tpu.memory_space<vmem>>, vector<8x16xbf16>,
    %c0_36 = arith.constant 0 : index
    %c0_37 = arith.constant 0 : index
    %c7 = arith.constant 7 : index
    %c0_38 = arith.constant 0 : index
    %c0_39 = arith.constant 0 : index
    %21 = vector.load %arg2[%c0_36, %c0_37, %c7, %c0_38, %c0_39] : memref<1x1x10x10x16xbf16, #tpu.memory_space<vmem>>, vector<1x1x1x8x16xbf16>
    %22 = vector.shape_cast %21 : vector<1x1x1x8x16xbf16> to vector<8x16xbf16>
    %c56 = arith.constant 56 : index
    %c0_40 = arith.constant 0 : index
    %23 = vector.load %arg9[%c56, %c0_40] : memref<64x432xbf16, #tpu.memory_space<vmem>>, vector<8x16xbf16>
    tpu.vector_store %arg9[%c56, %c0_40], %22 {strides = array<i32>} : memref<64x432xbf16, #tpu.memory_space<vmem>>, vector<8x16xbf16>,
    %c0_41 = arith.constant 0 : index
    %c0_42 = arith.constant 0 : index
    %c0_43 = arith.constant 0 : index
    %c1_44 = arith.constant 1 : index
    %c0_45 = arith.constant 0 : index
    %24 = vector.load %arg2[%c0_41, %c0_42, %c0_43, %c1_44, %c0_45] : memref<1x1x10x10x16xbf16, #tpu.memory_space<vmem>>, vector<1x1x1x8x16xbf16>
    %25 = vector.shape_cast %24 : vector<1x1x1x8x16xbf16> to vector<8x16xbf16>
    %c0_46 = arith.constant 0 : index
    %c16_47 = arith.constant 16 : index
    %26 = vector.load %arg9[%c0_46, %c16_47] : memref<64x432xbf16, #tpu.memory_space<vmem>>, vector<8x16xbf16>
    tpu.vector_store %arg9[%c0_46, %c16_47], %25 {strides = array<i32>} : memref<64x432xbf16, #tpu.memory_space<vmem>>, vector<8x16xbf16>,
    %c0_48 = arith.constant 0 : index
    %c0_49 = arith.constant 0 : index
    %c1_50 = arith.constant 1 : index
    %c1_51 = arith.constant 1 : index
    %c0_52 = arith.constant 0 : index
    %27 = vector.load %arg2[%c0_48, %c0_49, %c1_50, %c1_51, %c0_52] : memref<1x1x10x10x16xbf16, #tpu.memory_space<vmem>>, vector<1x1x1x8x16xbf16>
    %28 = vector.shape_cast %27 : vector<1x1x1x8x16xbf16> to vector<8x16xbf16>
    %c8_53 = arith.constant 8 : index
    %c16_54 = arith.constant 16 : index
    %29 = vector.load %arg9[%c8_53, %c16_54] : memref<64x432xbf16, #tpu.memory_space<vmem>>, vector<8x16xbf16>
    tpu.vector_store %arg9[%c8_53, %c16_54], %28 {strides = array<i32>} : memref<64x432xbf16, #tpu.memory_space<vmem>>, vector<8x16xbf16>,
    %c0_55 = arith.constant 0 : index
    %c0_56 = arith.constant 0 : index
    %c2_57 = arith.constant 2 : index
    %c1_58 = arith.constant 1 : index
    %c0_59 = arith.constant 0 : index
    %30 = vector.load %arg2[%c0_55, %c0_56, %c2_57, %c1_58, %c0_59] : memref<1x1x10x10x16xbf16, #tpu.memory_space<vmem>>, vector<1x1x1x8x16xbf16>
    %31 = vector.shape_cast %30 : vector<1x1x1x8x16xbf16> to vector<8x16xbf16>
    %c16_60 = arith.constant 16 : index
    %c16_61 = arith.constant 16 : index
    %32 = vector.load %arg9[%c16_60, %c16_61] : memref<64x432xbf16, #tpu.memory_space<vmem>>, vector<8x16xbf16>
    tpu.vector_store %arg9[%c16_60, %c16_61], %31 {strides = array<i32>} : memref<64x432xbf16, #tpu.memory_space<vmem>>, vector<8x16xbf16>,
    %c0_62 = arith.constant 0 : index
    %c0_63 = arith.constant 0 : index
    %c3_64 = arith.constant 3 : index
    %c1_65 = arith.constant 1 : index
    %c0_66 = arith.constant 0 : index
    %33 = vector.load %arg2[%c0_62, %c0_63, %c3_64, %c1_65, %c0_66] : memref<1x1x10x10x16xbf16, #tpu.memory_space<vmem>>, vector<1x1x1x8x16xbf16>
    %34 = vector.shape_cast %33 : vector<1x1x1x8x16xbf16> to vector<8x16xbf16>
    %c24_67 = arith.constant 24 : index
    %c16_68 = arith.constant 16 : index
    %35 = vector.load %arg9[%c24_67, %c16_68] : memref<64x432xbf16, #tpu.memory_space<vmem>>, vector<8x16xbf16>
    tpu.vector_store %arg9[%c24_67, %c16_68], %34 {strides = array<i32>} : memref<64x432xbf16, #tpu.memory_space<vmem>>, vector<8x16xbf16>,
    %c0_69 = arith.constant 0 : index
    %c0_70 = arith.constant 0 : index
    %c4_71 = arith.constant 4 : index
    %c1_72 = arith.constant 1 : index
    %c0_73 = arith.constant 0 : index
    %36 = vector.load %arg2[%c0_69, %c0_70, %c4_71, %c1_72, %c0_73] : memref<1x1x10x10x16xbf16, #tpu.memory_space<vmem>>, vector<1x1x1x8x16xbf16>
    %37 = vector.shape_cast %36 : vector<1x1x1x8x16xbf16> to vector<8x16xbf16>
    %c32_74 = arith.constant 32 : index
    %c16_75 = arith.constant 16 : index
    %38 = vector.load %arg9[%c32_74, %c16_75] : memref<64x432xbf16, #tpu.memory_space<vmem>>, vector<8x16xbf16>
    tpu.vector_store %arg9[%c32_74, %c16_75], %37 {strides = array<i32>} : memref<64x432xbf16, #tpu.memory_space<vmem>>, vector<8x16xbf16>,
    %c0_76 = arith.constant 0 : index
    %c0_77 = arith.constant 0 : index
    %c5_78 = arith.constant 5 : index
    %c1_79 = arith.constant 1 : index
    %c0_80 = arith.constant 0 : index
    %39 = vector.load %arg2[%c0_76, %c0_77, %c5_78, %c1_79, %c0_80] : memref<1x1x10x10x16xbf16, #tpu.memory_space<vmem>>, vector<1x1x1x8x16xbf16>
    %40 = vector.shape_cast %39 : vector<1x1x1x8x16xbf16> to vector<8x16xbf16>
    %c40_81 = arith.constant 40 : index
    %c16_82 = arith.constant 16 : index
    %41 = vector.load %arg9[%c40_81, %c16_82] : memref<64x432xbf16, #tpu.memory_space<vmem>>, vector<8x16xbf16>
    tpu.vector_store %arg9[%c40_81, %c16_82], %40 {strides = array<i32>} : memref<64x432xbf16, #tpu.memory_space<vmem>>, vector<8x16xbf16>,
    %c0_83 = arith.constant 0 : index
    %c0_84 = arith.constant 0 : index
    %c6_85 = arith.constant 6 : index
    %c1_86 = arith.constant 1 : index
    %c0_87 = arith.constant 0 : index
    %42 = vector.load %arg2[%c0_83, %c0_84, %c6_85, %c1_86, %c0_87] : memref<1x1x10x10x16xbf16, #tpu.memory_space<vmem>>, vector<1x1x1x8x16xbf16>
    %43 = vector.shape_cast %42 : vector<1x1x1x8x16xbf16> to vector<8x16xbf16>
    %c48_88 = arith.constant 48 : index
    %c16_89 = arith.constant 16 : index
    %44 = vector.load %arg9[%c48_88, %c16_89] : memref<64x432xbf16, #tpu.memory_space<vmem>>, vector<8x16xbf16>
    tpu.vector_store %arg9[%c48_88, %c16_89], %43 {strides = array<i32>} : memref<64x432xbf16, #tpu.memory_space<vmem>>, vector<8x16xbf16>,
    %c0_90 = arith.constant 0 : index
    %c0_91 = arith.constant 0 : index
    %c7_92 = arith.constant 7 : index
    %c1_93 = arith.constant 1 : index
    %c0_94 = arith.constant 0 : index
    %45 = vector.load %arg2[%c0_90, %c0_91, %c7_92, %c1_93, %c0_94] : memref<1x1x10x10x16xbf16, #tpu.memory_space<vmem>>, vector<1x1x1x8x16xbf16>
    %46 = vector.shape_cast %45 : vector<1x1x1x8x16xbf16> to vector<8x16xbf16>
    %c56_95 = arith.constant 56 : index
    %c16_96 = arith.constant 16 : index
    %47 = vector.load %arg9[%c56_95, %c16_96] : memref<64x432xbf16, #tpu.memory_space<vmem>>, vector<8x16xbf16>
    tpu.vector_store %arg9[%c56_95, %c16_96], %46 {strides = array<i32>} : memref<64x432xbf16, #tpu.memory_space<vmem>>, vector<8x16xbf16>,
    %c0_97 = arith.constant 0 : index
    %c0_98 = arith.constant 0 : index
    %c0_99 = arith.constant 0 : index
    %c2_100 = arith.constant 2 : index
    %c0_101 = arith.constant 0 : index
    %48 = vector.load %arg2[%c0_97, %c0_98, %c0_99, %c2_100, %c0_101] : memref<1x1x10x10x16xbf16, #tpu.memory_space<vmem>>, vector<1x1x1x8x16xbf16>
    %49 = vector.shape_cast %48 : vector<1x1x1x8x16xbf16> to vector<8x16xbf16>
    %c0_102 = arith.constant 0 : index
    %c32_103 = arith.constant 32 : index
    %50 = vector.load %arg9[%c0_102, %c32_103] : memref<64x432xbf16, #tpu.memory_space<vmem>>, vector<8x16xbf16>
    tpu.vector_store %arg9[%c0_102, %c32_103], %49 {strides = array<i32>} : memref<64x432xbf16, #tpu.memory_space<vmem>>, vector<8x16xbf16>,
    %c0_104 = arith.constant 0 : index
    %c0_105 = arith.constant 0 : index
    %c1_106 = arith.constant 1 : index
    %c2_107 = arith.constant 2 : index
    %c0_108 = arith.constant 0 : index
    %51 = vector.load %arg2[%c0_104, %c0_105, %c1_106, %c2_107, %c0_108] : memref<1x1x10x10x16xbf16, #tpu.memory_space<vmem>>, vector<1x1x1x8x16xbf16>
    %52 = vector.shape_cast %51 : vector<1x1x1x8x16xbf16> to vector<8x16xbf16>
    %c8_109 = arith.constant 8 : index
    %c32_110 = arith.constant 32 : index
    %53 = vector.load %arg9[%c8_109, %c32_110] : memref<64x432xbf16, #tpu.memory_space<vmem>>, vector<8x16xbf16>
    tpu.vector_store %arg9[%c8_109, %c32_110], %52 {strides = array<i32>} : memref<64x432xbf16, #tpu.memory_space<vmem>>, vector<8x16xbf16>,
    %c0_111 = arith.constant 0 : index
    %c0_112 = arith.constant 0 : index
    %c2_113 = arith.constant 2 : index
    %c2_114 = arith.constant 2 : index
    %c0_115 = arith.constant 0 : index
    %54 = vector.load %arg2[%c0_111, %c0_112, %c2_113, %c2_114, %c0_115] : memref<1x1x10x10x16xbf16, #tpu.memory_space<vmem>>, vector<1x1x1x8x16xbf16>
    %55 = vector.shape_cast %54 : vector<1x1x1x8x16xbf16> to vector<8x16xbf16>
    %c16_116 = arith.constant 16 : index
    %c32_117 = arith.constant 32 : index
    %56 = vector.load %arg9[%c16_116, %c32_117] : memref<64x432xbf16, #tpu.memory_space<vmem>>, vector<8x16xbf16>
    tpu.vector_store %arg9[%c16_116, %c32_117], %55 {strides = array<i32>} : memref<64x432xbf16, #tpu.memory_space<vmem>>, vector<8x16xbf16>,
    %c0_118 = arith.constant 0 : index
    %c0_119 = arith.constant 0 : index
    %c3_120 = arith.constant 3 : index
    %c2_121 = arith.constant 2 : index
    %c0_122 = arith.constant 0 : index
    %57 = vector.load %arg2[%c0_118, %c0_119, %c3_120, %c2_121, %c0_122] : memref<1x1x10x10x16xbf16, #tpu.memory_space<vmem>>, vector<1x1x1x8x16xbf16>
    %58 = vector.shape_cast %57 : vector<1x1x1x8x16xbf16> to vector<8x16xbf16>
    %c24_123 = arith.constant 24 : index
    %c32_124 = arith.constant 32 : index
    %59 = vector.load %arg9[%c24_123, %c32_124] : memref<64x432xbf16, #tpu.memory_space<vmem>>, vector<8x16xbf16>
    tpu.vector_store %arg9[%c24_123, %c32_124], %58 {strides = array<i32>} : memref<64x432xbf16, #tpu.memory_space<vmem>>, vector<8x16xbf16>,
    %c0_125 = arith.constant 0 : index
    %c0_126 = arith.constant 0 : index
    %c4_127 = arith.constant 4 : index
    %c2_128 = arith.constant 2 : index
    %c0_129 = arith.constant 0 : index
    %60 = vector.load %arg2[%c0_125, %c0_126, %c4_127, %c2_128, %c0_129] : memref<1x1x10x10x16xbf16, #tpu.memory_space<vmem>>, vector<1x1x1x8x16xbf16>
    %61 = vector.shape_cast %60 : vector<1x1x1x8x16xbf16> to vector<8x16xbf16>
    %c32_130 = arith.constant 32 : index
    %c32_131 = arith.constant 32 : index
    %62 = vector.load %arg9[%c32_130, %c32_131] : memref<64x432xbf16, #tpu.memory_space<vmem>>, vector<8x16xbf16>
    tpu.vector_store %arg9[%c32_130, %c32_131], %61 {strides = array<i32>} : memref<64x432xbf16, #tpu.memory_space<vmem>>, vector<8x16xbf16>,
    %c0_132 = arith.constant 0 : index
    %c0_133 = arith.constant 0 : index
    %c5_134 = arith.constant 5 : index
    %c2_135 = arith.constant 2 : index
    %c0_136 = arith.constant 0 : index
    %63 = vector.load %arg2[%c0_132, %c0_133, %c5_134, %c2_135, %c0_136] : memref<1x1x10x10x16xbf16, #tpu.memory_space<vmem>>, vector<1x1x1x8x16xbf16>
    %64 = vector.shape_cast %63 : vector<1x1x1x8x16xbf16> to vector<8x16xbf16>
    %c40_137 = arith.constant 40 : index
    %c32_138 = arith.constant 32 : index
    %65 = vector.load %arg9[%c40_137, %c32_138] : memref<64x432xbf16, #tpu.memory_space<vmem>>, vector<8x16xbf16>
    tpu.vector_store %arg9[%c40_137, %c32_138], %64 {strides = array<i32>} : memref<64x432xbf16, #tpu.memory_space<vmem>>, vector<8x16xbf16>,
    %c0_139 = arith.constant 0 : index
    %c0_140 = arith.constant 0 : index
    %c6_141 = arith.constant 6 : index
    %c2_142 = arith.constant 2 : index
    %c0_143 = arith.constant 0 : index
    %66 = vector.load %arg2[%c0_139, %c0_140, %c6_141, %c2_142, %c0_143] : memref<1x1x10x10x16xbf16, #tpu.memory_space<vmem>>, vector<1x1x1x8x16xbf16>
    %67 = vector.shape_cast %66 : vector<1x1x1x8x16xbf16> to vector<8x16xbf16>
    %c48_144 = arith.constant 48 : index
    %c32_145 = arith.constant 32 : index
    %68 = vector.load %arg9[%c48_144, %c32_145] : memref<64x432xbf16, #tpu.memory_space<vmem>>, vector<8x16xbf16>
    tpu.vector_store %arg9[%c48_144, %c32_145], %67 {strides = array<i32>} : memref<64x432xbf16, #tpu.memory_space<vmem>>, vector<8x16xbf16>,
    %c0_146 = arith.constant 0 : index
    %c0_147 = arith.constant 0 : index
    %c7_148 = arith.constant 7 : index
    %c2_149 = arith.constant 2 : index
    %c0_150 = arith.constant 0 : index
    %69 = vector.load %arg2[%c0_146, %c0_147, %c7_148, %c2_149, %c0_150] : memref<1x1x10x10x16xbf16, #tpu.memory_space<vmem>>, vector<1x1x1x8x16xbf16>
    %70 = vector.shape_cast %69 : vector<1x1x1x8x16xbf16> to vector<8x16xbf16>
    %c56_151 = arith.constant 56 : index
    %c32_152 = arith.constant 32 : index
    %71 = vector.load %arg9[%c56_151, %c32_152] : memref<64x432xbf16, #tpu.memory_space<vmem>>, vector<8x16xbf16>
    tpu.vector_store %arg9[%c56_151, %c32_152], %70 {strides = array<i32>} : memref<64x432xbf16, #tpu.memory_space<vmem>>, vector<8x16xbf16>,
    %c0_153 = arith.constant 0 : index
    %c0_154 = arith.constant 0 : index
    %c1_155 = arith.constant 1 : index
    %c0_156 = arith.constant 0 : index
    %c0_157 = arith.constant 0 : index
    %72 = vector.load %arg2[%c0_153, %c0_154, %c1_155, %c0_156, %c0_157] : memref<1x1x10x10x16xbf16, #tpu.memory_space<vmem>>, vector<1x1x1x8x16xbf16>
    %73 = vector.shape_cast %72 : vector<1x1x1x8x16xbf16> to vector<8x16xbf16>
    %c0_158 = arith.constant 0 : index
    %c48_159 = arith.constant 48 : index
    %74 = vector.load %arg9[%c0_158, %c48_159] : memref<64x432xbf16, #tpu.memory_space<vmem>>, vector<8x16xbf16>
    tpu.vector_store %arg9[%c0_158, %c48_159], %73 {strides = array<i32>} : memref<64x432xbf16, #tpu.memory_space<vmem>>, vector<8x16xbf16>,
    %c0_160 = arith.constant 0 : index
    %c0_161 = arith.constant 0 : index
    %c2_162 = arith.constant 2 : index
    %c0_163 = arith.constant 0 : index
    %c0_164 = arith.constant 0 : index
    %75 = vector.load %arg2[%c0_160, %c0_161, %c2_162, %c0_163, %c0_164] : memref<1x1x10x10x16xbf16, #tpu.memory_space<vmem>>, vector<1x1x1x8x16xbf16>
    %76 = vector.shape_cast %75 : vector<1x1x1x8x16xbf16> to vector<8x16xbf16>
    %c8_165 = arith.constant 8 : index
    %c48_166 = arith.constant 48 : index
    %77 = vector.load %arg9[%c8_165, %c48_166] : memref<64x432xbf16, #tpu.memory_space<vmem>>, vector<8x16xbf16>
    tpu.vector_store %arg9[%c8_165, %c48_166], %76 {strides = array<i32>} : memref<64x432xbf16, #tpu.memory_space<vmem>>, vector<8x16xbf16>,
    %c0_167 = arith.constant 0 : index
    %c0_168 = arith.constant 0 : index
    %c3_169 = arith.constant 3 : index
    %c0_170 = arith.constant 0 : index
    %c0_171 = arith.constant 0 : index
    %78 = vector.load %arg2[%c0_167, %c0_168, %c3_169, %c0_170, %c0_171] : memref<1x1x10x10x16xbf16, #tpu.memory_space<vmem>>, vector<1x1x1x8x16xbf16>
    %79 = vector.shape_cast %78 : vector<1x1x1x8x16xbf16> to vector<8x16xbf16>
    %c16_172 = arith.constant 16 : index
    %c48_173 = arith.constant 48 : index
    %80 = vector.load %arg9[%c16_172, %c48_173] : memref<64x432xbf16, #tpu.memory_space<vmem>>, vector<8x16xbf16>
    tpu.vector_store %arg9[%c16_172, %c48_173], %79 {strides = array<i32>} : memref<64x432xbf16, #tpu.memory_space<vmem>>, vector<8x16xbf16>,
    %c0_174 = arith.constant 0 : index
    %c0_175 = arith.constant 0 : index
    %c4_176 = arith.constant 4 : index
    %c0_177 = arith.constant 0 : index
    %c0_178 = arith.constant 0 : index
    %81 = vector.load %arg2[%c0_174, %c0_175, %c4_176, %c0_177, %c0_178] : memref<1x1x10x10x16xbf16, #tpu.memory_space<vmem>>, vector<1x1x1x8x16xbf16>
    %82 = vector.shape_cast %81 : vector<1x1x1x8x16xbf16> to vector<8x16xbf16>
    %c24_179 = arith.constant 24 : index
    %c48_180 = arith.constant 48 : index
    %83 = vector.load %arg9[%c24_179, %c48_180] : memref<64x432xbf16, #tpu.memory_space<vmem>>, vector<8x16xbf16>
    tpu.vector_store %arg9[%c24_179, %c48_180], %82 {strides = array<i32>} : memref<64x432xbf16, #tpu.memory_space<vmem>>, vector<8x16xbf16>,
    %c0_181 = arith.constant 0 : index
    %c0_182 = arith.constant 0 : index
    %c5_183 = arith.constant 5 : index
    %c0_184 = arith.constant 0 : index
    %c0_185 = arith.constant 0 : index
    %84 = vector.load %arg2[%c0_181, %c0_182, %c5_183, %c0_184, %c0_185] : memref<1x1x10x10x16xbf16, #tpu.memory_space<vmem>>, vector<1x1x1x8x16xbf16>
    %85 = vector.shape_cast %84 : vector<1x1x1x8x16xbf16> to vector<8x16xbf16>
    %c32_186 = arith.constant 32 : index
    %c48_187 = arith.constant 48 : index
    %86 = vector.load %arg9[%c32_186, %c48_187] : memref<64x432xbf16, #tpu.memory_space<vmem>>, vector<8x16xbf16>
    tpu.vector_store %arg9[%c32_186, %c48_187], %85 {strides = array<i32>} : memref<64x432xbf16, #tpu.memory_space<vmem>>, vector<8x16xbf16>,
    %c0_188 = arith.constant 0 : index
    %c0_189 = arith.constant 0 : index
    %c6_190 = arith.constant 6 : index
    %c0_191 = arith.constant 0 : index
    %c0_192 = arith.constant 0 : index
    %87 = vector.load %arg2[%c0_188, %c0_189, %c6_190, %c0_191, %c0_192] : memref<1x1x10x10x16xbf16, #tpu.memory_space<vmem>>, vector<1x1x1x8x16xbf16>
    %88 = vector.shape_cast %87 : vector<1x1x1x8x16xbf16> to vector<8x16xbf16>
    %c40_193 = arith.constant 40 : index
    %c48_194 = arith.constant 48 : index
    %89 = vector.load %arg9[%c40_193, %c48_194] : memref<64x432xbf16, #tpu.memory_space<vmem>>, vector<8x16xbf16>
    tpu.vector_store %arg9[%c40_193, %c48_194], %88 {strides = array<i32>} : memref<64x432xbf16, #tpu.memory_space<vmem>>, vector<8x16xbf16>,
    %c0_195 = arith.constant 0 : index
    %c0_196 = arith.constant 0 : index
    %c7_197 = arith.constant 7 : index
    %c0_198 = arith.constant 0 : index
    %c0_199 = arith.constant 0 : index
    %90 = vector.load %arg2[%c0_195, %c0_196, %c7_197, %c0_198, %c0_199] : memref<1x1x10x10x16xbf16, #tpu.memory_space<vmem>>, vector<1x1x1x8x16xbf16>
    %91 = vector.shape_cast %90 : vector<1x1x1x8x16xbf16> to vector<8x16xbf16>
    %c48_200 = arith.constant 48 : index
    %c48_201 = arith.constant 48 : index
    %92 = vector.load %arg9[%c48_200, %c48_201] : memref<64x432xbf16, #tpu.memory_space<vmem>>, vector<8x16xbf16>
    tpu.vector_store %arg9[%c48_200, %c48_201], %91 {strides = array<i32>} : memref<64x432xbf16, #tpu.memory_space<vmem>>, vector<8x16xbf16>,
    %c0_202 = arith.constant 0 : index
    %c0_203 = arith.constant 0 : index
    %c8_204 = arith.constant 8 : index
    %c0_205 = arith.constant 0 : index
    %c0_206 = arith.constant 0 : index
    %93 = vector.load %arg2[%c0_202, %c0_203, %c8_204, %c0_205, %c0_206] : memref<1x1x10x10x16xbf16, #tpu.memory_space<vmem>>, vector<1x1x1x8x16xbf16>
    %94 = vector.shape_cast %93 : vector<1x1x1x8x16xbf16> to vector<8x16xbf16>
    %c56_207 = arith.constant 56 : index
    %c48_208 = arith.constant 48 : index
    %95 = vector.load %arg9[%c56_207, %c48_208] : memref<64x432xbf16, #tpu.memory_space<vmem>>, vector<8x16xbf16>
    tpu.vector_store %arg9[%c56_207, %c48_208], %94 {strides = array<i32>} : memref<64x432xbf16, #tpu.memory_space<vmem>>, vector<8x16xbf16>,
    %c0_209 = arith.constant 0 : index
    %c0_210 = arith.constant 0 : index
    %c1_211 = arith.constant 1 : index
    %c1_212 = arith.constant 1 : index
    %c0_213 = arith.constant 0 : index
    %96 = vector.load %arg2[%c0_209, %c0_210, %c1_211, %c1_212, %c0_213] : memref<1x1x10x10x16xbf16, #tpu.memory_space<vmem>>, vector<1x1x1x8x16xbf16>
    %97 = vector.shape_cast %96 : vector<1x1x1x8x16xbf16> to vector<8x16xbf16>
    %c0_214 = arith.constant 0 : index
    %c64 = arith.constant 64 : index
    %98 = vector.load %arg9[%c0_214, %c64] : memref<64x432xbf16, #tpu.memory_space<vmem>>, vector<8x16xbf16>
    tpu.vector_store %arg9[%c0_214, %c64], %97 {strides = array<i32>} : memref<64x432xbf16, #tpu.memory_space<vmem>>, vector<8x16xbf16>,
    %c0_215 = arith.constant 0 : index
    %c0_216 = arith.constant 0 : index
    %c2_217 = arith.constant 2 : index
    %c1_218 = arith.constant 1 : index
    %c0_219 = arith.constant 0 : index
    %99 = vector.load %arg2[%c0_215, %c0_216, %c2_217, %c1_218, %c0_219] : memref<1x1x10x10x16xbf16, #tpu.memory_space<vmem>>, vector<1x1x1x8x16xbf16>
    %100 = vector.shape_cast %99 : vector<1x1x1x8x16xbf16> to vector<8x16xbf16>
    %c8_220 = arith.constant 8 : index
    %c64_221 = arith.constant 64 : index
    %101 = vector.load %arg9[%c8_220, %c64_221] : memref<64x432xbf16, #tpu.memory_space<vmem>>, vector<8x16xbf16>
    tpu.vector_store %arg9[%c8_220, %c64_221], %100 {strides = array<i32>} : memref<64x432xbf16, #tpu.memory_space<vmem>>, vector<8x16xbf16>,
    %c0_222 = arith.constant 0 : index
    %c0_223 = arith.constant 0 : index
    %c3_224 = arith.constant 3 : index
    %c1_225 = arith.constant 1 : index
    %c0_226 = arith.constant 0 : index
    %102 = vector.load %arg2[%c0_222, %c0_223, %c3_224, %c1_225, %c0_226] : memref<1x1x10x10x16xbf16, #tpu.memory_space<vmem>>, vector<1x1x1x8x16xbf16>
    %103 = vector.shape_cast %102 : vector<1x1x1x8x16xbf16> to vector<8x16xbf16>
    %c16_227 = arith.constant 16 : index
    %c64_228 = arith.constant 64 : index
    %104 = vector.load %arg9[%c16_227, %c64_228] : memref<64x432xbf16, #tpu.memory_space<vmem>>, vector<8x16xbf16>
    tpu.vector_store %arg9[%c16_227, %c64_228], %103 {strides = array<i32>} : memref<64x432xbf16, #tpu.memory_space<vmem>>, vector<8x16xbf16>,
    %c0_229 = arith.constant 0 : index
    %c0_230 = arith.constant 0 : index
    %c4_231 = arith.constant 4 : index
    %c1_232 = arith.constant 1 : index
    %c0_233 = arith.constant 0 : index
    %105 = vector.load %arg2[%c0_229, %c0_230, %c4_231, %c1_232, %c0_233] : memref<1x1x10x10x16xbf16, #tpu.memory_space<vmem>>, vector<1x1x1x8x16xbf16>
    %106 = vector.shape_cast %105 : vector<1x1x1x8x16xbf16> to vector<8x16xbf16>
    %c24_234 = arith.constant 24 : index
    %c64_235 = arith.constant 64 : index
    %107 = vector.load %arg9[%c24_234, %c64_235] : memref<64x432xbf16, #tpu.memory_space<vmem>>, vector<8x16xbf16>
    tpu.vector_store %arg9[%c24_234, %c64_235], %106 {strides = array<i32>} : memref<64x432xbf16, #tpu.memory_space<vmem>>, vector<8x16xbf16>,
    %c0_236 = arith.constant 0 : index
    %c0_237 = arith.constant 0 : index
    %c5_238 = arith.constant 5 : index
    %c1_239 = arith.constant 1 : index
    %c0_240 = arith.constant 0 : index
    %108 = vector.load %arg2[%c0_236, %c0_237, %c5_238, %c1_239, %c0_240] : memref<1x1x10x10x16xbf16, #tpu.memory_space<vmem>>, vector<1x1x1x8x16xbf16>
    %109 = vector.shape_cast %108 : vector<1x1x1x8x16xbf16> to vector<8x16xbf16>
    %c32_241 = arith.constant 32 : index
    %c64_242 = arith.constant 64 : index
    %110 = vector.load %arg9[%c32_241, %c64_242] : memref<64x432xbf16, #tpu.memory_space<vmem>>, vector<8x16xbf16>
    tpu.vector_store %arg9[%c32_241, %c64_242], %109 {strides = array<i32>} : memref<64x432xbf16, #tpu.memory_space<vmem>>, vector<8x16xbf16>,
    %c0_243 = arith.constant 0 : index
    %c0_244 = arith.constant 0 : index
    %c6_245 = arith.constant 6 : index
    %c1_246 = arith.constant 1 : index
    %c0_247 = arith.constant 0 : index
    %111 = vector.load %arg2[%c0_243, %c0_244, %c6_245, %c1_246, %c0_247] : memref<1x1x10x10x16xbf16, #tpu.memory_space<vmem>>, vector<1x1x1x8x16xbf16>
    %112 = vector.shape_cast %111 : vector<1x1x1x8x16xbf16> to vector<8x16xbf16>
    %c40_248 = arith.constant 40 : index
    %c64_249 = arith.constant 64 : index
    %113 = vector.load %arg9[%c40_248, %c64_249] : memref<64x432xbf16, #tpu.memory_space<vmem>>, vector<8x16xbf16>
    tpu.vector_store %arg9[%c40_248, %c64_249], %112 {strides = array<i32>} : memref<64x432xbf16, #tpu.memory_space<vmem>>, vector<8x16xbf16>,
    %c0_250 = arith.constant 0 : index
    %c0_251 = arith.constant 0 : index
    %c7_252 = arith.constant 7 : index
    %c1_253 = arith.constant 1 : index
    %c0_254 = arith.constant 0 : index
    %114 = vector.load %arg2[%c0_250, %c0_251, %c7_252, %c1_253, %c0_254] : memref<1x1x10x10x16xbf16, #tpu.memory_space<vmem>>, vector<1x1x1x8x16xbf16>
    %115 = vector.shape_cast %114 : vector<1x1x1x8x16xbf16> to vector<8x16xbf16>
    %c48_255 = arith.constant 48 : index
    %c64_256 = arith.constant 64 : index
    %116 = vector.load %arg9[%c48_255, %c64_256] : memref<64x432xbf16, #tpu.memory_space<vmem>>, vector<8x16xbf16>
    tpu.vector_store %arg9[%c48_255, %c64_256], %115 {strides = array<i32>} : memref<64x432xbf16, #tpu.memory_space<vmem>>, vector<8x16xbf16>,
    %c0_257 = arith.constant 0 : index
    %c0_258 = arith.constant 0 : index
    %c8_259 = arith.constant 8 : index
    %c1_260 = arith.constant 1 : index
    %c0_261 = arith.constant 0 : index
    %117 = vector.load %arg2[%c0_257, %c0_258, %c8_259, %c1_260, %c0_261] : memref<1x1x10x10x16xbf16, #tpu.memory_space<vmem>>, vector<1x1x1x8x16xbf16>
    %118 = vector.shape_cast %117 : vector<1x1x1x8x16xbf16> to vector<8x16xbf16>
    %c56_262 = arith.constant 56 : index
    %c64_263 = arith.constant 64 : index
    %119 = vector.load %arg9[%c56_262, %c64_263] : memref<64x432xbf16, #tpu.memory_space<vmem>>, vector<8x16xbf16>
    tpu.vector_store %arg9[%c56_262, %c64_263], %118 {strides = array<i32>} : memref<64x432xbf16, #tpu.memory_space<vmem>>, vector<8x16xbf16>,
    %c0_264 = arith.constant 0 : index
    %c0_265 = arith.constant 0 : index
    %c1_266 = arith.constant 1 : index
    %c2_267 = arith.constant 2 : index
    %c0_268 = arith.constant 0 : index
    %120 = vector.load %arg2[%c0_264, %c0_265, %c1_266, %c2_267, %c0_268] : memref<1x1x10x10x16xbf16, #tpu.memory_space<vmem>>, vector<1x1x1x8x16xbf16>
    %121 = vector.shape_cast %120 : vector<1x1x1x8x16xbf16> to vector<8x16xbf16>
    %c0_269 = arith.constant 0 : index
    %c80 = arith.constant 80 : index
    %122 = vector.load %arg9[%c0_269, %c80] : memref<64x432xbf16, #tpu.memory_space<vmem>>, vector<8x16xbf16>
    tpu.vector_store %arg9[%c0_269, %c80], %121 {strides = array<i32>} : memref<64x432xbf16, #tpu.memory_space<vmem>>, vector<8x16xbf16>,
    %c0_270 = arith.constant 0 : index
    %c0_271 = arith.constant 0 : index
    %c2_272 = arith.constant 2 : index
    %c2_273 = arith.constant 2 : index
    %c0_274 = arith.constant 0 : index
    %123 = vector.load %arg2[%c0_270, %c0_271, %c2_272, %c2_273, %c0_274] : memref<1x1x10x10x16xbf16, #tpu.memory_space<vmem>>, vector<1x1x1x8x16xbf16>
    %124 = vector.shape_cast %123 : vector<1x1x1x8x16xbf16> to vector<8x16xbf16>
    %c8_275 = arith.constant 8 : index
    %c80_276 = arith.constant 80 : index
    %125 = vector.load %arg9[%c8_275, %c80_276] : memref<64x432xbf16, #tpu.memory_space<vmem>>, vector<8x16xbf16>
    tpu.vector_store %arg9[%c8_275, %c80_276], %124 {strides = array<i32>} : memref<64x432xbf16, #tpu.memory_space<vmem>>, vector<8x16xbf16>,
    %c0_277 = arith.constant 0 : index
    %c0_278 = arith.constant 0 : index
    %c3_279 = arith.constant 3 : index
    %c2_280 = arith.constant 2 : index
    %c0_281 = arith.constant 0 : index
    %126 = vector.load %arg2[%c0_277, %c0_278, %c3_279, %c2_280, %c0_281] : memref<1x1x10x10x16xbf16, #tpu.memory_space<vmem>>, vector<1x1x1x8x16xbf16>
    %127 = vector.shape_cast %126 : vector<1x1x1x8x16xbf16> to vector<8x16xbf16>
    %c16_282 = arith.constant 16 : index
    %c80_283 = arith.constant 80 : index
    %128 = vector.load %arg9[%c16_282, %c80_283] : memref<64x432xbf16, #tpu.memory_space<vmem>>, vector<8x16xbf16>
    tpu.vector_store %arg9[%c16_282, %c80_283], %127 {strides = array<i32>} : memref<64x432xbf16, #tpu.memory_space<vmem>>, vector<8x16xbf16>,
    %c0_284 = arith.constant 0 : index
    %c0_285 = arith.constant 0 : index
    %c4_286 = arith.constant 4 : index
    %c2_287 = arith.constant 2 : index
    %c0_288 = arith.constant 0 : index
    %129 = vector.load %arg2[%c0_284, %c0_285, %c4_286, %c2_287, %c0_288] : memref<1x1x10x10x16xbf16, #tpu.memory_space<vmem>>, vector<1x1x1x8x16xbf16>
    %130 = vector.shape_cast %129 : vector<1x1x1x8x16xbf16> to vector<8x16xbf16>
    %c24_289 = arith.constant 24 : index
    %c80_290 = arith.constant 80 : index
    %131 = vector.load %arg9[%c24_289, %c80_290] : memref<64x432xbf16, #tpu.memory_space<vmem>>, vector<8x16xbf16>
    tpu.vector_store %arg9[%c24_289, %c80_290], %130 {strides = array<i32>} : memref<64x432xbf16, #tpu.memory_space<vmem>>, vector<8x16xbf16>,
    %c0_291 = arith.constant 0 : index
    %c0_292 = arith.constant 0 : index
    %c5_293 = arith.constant 5 : index
    %c2_294 = arith.constant 2 : index
    %c0_295 = arith.constant 0 : index
    %132 = vector.load %arg2[%c0_291, %c0_292, %c5_293, %c2_294, %c0_295] : memref<1x1x10x10x16xbf16, #tpu.memory_space<vmem>>, vector<1x1x1x8x16xbf16>
    %133 = vector.shape_cast %132 : vector<1x1x1x8x16xbf16> to vector<8x16xbf16>
    %c32_296 = arith.constant 32 : index
    %c80_297 = arith.constant 80 : index
    %134 = vector.load %arg9[%c32_296, %c80_297] : memref<64x432xbf16, #tpu.memory_space<vmem>>, vector<8x16xbf16>
    tpu.vector_store %arg9[%c32_296, %c80_297], %133 {strides = array<i32>} : memref<64x432xbf16, #tpu.memory_space<vmem>>, vector<8x16xbf16>,
    %c0_298 = arith.constant 0 : index
    %c0_299 = arith.constant 0 : index
    %c6_300 = arith.constant 6 : index
    %c2_301 = arith.constant 2 : index
    %c0_302 = arith.constant 0 : index
    %135 = vector.load %arg2[%c0_298, %c0_299, %c6_300, %c2_301, %c0_302] : memref<1x1x10x10x16xbf16, #tpu.memory_space<vmem>>, vector<1x1x1x8x16xbf16>
    %136 = vector.shape_cast %135 : vector<1x1x1x8x16xbf16> to vector<8x16xbf16>
    %c40_303 = arith.constant 40 : index
    %c80_304 = arith.constant 80 : index
    %137 = vector.load %arg9[%c40_303, %c80_304] : memref<64x432xbf16, #tpu.memory_space<vmem>>, vector<8x16xbf16>
    tpu.vector_store %arg9[%c40_303, %c80_304], %136 {strides = array<i32>} : memref<64x432xbf16, #tpu.memory_space<vmem>>, vector<8x16xbf16>,
    %c0_305 = arith.constant 0 : index
    %c0_306 = arith.constant 0 : index
    %c7_307 = arith.constant 7 : index
    %c2_308 = arith.constant 2 : index
    %c0_309 = arith.constant 0 : index
    %138 = vector.load %arg2[%c0_305, %c0_306, %c7_307, %c2_308, %c0_309] : memref<1x1x10x10x16xbf16, #tpu.memory_space<vmem>>, vector<1x1x1x8x16xbf16>
    %139 = vector.shape_cast %138 : vector<1x1x1x8x16xbf16> to vector<8x16xbf16>
    %c48_310 = arith.constant 48 : index
    %c80_311 = arith.constant 80 : index
    %140 = vector.load %arg9[%c48_310, %c80_311] : memref<64x432xbf16, #tpu.memory_space<vmem>>, vector<8x16xbf16>
    tpu.vector_store %arg9[%c48_310, %c80_311], %139 {strides = array<i32>} : memref<64x432xbf16, #tpu.memory_space<vmem>>, vector<8x16xbf16>,
    %c0_312 = arith.constant 0 : index
    %c0_313 = arith.constant 0 : index
    %c8_314 = arith.constant 8 : index
    %c2_315 = arith.constant 2 : index
    %c0_316 = arith.constant 0 : index
    %141 = vector.load %arg2[%c0_312, %c0_313, %c8_314, %c2_315, %c0_316] : memref<1x1x10x10x16xbf16, #tpu.memory_space<vmem>>, vector<1x1x1x8x16xbf16>
    %142 = vector.shape_cast %141 : vector<1x1x1x8x16xbf16> to vector<8x16xbf16>
    %c56_317 = arith.constant 56 : index
    %c80_318 = arith.constant 80 : index
    %143 = vector.load %arg9[%c56_317, %c80_318] : memref<64x432xbf16, #tpu.memory_space<vmem>>, vector<8x16xbf16>
    tpu.vector_store %arg9[%c56_317, %c80_318], %142 {strides = array<i32>} : memref<64x432xbf16, #tpu.memory_space<vmem>>, vector<8x16xbf16>,
    %c0_319 = arith.constant 0 : index
    %c0_320 = arith.constant 0 : index
    %c2_321 = arith.constant 2 : index
    %c0_322 = arith.constant 0 : index
    %c0_323 = arith.constant 0 : index
    %144 = vector.load %arg2[%c0_319, %c0_320, %c2_321, %c0_322, %c0_323] : memref<1x1x10x10x16xbf16, #tpu.memory_space<vmem>>, vector<1x1x1x8x16xbf16>
    %145 = vector.shape_cast %144 : vector<1x1x1x8x16xbf16> to vector<8x16xbf16>
    %c0_324 = arith.constant 0 : index
    %c96 = arith.constant 96 : index
    %146 = vector.load %arg9[%c0_324, %c96] : memref<64x432xbf16, #tpu.memory_space<vmem>>, vector<8x16xbf16>
    tpu.vector_store %arg9[%c0_324, %c96], %145 {strides = array<i32>} : memref<64x432xbf16, #tpu.memory_space<vmem>>, vector<8x16xbf16>,
    %c0_325 = arith.constant 0 : index
    %c0_326 = arith.constant 0 : index
    %c3_327 = arith.constant 3 : index
    %c0_328 = arith.constant 0 : index
    %c0_329 = arith.constant 0 : index
    %147 = vector.load %arg2[%c0_325, %c0_326, %c3_327, %c0_328, %c0_329] : memref<1x1x10x10x16xbf16, #tpu.memory_space<vmem>>, vector<1x1x1x8x16xbf16>
    %148 = vector.shape_cast %147 : vector<1x1x1x8x16xbf16> to vector<8x16xbf16>
    %c8_330 = arith.constant 8 : index
    %c96_331 = arith.constant 96 : index
    %149 = vector.load %arg9[%c8_330, %c96_331] : memref<64x432xbf16, #tpu.memory_space<vmem>>, vector<8x16xbf16>
    tpu.vector_store %arg9[%c8_330, %c96_331], %148 {strides = array<i32>} : memref<64x432xbf16, #tpu.memory_space<vmem>>, vector<8x16xbf16>,
    %c0_332 = arith.constant 0 : index
    %c0_333 = arith.constant 0 : index
    %c4_334 = arith.constant 4 : index
    %c0_335 = arith.constant 0 : index
    %c0_336 = arith.constant 0 : index
    %150 = vector.load %arg2[%c0_332, %c0_333, %c4_334, %c0_335, %c0_336] : memref<1x1x10x10x16xbf16, #tpu.memory_space<vmem>>, vector<1x1x1x8x16xbf16>
    %151 = vector.shape_cast %150 : vector<1x1x1x8x16xbf16> to vector<8x16xbf16>
    %c16_337 = arith.constant 16 : index
    %c96_338 = arith.constant 96 : index
    %152 = vector.load %arg9[%c16_337, %c96_338] : memref<64x432xbf16, #tpu.memory_space<vmem>>, vector<8x16xbf16>
    tpu.vector_store %arg9[%c16_337, %c96_338], %151 {strides = array<i32>} : memref<64x432xbf16, #tpu.memory_space<vmem>>, vector<8x16xbf16>,
    %c0_339 = arith.constant 0 : index
    %c0_340 = arith.constant 0 : index
    %c5_341 = arith.constant 5 : index
    %c0_342 = arith.constant 0 : index
    %c0_343 = arith.constant 0 : index
    %153 = vector.load %arg2[%c0_339, %c0_340, %c5_341, %c0_342, %c0_343] : memref<1x1x10x10x16xbf16, #tpu.memory_space<vmem>>, vector<1x1x1x8x16xbf16>
    %154 = vector.shape_cast %153 : vector<1x1x1x8x16xbf16> to vector<8x16xbf16>
    %c24_344 = arith.constant 24 : index
    %c96_345 = arith.constant 96 : index
    %155 = vector.load %arg9[%c24_344, %c96_345] : memref<64x432xbf16, #tpu.memory_space<vmem>>, vector<8x16xbf16>
    tpu.vector_store %arg9[%c24_344, %c96_345], %154 {strides = array<i32>} : memref<64x432xbf16, #tpu.memory_space<vmem>>, vector<8x16xbf16>,
    %c0_346 = arith.constant 0 : index
    %c0_347 = arith.constant 0 : index
    %c6_348 = arith.constant 6 : index
    %c0_349 = arith.constant 0 : index
    %c0_350 = arith.constant 0 : index
    %156 = vector.load %arg2[%c0_346, %c0_347, %c6_348, %c0_349, %c0_350] : memref<1x1x10x10x16xbf16, #tpu.memory_space<vmem>>, vector<1x1x1x8x16xbf16>
    %157 = vector.shape_cast %156 : vector<1x1x1x8x16xbf16> to vector<8x16xbf16>
    %c32_351 = arith.constant 32 : index
    %c96_352 = arith.constant 96 : index
    %158 = vector.load %arg9[%c32_351, %c96_352] : memref<64x432xbf16, #tpu.memory_space<vmem>>, vector<8x16xbf16>
    tpu.vector_store %arg9[%c32_351, %c96_352], %157 {strides = array<i32>} : memref<64x432xbf16, #tpu.memory_space<vmem>>, vector<8x16xbf16>,
    %c0_353 = arith.constant 0 : index
    %c0_354 = arith.constant 0 : index
    %c7_355 = arith.constant 7 : index
    %c0_356 = arith.constant 0 : index
    %c0_357 = arith.constant 0 : index
    %159 = vector.load %arg2[%c0_353, %c0_354, %c7_355, %c0_356, %c0_357] : memref<1x1x10x10x16xbf16, #tpu.memory_space<vmem>>, vector<1x1x1x8x16xbf16>
    %160 = vector.shape_cast %159 : vector<1x1x1x8x16xbf16> to vector<8x16xbf16>
    %c40_358 = arith.constant 40 : index
    %c96_359 = arith.constant 96 : index
    %161 = vector.load %arg9[%c40_358, %c96_359] : memref<64x432xbf16, #tpu.memory_space<vmem>>, vector<8x16xbf16>
    tpu.vector_store %arg9[%c40_358, %c96_359], %160 {strides = array<i32>} : memref<64x432xbf16, #tpu.memory_space<vmem>>, vector<8x16xbf16>,
    %c0_360 = arith.constant 0 : index
    %c0_361 = arith.constant 0 : index
    %c8_362 = arith.constant 8 : index
    %c0_363 = arith.constant 0 : index
    %c0_364 = arith.constant 0 : index
    %162 = vector.load %arg2[%c0_360, %c0_361, %c8_362, %c0_363, %c0_364] : memref<1x1x10x10x16xbf16, #tpu.memory_space<vmem>>, vector<1x1x1x8x16xbf16>
    %163 = vector.shape_cast %162 : vector<1x1x1x8x16xbf16> to vector<8x16xbf16>
    %c48_365 = arith.constant 48 : index
    %c96_366 = arith.constant 96 : index
    %164 = vector.load %arg9[%c48_365, %c96_366] : memref<64x432xbf16, #tpu.memory_space<vmem>>, vector<8x16xbf16>
    tpu.vector_store %arg9[%c48_365, %c96_366], %163 {strides = array<i32>} : memref<64x432xbf16, #tpu.memory_space<vmem>>, vector<8x16xbf16>,
    %c0_367 = arith.constant 0 : index
    %c0_368 = arith.constant 0 : index
    %c9 = arith.constant 9 : index
    %c0_369 = arith.constant 0 : index
    %c0_370 = arith.constant 0 : index
    %165 = vector.load %arg2[%c0_367, %c0_368, %c9, %c0_369, %c0_370] : memref<1x1x10x10x16xbf16, #tpu.memory_space<vmem>>, vector<1x1x1x8x16xbf16>
    %166 = vector.shape_cast %165 : vector<1x1x1x8x16xbf16> to vector<8x16xbf16>
    %c56_371 = arith.constant 56 : index
    %c96_372 = arith.constant 96 : index
    %167 = vector.load %arg9[%c56_371, %c96_372] : memref<64x432xbf16, #tpu.memory_space<vmem>>, vector<8x16xbf16>
    tpu.vector_store %arg9[%c56_371, %c96_372], %166 {strides = array<i32>} : memref<64x432xbf16, #tpu.memory_space<vmem>>, vector<8x16xbf16>,
    %c0_373 = arith.constant 0 : index
    %c0_374 = arith.constant 0 : index
    %c2_375 = arith.constant 2 : index
    %c1_376 = arith.constant 1 : index
    %c0_377 = arith.constant 0 : index
    %168 = vector.load %arg2[%c0_373, %c0_374, %c2_375, %c1_376, %c0_377] : memref<1x1x10x10x16xbf16, #tpu.memory_space<vmem>>, vector<1x1x1x8x16xbf16>
    %169 = vector.shape_cast %168 : vector<1x1x1x8x16xbf16> to vector<8x16xbf16>
    %c0_378 = arith.constant 0 : index
    %c112 = arith.constant 112 : index
    %170 = vector.load %arg9[%c0_378, %c112] : memref<64x432xbf16, #tpu.memory_space<vmem>>, vector<8x16xbf16>
    tpu.vector_store %arg9[%c0_378, %c112], %169 {strides = array<i32>} : memref<64x432xbf16, #tpu.memory_space<vmem>>, vector<8x16xbf16>,
    %c0_379 = arith.constant 0 : index
    %c0_380 = arith.constant 0 : index
    %c3_381 = arith.constant 3 : index
    %c1_382 = arith.constant 1 : index
    %c0_383 = arith.constant 0 : index
    %171 = vector.load %arg2[%c0_379, %c0_380, %c3_381, %c1_382, %c0_383] : memref<1x1x10x10x16xbf16, #tpu.memory_space<vmem>>, vector<1x1x1x8x16xbf16>
    %172 = vector.shape_cast %171 : vector<1x1x1x8x16xbf16> to vector<8x16xbf16>
    %c8_384 = arith.constant 8 : index
    %c112_385 = arith.constant 112 : index
    %173 = vector.load %arg9[%c8_384, %c112_385] : memref<64x432xbf16, #tpu.memory_space<vmem>>, vector<8x16xbf16>
    tpu.vector_store %arg9[%c8_384, %c112_385], %172 {strides = array<i32>} : memref<64x432xbf16, #tpu.memory_space<vmem>>, vector<8x16xbf16>,
    %c0_386 = arith.constant 0 : index
    %c0_387 = arith.constant 0 : index
    %c4_388 = arith.constant 4 : index
    %c1_389 = arith.constant 1 : index
    %c0_390 = arith.constant 0 : index
    %174 = vector.load %arg2[%c0_386, %c0_387, %c4_388, %c1_389, %c0_390] : memref<1x1x10x10x16xbf16, #tpu.memory_space<vmem>>, vector<1x1x1x8x16xbf16>
    %175 = vector.shape_cast %174 : vector<1x1x1x8x16xbf16> to vector<8x16xbf16>
    %c16_391 = arith.constant 16 : index
    %c112_392 = arith.constant 112 : index
    %176 = vector.load %arg9[%c16_391, %c112_392] : memref<64x432xbf16, #tpu.memory_space<vmem>>, vector<8x16xbf16>
    tpu.vector_store %arg9[%c16_391, %c112_392], %175 {strides = array<i32>} : memref<64x432xbf16, #tpu.memory_space<vmem>>, vector<8x16xbf16>,
    %c0_393 = arith.constant 0 : index
    %c0_394 = arith.constant 0 : index
    %c5_395 = arith.constant 5 : index
    %c1_396 = arith.constant 1 : index
    %c0_397 = arith.constant 0 : index
    %177 = vector.load %arg2[%c0_393, %c0_394, %c5_395, %c1_396, %c0_397] : memref<1x1x10x10x16xbf16, #tpu.memory_space<vmem>>, vector<1x1x1x8x16xbf16>
    %178 = vector.shape_cast %177 : vector<1x1x1x8x16xbf16> to vector<8x16xbf16>
    %c24_398 = arith.constant 24 : index
    %c112_399 = arith.constant 112 : index
    %179 = vector.load %arg9[%c24_398, %c112_399] : memref<64x432xbf16, #tpu.memory_space<vmem>>, vector<8x16xbf16>
    tpu.vector_store %arg9[%c24_398, %c112_399], %178 {strides = array<i32>} : memref<64x432xbf16, #tpu.memory_space<vmem>>, vector<8x16xbf16>,
    %c0_400 = arith.constant 0 : index
    %c0_401 = arith.constant 0 : index
    %c6_402 = arith.constant 6 : index
    %c1_403 = arith.constant 1 : index
    %c0_404 = arith.constant 0 : index
    %180 = vector.load %arg2[%c0_400, %c0_401, %c6_402, %c1_403, %c0_404] : memref<1x1x10x10x16xbf16, #tpu.memory_space<vmem>>, vector<1x1x1x8x16xbf16>
    %181 = vector.shape_cast %180 : vector<1x1x1x8x16xbf16> to vector<8x16xbf16>
    %c32_405 = arith.constant 32 : index
    %c112_406 = arith.constant 112 : index
    %182 = vector.load %arg9[%c32_405, %c112_406] : memref<64x432xbf16, #tpu.memory_space<vmem>>, vector<8x16xbf16>
    tpu.vector_store %arg9[%c32_405, %c112_406], %181 {strides = array<i32>} : memref<64x432xbf16, #tpu.memory_space<vmem>>, vector<8x16xbf16>,
    %c0_407 = arith.constant 0 : index
    %c0_408 = arith.constant 0 : index
    %c7_409 = arith.constant 7 : index
    %c1_410 = arith.constant 1 : index
    %c0_411 = arith.constant 0 : index
    %183 = vector.load %arg2[%c0_407, %c0_408, %c7_409, %c1_410, %c0_411] : memref<1x1x10x10x16xbf16, #tpu.memory_space<vmem>>, vector<1x1x1x8x16xbf16>
    %184 = vector.shape_cast %183 : vector<1x1x1x8x16xbf16> to vector<8x16xbf16>
    %c40_412 = arith.constant 40 : index
    %c112_413 = arith.constant 112 : index
    %185 = vector.load %arg9[%c40_412, %c112_413] : memref<64x432xbf16, #tpu.memory_space<vmem>>, vector<8x16xbf16>
    tpu.vector_store %arg9[%c40_412, %c112_413], %184 {strides = array<i32>} : memref<64x432xbf16, #tpu.memory_space<vmem>>, vector<8x16xbf16>,
    %c0_414 = arith.constant 0 : index
    %c0_415 = arith.constant 0 : index
    %c8_416 = arith.constant 8 : index
    %c1_417 = arith.constant 1 : index
    %c0_418 = arith.constant 0 : index
    %186 = vector.load %arg2[%c0_414, %c0_415, %c8_416, %c1_417, %c0_418] : memref<1x1x10x10x16xbf16, #tpu.memory_space<vmem>>, vector<1x1x1x8x16xbf16>
    %187 = vector.shape_cast %186 : vector<1x1x1x8x16xbf16> to vector<8x16xbf16>
    %c48_419 = arith.constant 48 : index
    %c112_420 = arith.constant 112 : index
    %188 = vector.load %arg9[%c48_419, %c112_420] : memref<64x432xbf16, #tpu.memory_space<vmem>>, vector<8x16xbf16>
    tpu.vector_store %arg9[%c48_419, %c112_420], %187 {strides = array<i32>} : memref<64x432xbf16, #tpu.memory_space<vmem>>, vector<8x16xbf16>,
    %c0_421 = arith.constant 0 : index
    %c0_422 = arith.constant 0 : index
    %c9_423 = arith.constant 9 : index
    %c1_424 = arith.constant 1 : index
    %c0_425 = arith.constant 0 : index
    %189 = vector.load %arg2[%c0_421, %c0_422, %c9_423, %c1_424, %c0_425] : memref<1x1x10x10x16xbf16, #tpu.memory_space<vmem>>, vector<1x1x1x8x16xbf16>
    %190 = vector.shape_cast %189 : vector<1x1x1x8x16xbf16> to vector<8x16xbf16>
    %c56_426 = arith.constant 56 : index
    %c112_427 = arith.constant 112 : index
    %191 = vector.load %arg9[%c56_426, %c112_427] : memref<64x432xbf16, #tpu.memory_space<vmem>>, vector<8x16xbf16>
    tpu.vector_store %arg9[%c56_426, %c112_427], %190 {strides = array<i32>} : memref<64x432xbf16, #tpu.memory_space<vmem>>, vector<8x16xbf16>,
    %c0_428 = arith.constant 0 : index
    %c0_429 = arith.constant 0 : index
    %c2_430 = arith.constant 2 : index
    %c2_431 = arith.constant 2 : index
    %c0_432 = arith.constant 0 : index
    %192 = vector.load %arg2[%c0_428, %c0_429, %c2_430, %c2_431, %c0_432] : memref<1x1x10x10x16xbf16, #tpu.memory_space<vmem>>, vector<1x1x1x8x16xbf16>
    %193 = vector.shape_cast %192 : vector<1x1x1x8x16xbf16> to vector<8x16xbf16>
    %c0_433 = arith.constant 0 : index
    %c128 = arith.constant 128 : index
    %194 = vector.load %arg9[%c0_433, %c128] : memref<64x432xbf16, #tpu.memory_space<vmem>>, vector<8x16xbf16>
    tpu.vector_store %arg9[%c0_433, %c128], %193 {strides = array<i32>} : memref<64x432xbf16, #tpu.memory_space<vmem>>, vector<8x16xbf16>,
    %c0_434 = arith.constant 0 : index
    %c0_435 = arith.constant 0 : index
    %c3_436 = arith.constant 3 : index
    %c2_437 = arith.constant 2 : index
    %c0_438 = arith.constant 0 : index
    %195 = vector.load %arg2[%c0_434, %c0_435, %c3_436, %c2_437, %c0_438] : memref<1x1x10x10x16xbf16, #tpu.memory_space<vmem>>, vector<1x1x1x8x16xbf16>
    %196 = vector.shape_cast %195 : vector<1x1x1x8x16xbf16> to vector<8x16xbf16>
    %c8_439 = arith.constant 8 : index
    %c128_440 = arith.constant 128 : index
    %197 = vector.load %arg9[%c8_439, %c128_440] : memref<64x432xbf16, #tpu.memory_space<vmem>>, vector<8x16xbf16>
    tpu.vector_store %arg9[%c8_439, %c128_440], %196 {strides = array<i32>} : memref<64x432xbf16, #tpu.memory_space<vmem>>, vector<8x16xbf16>,
    %c0_441 = arith.constant 0 : index
    %c0_442 = arith.constant 0 : index
    %c4_443 = arith.constant 4 : index
    %c2_444 = arith.constant 2 : index
    %c0_445 = arith.constant 0 : index
    %198 = vector.load %arg2[%c0_441, %c0_442, %c4_443, %c2_444, %c0_445] : memref<1x1x10x10x16xbf16, #tpu.memory_space<vmem>>, vector<1x1x1x8x16xbf16>
    %199 = vector.shape_cast %198 : vector<1x1x1x8x16xbf16> to vector<8x16xbf16>
    %c16_446 = arith.constant 16 : index
    %c128_447 = arith.constant 128 : index
    %200 = vector.load %arg9[%c16_446, %c128_447] : memref<64x432xbf16, #tpu.memory_space<vmem>>, vector<8x16xbf16>
    tpu.vector_store %arg9[%c16_446, %c128_447], %199 {strides = array<i32>} : memref<64x432xbf16, #tpu.memory_space<vmem>>, vector<8x16xbf16>,
    %c0_448 = arith.constant 0 : index
    %c0_449 = arith.constant 0 : index
    %c5_450 = arith.constant 5 : index
    %c2_451 = arith.constant 2 : index
    %c0_452 = arith.constant 0 : index
    %201 = vector.load %arg2[%c0_448, %c0_449, %c5_450, %c2_451, %c0_452] : memref<1x1x10x10x16xbf16, #tpu.memory_space<vmem>>, vector<1x1x1x8x16xbf16>
    %202 = vector.shape_cast %201 : vector<1x1x1x8x16xbf16> to vector<8x16xbf16>
    %c24_453 = arith.constant 24 : index
    %c128_454 = arith.constant 128 : index
    %203 = vector.load %arg9[%c24_453, %c128_454] : memref<64x432xbf16, #tpu.memory_space<vmem>>, vector<8x16xbf16>
    tpu.vector_store %arg9[%c24_453, %c128_454], %202 {strides = array<i32>} : memref<64x432xbf16, #tpu.memory_space<vmem>>, vector<8x16xbf16>,
    %c0_455 = arith.constant 0 : index
    %c0_456 = arith.constant 0 : index
    %c6_457 = arith.constant 6 : index
    %c2_458 = arith.constant 2 : index
    %c0_459 = arith.constant 0 : index
    %204 = vector.load %arg2[%c0_455, %c0_456, %c6_457, %c2_458, %c0_459] : memref<1x1x10x10x16xbf16, #tpu.memory_space<vmem>>, vector<1x1x1x8x16xbf16>
    %205 = vector.shape_cast %204 : vector<1x1x1x8x16xbf16> to vector<8x16xbf16>
    %c32_460 = arith.constant 32 : index
    %c128_461 = arith.constant 128 : index
    %206 = vector.load %arg9[%c32_460, %c128_461] : memref<64x432xbf16, #tpu.memory_space<vmem>>, vector<8x16xbf16>
    tpu.vector_store %arg9[%c32_460, %c128_461], %205 {strides = array<i32>} : memref<64x432xbf16, #tpu.memory_space<vmem>>, vector<8x16xbf16>,
    %c0_462 = arith.constant 0 : index
    %c0_463 = arith.constant 0 : index
    %c7_464 = arith.constant 7 : index
    %c2_465 = arith.constant 2 : index
    %c0_466 = arith.constant 0 : index
    %207 = vector.load %arg2[%c0_462, %c0_463, %c7_464, %c2_465, %c0_466] : memref<1x1x10x10x16xbf16, #tpu.memory_space<vmem>>, vector<1x1x1x8x16xbf16>
    %208 = vector.shape_cast %207 : vector<1x1x1x8x16xbf16> to vector<8x16xbf16>
    %c40_467 = arith.constant 40 : index
    %c128_468 = arith.constant 128 : index
    %209 = vector.load %arg9[%c40_467, %c128_468] : memref<64x432xbf16, #tpu.memory_space<vmem>>, vector<8x16xbf16>
    tpu.vector_store %arg9[%c40_467, %c128_468], %208 {strides = array<i32>} : memref<64x432xbf16, #tpu.memory_space<vmem>>, vector<8x16xbf16>,
    %c0_469 = arith.constant 0 : index
    %c0_470 = arith.constant 0 : index
    %c8_471 = arith.constant 8 : index
    %c2_472 = arith.constant 2 : index
    %c0_473 = arith.constant 0 : index
    %210 = vector.load %arg2[%c0_469, %c0_470, %c8_471, %c2_472, %c0_473] : memref<1x1x10x10x16xbf16, #tpu.memory_space<vmem>>, vector<1x1x1x8x16xbf16>
    %211 = vector.shape_cast %210 : vector<1x1x1x8x16xbf16> to vector<8x16xbf16>
    %c48_474 = arith.constant 48 : index
    %c128_475 = arith.constant 128 : index
    %212 = vector.load %arg9[%c48_474, %c128_475] : memref<64x432xbf16, #tpu.memory_space<vmem>>, vector<8x16xbf16>
    tpu.vector_store %arg9[%c48_474, %c128_475], %211 {strides = array<i32>} : memref<64x432xbf16, #tpu.memory_space<vmem>>, vector<8x16xbf16>,
    %c0_476 = arith.constant 0 : index
    %c0_477 = arith.constant 0 : index
    %c9_478 = arith.constant 9 : index
    %c2_479 = arith.constant 2 : index
    %c0_480 = arith.constant 0 : index
    %213 = vector.load %arg2[%c0_476, %c0_477, %c9_478, %c2_479, %c0_480] : memref<1x1x10x10x16xbf16, #tpu.memory_space<vmem>>, vector<1x1x1x8x16xbf16>
    %214 = vector.shape_cast %213 : vector<1x1x1x8x16xbf16> to vector<8x16xbf16>
    %c56_481 = arith.constant 56 : index
    %c128_482 = arith.constant 128 : index
    %215 = vector.load %arg9[%c56_481, %c128_482] : memref<64x432xbf16, #tpu.memory_space<vmem>>, vector<8x16xbf16>
    tpu.vector_store %arg9[%c56_481, %c128_482], %214 {strides = array<i32>} : memref<64x432xbf16, #tpu.memory_space<vmem>>, vector<8x16xbf16>,
    %c0_483 = arith.constant 0 : index
    %c0_484 = arith.constant 0 : index
    %c0_485 = arith.constant 0 : index
    %c0_486 = arith.constant 0 : index
    %c0_487 = arith.constant 0 : index
    %216 = vector.load %arg3[%c0_483, %c0_484, %c0_485, %c0_486, %c0_487] : memref<1x1x10x10x16xbf16, #tpu.memory_space<vmem>>, vector<1x1x1x8x16xbf16>
    %217 = vector.shape_cast %216 : vector<1x1x1x8x16xbf16> to vector<8x16xbf16>
    %c0_488 = arith.constant 0 : index
    %c144 = arith.constant 144 : index
    %218 = vector.load %arg9[%c0_488, %c144] : memref<64x432xbf16, #tpu.memory_space<vmem>>, vector<8x16xbf16>
    tpu.vector_store %arg9[%c0_488, %c144], %217 {strides = array<i32>} : memref<64x432xbf16, #tpu.memory_space<vmem>>, vector<8x16xbf16>,
    %c0_489 = arith.constant 0 : index
    %c0_490 = arith.constant 0 : index
    %c1_491 = arith.constant 1 : index
    %c0_492 = arith.constant 0 : index
    %c0_493 = arith.constant 0 : index
    %219 = vector.load %arg3[%c0_489, %c0_490, %c1_491, %c0_492, %c0_493] : memref<1x1x10x10x16xbf16, #tpu.memory_space<vmem>>, vector<1x1x1x8x16xbf16>
    %220 = vector.shape_cast %219 : vector<1x1x1x8x16xbf16> to vector<8x16xbf16>
    %c8_494 = arith.constant 8 : index
    %c144_495 = arith.constant 144 : index
    %221 = vector.load %arg9[%c8_494, %c144_495] : memref<64x432xbf16, #tpu.memory_space<vmem>>, vector<8x16xbf16>
    tpu.vector_store %arg9[%c8_494, %c144_495], %220 {strides = array<i32>} : memref<64x432xbf16, #tpu.memory_space<vmem>>, vector<8x16xbf16>,
    %c0_496 = arith.constant 0 : index
    %c0_497 = arith.constant 0 : index
    %c2_498 = arith.constant 2 : index
    %c0_499 = arith.constant 0 : index
    %c0_500 = arith.constant 0 : index
    %222 = vector.load %arg3[%c0_496, %c0_497, %c2_498, %c0_499, %c0_500] : memref<1x1x10x10x16xbf16, #tpu.memory_space<vmem>>, vector<1x1x1x8x16xbf16>
    %223 = vector.shape_cast %222 : vector<1x1x1x8x16xbf16> to vector<8x16xbf16>
    %c16_501 = arith.constant 16 : index
    %c144_502 = arith.constant 144 : index
    %224 = vector.load %arg9[%c16_501, %c144_502] : memref<64x432xbf16, #tpu.memory_space<vmem>>, vector<8x16xbf16>
    tpu.vector_store %arg9[%c16_501, %c144_502], %223 {strides = array<i32>} : memref<64x432xbf16, #tpu.memory_space<vmem>>, vector<8x16xbf16>,
    %c0_503 = arith.constant 0 : index
    %c0_504 = arith.constant 0 : index
    %c3_505 = arith.constant 3 : index
    %c0_506 = arith.constant 0 : index
    %c0_507 = arith.constant 0 : index
    %225 = vector.load %arg3[%c0_503, %c0_504, %c3_505, %c0_506, %c0_507] : memref<1x1x10x10x16xbf16, #tpu.memory_space<vmem>>, vector<1x1x1x8x16xbf16>
    %226 = vector.shape_cast %225 : vector<1x1x1x8x16xbf16> to vector<8x16xbf16>
    %c24_508 = arith.constant 24 : index
    %c144_509 = arith.constant 144 : index
    %227 = vector.load %arg9[%c24_508, %c144_509] : memref<64x432xbf16, #tpu.memory_space<vmem>>, vector<8x16xbf16>
    tpu.vector_store %arg9[%c24_508, %c144_509], %226 {strides = array<i32>} : memref<64x432xbf16, #tpu.memory_space<vmem>>, vector<8x16xbf16>,
    %c0_510 = arith.constant 0 : index
    %c0_511 = arith.constant 0 : index
    %c4_512 = arith.constant 4 : index
    %c0_513 = arith.constant 0 : index
    %c0_514 = arith.constant 0 : index
    %228 = vector.load %arg3[%c0_510, %c0_511, %c4_512, %c0_513, %c0_514] : memref<1x1x10x10x16xbf16, #tpu.memory_space<vmem>>, vector<1x1x1x8x16xbf16>
    %229 = vector.shape_cast %228 : vector<1x1x1x8x16xbf16> to vector<8x16xbf16>
    %c32_515 = arith.constant 32 : index
    %c144_516 = arith.constant 144 : index
    %230 = vector.load %arg9[%c32_515, %c144_516] : memref<64x432xbf16, #tpu.memory_space<vmem>>, vector<8x16xbf16>
    tpu.vector_store %arg9[%c32_515, %c144_516], %229 {strides = array<i32>} : memref<64x432xbf16, #tpu.memory_space<vmem>>, vector<8x16xbf16>,
    %c0_517 = arith.constant 0 : index
    %c0_518 = arith.constant 0 : index
    %c5_519 = arith.constant 5 : index
    %c0_520 = arith.constant 0 : index
    %c0_521 = arith.constant 0 : index
    %231 = vector.load %arg3[%c0_517, %c0_518, %c5_519, %c0_520, %c0_521] : memref<1x1x10x10x16xbf16, #tpu.memory_space<vmem>>, vector<1x1x1x8x16xbf16>
    %232 = vector.shape_cast %231 : vector<1x1x1x8x16xbf16> to vector<8x16xbf16>
    %c40_522 = arith.constant 40 : index
    %c144_523 = arith.constant 144 : index
    %233 = vector.load %arg9[%c40_522, %c144_523] : memref<64x432xbf16, #tpu.memory_space<vmem>>, vector<8x16xbf16>
    tpu.vector_store %arg9[%c40_522, %c144_523], %232 {strides = array<i32>} : memref<64x432xbf16, #tpu.memory_space<vmem>>, vector<8x16xbf16>,
    %c0_524 = arith.constant 0 : index
    %c0_525 = arith.constant 0 : index
    %c6_526 = arith.constant 6 : index
    %c0_527 = arith.constant 0 : index
    %c0_528 = arith.constant 0 : index
    %234 = vector.load %arg3[%c0_524, %c0_525, %c6_526, %c0_527, %c0_528] : memref<1x1x10x10x16xbf16, #tpu.memory_space<vmem>>, vector<1x1x1x8x16xbf16>
    %235 = vector.shape_cast %234 : vector<1x1x1x8x16xbf16> to vector<8x16xbf16>
    %c48_529 = arith.constant 48 : index
    %c144_530 = arith.constant 144 : index
    %236 = vector.load %arg9[%c48_529, %c144_530] : memref<64x432xbf16, #tpu.memory_space<vmem>>, vector<8x16xbf16>
    tpu.vector_store %arg9[%c48_529, %c144_530], %235 {strides = array<i32>} : memref<64x432xbf16, #tpu.memory_space<vmem>>, vector<8x16xbf16>,
    %c0_531 = arith.constant 0 : index
    %c0_532 = arith.constant 0 : index
    %c7_533 = arith.constant 7 : index
    %c0_534 = arith.constant 0 : index
    %c0_535 = arith.constant 0 : index
    %237 = vector.load %arg3[%c0_531, %c0_532, %c7_533, %c0_534, %c0_535] : memref<1x1x10x10x16xbf16, #tpu.memory_space<vmem>>, vector<1x1x1x8x16xbf16>
    %238 = vector.shape_cast %237 : vector<1x1x1x8x16xbf16> to vector<8x16xbf16>
    %c56_536 = arith.constant 56 : index
    %c144_537 = arith.constant 144 : index
    %239 = vector.load %arg9[%c56_536, %c144_537] : memref<64x432xbf16, #tpu.memory_space<vmem>>, vector<8x16xbf16>
    tpu.vector_store %arg9[%c56_536, %c144_537], %238 {strides = array<i32>} : memref<64x432xbf16, #tpu.memory_space<vmem>>, vector<8x16xbf16>,
    %c0_538 = arith.constant 0 : index
    %c0_539 = arith.constant 0 : index
    %c0_540 = arith.constant 0 : index
    %c1_541 = arith.constant 1 : index
    %c0_542 = arith.constant 0 : index
    %240 = vector.load %arg3[%c0_538, %c0_539, %c0_540, %c1_541, %c0_542] : memref<1x1x10x10x16xbf16, #tpu.memory_space<vmem>>, vector<1x1x1x8x16xbf16>
    %241 = vector.shape_cast %240 : vector<1x1x1x8x16xbf16> to vector<8x16xbf16>
    %c0_543 = arith.constant 0 : index
    %c160 = arith.constant 160 : index
    %242 = vector.load %arg9[%c0_543, %c160] : memref<64x432xbf16, #tpu.memory_space<vmem>>, vector<8x16xbf16>
    tpu.vector_store %arg9[%c0_543, %c160], %241 {strides = array<i32>} : memref<64x432xbf16, #tpu.memory_space<vmem>>, vector<8x16xbf16>,
    %c0_544 = arith.constant 0 : index
    %c0_545 = arith.constant 0 : index
    %c1_546 = arith.constant 1 : index
    %c1_547 = arith.constant 1 : index
    %c0_548 = arith.constant 0 : index
    %243 = vector.load %arg3[%c0_544, %c0_545, %c1_546, %c1_547, %c0_548] : memref<1x1x10x10x16xbf16, #tpu.memory_space<vmem>>, vector<1x1x1x8x16xbf16>
    %244 = vector.shape_cast %243 : vector<1x1x1x8x16xbf16> to vector<8x16xbf16>
    %c8_549 = arith.constant 8 : index
    %c160_550 = arith.constant 160 : index
    %245 = vector.load %arg9[%c8_549, %c160_550] : memref<64x432xbf16, #tpu.memory_space<vmem>>, vector<8x16xbf16>
    tpu.vector_store %arg9[%c8_549, %c160_550], %244 {strides = array<i32>} : memref<64x432xbf16, #tpu.memory_space<vmem>>, vector<8x16xbf16>,
    %c0_551 = arith.constant 0 : index
    %c0_552 = arith.constant 0 : index
    %c2_553 = arith.constant 2 : index
    %c1_554 = arith.constant 1 : index
    %c0_555 = arith.constant 0 : index
    %246 = vector.load %arg3[%c0_551, %c0_552, %c2_553, %c1_554, %c0_555] : memref<1x1x10x10x16xbf16, #tpu.memory_space<vmem>>, vector<1x1x1x8x16xbf16>
    %247 = vector.shape_cast %246 : vector<1x1x1x8x16xbf16> to vector<8x16xbf16>
    %c16_556 = arith.constant 16 : index
    %c160_557 = arith.constant 160 : index
    %248 = vector.load %arg9[%c16_556, %c160_557] : memref<64x432xbf16, #tpu.memory_space<vmem>>, vector<8x16xbf16>
    tpu.vector_store %arg9[%c16_556, %c160_557], %247 {strides = array<i32>} : memref<64x432xbf16, #tpu.memory_space<vmem>>, vector<8x16xbf16>,
    %c0_558 = arith.constant 0 : index
    %c0_559 = arith.constant 0 : index
    %c3_560 = arith.constant 3 : index
    %c1_561 = arith.constant 1 : index
    %c0_562 = arith.constant 0 : index
    %249 = vector.load %arg3[%c0_558, %c0_559, %c3_560, %c1_561, %c0_562] : memref<1x1x10x10x16xbf16, #tpu.memory_space<vmem>>, vector<1x1x1x8x16xbf16>
    %250 = vector.shape_cast %249 : vector<1x1x1x8x16xbf16> to vector<8x16xbf16>
    %c24_563 = arith.constant 24 : index
    %c160_564 = arith.constant 160 : index
    %251 = vector.load %arg9[%c24_563, %c160_564] : memref<64x432xbf16, #tpu.memory_space<vmem>>, vector<8x16xbf16>
    tpu.vector_store %arg9[%c24_563, %c160_564], %250 {strides = array<i32>} : memref<64x432xbf16, #tpu.memory_space<vmem>>, vector<8x16xbf16>,
    %c0_565 = arith.constant 0 : index
    %c0_566 = arith.constant 0 : index
    %c4_567 = arith.constant 4 : index
    %c1_568 = arith.constant 1 : index
    %c0_569 = arith.constant 0 : index
    %252 = vector.load %arg3[%c0_565, %c0_566, %c4_567, %c1_568, %c0_569] : memref<1x1x10x10x16xbf16, #tpu.memory_space<vmem>>, vector<1x1x1x8x16xbf16>
    %253 = vector.shape_cast %252 : vector<1x1x1x8x16xbf16> to vector<8x16xbf16>
    %c32_570 = arith.constant 32 : index
    %c160_571 = arith.constant 160 : index
    %254 = vector.load %arg9[%c32_570, %c160_571] : memref<64x432xbf16, #tpu.memory_space<vmem>>, vector<8x16xbf16>
    tpu.vector_store %arg9[%c32_570, %c160_571], %253 {strides = array<i32>} : memref<64x432xbf16, #tpu.memory_space<vmem>>, vector<8x16xbf16>,
    %c0_572 = arith.constant 0 : index
    %c0_573 = arith.constant 0 : index
    %c5_574 = arith.constant 5 : index
    %c1_575 = arith.constant 1 : index
    %c0_576 = arith.constant 0 : index
    %255 = vector.load %arg3[%c0_572, %c0_573, %c5_574, %c1_575, %c0_576] : memref<1x1x10x10x16xbf16, #tpu.memory_space<vmem>>, vector<1x1x1x8x16xbf16>
    %256 = vector.shape_cast %255 : vector<1x1x1x8x16xbf16> to vector<8x16xbf16>
    %c40_577 = arith.constant 40 : index
    %c160_578 = arith.constant 160 : index
    %257 = vector.load %arg9[%c40_577, %c160_578] : memref<64x432xbf16, #tpu.memory_space<vmem>>, vector<8x16xbf16>
    tpu.vector_store %arg9[%c40_577, %c160_578], %256 {strides = array<i32>} : memref<64x432xbf16, #tpu.memory_space<vmem>>, vector<8x16xbf16>,
    %c0_579 = arith.constant 0 : index
    %c0_580 = arith.constant 0 : index
    %c6_581 = arith.constant 6 : index
    %c1_582 = arith.constant 1 : index
    %c0_583 = arith.constant 0 : index
    %258 = vector.load %arg3[%c0_579, %c0_580, %c6_581, %c1_582, %c0_583] : memref<1x1x10x10x16xbf16, #tpu.memory_space<vmem>>, vector<1x1x1x8x16xbf16>
    %259 = vector.shape_cast %258 : vector<1x1x1x8x16xbf16> to vector<8x16xbf16>
    %c48_584 = arith.constant 48 : index
    %c160_585 = arith.constant 160 : index
    %260 = vector.load %arg9[%c48_584, %c160_585] : memref<64x432xbf16, #tpu.memory_space<vmem>>, vector<8x16xbf16>
    tpu.vector_store %arg9[%c48_584, %c160_585], %259 {strides = array<i32>} : memref<64x432xbf16, #tpu.memory_space<vmem>>, vector<8x16xbf16>,
    %c0_586 = arith.constant 0 : index
    %c0_587 = arith.constant 0 : index
    %c7_588 = arith.constant 7 : index
    %c1_589 = arith.constant 1 : index
    %c0_590 = arith.constant 0 : index
    %261 = vector.load %arg3[%c0_586, %c0_587, %c7_588, %c1_589, %c0_590] : memref<1x1x10x10x16xbf16, #tpu.memory_space<vmem>>, vector<1x1x1x8x16xbf16>
    %262 = vector.shape_cast %261 : vector<1x1x1x8x16xbf16> to vector<8x16xbf16>
    %c56_591 = arith.constant 56 : index
    %c160_592 = arith.constant 160 : index
    %263 = vector.load %arg9[%c56_591, %c160_592] : memref<64x432xbf16, #tpu.memory_space<vmem>>, vector<8x16xbf16>
    tpu.vector_store %arg9[%c56_591, %c160_592], %262 {strides = array<i32>} : memref<64x432xbf16, #tpu.memory_space<vmem>>, vector<8x16xbf16>,
    %c0_593 = arith.constant 0 : index
    %c0_594 = arith.constant 0 : index
    %c0_595 = arith.constant 0 : index
    %c2_596 = arith.constant 2 : index
    %c0_597 = arith.constant 0 : index
    %264 = vector.load %arg3[%c0_593, %c0_594, %c0_595, %c2_596, %c0_597] : memref<1x1x10x10x16xbf16, #tpu.memory_space<vmem>>, vector<1x1x1x8x16xbf16>
    %265 = vector.shape_cast %264 : vector<1x1x1x8x16xbf16> to vector<8x16xbf16>
    %c0_598 = arith.constant 0 : index
    %c176 = arith.constant 176 : index
    %266 = vector.load %arg9[%c0_598, %c176] : memref<64x432xbf16, #tpu.memory_space<vmem>>, vector<8x16xbf16>
    tpu.vector_store %arg9[%c0_598, %c176], %265 {strides = array<i32>} : memref<64x432xbf16, #tpu.memory_space<vmem>>, vector<8x16xbf16>,
    %c0_599 = arith.constant 0 : index
    %c0_600 = arith.constant 0 : index
    %c1_601 = arith.constant 1 : index
    %c2_602 = arith.constant 2 : index
    %c0_603 = arith.constant 0 : index
    %267 = vector.load %arg3[%c0_599, %c0_600, %c1_601, %c2_602, %c0_603] : memref<1x1x10x10x16xbf16, #tpu.memory_space<vmem>>, vector<1x1x1x8x16xbf16>
    %268 = vector.shape_cast %267 : vector<1x1x1x8x16xbf16> to vector<8x16xbf16>
    %c8_604 = arith.constant 8 : index
    %c176_605 = arith.constant 176 : index
    %269 = vector.load %arg9[%c8_604, %c176_605] : memref<64x432xbf16, #tpu.memory_space<vmem>>, vector<8x16xbf16>
    tpu.vector_store %arg9[%c8_604, %c176_605], %268 {strides = array<i32>} : memref<64x432xbf16, #tpu.memory_space<vmem>>, vector<8x16xbf16>,
    %c0_606 = arith.constant 0 : index
    %c0_607 = arith.constant 0 : index
    %c2_608 = arith.constant 2 : index
    %c2_609 = arith.constant 2 : index
    %c0_610 = arith.constant 0 : index
    %270 = vector.load %arg3[%c0_606, %c0_607, %c2_608, %c2_609, %c0_610] : memref<1x1x10x10x16xbf16, #tpu.memory_space<vmem>>, vector<1x1x1x8x16xbf16>
    %271 = vector.shape_cast %270 : vector<1x1x1x8x16xbf16> to vector<8x16xbf16>
    %c16_611 = arith.constant 16 : index
    %c176_612 = arith.constant 176 : index
    %272 = vector.load %arg9[%c16_611, %c176_612] : memref<64x432xbf16, #tpu.memory_space<vmem>>, vector<8x16xbf16>
    tpu.vector_store %arg9[%c16_611, %c176_612], %271 {strides = array<i32>} : memref<64x432xbf16, #tpu.memory_space<vmem>>, vector<8x16xbf16>,
    %c0_613 = arith.constant 0 : index
    %c0_614 = arith.constant 0 : index
    %c3_615 = arith.constant 3 : index
    %c2_616 = arith.constant 2 : index
    %c0_617 = arith.constant 0 : index
    %273 = vector.load %arg3[%c0_613, %c0_614, %c3_615, %c2_616, %c0_617] : memref<1x1x10x10x16xbf16, #tpu.memory_space<vmem>>, vector<1x1x1x8x16xbf16>
    %274 = vector.shape_cast %273 : vector<1x1x1x8x16xbf16> to vector<8x16xbf16>
    %c24_618 = arith.constant 24 : index
    %c176_619 = arith.constant 176 : index
    %275 = vector.load %arg9[%c24_618, %c176_619] : memref<64x432xbf16, #tpu.memory_space<vmem>>, vector<8x16xbf16>
    tpu.vector_store %arg9[%c24_618, %c176_619], %274 {strides = array<i32>} : memref<64x432xbf16, #tpu.memory_space<vmem>>, vector<8x16xbf16>,
    %c0_620 = arith.constant 0 : index
    %c0_621 = arith.constant 0 : index
    %c4_622 = arith.constant 4 : index
    %c2_623 = arith.constant 2 : index
    %c0_624 = arith.constant 0 : index
    %276 = vector.load %arg3[%c0_620, %c0_621, %c4_622, %c2_623, %c0_624] : memref<1x1x10x10x16xbf16, #tpu.memory_space<vmem>>, vector<1x1x1x8x16xbf16>
    %277 = vector.shape_cast %276 : vector<1x1x1x8x16xbf16> to vector<8x16xbf16>
    %c32_625 = arith.constant 32 : index
    %c176_626 = arith.constant 176 : index
    %278 = vector.load %arg9[%c32_625, %c176_626] : memref<64x432xbf16, #tpu.memory_space<vmem>>, vector<8x16xbf16>
    tpu.vector_store %arg9[%c32_625, %c176_626], %277 {strides = array<i32>} : memref<64x432xbf16, #tpu.memory_space<vmem>>, vector<8x16xbf16>,
    %c0_627 = arith.constant 0 : index
    %c0_628 = arith.constant 0 : index
    %c5_629 = arith.constant 5 : index
    %c2_630 = arith.constant 2 : index
    %c0_631 = arith.constant 0 : index
    %279 = vector.load %arg3[%c0_627, %c0_628, %c5_629, %c2_630, %c0_631] : memref<1x1x10x10x16xbf16, #tpu.memory_space<vmem>>, vector<1x1x1x8x16xbf16>
    %280 = vector.shape_cast %279 : vector<1x1x1x8x16xbf16> to vector<8x16xbf16>
    %c40_632 = arith.constant 40 : index
    %c176_633 = arith.constant 176 : index
    %281 = vector.load %arg9[%c40_632, %c176_633] : memref<64x432xbf16, #tpu.memory_space<vmem>>, vector<8x16xbf16>
    tpu.vector_store %arg9[%c40_632, %c176_633], %280 {strides = array<i32>} : memref<64x432xbf16, #tpu.memory_space<vmem>>, vector<8x16xbf16>,
    %c0_634 = arith.constant 0 : index
    %c0_635 = arith.constant 0 : index
    %c6_636 = arith.constant 6 : index
    %c2_637 = arith.constant 2 : index
    %c0_638 = arith.constant 0 : index
    %282 = vector.load %arg3[%c0_634, %c0_635, %c6_636, %c2_637, %c0_638] : memref<1x1x10x10x16xbf16, #tpu.memory_space<vmem>>, vector<1x1x1x8x16xbf16>
    %283 = vector.shape_cast %282 : vector<1x1x1x8x16xbf16> to vector<8x16xbf16>
    %c48_639 = arith.constant 48 : index
    %c176_640 = arith.constant 176 : index
    %284 = vector.load %arg9[%c48_639, %c176_640] : memref<64x432xbf16, #tpu.memory_space<vmem>>, vector<8x16xbf16>
    tpu.vector_store %arg9[%c48_639, %c176_640], %283 {strides = array<i32>} : memref<64x432xbf16, #tpu.memory_space<vmem>>, vector<8x16xbf16>,
    %c0_641 = arith.constant 0 : index
    %c0_642 = arith.constant 0 : index
    %c7_643 = arith.constant 7 : index
    %c2_644 = arith.constant 2 : index
    %c0_645 = arith.constant 0 : index
    %285 = vector.load %arg3[%c0_641, %c0_642, %c7_643, %c2_644, %c0_645] : memref<1x1x10x10x16xbf16, #tpu.memory_space<vmem>>, vector<1x1x1x8x16xbf16>
    %286 = vector.shape_cast %285 : vector<1x1x1x8x16xbf16> to vector<8x16xbf16>
    %c56_646 = arith.constant 56 : index
    %c176_647 = arith.constant 176 : index
    %287 = vector.load %arg9[%c56_646, %c176_647] : memref<64x432xbf16, #tpu.memory_space<vmem>>, vector<8x16xbf16>
    tpu.vector_store %arg9[%c56_646, %c176_647], %286 {strides = array<i32>} : memref<64x432xbf16, #tpu.memory_space<vmem>>, vector<8x16xbf16>,
    %c0_648 = arith.constant 0 : index
    %c0_649 = arith.constant 0 : index
    %c1_650 = arith.constant 1 : index
    %c0_651 = arith.constant 0 : index
    %c0_652 = arith.constant 0 : index
    %288 = vector.load %arg3[%c0_648, %c0_649, %c1_650, %c0_651, %c0_652] : memref<1x1x10x10x16xbf16, #tpu.memory_space<vmem>>, vector<1x1x1x8x16xbf16>
    %289 = vector.shape_cast %288 : vector<1x1x1x8x16xbf16> to vector<8x16xbf16>
    %c0_653 = arith.constant 0 : index
    %c192 = arith.constant 192 : index
    %290 = vector.load %arg9[%c0_653, %c192] : memref<64x432xbf16, #tpu.memory_space<vmem>>, vector<8x16xbf16>
    tpu.vector_store %arg9[%c0_653, %c192], %289 {strides = array<i32>} : memref<64x432xbf16, #tpu.memory_space<vmem>>, vector<8x16xbf16>,
    %c0_654 = arith.constant 0 : index
    %c0_655 = arith.constant 0 : index
    %c2_656 = arith.constant 2 : index
    %c0_657 = arith.constant 0 : index
    %c0_658 = arith.constant 0 : index
    %291 = vector.load %arg3[%c0_654, %c0_655, %c2_656, %c0_657, %c0_658] : memref<1x1x10x10x16xbf16, #tpu.memory_space<vmem>>, vector<1x1x1x8x16xbf16>
    %292 = vector.shape_cast %291 : vector<1x1x1x8x16xbf16> to vector<8x16xbf16>
    %c8_659 = arith.constant 8 : index
    %c192_660 = arith.constant 192 : index
    %293 = vector.load %arg9[%c8_659, %c192_660] : memref<64x432xbf16, #tpu.memory_space<vmem>>, vector<8x16xbf16>
    tpu.vector_store %arg9[%c8_659, %c192_660], %292 {strides = array<i32>} : memref<64x432xbf16, #tpu.memory_space<vmem>>, vector<8x16xbf16>,
    %c0_661 = arith.constant 0 : index
    %c0_662 = arith.constant 0 : index
    %c3_663 = arith.constant 3 : index
    %c0_664 = arith.constant 0 : index
    %c0_665 = arith.constant 0 : index
    %294 = vector.load %arg3[%c0_661, %c0_662, %c3_663, %c0_664, %c0_665] : memref<1x1x10x10x16xbf16, #tpu.memory_space<vmem>>, vector<1x1x1x8x16xbf16>
    %295 = vector.shape_cast %294 : vector<1x1x1x8x16xbf16> to vector<8x16xbf16>
    %c16_666 = arith.constant 16 : index
    %c192_667 = arith.constant 192 : index
    %296 = vector.load %arg9[%c16_666, %c192_667] : memref<64x432xbf16, #tpu.memory_space<vmem>>, vector<8x16xbf16>
    tpu.vector_store %arg9[%c16_666, %c192_667], %295 {strides = array<i32>} : memref<64x432xbf16, #tpu.memory_space<vmem>>, vector<8x16xbf16>,
    %c0_668 = arith.constant 0 : index
    %c0_669 = arith.constant 0 : index
    %c4_670 = arith.constant 4 : index
    %c0_671 = arith.constant 0 : index
    %c0_672 = arith.constant 0 : index
    %297 = vector.load %arg3[%c0_668, %c0_669, %c4_670, %c0_671, %c0_672] : memref<1x1x10x10x16xbf16, #tpu.memory_space<vmem>>, vector<1x1x1x8x16xbf16>
    %298 = vector.shape_cast %297 : vector<1x1x1x8x16xbf16> to vector<8x16xbf16>
    %c24_673 = arith.constant 24 : index
    %c192_674 = arith.constant 192 : index
    %299 = vector.load %arg9[%c24_673, %c192_674] : memref<64x432xbf16, #tpu.memory_space<vmem>>, vector<8x16xbf16>
    tpu.vector_store %arg9[%c24_673, %c192_674], %298 {strides = array<i32>} : memref<64x432xbf16, #tpu.memory_space<vmem>>, vector<8x16xbf16>,
    %c0_675 = arith.constant 0 : index
    %c0_676 = arith.constant 0 : index
    %c5_677 = arith.constant 5 : index
    %c0_678 = arith.constant 0 : index
    %c0_679 = arith.constant 0 : index
    %300 = vector.load %arg3[%c0_675, %c0_676, %c5_677, %c0_678, %c0_679] : memref<1x1x10x10x16xbf16, #tpu.memory_space<vmem>>, vector<1x1x1x8x16xbf16>
    %301 = vector.shape_cast %300 : vector<1x1x1x8x16xbf16> to vector<8x16xbf16>
    %c32_680 = arith.constant 32 : index
    %c192_681 = arith.constant 192 : index
    %302 = vector.load %arg9[%c32_680, %c192_681] : memref<64x432xbf16, #tpu.memory_space<vmem>>, vector<8x16xbf16>
    tpu.vector_store %arg9[%c32_680, %c192_681], %301 {strides = array<i32>} : memref<64x432xbf16, #tpu.memory_space<vmem>>, vector<8x16xbf16>,
    %c0_682 = arith.constant 0 : index
    %c0_683 = arith.constant 0 : index
    %c6_684 = arith.constant 6 : index
    %c0_685 = arith.constant 0 : index
    %c0_686 = arith.constant 0 : index
    %303 = vector.load %arg3[%c0_682, %c0_683, %c6_684, %c0_685, %c0_686] : memref<1x1x10x10x16xbf16, #tpu.memory_space<vmem>>, vector<1x1x1x8x16xbf16>
    %304 = vector.shape_cast %303 : vector<1x1x1x8x16xbf16> to vector<8x16xbf16>
    %c40_687 = arith.constant 40 : index
    %c192_688 = arith.constant 192 : index
    %305 = vector.load %arg9[%c40_687, %c192_688] : memref<64x432xbf16, #tpu.memory_space<vmem>>, vector<8x16xbf16>
    tpu.vector_store %arg9[%c40_687, %c192_688], %304 {strides = array<i32>} : memref<64x432xbf16, #tpu.memory_space<vmem>>, vector<8x16xbf16>,
    %c0_689 = arith.constant 0 : index
    %c0_690 = arith.constant 0 : index
    %c7_691 = arith.constant 7 : index
    %c0_692 = arith.constant 0 : index
    %c0_693 = arith.constant 0 : index
    %306 = vector.load %arg3[%c0_689, %c0_690, %c7_691, %c0_692, %c0_693] : memref<1x1x10x10x16xbf16, #tpu.memory_space<vmem>>, vector<1x1x1x8x16xbf16>
    %307 = vector.shape_cast %306 : vector<1x1x1x8x16xbf16> to vector<8x16xbf16>
    %c48_694 = arith.constant 48 : index
    %c192_695 = arith.constant 192 : index
    %308 = vector.load %arg9[%c48_694, %c192_695] : memref<64x432xbf16, #tpu.memory_space<vmem>>, vector<8x16xbf16>
    tpu.vector_store %arg9[%c48_694, %c192_695], %307 {strides = array<i32>} : memref<64x432xbf16, #tpu.memory_space<vmem>>, vector<8x16xbf16>,
    %c0_696 = arith.constant 0 : index
    %c0_697 = arith.constant 0 : index
    %c8_698 = arith.constant 8 : index
    %c0_699 = arith.constant 0 : index
    %c0_700 = arith.constant 0 : index
    %309 = vector.load %arg3[%c0_696, %c0_697, %c8_698, %c0_699, %c0_700] : memref<1x1x10x10x16xbf16, #tpu.memory_space<vmem>>, vector<1x1x1x8x16xbf16>
    %310 = vector.shape_cast %309 : vector<1x1x1x8x16xbf16> to vector<8x16xbf16>
    %c56_701 = arith.constant 56 : index
    %c192_702 = arith.constant 192 : index
    %311 = vector.load %arg9[%c56_701, %c192_702] : memref<64x432xbf16, #tpu.memory_space<vmem>>, vector<8x16xbf16>
    tpu.vector_store %arg9[%c56_701, %c192_702], %310 {strides = array<i32>} : memref<64x432xbf16, #tpu.memory_space<vmem>>, vector<8x16xbf16>,
    %c0_703 = arith.constant 0 : index
    %c0_704 = arith.constant 0 : index
    %c1_705 = arith.constant 1 : index
    %c1_706 = arith.constant 1 : index
    %c0_707 = arith.constant 0 : index
    %312 = vector.load %arg3[%c0_703, %c0_704, %c1_705, %c1_706, %c0_707] : memref<1x1x10x10x16xbf16, #tpu.memory_space<vmem>>, vector<1x1x1x8x16xbf16>
    %313 = vector.shape_cast %312 : vector<1x1x1x8x16xbf16> to vector<8x16xbf16>
    %c0_708 = arith.constant 0 : index
    %c208 = arith.constant 208 : index
    %314 = vector.load %arg9[%c0_708, %c208] : memref<64x432xbf16, #tpu.memory_space<vmem>>, vector<8x16xbf16>
    tpu.vector_store %arg9[%c0_708, %c208], %313 {strides = array<i32>} : memref<64x432xbf16, #tpu.memory_space<vmem>>, vector<8x16xbf16>,
    %c0_709 = arith.constant 0 : index
    %c0_710 = arith.constant 0 : index
    %c2_711 = arith.constant 2 : index
    %c1_712 = arith.constant 1 : index
    %c0_713 = arith.constant 0 : index
    %315 = vector.load %arg3[%c0_709, %c0_710, %c2_711, %c1_712, %c0_713] : memref<1x1x10x10x16xbf16, #tpu.memory_space<vmem>>, vector<1x1x1x8x16xbf16>
    %316 = vector.shape_cast %315 : vector<1x1x1x8x16xbf16> to vector<8x16xbf16>
    %c8_714 = arith.constant 8 : index
    %c208_715 = arith.constant 208 : index
    %317 = vector.load %arg9[%c8_714, %c208_715] : memref<64x432xbf16, #tpu.memory_space<vmem>>, vector<8x16xbf16>
    tpu.vector_store %arg9[%c8_714, %c208_715], %316 {strides = array<i32>} : memref<64x432xbf16, #tpu.memory_space<vmem>>, vector<8x16xbf16>,
    %c0_716 = arith.constant 0 : index
    %c0_717 = arith.constant 0 : index
    %c3_718 = arith.constant 3 : index
    %c1_719 = arith.constant 1 : index
    %c0_720 = arith.constant 0 : index
    %318 = vector.load %arg3[%c0_716, %c0_717, %c3_718, %c1_719, %c0_720] : memref<1x1x10x10x16xbf16, #tpu.memory_space<vmem>>, vector<1x1x1x8x16xbf16>
    %319 = vector.shape_cast %318 : vector<1x1x1x8x16xbf16> to vector<8x16xbf16>
    %c16_721 = arith.constant 16 : index
    %c208_722 = arith.constant 208 : index
    %320 = vector.load %arg9[%c16_721, %c208_722] : memref<64x432xbf16, #tpu.memory_space<vmem>>, vector<8x16xbf16>
    tpu.vector_store %arg9[%c16_721, %c208_722], %319 {strides = array<i32>} : memref<64x432xbf16, #tpu.memory_space<vmem>>, vector<8x16xbf16>,
    %c0_723 = arith.constant 0 : index
    %c0_724 = arith.constant 0 : index
    %c4_725 = arith.constant 4 : index
    %c1_726 = arith.constant 1 : index
    %c0_727 = arith.constant 0 : index
    %321 = vector.load %arg3[%c0_723, %c0_724, %c4_725, %c1_726, %c0_727] : memref<1x1x10x10x16xbf16, #tpu.memory_space<vmem>>, vector<1x1x1x8x16xbf16>
    %322 = vector.shape_cast %321 : vector<1x1x1x8x16xbf16> to vector<8x16xbf16>
    %c24_728 = arith.constant 24 : index
    %c208_729 = arith.constant 208 : index
    %323 = vector.load %arg9[%c24_728, %c208_729] : memref<64x432xbf16, #tpu.memory_space<vmem>>, vector<8x16xbf16>
    tpu.vector_store %arg9[%c24_728, %c208_729], %322 {strides = array<i32>} : memref<64x432xbf16, #tpu.memory_space<vmem>>, vector<8x16xbf16>,
    %c0_730 = arith.constant 0 : index
    %c0_731 = arith.constant 0 : index
    %c5_732 = arith.constant 5 : index
    %c1_733 = arith.constant 1 : index
    %c0_734 = arith.constant 0 : index
    %324 = vector.load %arg3[%c0_730, %c0_731, %c5_732, %c1_733, %c0_734] : memref<1x1x10x10x16xbf16, #tpu.memory_space<vmem>>, vector<1x1x1x8x16xbf16>
    %325 = vector.shape_cast %324 : vector<1x1x1x8x16xbf16> to vector<8x16xbf16>
    %c32_735 = arith.constant 32 : index
    %c208_736 = arith.constant 208 : index
    %326 = vector.load %arg9[%c32_735, %c208_736] : memref<64x432xbf16, #tpu.memory_space<vmem>>, vector<8x16xbf16>
    tpu.vector_store %arg9[%c32_735, %c208_736], %325 {strides = array<i32>} : memref<64x432xbf16, #tpu.memory_space<vmem>>, vector<8x16xbf16>,
    %c0_737 = arith.constant 0 : index
    %c0_738 = arith.constant 0 : index
    %c6_739 = arith.constant 6 : index
    %c1_740 = arith.constant 1 : index
    %c0_741 = arith.constant 0 : index
    %327 = vector.load %arg3[%c0_737, %c0_738, %c6_739, %c1_740, %c0_741] : memref<1x1x10x10x16xbf16, #tpu.memory_space<vmem>>, vector<1x1x1x8x16xbf16>
    %328 = vector.shape_cast %327 : vector<1x1x1x8x16xbf16> to vector<8x16xbf16>
    %c40_742 = arith.constant 40 : index
    %c208_743 = arith.constant 208 : index
    %329 = vector.load %arg9[%c40_742, %c208_743] : memref<64x432xbf16, #tpu.memory_space<vmem>>, vector<8x16xbf16>
    tpu.vector_store %arg9[%c40_742, %c208_743], %328 {strides = array<i32>} : memref<64x432xbf16, #tpu.memory_space<vmem>>, vector<8x16xbf16>,
    %c0_744 = arith.constant 0 : index
    %c0_745 = arith.constant 0 : index
    %c7_746 = arith.constant 7 : index
    %c1_747 = arith.constant 1 : index
    %c0_748 = arith.constant 0 : index
    %330 = vector.load %arg3[%c0_744, %c0_745, %c7_746, %c1_747, %c0_748] : memref<1x1x10x10x16xbf16, #tpu.memory_space<vmem>>, vector<1x1x1x8x16xbf16>
    %331 = vector.shape_cast %330 : vector<1x1x1x8x16xbf16> to vector<8x16xbf16>
    %c48_749 = arith.constant 48 : index
    %c208_750 = arith.constant 208 : index
    %332 = vector.load %arg9[%c48_749, %c208_750] : memref<64x432xbf16, #tpu.memory_space<vmem>>, vector<8x16xbf16>
    tpu.vector_store %arg9[%c48_749, %c208_750], %331 {strides = array<i32>} : memref<64x432xbf16, #tpu.memory_space<vmem>>, vector<8x16xbf16>,
    %c0_751 = arith.constant 0 : index
    %c0_752 = arith.constant 0 : index
    %c8_753 = arith.constant 8 : index
    %c1_754 = arith.constant 1 : index
    %c0_755 = arith.constant 0 : index
    %333 = vector.load %arg3[%c0_751, %c0_752, %c8_753, %c1_754, %c0_755] : memref<1x1x10x10x16xbf16, #tpu.memory_space<vmem>>, vector<1x1x1x8x16xbf16>
    %334 = vector.shape_cast %333 : vector<1x1x1x8x16xbf16> to vector<8x16xbf16>
    %c56_756 = arith.constant 56 : index
    %c208_757 = arith.constant 208 : index
    %335 = vector.load %arg9[%c56_756, %c208_757] : memref<64x432xbf16, #tpu.memory_space<vmem>>, vector<8x16xbf16>
    tpu.vector_store %arg9[%c56_756, %c208_757], %334 {strides = array<i32>} : memref<64x432xbf16, #tpu.memory_space<vmem>>, vector<8x16xbf16>,
    %c0_758 = arith.constant 0 : index
    %c0_759 = arith.constant 0 : index
    %c1_760 = arith.constant 1 : index
    %c2_761 = arith.constant 2 : index
    %c0_762 = arith.constant 0 : index
    %336 = vector.load %arg3[%c0_758, %c0_759, %c1_760, %c2_761, %c0_762] : memref<1x1x10x10x16xbf16, #tpu.memory_space<vmem>>, vector<1x1x1x8x16xbf16>
    %337 = vector.shape_cast %336 : vector<1x1x1x8x16xbf16> to vector<8x16xbf16>
    %c0_763 = arith.constant 0 : index
    %c224 = arith.constant 224 : index
    %338 = vector.load %arg9[%c0_763, %c224] : memref<64x432xbf16, #tpu.memory_space<vmem>>, vector<8x16xbf16>
    tpu.vector_store %arg9[%c0_763, %c224], %337 {strides = array<i32>} : memref<64x432xbf16, #tpu.memory_space<vmem>>, vector<8x16xbf16>,
    %c0_764 = arith.constant 0 : index
    %c0_765 = arith.constant 0 : index
    %c2_766 = arith.constant 2 : index
    %c2_767 = arith.constant 2 : index
    %c0_768 = arith.constant 0 : index
    %339 = vector.load %arg3[%c0_764, %c0_765, %c2_766, %c2_767, %c0_768] : memref<1x1x10x10x16xbf16, #tpu.memory_space<vmem>>, vector<1x1x1x8x16xbf16>
    %340 = vector.shape_cast %339 : vector<1x1x1x8x16xbf16> to vector<8x16xbf16>
    %c8_769 = arith.constant 8 : index
    %c224_770 = arith.constant 224 : index
    %341 = vector.load %arg9[%c8_769, %c224_770] : memref<64x432xbf16, #tpu.memory_space<vmem>>, vector<8x16xbf16>
    tpu.vector_store %arg9[%c8_769, %c224_770], %340 {strides = array<i32>} : memref<64x432xbf16, #tpu.memory_space<vmem>>, vector<8x16xbf16>,
    %c0_771 = arith.constant 0 : index
    %c0_772 = arith.constant 0 : index
    %c3_773 = arith.constant 3 : index
    %c2_774 = arith.constant 2 : index
    %c0_775 = arith.constant 0 : index
    %342 = vector.load %arg3[%c0_771, %c0_772, %c3_773, %c2_774, %c0_775] : memref<1x1x10x10x16xbf16, #tpu.memory_space<vmem>>, vector<1x1x1x8x16xbf16>
    %343 = vector.shape_cast %342 : vector<1x1x1x8x16xbf16> to vector<8x16xbf16>
    %c16_776 = arith.constant 16 : index
    %c224_777 = arith.constant 224 : index
    %344 = vector.load %arg9[%c16_776, %c224_777] : memref<64x432xbf16, #tpu.memory_space<vmem>>, vector<8x16xbf16>
    tpu.vector_store %arg9[%c16_776, %c224_777], %343 {strides = array<i32>} : memref<64x432xbf16, #tpu.memory_space<vmem>>, vector<8x16xbf16>,
    %c0_778 = arith.constant 0 : index
    %c0_779 = arith.constant 0 : index
    %c4_780 = arith.constant 4 : index
    %c2_781 = arith.constant 2 : index
    %c0_782 = arith.constant 0 : index
    %345 = vector.load %arg3[%c0_778, %c0_779, %c4_780, %c2_781, %c0_782] : memref<1x1x10x10x16xbf16, #tpu.memory_space<vmem>>, vector<1x1x1x8x16xbf16>
    %346 = vector.shape_cast %345 : vector<1x1x1x8x16xbf16> to vector<8x16xbf16>
    %c24_783 = arith.constant 24 : index
    %c224_784 = arith.constant 224 : index
    %347 = vector.load %arg9[%c24_783, %c224_784] : memref<64x432xbf16, #tpu.memory_space<vmem>>, vector<8x16xbf16>
    tpu.vector_store %arg9[%c24_783, %c224_784], %346 {strides = array<i32>} : memref<64x432xbf16, #tpu.memory_space<vmem>>, vector<8x16xbf16>,
    %c0_785 = arith.constant 0 : index
    %c0_786 = arith.constant 0 : index
    %c5_787 = arith.constant 5 : index
    %c2_788 = arith.constant 2 : index
    %c0_789 = arith.constant 0 : index
    %348 = vector.load %arg3[%c0_785, %c0_786, %c5_787, %c2_788, %c0_789] : memref<1x1x10x10x16xbf16, #tpu.memory_space<vmem>>, vector<1x1x1x8x16xbf16>
    %349 = vector.shape_cast %348 : vector<1x1x1x8x16xbf16> to vector<8x16xbf16>
    %c32_790 = arith.constant 32 : index
    %c224_791 = arith.constant 224 : index
    %350 = vector.load %arg9[%c32_790, %c224_791] : memref<64x432xbf16, #tpu.memory_space<vmem>>, vector<8x16xbf16>
    tpu.vector_store %arg9[%c32_790, %c224_791], %349 {strides = array<i32>} : memref<64x432xbf16, #tpu.memory_space<vmem>>, vector<8x16xbf16>,
    %c0_792 = arith.constant 0 : index
    %c0_793 = arith.constant 0 : index
    %c6_794 = arith.constant 6 : index
    %c2_795 = arith.constant 2 : index
    %c0_796 = arith.constant 0 : index
    %351 = vector.load %arg3[%c0_792, %c0_793, %c6_794, %c2_795, %c0_796] : memref<1x1x10x10x16xbf16, #tpu.memory_space<vmem>>, vector<1x1x1x8x16xbf16>
    %352 = vector.shape_cast %351 : vector<1x1x1x8x16xbf16> to vector<8x16xbf16>
    %c40_797 = arith.constant 40 : index
    %c224_798 = arith.constant 224 : index
    %353 = vector.load %arg9[%c40_797, %c224_798] : memref<64x432xbf16, #tpu.memory_space<vmem>>, vector<8x16xbf16>
    tpu.vector_store %arg9[%c40_797, %c224_798], %352 {strides = array<i32>} : memref<64x432xbf16, #tpu.memory_space<vmem>>, vector<8x16xbf16>,
    %c0_799 = arith.constant 0 : index
    %c0_800 = arith.constant 0 : index
    %c7_801 = arith.constant 7 : index
    %c2_802 = arith.constant 2 : index
    %c0_803 = arith.constant 0 : index
    %354 = vector.load %arg3[%c0_799, %c0_800, %c7_801, %c2_802, %c0_803] : memref<1x1x10x10x16xbf16, #tpu.memory_space<vmem>>, vector<1x1x1x8x16xbf16>
    %355 = vector.shape_cast %354 : vector<1x1x1x8x16xbf16> to vector<8x16xbf16>
    %c48_804 = arith.constant 48 : index
    %c224_805 = arith.constant 224 : index
    %356 = vector.load %arg9[%c48_804, %c224_805] : memref<64x432xbf16, #tpu.memory_space<vmem>>, vector<8x16xbf16>
    tpu.vector_store %arg9[%c48_804, %c224_805], %355 {strides = array<i32>} : memref<64x432xbf16, #tpu.memory_space<vmem>>, vector<8x16xbf16>,
    %c0_806 = arith.constant 0 : index
    %c0_807 = arith.constant 0 : index
    %c8_808 = arith.constant 8 : index
    %c2_809 = arith.constant 2 : index
    %c0_810 = arith.constant 0 : index
    %357 = vector.load %arg3[%c0_806, %c0_807, %c8_808, %c2_809, %c0_810] : memref<1x1x10x10x16xbf16, #tpu.memory_space<vmem>>, vector<1x1x1x8x16xbf16>
    %358 = vector.shape_cast %357 : vector<1x1x1x8x16xbf16> to vector<8x16xbf16>
    %c56_811 = arith.constant 56 : index
    %c224_812 = arith.constant 224 : index
    %359 = vector.load %arg9[%c56_811, %c224_812] : memref<64x432xbf16, #tpu.memory_space<vmem>>, vector<8x16xbf16>
    tpu.vector_store %arg9[%c56_811, %c224_812], %358 {strides = array<i32>} : memref<64x432xbf16, #tpu.memory_space<vmem>>, vector<8x16xbf16>,
    %c0_813 = arith.constant 0 : index
    %c0_814 = arith.constant 0 : index
    %c2_815 = arith.constant 2 : index
    %c0_816 = arith.constant 0 : index
    %c0_817 = arith.constant 0 : index
    %360 = vector.load %arg3[%c0_813, %c0_814, %c2_815, %c0_816, %c0_817] : memref<1x1x10x10x16xbf16, #tpu.memory_space<vmem>>, vector<1x1x1x8x16xbf16>
    %361 = vector.shape_cast %360 : vector<1x1x1x8x16xbf16> to vector<8x16xbf16>
    %c0_818 = arith.constant 0 : index
    %c240 = arith.constant 240 : index
    %362 = vector.load %arg9[%c0_818, %c240] : memref<64x432xbf16, #tpu.memory_space<vmem>>, vector<8x16xbf16>
    tpu.vector_store %arg9[%c0_818, %c240], %361 {strides = array<i32>} : memref<64x432xbf16, #tpu.memory_space<vmem>>, vector<8x16xbf16>,
    %c0_819 = arith.constant 0 : index
    %c0_820 = arith.constant 0 : index
    %c3_821 = arith.constant 3 : index
    %c0_822 = arith.constant 0 : index
    %c0_823 = arith.constant 0 : index
    %363 = vector.load %arg3[%c0_819, %c0_820, %c3_821, %c0_822, %c0_823] : memref<1x1x10x10x16xbf16, #tpu.memory_space<vmem>>, vector<1x1x1x8x16xbf16>
    %364 = vector.shape_cast %363 : vector<1x1x1x8x16xbf16> to vector<8x16xbf16>
    %c8_824 = arith.constant 8 : index
    %c240_825 = arith.constant 240 : index
    %365 = vector.load %arg9[%c8_824, %c240_825] : memref<64x432xbf16, #tpu.memory_space<vmem>>, vector<8x16xbf16>
    tpu.vector_store %arg9[%c8_824, %c240_825], %364 {strides = array<i32>} : memref<64x432xbf16, #tpu.memory_space<vmem>>, vector<8x16xbf16>,
    %c0_826 = arith.constant 0 : index
    %c0_827 = arith.constant 0 : index
    %c4_828 = arith.constant 4 : index
    %c0_829 = arith.constant 0 : index
    %c0_830 = arith.constant 0 : index
    %366 = vector.load %arg3[%c0_826, %c0_827, %c4_828, %c0_829, %c0_830] : memref<1x1x10x10x16xbf16, #tpu.memory_space<vmem>>, vector<1x1x1x8x16xbf16>
    %367 = vector.shape_cast %366 : vector<1x1x1x8x16xbf16> to vector<8x16xbf16>
    %c16_831 = arith.constant 16 : index
    %c240_832 = arith.constant 240 : index
    %368 = vector.load %arg9[%c16_831, %c240_832] : memref<64x432xbf16, #tpu.memory_space<vmem>>, vector<8x16xbf16>
    tpu.vector_store %arg9[%c16_831, %c240_832], %367 {strides = array<i32>} : memref<64x432xbf16, #tpu.memory_space<vmem>>, vector<8x16xbf16>,
    %c0_833 = arith.constant 0 : index
    %c0_834 = arith.constant 0 : index
    %c5_835 = arith.constant 5 : index
    %c0_836 = arith.constant 0 : index
    %c0_837 = arith.constant 0 : index
    %369 = vector.load %arg3[%c0_833, %c0_834, %c5_835, %c0_836, %c0_837] : memref<1x1x10x10x16xbf16, #tpu.memory_space<vmem>>, vector<1x1x1x8x16xbf16>
    %370 = vector.shape_cast %369 : vector<1x1x1x8x16xbf16> to vector<8x16xbf16>
    %c24_838 = arith.constant 24 : index
    %c240_839 = arith.constant 240 : index
    %371 = vector.load %arg9[%c24_838, %c240_839] : memref<64x432xbf16, #tpu.memory_space<vmem>>, vector<8x16xbf16>
    tpu.vector_store %arg9[%c24_838, %c240_839], %370 {strides = array<i32>} : memref<64x432xbf16, #tpu.memory_space<vmem>>, vector<8x16xbf16>,
    %c0_840 = arith.constant 0 : index
    %c0_841 = arith.constant 0 : index
    %c6_842 = arith.constant 6 : index
    %c0_843 = arith.constant 0 : index
    %c0_844 = arith.constant 0 : index
    %372 = vector.load %arg3[%c0_840, %c0_841, %c6_842, %c0_843, %c0_844] : memref<1x1x10x10x16xbf16, #tpu.memory_space<vmem>>, vector<1x1x1x8x16xbf16>
    %373 = vector.shape_cast %372 : vector<1x1x1x8x16xbf16> to vector<8x16xbf16>
    %c32_845 = arith.constant 32 : index
    %c240_846 = arith.constant 240 : index
    %374 = vector.load %arg9[%c32_845, %c240_846] : memref<64x432xbf16, #tpu.memory_space<vmem>>, vector<8x16xbf16>
    tpu.vector_store %arg9[%c32_845, %c240_846], %373 {strides = array<i32>} : memref<64x432xbf16, #tpu.memory_space<vmem>>, vector<8x16xbf16>,
    %c0_847 = arith.constant 0 : index
    %c0_848 = arith.constant 0 : index
    %c7_849 = arith.constant 7 : index
    %c0_850 = arith.constant 0 : index
    %c0_851 = arith.constant 0 : index
    %375 = vector.load %arg3[%c0_847, %c0_848, %c7_849, %c0_850, %c0_851] : memref<1x1x10x10x16xbf16, #tpu.memory_space<vmem>>, vector<1x1x1x8x16xbf16>
    %376 = vector.shape_cast %375 : vector<1x1x1x8x16xbf16> to vector<8x16xbf16>
    %c40_852 = arith.constant 40 : index
    %c240_853 = arith.constant 240 : index
    %377 = vector.load %arg9[%c40_852, %c240_853] : memref<64x432xbf16, #tpu.memory_space<vmem>>, vector<8x16xbf16>
    tpu.vector_store %arg9[%c40_852, %c240_853], %376 {strides = array<i32>} : memref<64x432xbf16, #tpu.memory_space<vmem>>, vector<8x16xbf16>,
    %c0_854 = arith.constant 0 : index
    %c0_855 = arith.constant 0 : index
    %c8_856 = arith.constant 8 : index
    %c0_857 = arith.constant 0 : index
    %c0_858 = arith.constant 0 : index
    %378 = vector.load %arg3[%c0_854, %c0_855, %c8_856, %c0_857, %c0_858] : memref<1x1x10x10x16xbf16, #tpu.memory_space<vmem>>, vector<1x1x1x8x16xbf16>
    %379 = vector.shape_cast %378 : vector<1x1x1x8x16xbf16> to vector<8x16xbf16>
    %c48_859 = arith.constant 48 : index
    %c240_860 = arith.constant 240 : index
    %380 = vector.load %arg9[%c48_859, %c240_860] : memref<64x432xbf16, #tpu.memory_space<vmem>>, vector<8x16xbf16>
    tpu.vector_store %arg9[%c48_859, %c240_860], %379 {strides = array<i32>} : memref<64x432xbf16, #tpu.memory_space<vmem>>, vector<8x16xbf16>,
    %c0_861 = arith.constant 0 : index
    %c0_862 = arith.constant 0 : index
    %c9_863 = arith.constant 9 : index
    %c0_864 = arith.constant 0 : index
    %c0_865 = arith.constant 0 : index
    %381 = vector.load %arg3[%c0_861, %c0_862, %c9_863, %c0_864, %c0_865] : memref<1x1x10x10x16xbf16, #tpu.memory_space<vmem>>, vector<1x1x1x8x16xbf16>
    %382 = vector.shape_cast %381 : vector<1x1x1x8x16xbf16> to vector<8x16xbf16>
    %c56_866 = arith.constant 56 : index
    %c240_867 = arith.constant 240 : index
    %383 = vector.load %arg9[%c56_866, %c240_867] : memref<64x432xbf16, #tpu.memory_space<vmem>>, vector<8x16xbf16>
    tpu.vector_store %arg9[%c56_866, %c240_867], %382 {strides = array<i32>} : memref<64x432xbf16, #tpu.memory_space<vmem>>, vector<8x16xbf16>,
    %c0_868 = arith.constant 0 : index
    %c0_869 = arith.constant 0 : index
    %c2_870 = arith.constant 2 : index
    %c1_871 = arith.constant 1 : index
    %c0_872 = arith.constant 0 : index
    %384 = vector.load %arg3[%c0_868, %c0_869, %c2_870, %c1_871, %c0_872] : memref<1x1x10x10x16xbf16, #tpu.memory_space<vmem>>, vector<1x1x1x8x16xbf16>
    %385 = vector.shape_cast %384 : vector<1x1x1x8x16xbf16> to vector<8x16xbf16>
    %c0_873 = arith.constant 0 : index
    %c256 = arith.constant 256 : index
    %386 = vector.load %arg9[%c0_873, %c256] : memref<64x432xbf16, #tpu.memory_space<vmem>>, vector<8x16xbf16>
    tpu.vector_store %arg9[%c0_873, %c256], %385 {strides = array<i32>} : memref<64x432xbf16, #tpu.memory_space<vmem>>, vector<8x16xbf16>,
    %c0_874 = arith.constant 0 : index
    %c0_875 = arith.constant 0 : index
    %c3_876 = arith.constant 3 : index
    %c1_877 = arith.constant 1 : index
    %c0_878 = arith.constant 0 : index
    %387 = vector.load %arg3[%c0_874, %c0_875, %c3_876, %c1_877, %c0_878] : memref<1x1x10x10x16xbf16, #tpu.memory_space<vmem>>, vector<1x1x1x8x16xbf16>
    %388 = vector.shape_cast %387 : vector<1x1x1x8x16xbf16> to vector<8x16xbf16>
    %c8_879 = arith.constant 8 : index
    %c256_880 = arith.constant 256 : index
    %389 = vector.load %arg9[%c8_879, %c256_880] : memref<64x432xbf16, #tpu.memory_space<vmem>>, vector<8x16xbf16>
    tpu.vector_store %arg9[%c8_879, %c256_880], %388 {strides = array<i32>} : memref<64x432xbf16, #tpu.memory_space<vmem>>, vector<8x16xbf16>,
    %c0_881 = arith.constant 0 : index
    %c0_882 = arith.constant 0 : index
    %c4_883 = arith.constant 4 : index
    %c1_884 = arith.constant 1 : index
    %c0_885 = arith.constant 0 : index
    %390 = vector.load %arg3[%c0_881, %c0_882, %c4_883, %c1_884, %c0_885] : memref<1x1x10x10x16xbf16, #tpu.memory_space<vmem>>, vector<1x1x1x8x16xbf16>
    %391 = vector.shape_cast %390 : vector<1x1x1x8x16xbf16> to vector<8x16xbf16>
    %c16_886 = arith.constant 16 : index
    %c256_887 = arith.constant 256 : index
    %392 = vector.load %arg9[%c16_886, %c256_887] : memref<64x432xbf16, #tpu.memory_space<vmem>>, vector<8x16xbf16>
    tpu.vector_store %arg9[%c16_886, %c256_887], %391 {strides = array<i32>} : memref<64x432xbf16, #tpu.memory_space<vmem>>, vector<8x16xbf16>,
    %c0_888 = arith.constant 0 : index
    %c0_889 = arith.constant 0 : index
    %c5_890 = arith.constant 5 : index
    %c1_891 = arith.constant 1 : index
    %c0_892 = arith.constant 0 : index
    %393 = vector.load %arg3[%c0_888, %c0_889, %c5_890, %c1_891, %c0_892] : memref<1x1x10x10x16xbf16, #tpu.memory_space<vmem>>, vector<1x1x1x8x16xbf16>
    %394 = vector.shape_cast %393 : vector<1x1x1x8x16xbf16> to vector<8x16xbf16>
    %c24_893 = arith.constant 24 : index
    %c256_894 = arith.constant 256 : index
    %395 = vector.load %arg9[%c24_893, %c256_894] : memref<64x432xbf16, #tpu.memory_space<vmem>>, vector<8x16xbf16>
    tpu.vector_store %arg9[%c24_893, %c256_894], %394 {strides = array<i32>} : memref<64x432xbf16, #tpu.memory_space<vmem>>, vector<8x16xbf16>,
    %c0_895 = arith.constant 0 : index
    %c0_896 = arith.constant 0 : index
    %c6_897 = arith.constant 6 : index
    %c1_898 = arith.constant 1 : index
    %c0_899 = arith.constant 0 : index
    %396 = vector.load %arg3[%c0_895, %c0_896, %c6_897, %c1_898, %c0_899] : memref<1x1x10x10x16xbf16, #tpu.memory_space<vmem>>, vector<1x1x1x8x16xbf16>
    %397 = vector.shape_cast %396 : vector<1x1x1x8x16xbf16> to vector<8x16xbf16>
    %c32_900 = arith.constant 32 : index
    %c256_901 = arith.constant 256 : index
    %398 = vector.load %arg9[%c32_900, %c256_901] : memref<64x432xbf16, #tpu.memory_space<vmem>>, vector<8x16xbf16>
    tpu.vector_store %arg9[%c32_900, %c256_901], %397 {strides = array<i32>} : memref<64x432xbf16, #tpu.memory_space<vmem>>, vector<8x16xbf16>,
    %c0_902 = arith.constant 0 : index
    %c0_903 = arith.constant 0 : index
    %c7_904 = arith.constant 7 : index
    %c1_905 = arith.constant 1 : index
    %c0_906 = arith.constant 0 : index
    %399 = vector.load %arg3[%c0_902, %c0_903, %c7_904, %c1_905, %c0_906] : memref<1x1x10x10x16xbf16, #tpu.memory_space<vmem>>, vector<1x1x1x8x16xbf16>
    %400 = vector.shape_cast %399 : vector<1x1x1x8x16xbf16> to vector<8x16xbf16>
    %c40_907 = arith.constant 40 : index
    %c256_908 = arith.constant 256 : index
    %401 = vector.load %arg9[%c40_907, %c256_908] : memref<64x432xbf16, #tpu.memory_space<vmem>>, vector<8x16xbf16>
    tpu.vector_store %arg9[%c40_907, %c256_908], %400 {strides = array<i32>} : memref<64x432xbf16, #tpu.memory_space<vmem>>, vector<8x16xbf16>,
    %c0_909 = arith.constant 0 : index
    %c0_910 = arith.constant 0 : index
    %c8_911 = arith.constant 8 : index
    %c1_912 = arith.constant 1 : index
    %c0_913 = arith.constant 0 : index
    %402 = vector.load %arg3[%c0_909, %c0_910, %c8_911, %c1_912, %c0_913] : memref<1x1x10x10x16xbf16, #tpu.memory_space<vmem>>, vector<1x1x1x8x16xbf16>
    %403 = vector.shape_cast %402 : vector<1x1x1x8x16xbf16> to vector<8x16xbf16>
    %c48_914 = arith.constant 48 : index
    %c256_915 = arith.constant 256 : index
    %404 = vector.load %arg9[%c48_914, %c256_915] : memref<64x432xbf16, #tpu.memory_space<vmem>>, vector<8x16xbf16>
    tpu.vector_store %arg9[%c48_914, %c256_915], %403 {strides = array<i32>} : memref<64x432xbf16, #tpu.memory_space<vmem>>, vector<8x16xbf16>,
    %c0_916 = arith.constant 0 : index
    %c0_917 = arith.constant 0 : index
    %c9_918 = arith.constant 9 : index
    %c1_919 = arith.constant 1 : index
    %c0_920 = arith.constant 0 : index
    %405 = vector.load %arg3[%c0_916, %c0_917, %c9_918, %c1_919, %c0_920] : memref<1x1x10x10x16xbf16, #tpu.memory_space<vmem>>, vector<1x1x1x8x16xbf16>
    %406 = vector.shape_cast %405 : vector<1x1x1x8x16xbf16> to vector<8x16xbf16>
    %c56_921 = arith.constant 56 : index
    %c256_922 = arith.constant 256 : index
    %407 = vector.load %arg9[%c56_921, %c256_922] : memref<64x432xbf16, #tpu.memory_space<vmem>>, vector<8x16xbf16>
    tpu.vector_store %arg9[%c56_921, %c256_922], %406 {strides = array<i32>} : memref<64x432xbf16, #tpu.memory_space<vmem>>, vector<8x16xbf16>,
    %c0_923 = arith.constant 0 : index
    %c0_924 = arith.constant 0 : index
    %c2_925 = arith.constant 2 : index
    %c2_926 = arith.constant 2 : index
    %c0_927 = arith.constant 0 : index
    %408 = vector.load %arg3[%c0_923, %c0_924, %c2_925, %c2_926, %c0_927] : memref<1x1x10x10x16xbf16, #tpu.memory_space<vmem>>, vector<1x1x1x8x16xbf16>
    %409 = vector.shape_cast %408 : vector<1x1x1x8x16xbf16> to vector<8x16xbf16>
    %c0_928 = arith.constant 0 : index
    %c272 = arith.constant 272 : index
    %410 = vector.load %arg9[%c0_928, %c272] : memref<64x432xbf16, #tpu.memory_space<vmem>>, vector<8x16xbf16>
    tpu.vector_store %arg9[%c0_928, %c272], %409 {strides = array<i32>} : memref<64x432xbf16, #tpu.memory_space<vmem>>, vector<8x16xbf16>,
    %c0_929 = arith.constant 0 : index
    %c0_930 = arith.constant 0 : index
    %c3_931 = arith.constant 3 : index
    %c2_932 = arith.constant 2 : index
    %c0_933 = arith.constant 0 : index
    %411 = vector.load %arg3[%c0_929, %c0_930, %c3_931, %c2_932, %c0_933] : memref<1x1x10x10x16xbf16, #tpu.memory_space<vmem>>, vector<1x1x1x8x16xbf16>
    %412 = vector.shape_cast %411 : vector<1x1x1x8x16xbf16> to vector<8x16xbf16>
    %c8_934 = arith.constant 8 : index
    %c272_935 = arith.constant 272 : index
    %413 = vector.load %arg9[%c8_934, %c272_935] : memref<64x432xbf16, #tpu.memory_space<vmem>>, vector<8x16xbf16>
    tpu.vector_store %arg9[%c8_934, %c272_935], %412 {strides = array<i32>} : memref<64x432xbf16, #tpu.memory_space<vmem>>, vector<8x16xbf16>,
    %c0_936 = arith.constant 0 : index
    %c0_937 = arith.constant 0 : index
    %c4_938 = arith.constant 4 : index
    %c2_939 = arith.constant 2 : index
    %c0_940 = arith.constant 0 : index
    %414 = vector.load %arg3[%c0_936, %c0_937, %c4_938, %c2_939, %c0_940] : memref<1x1x10x10x16xbf16, #tpu.memory_space<vmem>>, vector<1x1x1x8x16xbf16>
    %415 = vector.shape_cast %414 : vector<1x1x1x8x16xbf16> to vector<8x16xbf16>
    %c16_941 = arith.constant 16 : index
    %c272_942 = arith.constant 272 : index
    %416 = vector.load %arg9[%c16_941, %c272_942] : memref<64x432xbf16, #tpu.memory_space<vmem>>, vector<8x16xbf16>
    tpu.vector_store %arg9[%c16_941, %c272_942], %415 {strides = array<i32>} : memref<64x432xbf16, #tpu.memory_space<vmem>>, vector<8x16xbf16>,
    %c0_943 = arith.constant 0 : index
    %c0_944 = arith.constant 0 : index
    %c5_945 = arith.constant 5 : index
    %c2_946 = arith.constant 2 : index
    %c0_947 = arith.constant 0 : index
    %417 = vector.load %arg3[%c0_943, %c0_944, %c5_945, %c2_946, %c0_947] : memref<1x1x10x10x16xbf16, #tpu.memory_space<vmem>>, vector<1x1x1x8x16xbf16>
    %418 = vector.shape_cast %417 : vector<1x1x1x8x16xbf16> to vector<8x16xbf16>
    %c24_948 = arith.constant 24 : index
    %c272_949 = arith.constant 272 : index
    %419 = vector.load %arg9[%c24_948, %c272_949] : memref<64x432xbf16, #tpu.memory_space<vmem>>, vector<8x16xbf16>
    tpu.vector_store %arg9[%c24_948, %c272_949], %418 {strides = array<i32>} : memref<64x432xbf16, #tpu.memory_space<vmem>>, vector<8x16xbf16>,
    %c0_950 = arith.constant 0 : index
    %c0_951 = arith.constant 0 : index
    %c6_952 = arith.constant 6 : index
    %c2_953 = arith.constant 2 : index
    %c0_954 = arith.constant 0 : index
    %420 = vector.load %arg3[%c0_950, %c0_951, %c6_952, %c2_953, %c0_954] : memref<1x1x10x10x16xbf16, #tpu.memory_space<vmem>>, vector<1x1x1x8x16xbf16>
    %421 = vector.shape_cast %420 : vector<1x1x1x8x16xbf16> to vector<8x16xbf16>
    %c32_955 = arith.constant 32 : index
    %c272_956 = arith.constant 272 : index
    %422 = vector.load %arg9[%c32_955, %c272_956] : memref<64x432xbf16, #tpu.memory_space<vmem>>, vector<8x16xbf16>
    tpu.vector_store %arg9[%c32_955, %c272_956], %421 {strides = array<i32>} : memref<64x432xbf16, #tpu.memory_space<vmem>>, vector<8x16xbf16>,
    %c0_957 = arith.constant 0 : index
    %c0_958 = arith.constant 0 : index
    %c7_959 = arith.constant 7 : index
    %c2_960 = arith.constant 2 : index
    %c0_961 = arith.constant 0 : index
    %423 = vector.load %arg3[%c0_957, %c0_958, %c7_959, %c2_960, %c0_961] : memref<1x1x10x10x16xbf16, #tpu.memory_space<vmem>>, vector<1x1x1x8x16xbf16>
    %424 = vector.shape_cast %423 : vector<1x1x1x8x16xbf16> to vector<8x16xbf16>
    %c40_962 = arith.constant 40 : index
    %c272_963 = arith.constant 272 : index
    %425 = vector.load %arg9[%c40_962, %c272_963] : memref<64x432xbf16, #tpu.memory_space<vmem>>, vector<8x16xbf16>
    tpu.vector_store %arg9[%c40_962, %c272_963], %424 {strides = array<i32>} : memref<64x432xbf16, #tpu.memory_space<vmem>>, vector<8x16xbf16>,
    %c0_964 = arith.constant 0 : index
    %c0_965 = arith.constant 0 : index
    %c8_966 = arith.constant 8 : index
    %c2_967 = arith.constant 2 : index
    %c0_968 = arith.constant 0 : index
    %426 = vector.load %arg3[%c0_964, %c0_965, %c8_966, %c2_967, %c0_968] : memref<1x1x10x10x16xbf16, #tpu.memory_space<vmem>>, vector<1x1x1x8x16xbf16>
    %427 = vector.shape_cast %426 : vector<1x1x1x8x16xbf16> to vector<8x16xbf16>
    %c48_969 = arith.constant 48 : index
    %c272_970 = arith.constant 272 : index
    %428 = vector.load %arg9[%c48_969, %c272_970] : memref<64x432xbf16, #tpu.memory_space<vmem>>, vector<8x16xbf16>
    tpu.vector_store %arg9[%c48_969, %c272_970], %427 {strides = array<i32>} : memref<64x432xbf16, #tpu.memory_space<vmem>>, vector<8x16xbf16>,
    %c0_971 = arith.constant 0 : index
    %c0_972 = arith.constant 0 : index
    %c9_973 = arith.constant 9 : index
    %c2_974 = arith.constant 2 : index
    %c0_975 = arith.constant 0 : index
    %429 = vector.load %arg3[%c0_971, %c0_972, %c9_973, %c2_974, %c0_975] : memref<1x1x10x10x16xbf16, #tpu.memory_space<vmem>>, vector<1x1x1x8x16xbf16>
    %430 = vector.shape_cast %429 : vector<1x1x1x8x16xbf16> to vector<8x16xbf16>
    %c56_976 = arith.constant 56 : index
    %c272_977 = arith.constant 272 : index
    %431 = vector.load %arg9[%c56_976, %c272_977] : memref<64x432xbf16, #tpu.memory_space<vmem>>, vector<8x16xbf16>
    tpu.vector_store %arg9[%c56_976, %c272_977], %430 {strides = array<i32>} : memref<64x432xbf16, #tpu.memory_space<vmem>>, vector<8x16xbf16>,
    %c0_978 = arith.constant 0 : index
    %c0_979 = arith.constant 0 : index
    %c0_980 = arith.constant 0 : index
    %c0_981 = arith.constant 0 : index
    %c0_982 = arith.constant 0 : index
    %432 = vector.load %arg4[%c0_978, %c0_979, %c0_980, %c0_981, %c0_982] : memref<1x1x10x10x16xbf16, #tpu.memory_space<vmem>>, vector<1x1x1x8x16xbf16>
    %433 = vector.shape_cast %432 : vector<1x1x1x8x16xbf16> to vector<8x16xbf16>
    %c0_983 = arith.constant 0 : index
    %c288 = arith.constant 288 : index
    %434 = vector.load %arg9[%c0_983, %c288] : memref<64x432xbf16, #tpu.memory_space<vmem>>, vector<8x16xbf16>
    tpu.vector_store %arg9[%c0_983, %c288], %433 {strides = array<i32>} : memref<64x432xbf16, #tpu.memory_space<vmem>>, vector<8x16xbf16>,
    %c0_984 = arith.constant 0 : index
    %c0_985 = arith.constant 0 : index
    %c1_986 = arith.constant 1 : index
    %c0_987 = arith.constant 0 : index
    %c0_988 = arith.constant 0 : index
    %435 = vector.load %arg4[%c0_984, %c0_985, %c1_986, %c0_987, %c0_988] : memref<1x1x10x10x16xbf16, #tpu.memory_space<vmem>>, vector<1x1x1x8x16xbf16>
    %436 = vector.shape_cast %435 : vector<1x1x1x8x16xbf16> to vector<8x16xbf16>
    %c8_989 = arith.constant 8 : index
    %c288_990 = arith.constant 288 : index
    %437 = vector.load %arg9[%c8_989, %c288_990] : memref<64x432xbf16, #tpu.memory_space<vmem>>, vector<8x16xbf16>
    tpu.vector_store %arg9[%c8_989, %c288_990], %436 {strides = array<i32>} : memref<64x432xbf16, #tpu.memory_space<vmem>>, vector<8x16xbf16>,
    %c0_991 = arith.constant 0 : index
    %c0_992 = arith.constant 0 : index
    %c2_993 = arith.constant 2 : index
    %c0_994 = arith.constant 0 : index
    %c0_995 = arith.constant 0 : index
    %438 = vector.load %arg4[%c0_991, %c0_992, %c2_993, %c0_994, %c0_995] : memref<1x1x10x10x16xbf16, #tpu.memory_space<vmem>>, vector<1x1x1x8x16xbf16>
    %439 = vector.shape_cast %438 : vector<1x1x1x8x16xbf16> to vector<8x16xbf16>
    %c16_996 = arith.constant 16 : index
    %c288_997 = arith.constant 288 : index
    %440 = vector.load %arg9[%c16_996, %c288_997] : memref<64x432xbf16, #tpu.memory_space<vmem>>, vector<8x16xbf16>
    tpu.vector_store %arg9[%c16_996, %c288_997], %439 {strides = array<i32>} : memref<64x432xbf16, #tpu.memory_space<vmem>>, vector<8x16xbf16>,
    %c0_998 = arith.constant 0 : index
    %c0_999 = arith.constant 0 : index
    %c3_1000 = arith.constant 3 : index
    %c0_1001 = arith.constant 0 : index
    %c0_1002 = arith.constant 0 : index
    %441 = vector.load %arg4[%c0_998, %c0_999, %c3_1000, %c0_1001, %c0_1002] : memref<1x1x10x10x16xbf16, #tpu.memory_space<vmem>>, vector<1x1x1x8x16xbf16>
    %442 = vector.shape_cast %441 : vector<1x1x1x8x16xbf16> to vector<8x16xbf16>
    %c24_1003 = arith.constant 24 : index
    %c288_1004 = arith.constant 288 : index
    %443 = vector.load %arg9[%c24_1003, %c288_1004] : memref<64x432xbf16, #tpu.memory_space<vmem>>, vector<8x16xbf16>
    tpu.vector_store %arg9[%c24_1003, %c288_1004], %442 {strides = array<i32>} : memref<64x432xbf16, #tpu.memory_space<vmem>>, vector<8x16xbf16>,
    %c0_1005 = arith.constant 0 : index
    %c0_1006 = arith.constant 0 : index
    %c4_1007 = arith.constant 4 : index
    %c0_1008 = arith.constant 0 : index
    %c0_1009 = arith.constant 0 : index
    %444 = vector.load %arg4[%c0_1005, %c0_1006, %c4_1007, %c0_1008, %c0_1009] : memref<1x1x10x10x16xbf16, #tpu.memory_space<vmem>>, vector<1x1x1x8x16xbf16>
    %445 = vector.shape_cast %444 : vector<1x1x1x8x16xbf16> to vector<8x16xbf16>
    %c32_1010 = arith.constant 32 : index
    %c288_1011 = arith.constant 288 : index
    %446 = vector.load %arg9[%c32_1010, %c288_1011] : memref<64x432xbf16, #tpu.memory_space<vmem>>, vector<8x16xbf16>
    tpu.vector_store %arg9[%c32_1010, %c288_1011], %445 {strides = array<i32>} : memref<64x432xbf16, #tpu.memory_space<vmem>>, vector<8x16xbf16>,
    %c0_1012 = arith.constant 0 : index
    %c0_1013 = arith.constant 0 : index
    %c5_1014 = arith.constant 5 : index
    %c0_1015 = arith.constant 0 : index
    %c0_1016 = arith.constant 0 : index
    %447 = vector.load %arg4[%c0_1012, %c0_1013, %c5_1014, %c0_1015, %c0_1016] : memref<1x1x10x10x16xbf16, #tpu.memory_space<vmem>>, vector<1x1x1x8x16xbf16>
    %448 = vector.shape_cast %447 : vector<1x1x1x8x16xbf16> to vector<8x16xbf16>
    %c40_1017 = arith.constant 40 : index
    %c288_1018 = arith.constant 288 : index
    %449 = vector.load %arg9[%c40_1017, %c288_1018] : memref<64x432xbf16, #tpu.memory_space<vmem>>, vector<8x16xbf16>
    tpu.vector_store %arg9[%c40_1017, %c288_1018], %448 {strides = array<i32>} : memref<64x432xbf16, #tpu.memory_space<vmem>>, vector<8x16xbf16>,
    %c0_1019 = arith.constant 0 : index
    %c0_1020 = arith.constant 0 : index
    %c6_1021 = arith.constant 6 : index
    %c0_1022 = arith.constant 0 : index
    %c0_1023 = arith.constant 0 : index
    %450 = vector.load %arg4[%c0_1019, %c0_1020, %c6_1021, %c0_1022, %c0_1023] : memref<1x1x10x10x16xbf16, #tpu.memory_space<vmem>>, vector<1x1x1x8x16xbf16>
    %451 = vector.shape_cast %450 : vector<1x1x1x8x16xbf16> to vector<8x16xbf16>
    %c48_1024 = arith.constant 48 : index
    %c288_1025 = arith.constant 288 : index
    %452 = vector.load %arg9[%c48_1024, %c288_1025] : memref<64x432xbf16, #tpu.memory_space<vmem>>, vector<8x16xbf16>
    tpu.vector_store %arg9[%c48_1024, %c288_1025], %451 {strides = array<i32>} : memref<64x432xbf16, #tpu.memory_space<vmem>>, vector<8x16xbf16>,
    %c0_1026 = arith.constant 0 : index
    %c0_1027 = arith.constant 0 : index
    %c7_1028 = arith.constant 7 : index
    %c0_1029 = arith.constant 0 : index
    %c0_1030 = arith.constant 0 : index
    %453 = vector.load %arg4[%c0_1026, %c0_1027, %c7_1028, %c0_1029, %c0_1030] : memref<1x1x10x10x16xbf16, #tpu.memory_space<vmem>>, vector<1x1x1x8x16xbf16>
    %454 = vector.shape_cast %453 : vector<1x1x1x8x16xbf16> to vector<8x16xbf16>
    %c56_1031 = arith.constant 56 : index
    %c288_1032 = arith.constant 288 : index
    %455 = vector.load %arg9[%c56_1031, %c288_1032] : memref<64x432xbf16, #tpu.memory_space<vmem>>, vector<8x16xbf16>
    tpu.vector_store %arg9[%c56_1031, %c288_1032], %454 {strides = array<i32>} : memref<64x432xbf16, #tpu.memory_space<vmem>>, vector<8x16xbf16>,
    %c0_1033 = arith.constant 0 : index
    %c0_1034 = arith.constant 0 : index
    %c0_1035 = arith.constant 0 : index
    %c1_1036 = arith.constant 1 : index
    %c0_1037 = arith.constant 0 : index
    %456 = vector.load %arg4[%c0_1033, %c0_1034, %c0_1035, %c1_1036, %c0_1037] : memref<1x1x10x10x16xbf16, #tpu.memory_space<vmem>>, vector<1x1x1x8x16xbf16>
    %457 = vector.shape_cast %456 : vector<1x1x1x8x16xbf16> to vector<8x16xbf16>
    %c0_1038 = arith.constant 0 : index
    %c304 = arith.constant 304 : index
    %458 = vector.load %arg9[%c0_1038, %c304] : memref<64x432xbf16, #tpu.memory_space<vmem>>, vector<8x16xbf16>
    tpu.vector_store %arg9[%c0_1038, %c304], %457 {strides = array<i32>} : memref<64x432xbf16, #tpu.memory_space<vmem>>, vector<8x16xbf16>,
    %c0_1039 = arith.constant 0 : index
    %c0_1040 = arith.constant 0 : index
    %c1_1041 = arith.constant 1 : index
    %c1_1042 = arith.constant 1 : index
    %c0_1043 = arith.constant 0 : index
    %459 = vector.load %arg4[%c0_1039, %c0_1040, %c1_1041, %c1_1042, %c0_1043] : memref<1x1x10x10x16xbf16, #tpu.memory_space<vmem>>, vector<1x1x1x8x16xbf16>
    %460 = vector.shape_cast %459 : vector<1x1x1x8x16xbf16> to vector<8x16xbf16>
    %c8_1044 = arith.constant 8 : index
    %c304_1045 = arith.constant 304 : index
    %461 = vector.load %arg9[%c8_1044, %c304_1045] : memref<64x432xbf16, #tpu.memory_space<vmem>>, vector<8x16xbf16>
    tpu.vector_store %arg9[%c8_1044, %c304_1045], %460 {strides = array<i32>} : memref<64x432xbf16, #tpu.memory_space<vmem>>, vector<8x16xbf16>,
    %c0_1046 = arith.constant 0 : index
    %c0_1047 = arith.constant 0 : index
    %c2_1048 = arith.constant 2 : index
    %c1_1049 = arith.constant 1 : index
    %c0_1050 = arith.constant 0 : index
    %462 = vector.load %arg4[%c0_1046, %c0_1047, %c2_1048, %c1_1049, %c0_1050] : memref<1x1x10x10x16xbf16, #tpu.memory_space<vmem>>, vector<1x1x1x8x16xbf16>
    %463 = vector.shape_cast %462 : vector<1x1x1x8x16xbf16> to vector<8x16xbf16>
    %c16_1051 = arith.constant 16 : index
    %c304_1052 = arith.constant 304 : index
    %464 = vector.load %arg9[%c16_1051, %c304_1052] : memref<64x432xbf16, #tpu.memory_space<vmem>>, vector<8x16xbf16>
    tpu.vector_store %arg9[%c16_1051, %c304_1052], %463 {strides = array<i32>} : memref<64x432xbf16, #tpu.memory_space<vmem>>, vector<8x16xbf16>,
    %c0_1053 = arith.constant 0 : index
    %c0_1054 = arith.constant 0 : index
    %c3_1055 = arith.constant 3 : index
    %c1_1056 = arith.constant 1 : index
    %c0_1057 = arith.constant 0 : index
    %465 = vector.load %arg4[%c0_1053, %c0_1054, %c3_1055, %c1_1056, %c0_1057] : memref<1x1x10x10x16xbf16, #tpu.memory_space<vmem>>, vector<1x1x1x8x16xbf16>
    %466 = vector.shape_cast %465 : vector<1x1x1x8x16xbf16> to vector<8x16xbf16>
    %c24_1058 = arith.constant 24 : index
    %c304_1059 = arith.constant 304 : index
    %467 = vector.load %arg9[%c24_1058, %c304_1059] : memref<64x432xbf16, #tpu.memory_space<vmem>>, vector<8x16xbf16>
    tpu.vector_store %arg9[%c24_1058, %c304_1059], %466 {strides = array<i32>} : memref<64x432xbf16, #tpu.memory_space<vmem>>, vector<8x16xbf16>,
    %c0_1060 = arith.constant 0 : index
    %c0_1061 = arith.constant 0 : index
    %c4_1062 = arith.constant 4 : index
    %c1_1063 = arith.constant 1 : index
    %c0_1064 = arith.constant 0 : index
    %468 = vector.load %arg4[%c0_1060, %c0_1061, %c4_1062, %c1_1063, %c0_1064] : memref<1x1x10x10x16xbf16, #tpu.memory_space<vmem>>, vector<1x1x1x8x16xbf16>
    %469 = vector.shape_cast %468 : vector<1x1x1x8x16xbf16> to vector<8x16xbf16>
    %c32_1065 = arith.constant 32 : index
    %c304_1066 = arith.constant 304 : index
    %470 = vector.load %arg9[%c32_1065, %c304_1066] : memref<64x432xbf16, #tpu.memory_space<vmem>>, vector<8x16xbf16>
    tpu.vector_store %arg9[%c32_1065, %c304_1066], %469 {strides = array<i32>} : memref<64x432xbf16, #tpu.memory_space<vmem>>, vector<8x16xbf16>,
    %c0_1067 = arith.constant 0 : index
    %c0_1068 = arith.constant 0 : index
    %c5_1069 = arith.constant 5 : index
    %c1_1070 = arith.constant 1 : index
    %c0_1071 = arith.constant 0 : index
    %471 = vector.load %arg4[%c0_1067, %c0_1068, %c5_1069, %c1_1070, %c0_1071] : memref<1x1x10x10x16xbf16, #tpu.memory_space<vmem>>, vector<1x1x1x8x16xbf16>
    %472 = vector.shape_cast %471 : vector<1x1x1x8x16xbf16> to vector<8x16xbf16>
    %c40_1072 = arith.constant 40 : index
    %c304_1073 = arith.constant 304 : index
    %473 = vector.load %arg9[%c40_1072, %c304_1073] : memref<64x432xbf16, #tpu.memory_space<vmem>>, vector<8x16xbf16>
    tpu.vector_store %arg9[%c40_1072, %c304_1073], %472 {strides = array<i32>} : memref<64x432xbf16, #tpu.memory_space<vmem>>, vector<8x16xbf16>,
    %c0_1074 = arith.constant 0 : index
    %c0_1075 = arith.constant 0 : index
    %c6_1076 = arith.constant 6 : index
    %c1_1077 = arith.constant 1 : index
    %c0_1078 = arith.constant 0 : index
    %474 = vector.load %arg4[%c0_1074, %c0_1075, %c6_1076, %c1_1077, %c0_1078] : memref<1x1x10x10x16xbf16, #tpu.memory_space<vmem>>, vector<1x1x1x8x16xbf16>
    %475 = vector.shape_cast %474 : vector<1x1x1x8x16xbf16> to vector<8x16xbf16>
    %c48_1079 = arith.constant 48 : index
    %c304_1080 = arith.constant 304 : index
    %476 = vector.load %arg9[%c48_1079, %c304_1080] : memref<64x432xbf16, #tpu.memory_space<vmem>>, vector<8x16xbf16>
    tpu.vector_store %arg9[%c48_1079, %c304_1080], %475 {strides = array<i32>} : memref<64x432xbf16, #tpu.memory_space<vmem>>, vector<8x16xbf16>,
    %c0_1081 = arith.constant 0 : index
    %c0_1082 = arith.constant 0 : index
    %c7_1083 = arith.constant 7 : index
    %c1_1084 = arith.constant 1 : index
    %c0_1085 = arith.constant 0 : index
    %477 = vector.load %arg4[%c0_1081, %c0_1082, %c7_1083, %c1_1084, %c0_1085] : memref<1x1x10x10x16xbf16, #tpu.memory_space<vmem>>, vector<1x1x1x8x16xbf16>
    %478 = vector.shape_cast %477 : vector<1x1x1x8x16xbf16> to vector<8x16xbf16>
    %c56_1086 = arith.constant 56 : index
    %c304_1087 = arith.constant 304 : index
    %479 = vector.load %arg9[%c56_1086, %c304_1087] : memref<64x432xbf16, #tpu.memory_space<vmem>>, vector<8x16xbf16>
    tpu.vector_store %arg9[%c56_1086, %c304_1087], %478 {strides = array<i32>} : memref<64x432xbf16, #tpu.memory_space<vmem>>, vector<8x16xbf16>,
    %c0_1088 = arith.constant 0 : index
    %c0_1089 = arith.constant 0 : index
    %c0_1090 = arith.constant 0 : index
    %c2_1091 = arith.constant 2 : index
    %c0_1092 = arith.constant 0 : index
    %480 = vector.load %arg4[%c0_1088, %c0_1089, %c0_1090, %c2_1091, %c0_1092] : memref<1x1x10x10x16xbf16, #tpu.memory_space<vmem>>, vector<1x1x1x8x16xbf16>
    %481 = vector.shape_cast %480 : vector<1x1x1x8x16xbf16> to vector<8x16xbf16>
    %c0_1093 = arith.constant 0 : index
    %c320 = arith.constant 320 : index
    %482 = vector.load %arg9[%c0_1093, %c320] : memref<64x432xbf16, #tpu.memory_space<vmem>>, vector<8x16xbf16>
    tpu.vector_store %arg9[%c0_1093, %c320], %481 {strides = array<i32>} : memref<64x432xbf16, #tpu.memory_space<vmem>>, vector<8x16xbf16>,
    %c0_1094 = arith.constant 0 : index
    %c0_1095 = arith.constant 0 : index
    %c1_1096 = arith.constant 1 : index
    %c2_1097 = arith.constant 2 : index
    %c0_1098 = arith.constant 0 : index
    %483 = vector.load %arg4[%c0_1094, %c0_1095, %c1_1096, %c2_1097, %c0_1098] : memref<1x1x10x10x16xbf16, #tpu.memory_space<vmem>>, vector<1x1x1x8x16xbf16>
    %484 = vector.shape_cast %483 : vector<1x1x1x8x16xbf16> to vector<8x16xbf16>
    %c8_1099 = arith.constant 8 : index
    %c320_1100 = arith.constant 320 : index
    %485 = vector.load %arg9[%c8_1099, %c320_1100] : memref<64x432xbf16, #tpu.memory_space<vmem>>, vector<8x16xbf16>
    tpu.vector_store %arg9[%c8_1099, %c320_1100], %484 {strides = array<i32>} : memref<64x432xbf16, #tpu.memory_space<vmem>>, vector<8x16xbf16>,
    %c0_1101 = arith.constant 0 : index
    %c0_1102 = arith.constant 0 : index
    %c2_1103 = arith.constant 2 : index
    %c2_1104 = arith.constant 2 : index
    %c0_1105 = arith.constant 0 : index
    %486 = vector.load %arg4[%c0_1101, %c0_1102, %c2_1103, %c2_1104, %c0_1105] : memref<1x1x10x10x16xbf16, #tpu.memory_space<vmem>>, vector<1x1x1x8x16xbf16>
    %487 = vector.shape_cast %486 : vector<1x1x1x8x16xbf16> to vector<8x16xbf16>
    %c16_1106 = arith.constant 16 : index
    %c320_1107 = arith.constant 320 : index
    %488 = vector.load %arg9[%c16_1106, %c320_1107] : memref<64x432xbf16, #tpu.memory_space<vmem>>, vector<8x16xbf16>
    tpu.vector_store %arg9[%c16_1106, %c320_1107], %487 {strides = array<i32>} : memref<64x432xbf16, #tpu.memory_space<vmem>>, vector<8x16xbf16>,
    %c0_1108 = arith.constant 0 : index
    %c0_1109 = arith.constant 0 : index
    %c3_1110 = arith.constant 3 : index
    %c2_1111 = arith.constant 2 : index
    %c0_1112 = arith.constant 0 : index
    %489 = vector.load %arg4[%c0_1108, %c0_1109, %c3_1110, %c2_1111, %c0_1112] : memref<1x1x10x10x16xbf16, #tpu.memory_space<vmem>>, vector<1x1x1x8x16xbf16>
    %490 = vector.shape_cast %489 : vector<1x1x1x8x16xbf16> to vector<8x16xbf16>
    %c24_1113 = arith.constant 24 : index
    %c320_1114 = arith.constant 320 : index
    %491 = vector.load %arg9[%c24_1113, %c320_1114] : memref<64x432xbf16, #tpu.memory_space<vmem>>, vector<8x16xbf16>
    tpu.vector_store %arg9[%c24_1113, %c320_1114], %490 {strides = array<i32>} : memref<64x432xbf16, #tpu.memory_space<vmem>>, vector<8x16xbf16>,
    %c0_1115 = arith.constant 0 : index
    %c0_1116 = arith.constant 0 : index
    %c4_1117 = arith.constant 4 : index
    %c2_1118 = arith.constant 2 : index
    %c0_1119 = arith.constant 0 : index
    %492 = vector.load %arg4[%c0_1115, %c0_1116, %c4_1117, %c2_1118, %c0_1119] : memref<1x1x10x10x16xbf16, #tpu.memory_space<vmem>>, vector<1x1x1x8x16xbf16>
    %493 = vector.shape_cast %492 : vector<1x1x1x8x16xbf16> to vector<8x16xbf16>
    %c32_1120 = arith.constant 32 : index
    %c320_1121 = arith.constant 320 : index
    %494 = vector.load %arg9[%c32_1120, %c320_1121] : memref<64x432xbf16, #tpu.memory_space<vmem>>, vector<8x16xbf16>
    tpu.vector_store %arg9[%c32_1120, %c320_1121], %493 {strides = array<i32>} : memref<64x432xbf16, #tpu.memory_space<vmem>>, vector<8x16xbf16>,
    %c0_1122 = arith.constant 0 : index
    %c0_1123 = arith.constant 0 : index
    %c5_1124 = arith.constant 5 : index
    %c2_1125 = arith.constant 2 : index
    %c0_1126 = arith.constant 0 : index
    %495 = vector.load %arg4[%c0_1122, %c0_1123, %c5_1124, %c2_1125, %c0_1126] : memref<1x1x10x10x16xbf16, #tpu.memory_space<vmem>>, vector<1x1x1x8x16xbf16>
    %496 = vector.shape_cast %495 : vector<1x1x1x8x16xbf16> to vector<8x16xbf16>
    %c40_1127 = arith.constant 40 : index
    %c320_1128 = arith.constant 320 : index
    %497 = vector.load %arg9[%c40_1127, %c320_1128] : memref<64x432xbf16, #tpu.memory_space<vmem>>, vector<8x16xbf16>
    tpu.vector_store %arg9[%c40_1127, %c320_1128], %496 {strides = array<i32>} : memref<64x432xbf16, #tpu.memory_space<vmem>>, vector<8x16xbf16>,
    %c0_1129 = arith.constant 0 : index
    %c0_1130 = arith.constant 0 : index
    %c6_1131 = arith.constant 6 : index
    %c2_1132 = arith.constant 2 : index
    %c0_1133 = arith.constant 0 : index
    %498 = vector.load %arg4[%c0_1129, %c0_1130, %c6_1131, %c2_1132, %c0_1133] : memref<1x1x10x10x16xbf16, #tpu.memory_space<vmem>>, vector<1x1x1x8x16xbf16>
    %499 = vector.shape_cast %498 : vector<1x1x1x8x16xbf16> to vector<8x16xbf16>
    %c48_1134 = arith.constant 48 : index
    %c320_1135 = arith.constant 320 : index
    %500 = vector.load %arg9[%c48_1134, %c320_1135] : memref<64x432xbf16, #tpu.memory_space<vmem>>, vector<8x16xbf16>
    tpu.vector_store %arg9[%c48_1134, %c320_1135], %499 {strides = array<i32>} : memref<64x432xbf16, #tpu.memory_space<vmem>>, vector<8x16xbf16>,
    %c0_1136 = arith.constant 0 : index
    %c0_1137 = arith.constant 0 : index
    %c7_1138 = arith.constant 7 : index
    %c2_1139 = arith.constant 2 : index
    %c0_1140 = arith.constant 0 : index
    %501 = vector.load %arg4[%c0_1136, %c0_1137, %c7_1138, %c2_1139, %c0_1140] : memref<1x1x10x10x16xbf16, #tpu.memory_space<vmem>>, vector<1x1x1x8x16xbf16>
    %502 = vector.shape_cast %501 : vector<1x1x1x8x16xbf16> to vector<8x16xbf16>
    %c56_1141 = arith.constant 56 : index
    %c320_1142 = arith.constant 320 : index
    %503 = vector.load %arg9[%c56_1141, %c320_1142] : memref<64x432xbf16, #tpu.memory_space<vmem>>, vector<8x16xbf16>
    tpu.vector_store %arg9[%c56_1141, %c320_1142], %502 {strides = array<i32>} : memref<64x432xbf16, #tpu.memory_space<vmem>>, vector<8x16xbf16>,
    %c0_1143 = arith.constant 0 : index
    %c0_1144 = arith.constant 0 : index
    %c1_1145 = arith.constant 1 : index
    %c0_1146 = arith.constant 0 : index
    %c0_1147 = arith.constant 0 : index
    %504 = vector.load %arg4[%c0_1143, %c0_1144, %c1_1145, %c0_1146, %c0_1147] : memref<1x1x10x10x16xbf16, #tpu.memory_space<vmem>>, vector<1x1x1x8x16xbf16>
    %505 = vector.shape_cast %504 : vector<1x1x1x8x16xbf16> to vector<8x16xbf16>
    %c0_1148 = arith.constant 0 : index
    %c336 = arith.constant 336 : index
    %506 = vector.load %arg9[%c0_1148, %c336] : memref<64x432xbf16, #tpu.memory_space<vmem>>, vector<8x16xbf16>
    tpu.vector_store %arg9[%c0_1148, %c336], %505 {strides = array<i32>} : memref<64x432xbf16, #tpu.memory_space<vmem>>, vector<8x16xbf16>,
    %c0_1149 = arith.constant 0 : index
    %c0_1150 = arith.constant 0 : index
    %c2_1151 = arith.constant 2 : index
    %c0_1152 = arith.constant 0 : index
    %c0_1153 = arith.constant 0 : index
    %507 = vector.load %arg4[%c0_1149, %c0_1150, %c2_1151, %c0_1152, %c0_1153] : memref<1x1x10x10x16xbf16, #tpu.memory_space<vmem>>, vector<1x1x1x8x16xbf16>
    %508 = vector.shape_cast %507 : vector<1x1x1x8x16xbf16> to vector<8x16xbf16>
    %c8_1154 = arith.constant 8 : index
    %c336_1155 = arith.constant 336 : index
    %509 = vector.load %arg9[%c8_1154, %c336_1155] : memref<64x432xbf16, #tpu.memory_space<vmem>>, vector<8x16xbf16>
    tpu.vector_store %arg9[%c8_1154, %c336_1155], %508 {strides = array<i32>} : memref<64x432xbf16, #tpu.memory_space<vmem>>, vector<8x16xbf16>,
    %c0_1156 = arith.constant 0 : index
    %c0_1157 = arith.constant 0 : index
    %c3_1158 = arith.constant 3 : index
    %c0_1159 = arith.constant 0 : index
    %c0_1160 = arith.constant 0 : index
    %510 = vector.load %arg4[%c0_1156, %c0_1157, %c3_1158, %c0_1159, %c0_1160] : memref<1x1x10x10x16xbf16, #tpu.memory_space<vmem>>, vector<1x1x1x8x16xbf16>
    %511 = vector.shape_cast %510 : vector<1x1x1x8x16xbf16> to vector<8x16xbf16>
    %c16_1161 = arith.constant 16 : index
    %c336_1162 = arith.constant 336 : index
    %512 = vector.load %arg9[%c16_1161, %c336_1162] : memref<64x432xbf16, #tpu.memory_space<vmem>>, vector<8x16xbf16>
    tpu.vector_store %arg9[%c16_1161, %c336_1162], %511 {strides = array<i32>} : memref<64x432xbf16, #tpu.memory_space<vmem>>, vector<8x16xbf16>,
    %c0_1163 = arith.constant 0 : index
    %c0_1164 = arith.constant 0 : index
    %c4_1165 = arith.constant 4 : index
    %c0_1166 = arith.constant 0 : index
    %c0_1167 = arith.constant 0 : index
    %513 = vector.load %arg4[%c0_1163, %c0_1164, %c4_1165, %c0_1166, %c0_1167] : memref<1x1x10x10x16xbf16, #tpu.memory_space<vmem>>, vector<1x1x1x8x16xbf16>
    %514 = vector.shape_cast %513 : vector<1x1x1x8x16xbf16> to vector<8x16xbf16>
    %c24_1168 = arith.constant 24 : index
    %c336_1169 = arith.constant 336 : index
    %515 = vector.load %arg9[%c24_1168, %c336_1169] : memref<64x432xbf16, #tpu.memory_space<vmem>>, vector<8x16xbf16>
    tpu.vector_store %arg9[%c24_1168, %c336_1169], %514 {strides = array<i32>} : memref<64x432xbf16, #tpu.memory_space<vmem>>, vector<8x16xbf16>,
    %c0_1170 = arith.constant 0 : index
    %c0_1171 = arith.constant 0 : index
    %c5_1172 = arith.constant 5 : index
    %c0_1173 = arith.constant 0 : index
    %c0_1174 = arith.constant 0 : index
    %516 = vector.load %arg4[%c0_1170, %c0_1171, %c5_1172, %c0_1173, %c0_1174] : memref<1x1x10x10x16xbf16, #tpu.memory_space<vmem>>, vector<1x1x1x8x16xbf16>
    %517 = vector.shape_cast %516 : vector<1x1x1x8x16xbf16> to vector<8x16xbf16>
    %c32_1175 = arith.constant 32 : index
    %c336_1176 = arith.constant 336 : index
    %518 = vector.load %arg9[%c32_1175, %c336_1176] : memref<64x432xbf16, #tpu.memory_space<vmem>>, vector<8x16xbf16>
    tpu.vector_store %arg9[%c32_1175, %c336_1176], %517 {strides = array<i32>} : memref<64x432xbf16, #tpu.memory_space<vmem>>, vector<8x16xbf16>,
    %c0_1177 = arith.constant 0 : index
    %c0_1178 = arith.constant 0 : index
    %c6_1179 = arith.constant 6 : index
    %c0_1180 = arith.constant 0 : index
    %c0_1181 = arith.constant 0 : index
    %519 = vector.load %arg4[%c0_1177, %c0_1178, %c6_1179, %c0_1180, %c0_1181] : memref<1x1x10x10x16xbf16, #tpu.memory_space<vmem>>, vector<1x1x1x8x16xbf16>
    %520 = vector.shape_cast %519 : vector<1x1x1x8x16xbf16> to vector<8x16xbf16>
    %c40_1182 = arith.constant 40 : index
    %c336_1183 = arith.constant 336 : index
    %521 = vector.load %arg9[%c40_1182, %c336_1183] : memref<64x432xbf16, #tpu.memory_space<vmem>>, vector<8x16xbf16>
    tpu.vector_store %arg9[%c40_1182, %c336_1183], %520 {strides = array<i32>} : memref<64x432xbf16, #tpu.memory_space<vmem>>, vector<8x16xbf16>,
    %c0_1184 = arith.constant 0 : index
    %c0_1185 = arith.constant 0 : index
    %c7_1186 = arith.constant 7 : index
    %c0_1187 = arith.constant 0 : index
    %c0_1188 = arith.constant 0 : index
    %522 = vector.load %arg4[%c0_1184, %c0_1185, %c7_1186, %c0_1187, %c0_1188] : memref<1x1x10x10x16xbf16, #tpu.memory_space<vmem>>, vector<1x1x1x8x16xbf16>
    %523 = vector.shape_cast %522 : vector<1x1x1x8x16xbf16> to vector<8x16xbf16>
    %c48_1189 = arith.constant 48 : index
    %c336_1190 = arith.constant 336 : index
    %524 = vector.load %arg9[%c48_1189, %c336_1190] : memref<64x432xbf16, #tpu.memory_space<vmem>>, vector<8x16xbf16>
    tpu.vector_store %arg9[%c48_1189, %c336_1190], %523 {strides = array<i32>} : memref<64x432xbf16, #tpu.memory_space<vmem>>, vector<8x16xbf16>,
    %c0_1191 = arith.constant 0 : index
    %c0_1192 = arith.constant 0 : index
    %c8_1193 = arith.constant 8 : index
    %c0_1194 = arith.constant 0 : index
    %c0_1195 = arith.constant 0 : index
    %525 = vector.load %arg4[%c0_1191, %c0_1192, %c8_1193, %c0_1194, %c0_1195] : memref<1x1x10x10x16xbf16, #tpu.memory_space<vmem>>, vector<1x1x1x8x16xbf16>
    %526 = vector.shape_cast %525 : vector<1x1x1x8x16xbf16> to vector<8x16xbf16>
    %c56_1196 = arith.constant 56 : index
    %c336_1197 = arith.constant 336 : index
    %527 = vector.load %arg9[%c56_1196, %c336_1197] : memref<64x432xbf16, #tpu.memory_space<vmem>>, vector<8x16xbf16>
    tpu.vector_store %arg9[%c56_1196, %c336_1197], %526 {strides = array<i32>} : memref<64x432xbf16, #tpu.memory_space<vmem>>, vector<8x16xbf16>,
    %c0_1198 = arith.constant 0 : index
    %c0_1199 = arith.constant 0 : index
    %c1_1200 = arith.constant 1 : index
    %c1_1201 = arith.constant 1 : index
    %c0_1202 = arith.constant 0 : index
    %528 = vector.load %arg4[%c0_1198, %c0_1199, %c1_1200, %c1_1201, %c0_1202] : memref<1x1x10x10x16xbf16, #tpu.memory_space<vmem>>, vector<1x1x1x8x16xbf16>
    %529 = vector.shape_cast %528 : vector<1x1x1x8x16xbf16> to vector<8x16xbf16>
    %c0_1203 = arith.constant 0 : index
    %c352 = arith.constant 352 : index
    %530 = vector.load %arg9[%c0_1203, %c352] : memref<64x432xbf16, #tpu.memory_space<vmem>>, vector<8x16xbf16>
    tpu.vector_store %arg9[%c0_1203, %c352], %529 {strides = array<i32>} : memref<64x432xbf16, #tpu.memory_space<vmem>>, vector<8x16xbf16>,
    %c0_1204 = arith.constant 0 : index
    %c0_1205 = arith.constant 0 : index
    %c2_1206 = arith.constant 2 : index
    %c1_1207 = arith.constant 1 : index
    %c0_1208 = arith.constant 0 : index
    %531 = vector.load %arg4[%c0_1204, %c0_1205, %c2_1206, %c1_1207, %c0_1208] : memref<1x1x10x10x16xbf16, #tpu.memory_space<vmem>>, vector<1x1x1x8x16xbf16>
    %532 = vector.shape_cast %531 : vector<1x1x1x8x16xbf16> to vector<8x16xbf16>
    %c8_1209 = arith.constant 8 : index
    %c352_1210 = arith.constant 352 : index
    %533 = vector.load %arg9[%c8_1209, %c352_1210] : memref<64x432xbf16, #tpu.memory_space<vmem>>, vector<8x16xbf16>
    tpu.vector_store %arg9[%c8_1209, %c352_1210], %532 {strides = array<i32>} : memref<64x432xbf16, #tpu.memory_space<vmem>>, vector<8x16xbf16>,
    %c0_1211 = arith.constant 0 : index
    %c0_1212 = arith.constant 0 : index
    %c3_1213 = arith.constant 3 : index
    %c1_1214 = arith.constant 1 : index
    %c0_1215 = arith.constant 0 : index
    %534 = vector.load %arg4[%c0_1211, %c0_1212, %c3_1213, %c1_1214, %c0_1215] : memref<1x1x10x10x16xbf16, #tpu.memory_space<vmem>>, vector<1x1x1x8x16xbf16>
    %535 = vector.shape_cast %534 : vector<1x1x1x8x16xbf16> to vector<8x16xbf16>
    %c16_1216 = arith.constant 16 : index
    %c352_1217 = arith.constant 352 : index
    %536 = vector.load %arg9[%c16_1216, %c352_1217] : memref<64x432xbf16, #tpu.memory_space<vmem>>, vector<8x16xbf16>
    tpu.vector_store %arg9[%c16_1216, %c352_1217], %535 {strides = array<i32>} : memref<64x432xbf16, #tpu.memory_space<vmem>>, vector<8x16xbf16>,
    %c0_1218 = arith.constant 0 : index
    %c0_1219 = arith.constant 0 : index
    %c4_1220 = arith.constant 4 : index
    %c1_1221 = arith.constant 1 : index
    %c0_1222 = arith.constant 0 : index
    %537 = vector.load %arg4[%c0_1218, %c0_1219, %c4_1220, %c1_1221, %c0_1222] : memref<1x1x10x10x16xbf16, #tpu.memory_space<vmem>>, vector<1x1x1x8x16xbf16>
    %538 = vector.shape_cast %537 : vector<1x1x1x8x16xbf16> to vector<8x16xbf16>
    %c24_1223 = arith.constant 24 : index
    %c352_1224 = arith.constant 352 : index
    %539 = vector.load %arg9[%c24_1223, %c352_1224] : memref<64x432xbf16, #tpu.memory_space<vmem>>, vector<8x16xbf16>
    tpu.vector_store %arg9[%c24_1223, %c352_1224], %538 {strides = array<i32>} : memref<64x432xbf16, #tpu.memory_space<vmem>>, vector<8x16xbf16>,
    %c0_1225 = arith.constant 0 : index
    %c0_1226 = arith.constant 0 : index
    %c5_1227 = arith.constant 5 : index
    %c1_1228 = arith.constant 1 : index
    %c0_1229 = arith.constant 0 : index
    %540 = vector.load %arg4[%c0_1225, %c0_1226, %c5_1227, %c1_1228, %c0_1229] : memref<1x1x10x10x16xbf16, #tpu.memory_space<vmem>>, vector<1x1x1x8x16xbf16>
    %541 = vector.shape_cast %540 : vector<1x1x1x8x16xbf16> to vector<8x16xbf16>
    %c32_1230 = arith.constant 32 : index
    %c352_1231 = arith.constant 352 : index
    %542 = vector.load %arg9[%c32_1230, %c352_1231] : memref<64x432xbf16, #tpu.memory_space<vmem>>, vector<8x16xbf16>
    tpu.vector_store %arg9[%c32_1230, %c352_1231], %541 {strides = array<i32>} : memref<64x432xbf16, #tpu.memory_space<vmem>>, vector<8x16xbf16>,
    %c0_1232 = arith.constant 0 : index
    %c0_1233 = arith.constant 0 : index
    %c6_1234 = arith.constant 6 : index
    %c1_1235 = arith.constant 1 : index
    %c0_1236 = arith.constant 0 : index
    %543 = vector.load %arg4[%c0_1232, %c0_1233, %c6_1234, %c1_1235, %c0_1236] : memref<1x1x10x10x16xbf16, #tpu.memory_space<vmem>>, vector<1x1x1x8x16xbf16>
    %544 = vector.shape_cast %543 : vector<1x1x1x8x16xbf16> to vector<8x16xbf16>
    %c40_1237 = arith.constant 40 : index
    %c352_1238 = arith.constant 352 : index
    %545 = vector.load %arg9[%c40_1237, %c352_1238] : memref<64x432xbf16, #tpu.memory_space<vmem>>, vector<8x16xbf16>
    tpu.vector_store %arg9[%c40_1237, %c352_1238], %544 {strides = array<i32>} : memref<64x432xbf16, #tpu.memory_space<vmem>>, vector<8x16xbf16>,
    %c0_1239 = arith.constant 0 : index
    %c0_1240 = arith.constant 0 : index
    %c7_1241 = arith.constant 7 : index
    %c1_1242 = arith.constant 1 : index
    %c0_1243 = arith.constant 0 : index
    %546 = vector.load %arg4[%c0_1239, %c0_1240, %c7_1241, %c1_1242, %c0_1243] : memref<1x1x10x10x16xbf16, #tpu.memory_space<vmem>>, vector<1x1x1x8x16xbf16>
    %547 = vector.shape_cast %546 : vector<1x1x1x8x16xbf16> to vector<8x16xbf16>
    %c48_1244 = arith.constant 48 : index
    %c352_1245 = arith.constant 352 : index
    %548 = vector.load %arg9[%c48_1244, %c352_1245] : memref<64x432xbf16, #tpu.memory_space<vmem>>, vector<8x16xbf16>
    tpu.vector_store %arg9[%c48_1244, %c352_1245], %547 {strides = array<i32>} : memref<64x432xbf16, #tpu.memory_space<vmem>>, vector<8x16xbf16>,
    %c0_1246 = arith.constant 0 : index
    %c0_1247 = arith.constant 0 : index
    %c8_1248 = arith.constant 8 : index
    %c1_1249 = arith.constant 1 : index
    %c0_1250 = arith.constant 0 : index
    %549 = vector.load %arg4[%c0_1246, %c0_1247, %c8_1248, %c1_1249, %c0_1250] : memref<1x1x10x10x16xbf16, #tpu.memory_space<vmem>>, vector<1x1x1x8x16xbf16>
    %550 = vector.shape_cast %549 : vector<1x1x1x8x16xbf16> to vector<8x16xbf16>
    %c56_1251 = arith.constant 56 : index
    %c352_1252 = arith.constant 352 : index
    %551 = vector.load %arg9[%c56_1251, %c352_1252] : memref<64x432xbf16, #tpu.memory_space<vmem>>, vector<8x16xbf16>
    tpu.vector_store %arg9[%c56_1251, %c352_1252], %550 {strides = array<i32>} : memref<64x432xbf16, #tpu.memory_space<vmem>>, vector<8x16xbf16>,
    %c0_1253 = arith.constant 0 : index
    %c0_1254 = arith.constant 0 : index
    %c1_1255 = arith.constant 1 : index
    %c2_1256 = arith.constant 2 : index
    %c0_1257 = arith.constant 0 : index
    %552 = vector.load %arg4[%c0_1253, %c0_1254, %c1_1255, %c2_1256, %c0_1257] : memref<1x1x10x10x16xbf16, #tpu.memory_space<vmem>>, vector<1x1x1x8x16xbf16>
    %553 = vector.shape_cast %552 : vector<1x1x1x8x16xbf16> to vector<8x16xbf16>
    %c0_1258 = arith.constant 0 : index
    %c368 = arith.constant 368 : index
    %554 = vector.load %arg9[%c0_1258, %c368] : memref<64x432xbf16, #tpu.memory_space<vmem>>, vector<8x16xbf16>
    tpu.vector_store %arg9[%c0_1258, %c368], %553 {strides = array<i32>} : memref<64x432xbf16, #tpu.memory_space<vmem>>, vector<8x16xbf16>,
    %c0_1259 = arith.constant 0 : index
    %c0_1260 = arith.constant 0 : index
    %c2_1261 = arith.constant 2 : index
    %c2_1262 = arith.constant 2 : index
    %c0_1263 = arith.constant 0 : index
    %555 = vector.load %arg4[%c0_1259, %c0_1260, %c2_1261, %c2_1262, %c0_1263] : memref<1x1x10x10x16xbf16, #tpu.memory_space<vmem>>, vector<1x1x1x8x16xbf16>
    %556 = vector.shape_cast %555 : vector<1x1x1x8x16xbf16> to vector<8x16xbf16>
    %c8_1264 = arith.constant 8 : index
    %c368_1265 = arith.constant 368 : index
    %557 = vector.load %arg9[%c8_1264, %c368_1265] : memref<64x432xbf16, #tpu.memory_space<vmem>>, vector<8x16xbf16>
    tpu.vector_store %arg9[%c8_1264, %c368_1265], %556 {strides = array<i32>} : memref<64x432xbf16, #tpu.memory_space<vmem>>, vector<8x16xbf16>,
    %c0_1266 = arith.constant 0 : index
    %c0_1267 = arith.constant 0 : index
    %c3_1268 = arith.constant 3 : index
    %c2_1269 = arith.constant 2 : index
    %c0_1270 = arith.constant 0 : index
    %558 = vector.load %arg4[%c0_1266, %c0_1267, %c3_1268, %c2_1269, %c0_1270] : memref<1x1x10x10x16xbf16, #tpu.memory_space<vmem>>, vector<1x1x1x8x16xbf16>
    %559 = vector.shape_cast %558 : vector<1x1x1x8x16xbf16> to vector<8x16xbf16>
    %c16_1271 = arith.constant 16 : index
    %c368_1272 = arith.constant 368 : index
    %560 = vector.load %arg9[%c16_1271, %c368_1272] : memref<64x432xbf16, #tpu.memory_space<vmem>>, vector<8x16xbf16>
    tpu.vector_store %arg9[%c16_1271, %c368_1272], %559 {strides = array<i32>} : memref<64x432xbf16, #tpu.memory_space<vmem>>, vector<8x16xbf16>,
    %c0_1273 = arith.constant 0 : index
    %c0_1274 = arith.constant 0 : index
    %c4_1275 = arith.constant 4 : index
    %c2_1276 = arith.constant 2 : index
    %c0_1277 = arith.constant 0 : index
    %561 = vector.load %arg4[%c0_1273, %c0_1274, %c4_1275, %c2_1276, %c0_1277] : memref<1x1x10x10x16xbf16, #tpu.memory_space<vmem>>, vector<1x1x1x8x16xbf16>
    %562 = vector.shape_cast %561 : vector<1x1x1x8x16xbf16> to vector<8x16xbf16>
    %c24_1278 = arith.constant 24 : index
    %c368_1279 = arith.constant 368 : index
    %563 = vector.load %arg9[%c24_1278, %c368_1279] : memref<64x432xbf16, #tpu.memory_space<vmem>>, vector<8x16xbf16>
    tpu.vector_store %arg9[%c24_1278, %c368_1279], %562 {strides = array<i32>} : memref<64x432xbf16, #tpu.memory_space<vmem>>, vector<8x16xbf16>,
    %c0_1280 = arith.constant 0 : index
    %c0_1281 = arith.constant 0 : index
    %c5_1282 = arith.constant 5 : index
    %c2_1283 = arith.constant 2 : index
    %c0_1284 = arith.constant 0 : index
    %564 = vector.load %arg4[%c0_1280, %c0_1281, %c5_1282, %c2_1283, %c0_1284] : memref<1x1x10x10x16xbf16, #tpu.memory_space<vmem>>, vector<1x1x1x8x16xbf16>
    %565 = vector.shape_cast %564 : vector<1x1x1x8x16xbf16> to vector<8x16xbf16>
    %c32_1285 = arith.constant 32 : index
    %c368_1286 = arith.constant 368 : index
    %566 = vector.load %arg9[%c32_1285, %c368_1286] : memref<64x432xbf16, #tpu.memory_space<vmem>>, vector<8x16xbf16>
    tpu.vector_store %arg9[%c32_1285, %c368_1286], %565 {strides = array<i32>} : memref<64x432xbf16, #tpu.memory_space<vmem>>, vector<8x16xbf16>,
    %c0_1287 = arith.constant 0 : index
    %c0_1288 = arith.constant 0 : index
    %c6_1289 = arith.constant 6 : index
    %c2_1290 = arith.constant 2 : index
    %c0_1291 = arith.constant 0 : index
    %567 = vector.load %arg4[%c0_1287, %c0_1288, %c6_1289, %c2_1290, %c0_1291] : memref<1x1x10x10x16xbf16, #tpu.memory_space<vmem>>, vector<1x1x1x8x16xbf16>
    %568 = vector.shape_cast %567 : vector<1x1x1x8x16xbf16> to vector<8x16xbf16>
    %c40_1292 = arith.constant 40 : index
    %c368_1293 = arith.constant 368 : index
    %569 = vector.load %arg9[%c40_1292, %c368_1293] : memref<64x432xbf16, #tpu.memory_space<vmem>>, vector<8x16xbf16>
    tpu.vector_store %arg9[%c40_1292, %c368_1293], %568 {strides = array<i32>} : memref<64x432xbf16, #tpu.memory_space<vmem>>, vector<8x16xbf16>,
    %c0_1294 = arith.constant 0 : index
    %c0_1295 = arith.constant 0 : index
    %c7_1296 = arith.constant 7 : index
    %c2_1297 = arith.constant 2 : index
    %c0_1298 = arith.constant 0 : index
    %570 = vector.load %arg4[%c0_1294, %c0_1295, %c7_1296, %c2_1297, %c0_1298] : memref<1x1x10x10x16xbf16, #tpu.memory_space<vmem>>, vector<1x1x1x8x16xbf16>
    %571 = vector.shape_cast %570 : vector<1x1x1x8x16xbf16> to vector<8x16xbf16>
    %c48_1299 = arith.constant 48 : index
    %c368_1300 = arith.constant 368 : index
    %572 = vector.load %arg9[%c48_1299, %c368_1300] : memref<64x432xbf16, #tpu.memory_space<vmem>>, vector<8x16xbf16>
    tpu.vector_store %arg9[%c48_1299, %c368_1300], %571 {strides = array<i32>} : memref<64x432xbf16, #tpu.memory_space<vmem>>, vector<8x16xbf16>,
    %c0_1301 = arith.constant 0 : index
    %c0_1302 = arith.constant 0 : index
    %c8_1303 = arith.constant 8 : index
    %c2_1304 = arith.constant 2 : index
    %c0_1305 = arith.constant 0 : index
    %573 = vector.load %arg4[%c0_1301, %c0_1302, %c8_1303, %c2_1304, %c0_1305] : memref<1x1x10x10x16xbf16, #tpu.memory_space<vmem>>, vector<1x1x1x8x16xbf16>
    %574 = vector.shape_cast %573 : vector<1x1x1x8x16xbf16> to vector<8x16xbf16>
    %c56_1306 = arith.constant 56 : index
    %c368_1307 = arith.constant 368 : index
    %575 = vector.load %arg9[%c56_1306, %c368_1307] : memref<64x432xbf16, #tpu.memory_space<vmem>>, vector<8x16xbf16>
    tpu.vector_store %arg9[%c56_1306, %c368_1307], %574 {strides = array<i32>} : memref<64x432xbf16, #tpu.memory_space<vmem>>, vector<8x16xbf16>,
    %c0_1308 = arith.constant 0 : index
    %c0_1309 = arith.constant 0 : index
    %c2_1310 = arith.constant 2 : index
    %c0_1311 = arith.constant 0 : index
    %c0_1312 = arith.constant 0 : index
    %576 = vector.load %arg4[%c0_1308, %c0_1309, %c2_1310, %c0_1311, %c0_1312] : memref<1x1x10x10x16xbf16, #tpu.memory_space<vmem>>, vector<1x1x1x8x16xbf16>
    %577 = vector.shape_cast %576 : vector<1x1x1x8x16xbf16> to vector<8x16xbf16>
    %c0_1313 = arith.constant 0 : index
    %c384 = arith.constant 384 : index
    %578 = vector.load %arg9[%c0_1313, %c384] : memref<64x432xbf16, #tpu.memory_space<vmem>>, vector<8x16xbf16>
    tpu.vector_store %arg9[%c0_1313, %c384], %577 {strides = array<i32>} : memref<64x432xbf16, #tpu.memory_space<vmem>>, vector<8x16xbf16>,
    %c0_1314 = arith.constant 0 : index
    %c0_1315 = arith.constant 0 : index
    %c3_1316 = arith.constant 3 : index
    %c0_1317 = arith.constant 0 : index
    %c0_1318 = arith.constant 0 : index
    %579 = vector.load %arg4[%c0_1314, %c0_1315, %c3_1316, %c0_1317, %c0_1318] : memref<1x1x10x10x16xbf16, #tpu.memory_space<vmem>>, vector<1x1x1x8x16xbf16>
    %580 = vector.shape_cast %579 : vector<1x1x1x8x16xbf16> to vector<8x16xbf16>
    %c8_1319 = arith.constant 8 : index
    %c384_1320 = arith.constant 384 : index
    %581 = vector.load %arg9[%c8_1319, %c384_1320] : memref<64x432xbf16, #tpu.memory_space<vmem>>, vector<8x16xbf16>
    tpu.vector_store %arg9[%c8_1319, %c384_1320], %580 {strides = array<i32>} : memref<64x432xbf16, #tpu.memory_space<vmem>>, vector<8x16xbf16>,
    %c0_1321 = arith.constant 0 : index
    %c0_1322 = arith.constant 0 : index
    %c4_1323 = arith.constant 4 : index
    %c0_1324 = arith.constant 0 : index
    %c0_1325 = arith.constant 0 : index
    %582 = vector.load %arg4[%c0_1321, %c0_1322, %c4_1323, %c0_1324, %c0_1325] : memref<1x1x10x10x16xbf16, #tpu.memory_space<vmem>>, vector<1x1x1x8x16xbf16>
    %583 = vector.shape_cast %582 : vector<1x1x1x8x16xbf16> to vector<8x16xbf16>
    %c16_1326 = arith.constant 16 : index
    %c384_1327 = arith.constant 384 : index
    %584 = vector.load %arg9[%c16_1326, %c384_1327] : memref<64x432xbf16, #tpu.memory_space<vmem>>, vector<8x16xbf16>
    tpu.vector_store %arg9[%c16_1326, %c384_1327], %583 {strides = array<i32>} : memref<64x432xbf16, #tpu.memory_space<vmem>>, vector<8x16xbf16>,
    %c0_1328 = arith.constant 0 : index
    %c0_1329 = arith.constant 0 : index
    %c5_1330 = arith.constant 5 : index
    %c0_1331 = arith.constant 0 : index
    %c0_1332 = arith.constant 0 : index
    %585 = vector.load %arg4[%c0_1328, %c0_1329, %c5_1330, %c0_1331, %c0_1332] : memref<1x1x10x10x16xbf16, #tpu.memory_space<vmem>>, vector<1x1x1x8x16xbf16>
    %586 = vector.shape_cast %585 : vector<1x1x1x8x16xbf16> to vector<8x16xbf16>
    %c24_1333 = arith.constant 24 : index
    %c384_1334 = arith.constant 384 : index
    %587 = vector.load %arg9[%c24_1333, %c384_1334] : memref<64x432xbf16, #tpu.memory_space<vmem>>, vector<8x16xbf16>
    tpu.vector_store %arg9[%c24_1333, %c384_1334], %586 {strides = array<i32>} : memref<64x432xbf16, #tpu.memory_space<vmem>>, vector<8x16xbf16>,
    %c0_1335 = arith.constant 0 : index
    %c0_1336 = arith.constant 0 : index
    %c6_1337 = arith.constant 6 : index
    %c0_1338 = arith.constant 0 : index
    %c0_1339 = arith.constant 0 : index
    %588 = vector.load %arg4[%c0_1335, %c0_1336, %c6_1337, %c0_1338, %c0_1339] : memref<1x1x10x10x16xbf16, #tpu.memory_space<vmem>>, vector<1x1x1x8x16xbf16>
    %589 = vector.shape_cast %588 : vector<1x1x1x8x16xbf16> to vector<8x16xbf16>
    %c32_1340 = arith.constant 32 : index
    %c384_1341 = arith.constant 384 : index
    %590 = vector.load %arg9[%c32_1340, %c384_1341] : memref<64x432xbf16, #tpu.memory_space<vmem>>, vector<8x16xbf16>
    tpu.vector_store %arg9[%c32_1340, %c384_1341], %589 {strides = array<i32>} : memref<64x432xbf16, #tpu.memory_space<vmem>>, vector<8x16xbf16>,
    %c0_1342 = arith.constant 0 : index
    %c0_1343 = arith.constant 0 : index
    %c7_1344 = arith.constant 7 : index
    %c0_1345 = arith.constant 0 : index
    %c0_1346 = arith.constant 0 : index
    %591 = vector.load %arg4[%c0_1342, %c0_1343, %c7_1344, %c0_1345, %c0_1346] : memref<1x1x10x10x16xbf16, #tpu.memory_space<vmem>>, vector<1x1x1x8x16xbf16>
    %592 = vector.shape_cast %591 : vector<1x1x1x8x16xbf16> to vector<8x16xbf16>
    %c40_1347 = arith.constant 40 : index
    %c384_1348 = arith.constant 384 : index
    %593 = vector.load %arg9[%c40_1347, %c384_1348] : memref<64x432xbf16, #tpu.memory_space<vmem>>, vector<8x16xbf16>
    tpu.vector_store %arg9[%c40_1347, %c384_1348], %592 {strides = array<i32>} : memref<64x432xbf16, #tpu.memory_space<vmem>>, vector<8x16xbf16>,
    %c0_1349 = arith.constant 0 : index
    %c0_1350 = arith.constant 0 : index
    %c8_1351 = arith.constant 8 : index
    %c0_1352 = arith.constant 0 : index
    %c0_1353 = arith.constant 0 : index
    %594 = vector.load %arg4[%c0_1349, %c0_1350, %c8_1351, %c0_1352, %c0_1353] : memref<1x1x10x10x16xbf16, #tpu.memory_space<vmem>>, vector<1x1x1x8x16xbf16>
    %595 = vector.shape_cast %594 : vector<1x1x1x8x16xbf16> to vector<8x16xbf16>
    %c48_1354 = arith.constant 48 : index
    %c384_1355 = arith.constant 384 : index
    %596 = vector.load %arg9[%c48_1354, %c384_1355] : memref<64x432xbf16, #tpu.memory_space<vmem>>, vector<8x16xbf16>
    tpu.vector_store %arg9[%c48_1354, %c384_1355], %595 {strides = array<i32>} : memref<64x432xbf16, #tpu.memory_space<vmem>>, vector<8x16xbf16>,
    %c0_1356 = arith.constant 0 : index
    %c0_1357 = arith.constant 0 : index
    %c9_1358 = arith.constant 9 : index
    %c0_1359 = arith.constant 0 : index
    %c0_1360 = arith.constant 0 : index
    %597 = vector.load %arg4[%c0_1356, %c0_1357, %c9_1358, %c0_1359, %c0_1360] : memref<1x1x10x10x16xbf16, #tpu.memory_space<vmem>>, vector<1x1x1x8x16xbf16>
    %598 = vector.shape_cast %597 : vector<1x1x1x8x16xbf16> to vector<8x16xbf16>
    %c56_1361 = arith.constant 56 : index
    %c384_1362 = arith.constant 384 : index
    %599 = vector.load %arg9[%c56_1361, %c384_1362] : memref<64x432xbf16, #tpu.memory_space<vmem>>, vector<8x16xbf16>
    tpu.vector_store %arg9[%c56_1361, %c384_1362], %598 {strides = array<i32>} : memref<64x432xbf16, #tpu.memory_space<vmem>>, vector<8x16xbf16>,
    %c0_1363 = arith.constant 0 : index
    %c0_1364 = arith.constant 0 : index
    %c2_1365 = arith.constant 2 : index
    %c1_1366 = arith.constant 1 : index
    %c0_1367 = arith.constant 0 : index
    %600 = vector.load %arg4[%c0_1363, %c0_1364, %c2_1365, %c1_1366, %c0_1367] : memref<1x1x10x10x16xbf16, #tpu.memory_space<vmem>>, vector<1x1x1x8x16xbf16>
    %601 = vector.shape_cast %600 : vector<1x1x1x8x16xbf16> to vector<8x16xbf16>
    %c0_1368 = arith.constant 0 : index
    %c400 = arith.constant 400 : index
    %602 = vector.load %arg9[%c0_1368, %c400] : memref<64x432xbf16, #tpu.memory_space<vmem>>, vector<8x16xbf16>
    tpu.vector_store %arg9[%c0_1368, %c400], %601 {strides = array<i32>} : memref<64x432xbf16, #tpu.memory_space<vmem>>, vector<8x16xbf16>,
    %c0_1369 = arith.constant 0 : index
    %c0_1370 = arith.constant 0 : index
    %c3_1371 = arith.constant 3 : index
    %c1_1372 = arith.constant 1 : index
    %c0_1373 = arith.constant 0 : index
    %603 = vector.load %arg4[%c0_1369, %c0_1370, %c3_1371, %c1_1372, %c0_1373] : memref<1x1x10x10x16xbf16, #tpu.memory_space<vmem>>, vector<1x1x1x8x16xbf16>
    %604 = vector.shape_cast %603 : vector<1x1x1x8x16xbf16> to vector<8x16xbf16>
    %c8_1374 = arith.constant 8 : index
    %c400_1375 = arith.constant 400 : index
    %605 = vector.load %arg9[%c8_1374, %c400_1375] : memref<64x432xbf16, #tpu.memory_space<vmem>>, vector<8x16xbf16>
    tpu.vector_store %arg9[%c8_1374, %c400_1375], %604 {strides = array<i32>} : memref<64x432xbf16, #tpu.memory_space<vmem>>, vector<8x16xbf16>,
    %c0_1376 = arith.constant 0 : index
    %c0_1377 = arith.constant 0 : index
    %c4_1378 = arith.constant 4 : index
    %c1_1379 = arith.constant 1 : index
    %c0_1380 = arith.constant 0 : index
    %606 = vector.load %arg4[%c0_1376, %c0_1377, %c4_1378, %c1_1379, %c0_1380] : memref<1x1x10x10x16xbf16, #tpu.memory_space<vmem>>, vector<1x1x1x8x16xbf16>
    %607 = vector.shape_cast %606 : vector<1x1x1x8x16xbf16> to vector<8x16xbf16>
    %c16_1381 = arith.constant 16 : index
    %c400_1382 = arith.constant 400 : index
    %608 = vector.load %arg9[%c16_1381, %c400_1382] : memref<64x432xbf16, #tpu.memory_space<vmem>>, vector<8x16xbf16>
    tpu.vector_store %arg9[%c16_1381, %c400_1382], %607 {strides = array<i32>} : memref<64x432xbf16, #tpu.memory_space<vmem>>, vector<8x16xbf16>,
    %c0_1383 = arith.constant 0 : index
    %c0_1384 = arith.constant 0 : index
    %c5_1385 = arith.constant 5 : index
    %c1_1386 = arith.constant 1 : index
    %c0_1387 = arith.constant 0 : index
    %609 = vector.load %arg4[%c0_1383, %c0_1384, %c5_1385, %c1_1386, %c0_1387] : memref<1x1x10x10x16xbf16, #tpu.memory_space<vmem>>, vector<1x1x1x8x16xbf16>
    %610 = vector.shape_cast %609 : vector<1x1x1x8x16xbf16> to vector<8x16xbf16>
    %c24_1388 = arith.constant 24 : index
    %c400_1389 = arith.constant 400 : index
    %611 = vector.load %arg9[%c24_1388, %c400_1389] : memref<64x432xbf16, #tpu.memory_space<vmem>>, vector<8x16xbf16>
    tpu.vector_store %arg9[%c24_1388, %c400_1389], %610 {strides = array<i32>} : memref<64x432xbf16, #tpu.memory_space<vmem>>, vector<8x16xbf16>,
    %c0_1390 = arith.constant 0 : index
    %c0_1391 = arith.constant 0 : index
    %c6_1392 = arith.constant 6 : index
    %c1_1393 = arith.constant 1 : index
    %c0_1394 = arith.constant 0 : index
    %612 = vector.load %arg4[%c0_1390, %c0_1391, %c6_1392, %c1_1393, %c0_1394] : memref<1x1x10x10x16xbf16, #tpu.memory_space<vmem>>, vector<1x1x1x8x16xbf16>
    %613 = vector.shape_cast %612 : vector<1x1x1x8x16xbf16> to vector<8x16xbf16>
    %c32_1395 = arith.constant 32 : index
    %c400_1396 = arith.constant 400 : index
    %614 = vector.load %arg9[%c32_1395, %c400_1396] : memref<64x432xbf16, #tpu.memory_space<vmem>>, vector<8x16xbf16>
    tpu.vector_store %arg9[%c32_1395, %c400_1396], %613 {strides = array<i32>} : memref<64x432xbf16, #tpu.memory_space<vmem>>, vector<8x16xbf16>,
    %c0_1397 = arith.constant 0 : index
    %c0_1398 = arith.constant 0 : index
    %c7_1399 = arith.constant 7 : index
    %c1_1400 = arith.constant 1 : index
    %c0_1401 = arith.constant 0 : index
    %615 = vector.load %arg4[%c0_1397, %c0_1398, %c7_1399, %c1_1400, %c0_1401] : memref<1x1x10x10x16xbf16, #tpu.memory_space<vmem>>, vector<1x1x1x8x16xbf16>
    %616 = vector.shape_cast %615 : vector<1x1x1x8x16xbf16> to vector<8x16xbf16>
    %c40_1402 = arith.constant 40 : index
    %c400_1403 = arith.constant 400 : index
    %617 = vector.load %arg9[%c40_1402, %c400_1403] : memref<64x432xbf16, #tpu.memory_space<vmem>>, vector<8x16xbf16>
    tpu.vector_store %arg9[%c40_1402, %c400_1403], %616 {strides = array<i32>} : memref<64x432xbf16, #tpu.memory_space<vmem>>, vector<8x16xbf16>,
    %c0_1404 = arith.constant 0 : index
    %c0_1405 = arith.constant 0 : index
    %c8_1406 = arith.constant 8 : index
    %c1_1407 = arith.constant 1 : index
    %c0_1408 = arith.constant 0 : index
    %618 = vector.load %arg4[%c0_1404, %c0_1405, %c8_1406, %c1_1407, %c0_1408] : memref<1x1x10x10x16xbf16, #tpu.memory_space<vmem>>, vector<1x1x1x8x16xbf16>
    %619 = vector.shape_cast %618 : vector<1x1x1x8x16xbf16> to vector<8x16xbf16>
    %c48_1409 = arith.constant 48 : index
    %c400_1410 = arith.constant 400 : index
    %620 = vector.load %arg9[%c48_1409, %c400_1410] : memref<64x432xbf16, #tpu.memory_space<vmem>>, vector<8x16xbf16>
    tpu.vector_store %arg9[%c48_1409, %c400_1410], %619 {strides = array<i32>} : memref<64x432xbf16, #tpu.memory_space<vmem>>, vector<8x16xbf16>,
    %c0_1411 = arith.constant 0 : index
    %c0_1412 = arith.constant 0 : index
    %c9_1413 = arith.constant 9 : index
    %c1_1414 = arith.constant 1 : index
    %c0_1415 = arith.constant 0 : index
    %621 = vector.load %arg4[%c0_1411, %c0_1412, %c9_1413, %c1_1414, %c0_1415] : memref<1x1x10x10x16xbf16, #tpu.memory_space<vmem>>, vector<1x1x1x8x16xbf16>
    %622 = vector.shape_cast %621 : vector<1x1x1x8x16xbf16> to vector<8x16xbf16>
    %c56_1416 = arith.constant 56 : index
    %c400_1417 = arith.constant 400 : index
    %623 = vector.load %arg9[%c56_1416, %c400_1417] : memref<64x432xbf16, #tpu.memory_space<vmem>>, vector<8x16xbf16>
    tpu.vector_store %arg9[%c56_1416, %c400_1417], %622 {strides = array<i32>} : memref<64x432xbf16, #tpu.memory_space<vmem>>, vector<8x16xbf16>,
    %c0_1418 = arith.constant 0 : index
    %c0_1419 = arith.constant 0 : index
    %c2_1420 = arith.constant 2 : index
    %c2_1421 = arith.constant 2 : index
    %c0_1422 = arith.constant 0 : index
    %624 = vector.load %arg4[%c0_1418, %c0_1419, %c2_1420, %c2_1421, %c0_1422] : memref<1x1x10x10x16xbf16, #tpu.memory_space<vmem>>, vector<1x1x1x8x16xbf16>
    %625 = vector.shape_cast %624 : vector<1x1x1x8x16xbf16> to vector<8x16xbf16>
    %c0_1423 = arith.constant 0 : index
    %c416 = arith.constant 416 : index
    %626 = vector.load %arg9[%c0_1423, %c416] : memref<64x432xbf16, #tpu.memory_space<vmem>>, vector<8x16xbf16>
    tpu.vector_store %arg9[%c0_1423, %c416], %625 {strides = array<i32>} : memref<64x432xbf16, #tpu.memory_space<vmem>>, vector<8x16xbf16>,
    %c0_1424 = arith.constant 0 : index
    %c0_1425 = arith.constant 0 : index
    %c3_1426 = arith.constant 3 : index
    %c2_1427 = arith.constant 2 : index
    %c0_1428 = arith.constant 0 : index
    %627 = vector.load %arg4[%c0_1424, %c0_1425, %c3_1426, %c2_1427, %c0_1428] : memref<1x1x10x10x16xbf16, #tpu.memory_space<vmem>>, vector<1x1x1x8x16xbf16>
    %628 = vector.shape_cast %627 : vector<1x1x1x8x16xbf16> to vector<8x16xbf16>
    %c8_1429 = arith.constant 8 : index
    %c416_1430 = arith.constant 416 : index
    %629 = vector.load %arg9[%c8_1429, %c416_1430] : memref<64x432xbf16, #tpu.memory_space<vmem>>, vector<8x16xbf16>
    tpu.vector_store %arg9[%c8_1429, %c416_1430], %628 {strides = array<i32>} : memref<64x432xbf16, #tpu.memory_space<vmem>>, vector<8x16xbf16>,
    %c0_1431 = arith.constant 0 : index
    %c0_1432 = arith.constant 0 : index
    %c4_1433 = arith.constant 4 : index
    %c2_1434 = arith.constant 2 : index
    %c0_1435 = arith.constant 0 : index
    %630 = vector.load %arg4[%c0_1431, %c0_1432, %c4_1433, %c2_1434, %c0_1435] : memref<1x1x10x10x16xbf16, #tpu.memory_space<vmem>>, vector<1x1x1x8x16xbf16>
    %631 = vector.shape_cast %630 : vector<1x1x1x8x16xbf16> to vector<8x16xbf16>
    %c16_1436 = arith.constant 16 : index
    %c416_1437 = arith.constant 416 : index
    %632 = vector.load %arg9[%c16_1436, %c416_1437] : memref<64x432xbf16, #tpu.memory_space<vmem>>, vector<8x16xbf16>
    tpu.vector_store %arg9[%c16_1436, %c416_1437], %631 {strides = array<i32>} : memref<64x432xbf16, #tpu.memory_space<vmem>>, vector<8x16xbf16>,
    %c0_1438 = arith.constant 0 : index
    %c0_1439 = arith.constant 0 : index
    %c5_1440 = arith.constant 5 : index
    %c2_1441 = arith.constant 2 : index
    %c0_1442 = arith.constant 0 : index
    %633 = vector.load %arg4[%c0_1438, %c0_1439, %c5_1440, %c2_1441, %c0_1442] : memref<1x1x10x10x16xbf16, #tpu.memory_space<vmem>>, vector<1x1x1x8x16xbf16>
    %634 = vector.shape_cast %633 : vector<1x1x1x8x16xbf16> to vector<8x16xbf16>
    %c24_1443 = arith.constant 24 : index
    %c416_1444 = arith.constant 416 : index
    %635 = vector.load %arg9[%c24_1443, %c416_1444] : memref<64x432xbf16, #tpu.memory_space<vmem>>, vector<8x16xbf16>
    tpu.vector_store %arg9[%c24_1443, %c416_1444], %634 {strides = array<i32>} : memref<64x432xbf16, #tpu.memory_space<vmem>>, vector<8x16xbf16>,
    %c0_1445 = arith.constant 0 : index
    %c0_1446 = arith.constant 0 : index
    %c6_1447 = arith.constant 6 : index
    %c2_1448 = arith.constant 2 : index
    %c0_1449 = arith.constant 0 : index
    %636 = vector.load %arg4[%c0_1445, %c0_1446, %c6_1447, %c2_1448, %c0_1449] : memref<1x1x10x10x16xbf16, #tpu.memory_space<vmem>>, vector<1x1x1x8x16xbf16>
    %637 = vector.shape_cast %636 : vector<1x1x1x8x16xbf16> to vector<8x16xbf16>
    %c32_1450 = arith.constant 32 : index
    %c416_1451 = arith.constant 416 : index
    %638 = vector.load %arg9[%c32_1450, %c416_1451] : memref<64x432xbf16, #tpu.memory_space<vmem>>, vector<8x16xbf16>
    tpu.vector_store %arg9[%c32_1450, %c416_1451], %637 {strides = array<i32>} : memref<64x432xbf16, #tpu.memory_space<vmem>>, vector<8x16xbf16>,
    %c0_1452 = arith.constant 0 : index
    %c0_1453 = arith.constant 0 : index
    %c7_1454 = arith.constant 7 : index
    %c2_1455 = arith.constant 2 : index
    %c0_1456 = arith.constant 0 : index
    %639 = vector.load %arg4[%c0_1452, %c0_1453, %c7_1454, %c2_1455, %c0_1456] : memref<1x1x10x10x16xbf16, #tpu.memory_space<vmem>>, vector<1x1x1x8x16xbf16>
    %640 = vector.shape_cast %639 : vector<1x1x1x8x16xbf16> to vector<8x16xbf16>
    %c40_1457 = arith.constant 40 : index
    %c416_1458 = arith.constant 416 : index
    %641 = vector.load %arg9[%c40_1457, %c416_1458] : memref<64x432xbf16, #tpu.memory_space<vmem>>, vector<8x16xbf16>
    tpu.vector_store %arg9[%c40_1457, %c416_1458], %640 {strides = array<i32>} : memref<64x432xbf16, #tpu.memory_space<vmem>>, vector<8x16xbf16>,
    %c0_1459 = arith.constant 0 : index
    %c0_1460 = arith.constant 0 : index
    %c8_1461 = arith.constant 8 : index
    %c2_1462 = arith.constant 2 : index
    %c0_1463 = arith.constant 0 : index
    %642 = vector.load %arg4[%c0_1459, %c0_1460, %c8_1461, %c2_1462, %c0_1463] : memref<1x1x10x10x16xbf16, #tpu.memory_space<vmem>>, vector<1x1x1x8x16xbf16>
    %643 = vector.shape_cast %642 : vector<1x1x1x8x16xbf16> to vector<8x16xbf16>
    %c48_1464 = arith.constant 48 : index
    %c416_1465 = arith.constant 416 : index
    %644 = vector.load %arg9[%c48_1464, %c416_1465] : memref<64x432xbf16, #tpu.memory_space<vmem>>, vector<8x16xbf16>
    tpu.vector_store %arg9[%c48_1464, %c416_1465], %643 {strides = array<i32>} : memref<64x432xbf16, #tpu.memory_space<vmem>>, vector<8x16xbf16>,
    %c0_1466 = arith.constant 0 : index
    %c0_1467 = arith.constant 0 : index
    %c9_1468 = arith.constant 9 : index
    %c2_1469 = arith.constant 2 : index
    %c0_1470 = arith.constant 0 : index
    %645 = vector.load %arg4[%c0_1466, %c0_1467, %c9_1468, %c2_1469, %c0_1470] : memref<1x1x10x10x16xbf16, #tpu.memory_space<vmem>>, vector<1x1x1x8x16xbf16>
    %646 = vector.shape_cast %645 : vector<1x1x1x8x16xbf16> to vector<8x16xbf16>
    %c56_1471 = arith.constant 56 : index
    %c416_1472 = arith.constant 416 : index
    %647 = vector.load %arg9[%c56_1471, %c416_1472] : memref<64x432xbf16, #tpu.memory_space<vmem>>, vector<8x16xbf16>
    tpu.vector_store %arg9[%c56_1471, %c416_1472], %646 {strides = array<i32>} : memref<64x432xbf16, #tpu.memory_space<vmem>>, vector<8x16xbf16>,
    %c0_1473 = arith.constant 0 : index
    %c0_1474 = arith.constant 0 : index
    %648 = vector.load %arg9[%c0_1473, %c0_1474] : memref<64x432xbf16, #tpu.memory_space<vmem>>, vector<64x432xbf16>
    %c0_1475 = arith.constant 0 : index
    %c0_1476 = arith.constant 0 : index
    %649 = vector.load %arg5[%c0_1475, %c0_1476] : memref<432x32xbf16, #tpu.memory_space<vmem>>, vector<432x32xbf16>
    %cst = arith.constant dense<0.000000e+00> : vector<64x32xf32>
    %650 = tpu.matmul %648, %649, %cst {dimension_numbers = #tpu.dot_dimension_numbers<[1], [0], [0], [1], [0, 0, 1, 1], [], []>} : vector<64x432xbf16>, vector<432x32xbf16>, vector<64x32xf32> -> vector<64x32xf32>
    %c0_1477 = arith.constant 0 : index
    %c0_1478 = arith.constant 0 : index
    %651 = vector.load %arg6[%c0_1477, %c0_1478] : memref<1x32xf32, #tpu.memory_space<vmem>>, vector<1x32xf32>
    %652 = vector.broadcast %651 : vector<1x32xf32> to vector<64x32xf32>
    %653 = arith.addf %650, %652 : vector<64x32xf32>
    %cst_1479 = arith.constant 0.000000e+00 : f32
    %654 = vector.broadcast %cst_1479 : f32 to vector<64x32xf32>
    %655 = arith.maximumf %653, %654 : vector<64x32xf32>
    %c0_1480 = arith.constant 0 : index
    %c0_1481 = arith.constant 0 : index
    %c0_1482 = arith.constant 0 : index
    %c0_1483 = arith.constant 0 : index
    %656 = vector.load %arg7[%c0_1480, %c0_1481, %c0_1482, %c0_1483] : memref<1x1x64x1xf32, #tpu.memory_space<vmem>>, vector<1x1x64x1xf32>
    %657 = vector.shape_cast %656 : vector<1x1x64x1xf32> to vector<64x1xf32>
    %658 = vector.broadcast %657 : vector<64x1xf32> to vector<64x32xf32>
    %659 = arith.mulf %655, %658 : vector<64x32xf32>
    %660 = arith.truncf %659 : vector<64x32xf32> to vector<64x32xbf16>
    %c0_1484 = arith.constant 0 : index
    %c0_1485 = arith.constant 0 : index
    %c0_1486 = arith.constant 0 : index
    %c0_1487 = arith.constant 0 : index
    %661 = vector.load %arg8[%c0_1484, %c0_1485, %c0_1486, %c0_1487] : memref<1x1x64x32xbf16, #tpu.memory_space<vmem>>, vector<1x1x64x32xbf16>
    %662 = vector.shape_cast %661 : vector<1x1x64x32xbf16> to vector<64x32xbf16>
    %663 = vector.shape_cast %660 : vector<64x32xbf16> to vector<1x1x64x32xbf16>
    tpu.vector_store %arg8[%c0_1484, %c0_1485, %c0_1486, %c0_1487], %663 {strides = array<i32>} : memref<1x1x64x32xbf16, #tpu.memory_space<vmem>>, vector<1x1x64x32xbf16>,
    return
  }
  func.func @transform_0(%arg0: i32, %arg1: i32) -> (i32, i32, i32, i32, i32) {
    %c1_i32 = arith.constant 1 : i32
    %0 = arith.muli %arg1, %c1_i32 : i32
    %c0_i32 = arith.constant 0 : i32
    %1 = arith.addi %0, %c0_i32 : i32
    %c0_i32_0 = arith.constant 0 : i32
    %c0_i32_1 = arith.constant 0 : i32
    %c0_i32_2 = arith.constant 0 : i32
    %c0_i32_3 = arith.constant 0 : i32
    return %arg0, %1, %c0_i32_0, %c0_i32_1, %c0_i32_2 : i32, i32, i32, i32, i32
  }
  func.func @transform_1(%arg0: i32, %arg1: i32) -> (i32, i32, i32, i32, i32) {
    %c1_i32 = arith.constant 1 : i32
    %0 = arith.muli %arg1, %c1_i32 : i32
    %c1_i32_0 = arith.constant 1 : i32
    %1 = arith.addi %0, %c1_i32_0 : i32
    %c0_i32 = arith.constant 0 : i32
    %c0_i32_1 = arith.constant 0 : i32
    %c0_i32_2 = arith.constant 0 : i32
    %c0_i32_3 = arith.constant 0 : i32
    return %arg0, %1, %c0_i32, %c0_i32_1, %c0_i32_2 : i32, i32, i32, i32, i32
  }
  func.func @transform_2(%arg0: i32, %arg1: i32) -> (i32, i32, i32, i32, i32) {
    %c1_i32 = arith.constant 1 : i32
    %0 = arith.muli %arg1, %c1_i32 : i32
    %c2_i32 = arith.constant 2 : i32
    %1 = arith.addi %0, %c2_i32 : i32
    %c0_i32 = arith.constant 0 : i32
    %c0_i32_0 = arith.constant 0 : i32
    %c0_i32_1 = arith.constant 0 : i32
    %c0_i32_2 = arith.constant 0 : i32
    return %arg0, %1, %c0_i32, %c0_i32_0, %c0_i32_1 : i32, i32, i32, i32, i32
  }
  func.func @transform_3(%arg0: i32, %arg1: i32) -> (i32, i32) {
    %c0_i32 = arith.constant 0 : i32
    %c0_i32_0 = arith.constant 0 : i32
    %c0_i32_1 = arith.constant 0 : i32
    return %c0_i32, %c0_i32_0 : i32, i32
  }
  func.func @transform_4(%arg0: i32, %arg1: i32) -> (i32, i32) {
    %c0_i32 = arith.constant 0 : i32
    %c0_i32_0 = arith.constant 0 : i32
    %c0_i32_1 = arith.constant 0 : i32
    return %c0_i32, %c0_i32_0 : i32, i32
  }
  func.func @transform_5(%arg0: i32, %arg1: i32) -> (i32, i32, i32, i32) {
    %c0_i32 = arith.constant 0 : i32
    %c0_i32_0 = arith.constant 0 : i32
    %c0_i32_1 = arith.constant 0 : i32
    return %arg0, %arg1, %c0_i32, %c0_i32_0 : i32, i32, i32, i32
  }
  func.func @transform_6(%arg0: i32, %arg1: i32) -> (i32, i32, i32, i32) {
    %c0_i32 = arith.constant 0 : i32
    %c0_i32_0 = arith.constant 0 : i32
    %c0_i32_1 = arith.constant 0 : i32
    return %arg0, %arg1, %c0_i32, %c0_i32_0 : i32, i32, i32, i32
  }
}

</mosaic_0001>

<llo_original>
// kernel: tpu_custom_call.1
$region0: #{tpu_custom_call.1}
  #allocation0 [shape = 'u32[]', space=smem, size = 0x4, offset = 0x4, fixed_abs, tag = 'smem constant byte address 0x4 - core index']
  #allocation1 [shape = 'u32[72,128]{1,0:T(1,128)}', space=vmem, size = 0x9000, scoped, tag = 'internal scratch']
  #allocation2 [shape = 'bf16[64,432]{1,0:T(8,128)(2,1)}', space=vmem, size = 0x10000, scoped, tag = 'scratch operand']
  %s0 = inlined_call_operand.vmem [shape: bf16[2,8,10,10,16], index: 0, kind: input, shape index: {}]
  %s1 = inlined_call_operand.vmem [shape: bf16[2,8,10,10,16], index: 1, kind: input, shape index: {}]
  %s2 = inlined_call_operand.vmem [shape: bf16[2,8,10,10,16], index: 2, kind: input, shape index: {}]
  %s3 = inlined_call_operand.vmem [shape: bf16[432,32], index: 3, kind: input, shape index: {}]
  %s4 = inlined_call_operand.vmem [shape: f32[1,32], index: 4, kind: input, shape index: {}]
  %s5 = inlined_call_operand.vmem [shape: f32[2,6,64,1], index: 5, kind: input, shape index: {}]
  %s6 = inlined_call_operand.vmem [shape: bf16[2,6,64,32], index: 6, kind: output, shape index: {}]
  %s7 = sld [smem:[#allocation0]]
  $region57: #{tpu_custom_call.1} parent=0
    _
  %s9 = ssub.s32 1, %s7
  %s10 = scalar_select 0, %s9, %s7
  loop: start=0, step=1, limit=14
  $region2: #{tpu_custom_call.1} parent=0 // loop_pre_header
    _
  $region3: #{tpu_custom_call.1} parent=0 // loop_header
    %s12 = sphi 0, %s16
    %p13 = scmp.ge.s32.totalorder %s12, 14
    %s19 = sphi 0, %s31
    %s20 = sphi 0, %s27
    %s21 = sphi 0, %s19
    %s22 = sphi 0, %s20
    %s23 = sphi 0, %s21
    %s24 = sphi 0, %s22
    %s36 = sphi 0, %s38
    %s39 = sphi 0, %s36
    %s40 = sphi 0, %s39
    %s56 = sphi 0, %s40
    %s66 = sphi 0, %s68
    %s69 = sphi 0, %s66
    %s70 = sphi 0, %s69
    %s86 = sphi 0, %s70
    %s96 = sphi 0, %s98
    %s99 = sphi 0, %s96
    %s100 = sphi 0, %s99
    %s116 = sphi 0, %s100
    %s120 = sphi 0, %s120
    %s122 = sphi 0, %s120
    %s123 = sphi 0, %s122
    %s137 = sphi 0, %s123
    %s141 = sphi 0, %s141
    %s143 = sphi 0, %s141
    %s144 = sphi 0, %s143
    %s158 = sphi 0, %s144
    %s166 = sphi 0, %s168
    %s169 = sphi 0, %s166
    %s170 = sphi 0, %s169
    %s186 = sphi 0, %s170
    %s194 = sphi 0, %s196
    %s197 = sphi 0, %s194
    %s198 = sphi 0, %s197
    %s214 = sphi 0, %s198
  $region4: #{tpu_custom_call.1} parent=0 // loop_header_branch
    %15 = sbr.rel (%p13) target = $region8
  $region5: #{tpu_custom_call.1} parent=0 // loop_body
    %s17 = ssub.s32 %s12, 1
    %s18 = ssub.s32 %s12, 2
    %s25 = sadd.s32 1, %s20
    %p26 = scmp.ge.s32.totalorder %s25, 6
    %s27 = scalar_select %p26, 0, %s25
    %s28 = sadd.s32 1, %s19
    %s29 = scalar_select %p26, %s28, %s19
    %p30 = scmp.ge.s32.totalorder %s29, 2
    %s31 = scalar_select %p30, 0, %s29
    %s32 = ssub.s32 %s19, %s31
    %s33 = ssub.s32 %s20, %s27
    %s34 = sor.u32 %s32, %s33
    %p35 = scmp.eq.s32.totalorder %s34, 0
    %s37 = sadd.s32 %s36, 1
    %s38 = scalar_select %p35, %s36, %s37
    %p41 = pneg %p35
    %p42 = scmp.eq.s32.totalorder %s12, 11
    %p43 = por %p41, %p42
    %p44 = scmp.ne.s32.totalorder %s36, %s39
    %p45 = scmp.eq.s32.totalorder %s12, 0
    %p46 = por %p44, %p45
    %p47 = scmp.ne.s32.totalorder %s36, %s39
    %p48 = scmp.eq.s32.totalorder %s17, 11
    %p49 = por %p47, %p48
    %p50 = scmp.ne.s32.totalorder %s39, %s40
    %p51 = scmp.eq.s32.totalorder %s17, 0
    %p52 = por %p50, %p51
    %p53 = scmp.ne.s32.totalorder %s39, %s40
    %p54 = scmp.eq.s32.totalorder %s18, 11
    %p55 = por %p53, %p54
    %p57 = scmp.ne.s32.totalorder %s40, %s56
    %p58 = scmp.eq.s32.totalorder %s18, 0
    %p59 = por %p57, %p58
    %s60 = sadd.s32 %s20, 1
    %s61 = sadd.s32 %s27, 1
    %s62 = ssub.s32 %s19, %s31
    %s63 = ssub.s32 %s60, %s61
    %s64 = sor.u32 %s62, %s63
    %p65 = scmp.eq.s32.totalorder %s64, 0
    %s67 = sadd.s32 %s66, 1
    %s68 = scalar_select %p65, %s66, %s67
    %p71 = pneg %p65
    %p72 = scmp.eq.s32.totalorder %s12, 11
    %p73 = por %p71, %p72
    %p74 = scmp.ne.s32.totalorder %s66, %s69
    %p75 = scmp.eq.s32.totalorder %s12, 0
    %p76 = por %p74, %p75
    %p77 = scmp.ne.s32.totalorder %s66, %s69
    %p78 = scmp.eq.s32.totalorder %s17, 11
    %p79 = por %p77, %p78
    %p80 = scmp.ne.s32.totalorder %s69, %s70
    %p81 = scmp.eq.s32.totalorder %s17, 0
    %p82 = por %p80, %p81
    %p83 = scmp.ne.s32.totalorder %s69, %s70
    %p84 = scmp.eq.s32.totalorder %s18, 11
    %p85 = por %p83, %p84
    %p87 = scmp.ne.s32.totalorder %s70, %s86
    %p88 = scmp.eq.s32.totalorder %s18, 0
    %p89 = por %p87, %p88
    %s90 = sadd.s32 %s20, 2
    %s91 = sadd.s32 %s27, 2
    %s92 = ssub.s32 %s19, %s31
    %s93 = ssub.s32 %s90, %s91
    %s94 = sor.u32 %s92, %s93
    %p95 = scmp.eq.s32.totalorder %s94, 0
    %s97 = sadd.s32 %s96, 1
    %s98 = scalar_select %p95, %s96, %s97
    %p101 = pneg %p95
    %p102 = scmp.eq.s32.totalorder %s12, 11
    %p103 = por %p101, %p102
    %p104 = scmp.ne.s32.totalorder %s96, %s99
    %p105 = scmp.eq.s32.totalorder %s12, 0
    %p106 = por %p104, %p105
    %p107 = scmp.ne.s32.totalorder %s96, %s99
    %p108 = scmp.eq.s32.totalorder %s17, 11
    %p109 = por %p107, %p108
    %p110 = scmp.ne.s32.totalorder %s99, %s100
    %p111 = scmp.eq.s32.totalorder %s17, 0
    %p112 = por %p110, %p111
    %p113 = scmp.ne.s32.totalorder %s99, %s100
    %p114 = scmp.eq.s32.totalorder %s18, 11
    %p115 = por %p113, %p114
    %p117 = scmp.ne.s32.totalorder %s100, %s116
    %p118 = scmp.eq.s32.totalorder %s18, 0
    %p119 = por %p117, %p118
    %s121 = sadd.s32 %s120, 1
    %p124 = scmp.eq.s32.totalorder %s12, 11
    %p125 = scmp.ne.s32.totalorder %s120, %s122
    %p126 = scmp.eq.s32.totalorder %s12, 0
    %p127 = por %p125, %p126
    %p128 = scmp.ne.s32.totalorder %s120, %s122
    %p129 = scmp.eq.s32.totalorder %s17, 11
    %p130 = por %p128, %p129
    %p131 = scmp.ne.s32.totalorder %s122, %s123
    %p132 = scmp.eq.s32.totalorder %s17, 0
    %p133 = por %p131, %p132
    %p134 = scmp.ne.s32.totalorder %s122, %s123
    %p135 = scmp.eq.s32.totalorder %s18, 11
    %p136 = por %p134, %p135
    %p138 = scmp.ne.s32.totalorder %s123, %s137
    %p139 = scmp.eq.s32.totalorder %s18, 0
    %p140 = por %p138, %p139
    %s142 = sadd.s32 %s141, 1
    %p145 = scmp.eq.s32.totalorder %s12, 11
    %p146 = scmp.ne.s32.totalorder %s141, %s143
    %p147 = scmp.eq.s32.totalorder %s12, 0
    %p148 = por %p146, %p147
    %p149 = scmp.ne.s32.totalorder %s141, %s143
    %p150 = scmp.eq.s32.totalorder %s17, 11
    %p151 = por %p149, %p150
    %p152 = scmp.ne.s32.totalorder %s143, %s144
    %p153 = scmp.eq.s32.totalorder %s17, 0
    %p154 = por %p152, %p153
    %p155 = scmp.ne.s32.totalorder %s143, %s144
    %p156 = scmp.eq.s32.totalorder %s18, 11
    %p157 = por %p155, %p156
    %p159 = scmp.ne.s32.totalorder %s144, %s158
    %p160 = scmp.eq.s32.totalorder %s18, 0
    %p161 = por %p159, %p160
    %s162 = ssub.s32 %s19, %s31
    %s163 = ssub.s32 %s20, %s27
    %s164 = sor.u32 %s162, %s163
    %p165 = scmp.eq.s32.totalorder %s164, 0
    %s167 = sadd.s32 %s166, 1
    %s168 = scalar_select %p165, %s166, %s167
    %p171 = pneg %p165
    %p172 = scmp.eq.s32.totalorder %s12, 11
    %p173 = por %p171, %p172
    %p174 = scmp.ne.s32.totalorder %s166, %s169
    %p175 = scmp.eq.s32.totalorder %s12, 0
    %p176 = por %p174, %p175
    %p177 = scmp.ne.s32.totalorder %s166, %s169
    %p178 = scmp.eq.s32.totalorder %s17, 11
    %p179 = por %p177, %p178
    %p180 = scmp.ne.s32.totalorder %s169, %s170
    %p181 = scmp.eq.s32.totalorder %s17, 0
    %p182 = por %p180, %p181
    %p183 = scmp.ne.s32.totalorder %s169, %s170
    %p184 = scmp.eq.s32.totalorder %s18, 11
    %p185 = por %p183, %p184
    %p187 = scmp.ne.s32.totalorder %s170, %s186
    %p188 = scmp.eq.s32.totalorder %s18, 0
    %p189 = por %p187, %p188
    %s190 = ssub.s32 %s19, %s31
    %s191 = ssub.s32 %s20, %s27
    %s192 = sor.u32 %s190, %s191
    %p193 = scmp.eq.s32.totalorder %s192, 0
    %s195 = sadd.s32 %s194, 1
    %s196 = scalar_select %p193, %s194, %s195
    %p199 = pneg %p193
    %p200 = scmp.eq.s32.totalorder %s12, 11
    %p201 = por %p199, %p200
    %p202 = scmp.ne.s32.totalorder %s194, %s197
    %p203 = scmp.eq.s32.totalorder %s12, 0
    %p204 = por %p202, %p203
    %p205 = scmp.ne.s32.totalorder %s194, %s197
    %p206 = scmp.eq.s32.totalorder %s17, 11
    %p207 = por %p205, %p206
    %p208 = scmp.ne.s32.totalorder %s197, %s198
    %p209 = scmp.eq.s32.totalorder %s17, 0
    %p210 = por %p208, %p209
    %p211 = scmp.ne.s32.totalorder %s197, %s198
    %p212 = scmp.eq.s32.totalorder %s18, 11
    %p213 = por %p211, %p212
    %p215 = scmp.ne.s32.totalorder %s198, %s214
    %p216 = scmp.eq.s32.totalorder %s18, 0
    %p217 = por %p215, %p216
    %p218 = scmp.le.s32.totalorder 1, %s12
    %p219 = scmp.lt.s32.totalorder %s12, 13
    %p220 = pnand %p218, %p219
    %p221 = pneg %p220
    // Predicated region
    $region9: #{tpu_custom_call.1} parent=5 // pred_check
      _
    $region10: #{tpu_custom_call.1} parent=5 // pred_check_branch
      %223 = sbr.rel (%p220) target = $region12
    $region11: #{tpu_custom_call.1} parent=5 // pred_region
      %s224 = ssub.s32 %s12, 1
      // Predicated region
      $region13: #{tpu_custom_call.1} parent=11 // pred_check
        %p225 = pneg %p133
      $region14: #{tpu_custom_call.1} parent=11 // pred_check_branch
        %227 = sbr.rel (%p225) target = $region16
      $region15: #{tpu_custom_call.1} parent=11 // pred_region
        _
      $region16: #{tpu_custom_call.1} parent=11 // pred_fallthru
        _
      // Predicated region
      $region17: #{tpu_custom_call.1} parent=11 // pred_check
        %p228 = pneg %p154
      $region18: #{tpu_custom_call.1} parent=11 // pred_check_branch
        %230 = sbr.rel (%p228) target = $region20
      $region19: #{tpu_custom_call.1} parent=11 // pred_region
        _
      $region20: #{tpu_custom_call.1} parent=11 // pred_fallthru
        _
    $region12: #{tpu_custom_call.1} parent=5 // pred_fallthru
      _
    %p231 = scmp.lt.s32.totalorder %s12, 12
    // Predicated region
    $region21: #{tpu_custom_call.1} parent=5 // pred_check
      %p232 = pneg %p231
    $region22: #{tpu_custom_call.1} parent=5 // pred_check_branch
      %234 = sbr.rel (%p232) target = $region24
    $region23: #{tpu_custom_call.1} parent=5 // pred_region
      // Predicated region
      $region25: #{tpu_custom_call.1} parent=23 // pred_check
        %p235 = pneg %p46
      $region26: #{tpu_custom_call.1} parent=23 // pred_check_branch
        %237 = sbr.rel (%p235) target = $region28
      $region27: #{tpu_custom_call.1} parent=23 // pred_region
        %p238 = scmp.lt.s32.totalorder %s19, 1
        %s239 = scalar_select %p238, %s19, 1
        %p240 = scmp.lt.s32.totalorder %s20, 7
        %s241 = scalar_select %p240, %s20, 7
        %s242 = smul.addr %s241, 20
        %s243 = smul.addr %s239, 160
        %s244 = sadd.s32 %s242, %s243
        %s245 = smul.addr %s244, 4
        %s246 = scalar_lea.vmem %s0, %s245
      $region28: #{tpu_custom_call.1} parent=23 // pred_fallthru
        _
      // Predicated region
      $region29: #{tpu_custom_call.1} parent=23 // pred_check
        %p247 = pneg %p76
      $region30: #{tpu_custom_call.1} parent=23 // pred_check_branch
        %249 = sbr.rel (%p247) target = $region32
      $region31: #{tpu_custom_call.1} parent=23 // pred_region
        %s250 = sadd.s32 %s20, 1
        %p251 = scmp.lt.s32.totalorder %s19, 1
        %s252 = scalar_select %p251, %s19, 1
        %p253 = scmp.lt.s32.totalorder %s250, 7
        %s254 = scalar_select %p253, %s250, 7
        %s255 = smul.addr %s254, 20
        %s256 = smul.addr %s252, 160
        %s257 = sadd.s32 %s255, %s256
        %s258 = smul.addr %s257, 4
        %s259 = scalar_lea.vmem %s1, %s258
        %s260 = sadd.s32 %s20, 1
      $region32: #{tpu_custom_call.1} parent=23 // pred_fallthru
        _
      // Predicated region
      $region33: #{tpu_custom_call.1} parent=23 // pred_check
        %p261 = pneg %p106
      $region34: #{tpu_custom_call.1} parent=23 // pred_check_branch
        %263 = sbr.rel (%p261) target = $region36
      $region35: #{tpu_custom_call.1} parent=23 // pred_region
        %s264 = sadd.s32 %s20, 2
        %p265 = scmp.lt.s32.totalorder %s19, 1
        %s266 = scalar_select %p265, %s19, 1
        %p267 = scmp.lt.s32.totalorder %s264, 7
        %s268 = scalar_select %p267, %s264, 7
        %s269 = smul.addr %s268, 20
        %s270 = smul.addr %s266, 160
        %s271 = sadd.s32 %s269, %s270
        %s272 = smul.addr %s271, 4
        %s273 = scalar_lea.vmem %s2, %s272
        %s274 = sadd.s32 %s20, 2
      $region36: #{tpu_custom_call.1} parent=23 // pred_fallthru
        _
      // Predicated region
      $region37: #{tpu_custom_call.1} parent=23 // pred_check
        %p275 = pneg %p176
      $region38: #{tpu_custom_call.1} parent=23 // pred_check_branch
        %277 = sbr.rel (%p275) target = $region40
      $region39: #{tpu_custom_call.1} parent=23 // pred_region
        %p278 = scmp.lt.s32.totalorder %s19, 1
        %s279 = scalar_select %p278, %s19, 1
        %p280 = scmp.lt.s32.totalorder %s20, 5
        %s281 = scalar_select %p280, %s20, 5
        %s282 = smul.addr %s281, 8
        %s283 = smul.addr %s279, 48
        %s284 = sadd.s32 %s282, %s283
        %s285 = smul.addr %s284, 8
        %s286 = scalar_lea.vmem %s5, %s285
      $region40: #{tpu_custom_call.1} parent=23 // pred_fallthru
        _
    $region24: #{tpu_custom_call.1} parent=5 // pred_fallthru
      _
    %p287 = scmp.le.s32.totalorder 1, %s12
    %p288 = scmp.lt.s32.totalorder %s12, 13
    %p289 = pnand %p287, %p288
    %p290 = pneg %p289
    // Predicated region
    $region41: #{tpu_custom_call.1} parent=5 // pred_check
      _
    $region42: #{tpu_custom_call.1} parent=5 // pred_check_branch
      %292 = sbr.rel (%p289) target = $region44
    $region43: #{tpu_custom_call.1} parent=5 // pred_region
      %s293 = ssub.s32 %s12, 1
      %p294 = scmp.lt.s32.totalorder %s21, 1
      %s295 = scalar_select %p294, %s21, 1
      %p296 = scmp.lt.s32.totalorder %s22, 7
      %s297 = scalar_select %p296, %s22, 7
      %s298 = smul.addr %s297, 20
      %s299 = smul.addr %s295, 160
      %s300 = sadd.s32 %s298, %s299
      %s301 = smul.addr %s300, 4
      %s302 = scalar_lea.vmem %s0, %s301
      %p303 = pneg %p52
      %p304 = pneg %p49
      %s305 = sadd.s32 %s22, 1
      %p306 = scmp.lt.s32.totalorder %s21, 1
      %s307 = scalar_select %p306, %s21, 1
      %p308 = scmp.lt.s32.totalorder %s305, 7
      %s309 = scalar_select %p308, %s305, 7
      %s310 = smul.addr %s309, 20
      %s311 = smul.addr %s307, 160
      %s312 = sadd.s32 %s310, %s311
      %s313 = smul.addr %s312, 4
      %s314 = scalar_lea.vmem %s1, %s313
      %p315 = pneg %p82
      %p316 = pneg %p79
      %s317 = sadd.s32 %s22, 2
      %p318 = scmp.lt.s32.totalorder %s21, 1
      %s319 = scalar_select %p318, %s21, 1
      %p320 = scmp.lt.s32.totalorder %s317, 7
      %s321 = scalar_select %p320, %s317, 7
      %s322 = smul.addr %s321, 20
      %s323 = smul.addr %s319, 160
      %s324 = sadd.s32 %s322, %s323
      %s325 = smul.addr %s324, 4
      %s326 = scalar_lea.vmem %s2, %s325
      %p327 = pneg %p112
      %p328 = pneg %p109
      %p329 = pneg %p133
      %p330 = pneg %p130
      %p331 = pneg %p154
      %p332 = pneg %p151
      %p333 = scmp.lt.s32.totalorder %s21, 1
      %s334 = scalar_select %p333, %s21, 1
      %p335 = scmp.lt.s32.totalorder %s22, 5
      %s336 = scalar_select %p335, %s22, 5
      %s337 = smul.addr %s336, 8
      %s338 = smul.addr %s334, 48
      %s339 = sadd.s32 %s337, %s338
      %s340 = smul.addr %s339, 8
      %s341 = scalar_lea.vmem %s5, %s340
      %p342 = pneg %p182
      %p343 = pneg %p179
      %p344 = pneg %p210
      %p345 = pneg %p207
      %p346 = scmp.lt.s32.totalorder %s21, 1
      %s347 = scalar_select %p346, %s21, 1
      %p348 = scmp.lt.s32.totalorder %s22, 5
      %s349 = scalar_select %p348, %s22, 5
      %s350 = smul.addr %s349, 8
      %s351 = smul.addr %s347, 48
      %s352 = sadd.s32 %s350, %s351
      %s353 = smul.addr %s352, 4
      %s354 = scalar_lea.vmem %s6, %s353
      %p355 = scmp.lt.s32.totalorder %s21, 1
      %s356 = scalar_select %p355, %s21, 1
      %p357 = scmp.lt.s32.totalorder %s22, 7
      %s358 = scalar_select %p357, %s22, 7
      %s359 = smul.addr %s358, 20
      %s360 = smul.addr %s356, 160
      %s361 = sadd.s32 %s359, %s360
      %s362 = smul.addr %s361, 4
      %s363 = scalar_lea.vmem %s0, %s362
      %s364 = sadd.s32 %s22, 1
      %p365 = scmp.lt.s32.totalorder %s21, 1
      %s366 = scalar_select %p365, %s21, 1
      %p367 = scmp.lt.s32.totalorder %s364, 7
      %s368 = scalar_select %p367, %s364, 7
      %s369 = smul.addr %s368, 20
      %s370 = smul.addr %s366, 160
      %s371 = sadd.s32 %s369, %s370
      %s372 = smul.addr %s371, 4
      %s373 = scalar_lea.vmem %s1, %s372
      %s374 = sadd.s32 %s22, 1
      %s375 = sadd.s32 %s22, 2
      %p376 = scmp.lt.s32.totalorder %s21, 1
      %s377 = scalar_select %p376, %s21, 1
      %p378 = scmp.lt.s32.totalorder %s375, 7
      %s379 = scalar_select %p378, %s375, 7
      %s380 = smul.addr %s379, 20
      %s381 = smul.addr %s377, 160
      %s382 = sadd.s32 %s380, %s381
      %s383 = smul.addr %s382, 4
      %s384 = scalar_lea.vmem %s2, %s383
      %s385 = sadd.s32 %s22, 2
      %p386 = scmp.lt.s32.totalorder %s21, 1
      %s387 = scalar_select %p386, %s21, 1
      %p388 = scmp.lt.s32.totalorder %s22, 5
      %s389 = scalar_select %p388, %s22, 5
      %s390 = smul.addr %s389, 8
      %s391 = smul.addr %s387, 48
      %s392 = sadd.s32 %s390, %s391
      %s393 = smul.addr %s392, 8
      %s394 = scalar_lea.vmem %s5, %s393
      %p395 = scmp.lt.s32.totalorder %s21, 1
      %s396 = scalar_select %p395, %s21, 1
      %p397 = scmp.lt.s32.totalorder %s22, 5
      %s398 = scalar_select %p397, %s22, 5
      %s399 = smul.addr %s398, 8
      %s400 = smul.addr %s396, 48
      %s401 = sadd.s32 %s399, %s400
      %s402 = smul.addr %s401, 4
      %s403 = scalar_lea.vmem %s6, %s402
      %v405 = vld [vmem:[%s363] sm:$0xf]
      %vm406 = vcmask 125952
      %407 = vst.msk [vmem:[#allocation2] sm:$0xf] %vm406, %v405
      %s408 = scalar_lea.vmem %s363, 8
      %v409 = vld [vmem:[%s408] sm:$0xf]
      %410 = vst.msk [vmem:[#allocation2 + $0x10] sm:$0xf] %vm406, %v409
      %s411 = scalar_lea.vmem %s363, 16
      %v412 = vld [vmem:[%s411] sm:$0xf]
      %413 = vst.msk [vmem:[#allocation2 + $0x20] sm:$0xf] %vm406, %v412
      %s414 = scalar_lea.vmem %s363, 24
      %v415 = vld [vmem:[%s414] sm:$0xf]
      %416 = vst.msk [vmem:[#allocation2 + $0x30] sm:$0xf] %vm406, %v415
      %s417 = scalar_lea.vmem %s363, 32
      %v418 = vld [vmem:[%s417] sm:$0xf]
      %419 = vst.msk [vmem:[#allocation2 + $0x40] sm:$0xf] %vm406, %v418
      %s420 = scalar_lea.vmem %s363, 40
      %v421 = vld [vmem:[%s420] sm:$0xf]
      %422 = vst.msk [vmem:[#allocation2 + $0x50] sm:$0xf] %vm406, %v421
      %s423 = scalar_lea.vmem %s363, 48
      %v424 = vld [vmem:[%s423] sm:$0xf]
      %425 = vst.msk [vmem:[#allocation2 + $0x60] sm:$0xf] %vm406, %v424
      %s426 = scalar_lea.vmem %s363, 56
      %v427 = vld [vmem:[%s426] sm:$0xf]
      %428 = vst.msk [vmem:[#allocation2 + $0x70] sm:$0xf] %vm406, %v427
      %v429 = vld [vmem:[%s363] sm:$0xf]
      %v430 = vld [vmem:[%s363 + $0x4] sm:$0x1]
      %vm431 = vsmask.f32 3328
      %vm432 = vsmask.f32 7440
      %vm433 = vmor %vm431, %vm432
      %v435 = vshrl.u32 %v429, 16
      %v437 = vrot.slane %v435, 4
      %v438 = vshll.u32 %v429, 16
      %v440 = vrot.slane %v438, 5
      %v441 = vor.u32 %v437, %v440
      %v442 = vrot.slane %v441, 4
      %v444 = vshll.u32 %v430, 16
      %v446 = vrot.slane %v444, 5
      %v447 = vsel %vm433, %v442, %v446
      %448 = vrot.lane.b32.xlu0 %v447, 16
      %v449 = vpop.permute.xlu0 %448
      %vm451 = vcmask 257152
      %452 = vst.msk [vmem:[#allocation2] sm:$0xf] %vm451, %v449
      %v453 = vld [vmem:[%s408] sm:$0xf]
      %v454 = vld [vmem:[%s408 + $0x4] sm:$0x1]
      %v456 = vshrl.u32 %v453, 16
      %v458 = vrot.slane %v456, 4
      %v459 = vshll.u32 %v453, 16
      %v461 = vrot.slane %v459, 5
      %v462 = vor.u32 %v458, %v461
      %v463 = vrot.slane %v462, 4
      %v465 = vshll.u32 %v454, 16
      %v467 = vrot.slane %v465, 5
      %v468 = vsel %vm433, %v463, %v467
      %469 = vrot.lane.b32.xlu0 %v468, 16
      %v470 = vpop.permute.xlu0 %469
      %472 = vst.msk [vmem:[#allocation2 + $0x10] sm:$0xf] %vm451, %v470
      %v473 = vld [vmem:[%s411] sm:$0xf]
      %v474 = vld [vmem:[%s411 + $0x4] sm:$0x1]
      %v476 = vshrl.u32 %v473, 16
      %v478 = vrot.slane %v476, 4
      %v479 = vshll.u32 %v473, 16
      %v481 = vrot.slane %v479, 5
      %v482 = vor.u32 %v478, %v481
      %v483 = vrot.slane %v482, 4
      %v485 = vshll.u32 %v474, 16
      %v487 = vrot.slane %v485, 5
      %v488 = vsel %vm433, %v483, %v487
      %489 = vrot.lane.b32.xlu0 %v488, 16
      %v490 = vpop.permute.xlu0 %489
      %492 = vst.msk [vmem:[#allocation2 + $0x20] sm:$0xf] %vm451, %v490
      %v493 = vld [vmem:[%s414] sm:$0xf]
      %v494 = vld [vmem:[%s414 + $0x4] sm:$0x1]
      %v496 = vshrl.u32 %v493, 16
      %v498 = vrot.slane %v496, 4
      %v499 = vshll.u32 %v493, 16
      %v501 = vrot.slane %v499, 5
      %v502 = vor.u32 %v498, %v501
      %v503 = vrot.slane %v502, 4
      %v505 = vshll.u32 %v494, 16
      %v507 = vrot.slane %v505, 5
      %v508 = vsel %vm433, %v503, %v507
      %509 = vrot.lane.b32.xlu0 %v508, 16
      %v510 = vpop.permute.xlu0 %509
      %512 = vst.msk [vmem:[#allocation2 + $0x30] sm:$0xf] %vm451, %v510
      %v513 = vld [vmem:[%s417] sm:$0xf]
      %v514 = vld [vmem:[%s417 + $0x4] sm:$0x1]
      %v516 = vshrl.u32 %v513, 16
      %v518 = vrot.slane %v516, 4
      %v519 = vshll.u32 %v513, 16
      %v521 = vrot.slane %v519, 5
      %v522 = vor.u32 %v518, %v521
      %v523 = vrot.slane %v522, 4
      %v525 = vshll.u32 %v514, 16
      %v527 = vrot.slane %v525, 5
      %v528 = vsel %vm433, %v523, %v527
      %529 = vrot.lane.b32.xlu0 %v528, 16
      %v530 = vpop.permute.xlu0 %529
      %532 = vst.msk [vmem:[#allocation2 + $0x40] sm:$0xf] %vm451, %v530
      %v533 = vld [vmem:[%s420] sm:$0xf]
      %v534 = vld [vmem:[%s420 + $0x4] sm:$0x1]
      %v536 = vshrl.u32 %v533, 16
      %v538 = vrot.slane %v536, 4
      %v539 = vshll.u32 %v533, 16
      %v541 = vrot.slane %v539, 5
      %v542 = vor.u32 %v538, %v541
      %v543 = vrot.slane %v542, 4
      %v545 = vshll.u32 %v534, 16
      %v547 = vrot.slane %v545, 5
      %v548 = vsel %vm433, %v543, %v547
      %549 = vrot.lane.b32.xlu0 %v548, 16
      %v550 = vpop.permute.xlu0 %549
      %552 = vst.msk [vmem:[#allocation2 + $0x50] sm:$0xf] %vm451, %v550
      %v553 = vld [vmem:[%s423] sm:$0xf]
      %v554 = vld [vmem:[%s423 + $0x4] sm:$0x1]
      %v556 = vshrl.u32 %v553, 16
      %v558 = vrot.slane %v556, 4
      %v559 = vshll.u32 %v553, 16
      %v561 = vrot.slane %v559, 5
      %v562 = vor.u32 %v558, %v561
      %v563 = vrot.slane %v562, 4
      %v565 = vshll.u32 %v554, 16
      %v567 = vrot.slane %v565, 5
      %v568 = vsel %vm433, %v563, %v567
      %569 = vrot.lane.b32.xlu0 %v568, 16
      %v570 = vpop.permute.xlu0 %569
      %572 = vst.msk [vmem:[#allocation2 + $0x60] sm:$0xf] %vm451, %v570
      %v573 = vld [vmem:[%s426] sm:$0xf]
      %v574 = vld [vmem:[%s426 + $0x4] sm:$0x1]
      %v576 = vshrl.u32 %v573, 16
      %v578 = vrot.slane %v576, 4
      %v579 = vshll.u32 %v573, 16
      %v581 = vrot.slane %v579, 5
      %v582 = vor.u32 %v578, %v581
      %v583 = vrot.slane %v582, 4
      %v585 = vshll.u32 %v574, 16
      %v587 = vrot.slane %v585, 5
      %v588 = vsel %vm433, %v583, %v587
      %589 = vrot.lane.b32.xlu0 %v588, 16
      %v590 = vpop.permute.xlu0 %589
      %592 = vst.msk [vmem:[#allocation2 + $0x70] sm:$0xf] %vm451, %v590
      %v593 = vld [vmem:[%s363] sm:$0xe]
      %v594 = vld [vmem:[%s363 + $0x4] sm:$0x1]
      %vm597 = vcmask 1042432
      %vm598 = vcmask 1046532
      %vm599 = vmor %vm597, %vm598
      %v600 = vrot.slane %v593, 5
      %v601 = vrot.slane %v600, 4
      %v602 = vrot.slane %v594, 5
      %v603 = vsel %vm599, %v601, %v602
      %604 = vrot.lane.b32.xlu0 %v603, 32
      %v605 = vpop.permute.xlu0 %604
      %vm607 = vcmask 388352
      %608 = vst.msk [vmem:[#allocation2] sm:$0xf] %vm607, %v605
      %v609 = vld [vmem:[%s408] sm:$0xe]
      %v610 = vld [vmem:[%s408 + $0x4] sm:$0x1]
      %v613 = vrot.slane %v609, 5
      %v614 = vrot.slane %v613, 4
      %v615 = vrot.slane %v610, 5
      %v616 = vsel %vm599, %v614, %v615
      %617 = vrot.lane.b32.xlu0 %v616, 32
      %v618 = vpop.permute.xlu0 %617
      %620 = vst.msk [vmem:[#allocation2 + $0x10] sm:$0xf] %vm607, %v618
      %v621 = vld [vmem:[%s411] sm:$0xe]
      %v622 = vld [vmem:[%s411 + $0x4] sm:$0x1]
      %v625 = vrot.slane %v621, 5
      %v626 = vrot.slane %v625, 4
      %v627 = vrot.slane %v622, 5
      %v628 = vsel %vm599, %v626, %v627
      %629 = vrot.lane.b32.xlu0 %v628, 32
      %v630 = vpop.permute.xlu0 %629
      %632 = vst.msk [vmem:[#allocation2 + $0x20] sm:$0xf] %vm607, %v630
      %v633 = vld [vmem:[%s414] sm:$0xe]
      %v634 = vld [vmem:[%s414 + $0x4] sm:$0x1]
      %v637 = vrot.slane %v633, 5
      %v638 = vrot.slane %v637, 4
      %v639 = vrot.slane %v634, 5
      %v640 = vsel %vm599, %v638, %v639
      %641 = vrot.lane.b32.xlu0 %v640, 32
      %v642 = vpop.permute.xlu0 %641
      %644 = vst.msk [vmem:[#allocation2 + $0x30] sm:$0xf] %vm607, %v642
      %v645 = vld [vmem:[%s417] sm:$0xe]
      %v646 = vld [vmem:[%s417 + $0x4] sm:$0x1]
      %v649 = vrot.slane %v645, 5
      %v650 = vrot.slane %v649, 4
      %v651 = vrot.slane %v646, 5
      %v652 = vsel %vm599, %v650, %v651
      %653 = vrot.lane.b32.xlu0 %v652, 32
      %v654 = vpop.permute.xlu0 %653
      %656 = vst.msk [vmem:[#allocation2 + $0x40] sm:$0xf] %vm607, %v654
      %v657 = vld [vmem:[%s420] sm:$0xe]
      %v658 = vld [vmem:[%s420 + $0x4] sm:$0x1]
      %v661 = vrot.slane %v657, 5
      %v662 = vrot.slane %v661, 4
      %v663 = vrot.slane %v658, 5
      %v664 = vsel %vm599, %v662, %v663
      %665 = vrot.lane.b32.xlu0 %v664, 32
      %v666 = vpop.permute.xlu0 %665
      %668 = vst.msk [vmem:[#allocation2 + $0x50] sm:$0xf] %vm607, %v666
      %v669 = vld [vmem:[%s423] sm:$0xe]
      %v670 = vld [vmem:[%s423 + $0x4] sm:$0x1]
      %v673 = vrot.slane %v669, 5
      %v674 = vrot.slane %v673, 4
      %v675 = vrot.slane %v670, 5
      %v676 = vsel %vm599, %v674, %v675
      %677 = vrot.lane.b32.xlu0 %v676, 32
      %v678 = vpop.permute.xlu0 %677
      %680 = vst.msk [vmem:[#allocation2 + $0x60] sm:$0xf] %vm607, %v678
      %v681 = vld [vmem:[%s426] sm:$0xe]
      %v682 = vld [vmem:[%s426 + $0x4] sm:$0x1]
      %v685 = vrot.slane %v681, 5
      %v686 = vrot.slane %v685, 4
      %v687 = vrot.slane %v682, 5
      %v688 = vsel %vm599, %v686, %v687
      %689 = vrot.lane.b32.xlu0 %v688, 32
      %v690 = vpop.permute.xlu0 %689
      %692 = vst.msk [vmem:[#allocation2 + $0x70] sm:$0xf] %vm607, %v690
      %v693 = vld [vmem:[%s408] sm:$0xf]
      %695 = vrot.lane.b32.xlu0 %v693, 48
      %v696 = vpop.permute.xlu0 %695
      %vm698 = vcmask 519552
      %699 = vst.msk [vmem:[#allocation2] sm:$0xf] %vm698, %v696
      %v700 = vld [vmem:[%s411] sm:$0xf]
      %702 = vrot.lane.b32.xlu0 %v700, 48
      %v703 = vpop.permute.xlu0 %702
      %705 = vst.msk [vmem:[#allocation2 + $0x10] sm:$0xf] %vm698, %v703
      %v706 = vld [vmem:[%s414] sm:$0xf]
      %708 = vrot.lane.b32.xlu0 %v706, 48
      %v709 = vpop.permute.xlu0 %708
      %711 = vst.msk [vmem:[#allocation2 + $0x20] sm:$0xf] %vm698, %v709
      %v712 = vld [vmem:[%s417] sm:$0xf]
      %714 = vrot.lane.b32.xlu0 %v712, 48
      %v715 = vpop.permute.xlu0 %714
      %717 = vst.msk [vmem:[#allocation2 + $0x30] sm:$0xf] %vm698, %v715
      %v718 = vld [vmem:[%s420] sm:$0xf]
      %720 = vrot.lane.b32.xlu0 %v718, 48
      %v721 = vpop.permute.xlu0 %720
      %723 = vst.msk [vmem:[#allocation2 + $0x40] sm:$0xf] %vm698, %v721
      %v724 = vld [vmem:[%s423] sm:$0xf]
      %726 = vrot.lane.b32.xlu0 %v724, 48
      %v727 = vpop.permute.xlu0 %726
      %729 = vst.msk [vmem:[#allocation2 + $0x50] sm:$0xf] %vm698, %v727
      %v730 = vld [vmem:[%s426] sm:$0xf]
      %732 = vrot.lane.b32.xlu0 %v730, 48
      %v733 = vpop.permute.xlu0 %732
      %735 = vst.msk [vmem:[#allocation2 + $0x60] sm:$0xf] %vm698, %v733
      %s736 = scalar_lea.vmem %s363, 64
      %v737 = vld [vmem:[%s736] sm:$0xf]
      %739 = vrot.lane.b32.xlu0 %v737, 48
      %v740 = vpop.permute.xlu0 %739
      %742 = vst.msk [vmem:[#allocation2 + $0x70] sm:$0xf] %vm698, %v740
      %v743 = vld [vmem:[%s408] sm:$0xf]
      %v744 = vld [vmem:[%s408 + $0x4] sm:$0x1]
      %v746 = vshrl.u32 %v743, 16
      %v748 = vrot.slane %v746, 4
      %v749 = vshll.u32 %v743, 16
      %v751 = vrot.slane %v749, 5
      %v752 = vor.u32 %v748, %v751
      %v753 = vrot.slane %v752, 4
      %v755 = vshll.u32 %v744, 16
      %v757 = vrot.slane %v755, 5
      %v758 = vsel %vm433, %v753, %v757
      %759 = vrot.lane.b32.xlu0 %v758, 64
      %v760 = vpop.permute.xlu0 %759
      %vm762 = vcmask 650752
      %763 = vst.msk [vmem:[#allocation2] sm:$0xf] %vm762, %v760
      %v764 = vld [vmem:[%s411] sm:$0xf]
      %v765 = vld [vmem:[%s411 + $0x4] sm:$0x1]
      %v767 = vshrl.u32 %v764, 16
      %v769 = vrot.slane %v767, 4
      %v770 = vshll.u32 %v764, 16
      %v772 = vrot.slane %v770, 5
      %v773 = vor.u32 %v769, %v772
      %v774 = vrot.slane %v773, 4
      %v776 = vshll.u32 %v765, 16
      %v778 = vrot.slane %v776, 5
      %v779 = vsel %vm433, %v774, %v778
      %780 = vrot.lane.b32.xlu0 %v779, 64
      %v781 = vpop.permute.xlu0 %780
      %783 = vst.msk [vmem:[#allocation2 + $0x10] sm:$0xf] %vm762, %v781
      %v784 = vld [vmem:[%s414] sm:$0xf]
      %v785 = vld [vmem:[%s414 + $0x4] sm:$0x1]
      %v787 = vshrl.u32 %v784, 16
      %v789 = vrot.slane %v787, 4
      %v790 = vshll.u32 %v784, 16
      %v792 = vrot.slane %v790, 5
      %v793 = vor.u32 %v789, %v792
      %v794 = vrot.slane %v793, 4
      %v796 = vshll.u32 %v785, 16
      %v798 = vrot.slane %v796, 5
      %v799 = vsel %vm433, %v794, %v798
      %800 = vrot.lane.b32.xlu0 %v799, 64
      %v801 = vpop.permute.xlu0 %800
      %803 = vst.msk [vmem:[#allocation2 + $0x20] sm:$0xf] %vm762, %v801
      %v804 = vld [vmem:[%s417] sm:$0xf]
      %v805 = vld [vmem:[%s417 + $0x4] sm:$0x1]
      %v807 = vshrl.u32 %v804, 16
      %v809 = vrot.slane %v807, 4
      %v810 = vshll.u32 %v804, 16
      %v812 = vrot.slane %v810, 5
      %v813 = vor.u32 %v809, %v812
      %v814 = vrot.slane %v813, 4
      %v816 = vshll.u32 %v805, 16
      %v818 = vrot.slane %v816, 5
      %v819 = vsel %vm433, %v814, %v818
      %820 = vrot.lane.b32.xlu0 %v819, 64
      %v821 = vpop.permute.xlu0 %820
      %823 = vst.msk [vmem:[#allocation2 + $0x30] sm:$0xf] %vm762, %v821
      %v824 = vld [vmem:[%s420] sm:$0xf]
      %v825 = vld [vmem:[%s420 + $0x4] sm:$0x1]
      %v827 = vshrl.u32 %v824, 16
      %v829 = vrot.slane %v827, 4
      %v830 = vshll.u32 %v824, 16
      %v832 = vrot.slane %v830, 5
      %v833 = vor.u32 %v829, %v832
      %v834 = vrot.slane %v833, 4
      %v836 = vshll.u32 %v825, 16
      %v838 = vrot.slane %v836, 5
      %v839 = vsel %vm433, %v834, %v838
      %840 = vrot.lane.b32.xlu0 %v839, 64
      %v841 = vpop.permute.xlu0 %840
      %843 = vst.msk [vmem:[#allocation2 + $0x40] sm:$0xf] %vm762, %v841
      %v844 = vld [vmem:[%s423] sm:$0xf]
      %v845 = vld [vmem:[%s423 + $0x4] sm:$0x1]
      %v847 = vshrl.u32 %v844, 16
      %v849 = vrot.slane %v847, 4
      %v850 = vshll.u32 %v844, 16
      %v852 = vrot.slane %v850, 5
      %v853 = vor.u32 %v849, %v852
      %v854 = vrot.slane %v853, 4
      %v856 = vshll.u32 %v845, 16
      %v858 = vrot.slane %v856, 5
      %v859 = vsel %vm433, %v854, %v858
      %860 = vrot.lane.b32.xlu0 %v859, 64
      %v861 = vpop.permute.xlu0 %860
      %863 = vst.msk [vmem:[#allocation2 + $0x50] sm:$0xf] %vm762, %v861
      %v864 = vld [vmem:[%s426] sm:$0xf]
      %v865 = vld [vmem:[%s426 + $0x4] sm:$0x1]
      %v867 = vshrl.u32 %v864, 16
      %v869 = vrot.slane %v867, 4
      %v870 = vshll.u32 %v864, 16
      %v872 = vrot.slane %v870, 5
      %v873 = vor.u32 %v869, %v872
      %v874 = vrot.slane %v873, 4
      %v876 = vshll.u32 %v865, 16
      %v878 = vrot.slane %v876, 5
      %v879 = vsel %vm433, %v874, %v878
      %880 = vrot.lane.b32.xlu0 %v879, 64
      %v881 = vpop.permute.xlu0 %880
      %883 = vst.msk [vmem:[#allocation2 + $0x60] sm:$0xf] %vm762, %v881
      %v884 = vld [vmem:[%s736] sm:$0xf]
      %v885 = vld [vmem:[%s736 + $0x4] sm:$0x1]
      %v887 = vshrl.u32 %v884, 16
      %v889 = vrot.slane %v887, 4
      %v890 = vshll.u32 %v884, 16
      %v892 = vrot.slane %v890, 5
      %v893 = vor.u32 %v889, %v892
      %v894 = vrot.slane %v893, 4
      %v896 = vshll.u32 %v885, 16
      %v898 = vrot.slane %v896, 5
      %v899 = vsel %vm433, %v894, %v898
      %900 = vrot.lane.b32.xlu0 %v899, 64
      %v901 = vpop.permute.xlu0 %900
      %903 = vst.msk [vmem:[#allocation2 + $0x70] sm:$0xf] %vm762, %v901
      %v904 = vld [vmem:[%s408] sm:$0xe]
      %v905 = vld [vmem:[%s408 + $0x4] sm:$0x1]
      %v908 = vrot.slane %v904, 5
      %v909 = vrot.slane %v908, 4
      %v910 = vrot.slane %v905, 5
      %v911 = vsel %vm599, %v909, %v910
      %912 = vrot.lane.b32.xlu0 %v911, 80
      %v913 = vpop.permute.xlu0 %912
      %vm915 = vcmask 781952
      %916 = vst.msk [vmem:[#allocation2] sm:$0xf] %vm915, %v913
      %v917 = vld [vmem:[%s411] sm:$0xe]
      %v918 = vld [vmem:[%s411 + $0x4] sm:$0x1]
      %v921 = vrot.slane %v917, 5
      %v922 = vrot.slane %v921, 4
      %v923 = vrot.slane %v918, 5
      %v924 = vsel %vm599, %v922, %v923
      %925 = vrot.lane.b32.xlu0 %v924, 80
      %v926 = vpop.permute.xlu0 %925
      %928 = vst.msk [vmem:[#allocation2 + $0x10] sm:$0xf] %vm915, %v926
      %v929 = vld [vmem:[%s414] sm:$0xe]
      %v930 = vld [vmem:[%s414 + $0x4] sm:$0x1]
      %v933 = vrot.slane %v929, 5
      %v934 = vrot.slane %v933, 4
      %v935 = vrot.slane %v930, 5
      %v936 = vsel %vm599, %v934, %v935
      %937 = vrot.lane.b32.xlu0 %v936, 80
      %v938 = vpop.permute.xlu0 %937
      %940 = vst.msk [vmem:[#allocation2 + $0x20] sm:$0xf] %vm915, %v938
      %v941 = vld [vmem:[%s417] sm:$0xe]
      %v942 = vld [vmem:[%s417 + $0x4] sm:$0x1]
      %v945 = vrot.slane %v941, 5
      %v946 = vrot.slane %v945, 4
      %v947 = vrot.slane %v942, 5
      %v948 = vsel %vm599, %v946, %v947
      %949 = vrot.lane.b32.xlu0 %v948, 80
      %v950 = vpop.permute.xlu0 %949
      %952 = vst.msk [vmem:[#allocation2 + $0x30] sm:$0xf] %vm915, %v950
      %v953 = vld [vmem:[%s420] sm:$0xe]
      %v954 = vld [vmem:[%s420 + $0x4] sm:$0x1]
      %v957 = vrot.slane %v953, 5
      %v958 = vrot.slane %v957, 4
      %v959 = vrot.slane %v954, 5
      %v960 = vsel %vm599, %v958, %v959
      %961 = vrot.lane.b32.xlu0 %v960, 80
      %v962 = vpop.permute.xlu0 %961
      %964 = vst.msk [vmem:[#allocation2 + $0x40] sm:$0xf] %vm915, %v962
      %v965 = vld [vmem:[%s423] sm:$0xe]
      %v966 = vld [vmem:[%s423 + $0x4] sm:$0x1]
      %v969 = vrot.slane %v965, 5
      %v970 = vrot.slane %v969, 4
      %v971 = vrot.slane %v966, 5
      %v972 = vsel %vm599, %v970, %v971
      %973 = vrot.lane.b32.xlu0 %v972, 80
      %v974 = vpop.permute.xlu0 %973
      %976 = vst.msk [vmem:[#allocation2 + $0x50] sm:$0xf] %vm915, %v974
      %v977 = vld [vmem:[%s426] sm:$0xe]
      %v978 = vld [vmem:[%s426 + $0x4] sm:$0x1]
      %v981 = vrot.slane %v977, 5
      %v982 = vrot.slane %v981, 4
      %v983 = vrot.slane %v978, 5
      %v984 = vsel %vm599, %v982, %v983
      %985 = vrot.lane.b32.xlu0 %v984, 80
      %v986 = vpop.permute.xlu0 %985
      %988 = vst.msk [vmem:[#allocation2 + $0x60] sm:$0xf] %vm915, %v986
      %v989 = vld [vmem:[%s736] sm:$0xe]
      %v990 = vld [vmem:[%s736 + $0x4] sm:$0x1]
      %v993 = vrot.slane %v989, 5
      %v994 = vrot.slane %v993, 4
      %v995 = vrot.slane %v990, 5
      %v996 = vsel %vm599, %v994, %v995
      %997 = vrot.lane.b32.xlu0 %v996, 80
      %v998 = vpop.permute.xlu0 %997
      %1000 = vst.msk [vmem:[#allocation2 + $0x70] sm:$0xf] %vm915, %v998
      %v1001 = vld [vmem:[%s411] sm:$0xf]
      %1003 = vrot.lane.b32.xlu0 %v1001, 96
      %v1004 = vpop.permute.xlu0 %1003
      %vm1006 = vcmask 913152
      %1007 = vst.msk [vmem:[#allocation2] sm:$0xf] %vm1006, %v1004
      %v1008 = vld [vmem:[%s414] sm:$0xf]
      %1010 = vrot.lane.b32.xlu0 %v1008, 96
      %v1011 = vpop.permute.xlu0 %1010
      %1013 = vst.msk [vmem:[#allocation2 + $0x10] sm:$0xf] %vm1006, %v1011
      %v1014 = vld [vmem:[%s417] sm:$0xf]
      %1016 = vrot.lane.b32.xlu0 %v1014, 96
      %v1017 = vpop.permute.xlu0 %1016
      %1019 = vst.msk [vmem:[#allocation2 + $0x20] sm:$0xf] %vm1006, %v1017
      %v1020 = vld [vmem:[%s420] sm:$0xf]
      %1022 = vrot.lane.b32.xlu0 %v1020, 96
      %v1023 = vpop.permute.xlu0 %1022
      %1025 = vst.msk [vmem:[#allocation2 + $0x30] sm:$0xf] %vm1006, %v1023
      %v1026 = vld [vmem:[%s423] sm:$0xf]
      %1028 = vrot.lane.b32.xlu0 %v1026, 96
      %v1029 = vpop.permute.xlu0 %1028
      %1031 = vst.msk [vmem:[#allocation2 + $0x40] sm:$0xf] %vm1006, %v1029
      %v1032 = vld [vmem:[%s426] sm:$0xf]
      %1034 = vrot.lane.b32.xlu0 %v1032, 96
      %v1035 = vpop.permute.xlu0 %1034
      %1037 = vst.msk [vmem:[#allocation2 + $0x50] sm:$0xf] %vm1006, %v1035
      %v1038 = vld [vmem:[%s736] sm:$0xf]
      %1040 = vrot.lane.b32.xlu0 %v1038, 96
      %v1041 = vpop.permute.xlu0 %1040
      %1043 = vst.msk [vmem:[#allocation2 + $0x60] sm:$0xf] %vm1006, %v1041
      %s1044 = scalar_lea.vmem %s363, 72
      %v1045 = vld [vmem:[%s1044] sm:$0xf]
      %1047 = vrot.lane.b32.xlu0 %v1045, 96
      %v1048 = vpop.permute.xlu0 %1047
      %1050 = vst.msk [vmem:[#allocation2 + $0x70] sm:$0xf] %vm1006, %v1048
      %v1051 = vld [vmem:[%s411] sm:$0xf]
      %v1052 = vld [vmem:[%s411 + $0x4] sm:$0x1]
      %v1054 = vshrl.u32 %v1051, 16
      %v1056 = vrot.slane %v1054, 4
      %v1057 = vshll.u32 %v1051, 16
      %v1059 = vrot.slane %v1057, 5
      %v1060 = vor.u32 %v1056, %v1059
      %v1061 = vrot.slane %v1060, 4
      %v1063 = vshll.u32 %v1052, 16
      %v1065 = vrot.slane %v1063, 5
      %v1066 = vsel %vm433, %v1061, %v1065
      %1067 = vrot.lane.b32.xlu0 %v1066, 112
      %v1068 = vpop.permute.xlu0 %1067
      %vm1070 = vcmask 1044352
      %1071 = vst.msk [vmem:[#allocation2] sm:$0xf] %vm1070, %v1068
      %v1072 = vld [vmem:[%s414] sm:$0xf]
      %v1073 = vld [vmem:[%s414 + $0x4] sm:$0x1]
      %v1075 = vshrl.u32 %v1072, 16
      %v1077 = vrot.slane %v1075, 4
      %v1078 = vshll.u32 %v1072, 16
      %v1080 = vrot.slane %v1078, 5
      %v1081 = vor.u32 %v1077, %v1080
      %v1082 = vrot.slane %v1081, 4
      %v1084 = vshll.u32 %v1073, 16
      %v1086 = vrot.slane %v1084, 5
      %v1087 = vsel %vm433, %v1082, %v1086
      %1088 = vrot.lane.b32.xlu0 %v1087, 112
      %v1089 = vpop.permute.xlu0 %1088
      %1091 = vst.msk [vmem:[#allocation2 + $0x10] sm:$0xf] %vm1070, %v1089
      %v1092 = vld [vmem:[%s417] sm:$0xf]
      %v1093 = vld [vmem:[%s417 + $0x4] sm:$0x1]
      %v1095 = vshrl.u32 %v1092, 16
      %v1097 = vrot.slane %v1095, 4
      %v1098 = vshll.u32 %v1092, 16
      %v1100 = vrot.slane %v1098, 5
      %v1101 = vor.u32 %v1097, %v1100
      %v1102 = vrot.slane %v1101, 4
      %v1104 = vshll.u32 %v1093, 16
      %v1106 = vrot.slane %v1104, 5
      %v1107 = vsel %vm433, %v1102, %v1106
      %1108 = vrot.lane.b32.xlu0 %v1107, 112
      %v1109 = vpop.permute.xlu0 %1108
      %1111 = vst.msk [vmem:[#allocation2 + $0x20] sm:$0xf] %vm1070, %v1109
      %v1112 = vld [vmem:[%s420] sm:$0xf]
      %v1113 = vld [vmem:[%s420 + $0x4] sm:$0x1]
      %v1115 = vshrl.u32 %v1112, 16
      %v1117 = vrot.slane %v1115, 4
      %v1118 = vshll.u32 %v1112, 16
      %v1120 = vrot.slane %v1118, 5
      %v1121 = vor.u32 %v1117, %v1120
      %v1122 = vrot.slane %v1121, 4
      %v1124 = vshll.u32 %v1113, 16
      %v1126 = vrot.slane %v1124, 5
      %v1127 = vsel %vm433, %v1122, %v1126
      %1128 = vrot.lane.b32.xlu0 %v1127, 112
      %v1129 = vpop.permute.xlu0 %1128
      %1131 = vst.msk [vmem:[#allocation2 + $0x30] sm:$0xf] %vm1070, %v1129
      %v1132 = vld [vmem:[%s423] sm:$0xf]
      %v1133 = vld [vmem:[%s423 + $0x4] sm:$0x1]
      %v1135 = vshrl.u32 %v1132, 16
      %v1137 = vrot.slane %v1135, 4
      %v1138 = vshll.u32 %v1132, 16
      %v1140 = vrot.slane %v1138, 5
      %v1141 = vor.u32 %v1137, %v1140
      %v1142 = vrot.slane %v1141, 4
      %v1144 = vshll.u32 %v1133, 16
      %v1146 = vrot.slane %v1144, 5
      %v1147 = vsel %vm433, %v1142, %v1146
      %1148 = vrot.lane.b32.xlu0 %v1147, 112
      %v1149 = vpop.permute.xlu0 %1148
      %1151 = vst.msk [vmem:[#allocation2 + $0x40] sm:$0xf] %vm1070, %v1149
      %v1152 = vld [vmem:[%s426] sm:$0xf]
      %v1153 = vld [vmem:[%s426 + $0x4] sm:$0x1]
      %v1155 = vshrl.u32 %v1152, 16
      %v1157 = vrot.slane %v1155, 4
      %v1158 = vshll.u32 %v1152, 16
      %v1160 = vrot.slane %v1158, 5
      %v1161 = vor.u32 %v1157, %v1160
      %v1162 = vrot.slane %v1161, 4
      %v1164 = vshll.u32 %v1153, 16
      %v1166 = vrot.slane %v1164, 5
      %v1167 = vsel %vm433, %v1162, %v1166
      %1168 = vrot.lane.b32.xlu0 %v1167, 112
      %v1169 = vpop.permute.xlu0 %1168
      %1171 = vst.msk [vmem:[#allocation2 + $0x50] sm:$0xf] %vm1070, %v1169
      %v1172 = vld [vmem:[%s736] sm:$0xf]
      %v1173 = vld [vmem:[%s736 + $0x4] sm:$0x1]
      %v1175 = vshrl.u32 %v1172, 16
      %v1177 = vrot.slane %v1175, 4
      %v1178 = vshll.u32 %v1172, 16
      %v1180 = vrot.slane %v1178, 5
      %v1181 = vor.u32 %v1177, %v1180
      %v1182 = vrot.slane %v1181, 4
      %v1184 = vshll.u32 %v1173, 16
      %v1186 = vrot.slane %v1184, 5
      %v1187 = vsel %vm433, %v1182, %v1186
      %1188 = vrot.lane.b32.xlu0 %v1187, 112
      %v1189 = vpop.permute.xlu0 %1188
      %1191 = vst.msk [vmem:[#allocation2 + $0x60] sm:$0xf] %vm1070, %v1189
      %v1192 = vld [vmem:[%s1044] sm:$0xf]
      %v1193 = vld [vmem:[%s1044 + $0x4] sm:$0x1]
      %v1195 = vshrl.u32 %v1192, 16
      %v1197 = vrot.slane %v1195, 4
      %v1198 = vshll.u32 %v1192, 16
      %v1200 = vrot.slane %v1198, 5
      %v1201 = vor.u32 %v1197, %v1200
      %v1202 = vrot.slane %v1201, 4
      %v1204 = vshll.u32 %v1193, 16
      %v1206 = vrot.slane %v1204, 5
      %v1207 = vsel %vm433, %v1202, %v1206
      %1208 = vrot.lane.b32.xlu0 %v1207, 112
      %v1209 = vpop.permute.xlu0 %1208
      %1211 = vst.msk [vmem:[#allocation2 + $0x70] sm:$0xf] %vm1070, %v1209
      %v1212 = vld [vmem:[%s411] sm:$0xe]
      %v1213 = vld [vmem:[%s411 + $0x4] sm:$0x1]
      %v1216 = vrot.slane %v1212, 5
      %v1217 = vrot.slane %v1216, 4
      %v1218 = vrot.slane %v1213, 5
      %v1219 = vsel %vm599, %v1217, %v1218
      %1221 = vst.msk [vmem:[#allocation2 + $0x4] sm:$0xf] %vm406, %v1219
      %v1222 = vld [vmem:[%s414] sm:$0xe]
      %v1223 = vld [vmem:[%s414 + $0x4] sm:$0x1]
      %v1226 = vrot.slane %v1222, 5
      %v1227 = vrot.slane %v1226, 4
      %v1228 = vrot.slane %v1223, 5
      %v1229 = vsel %vm599, %v1227, %v1228
      %1231 = vst.msk [vmem:[#allocation2 + $0x14] sm:$0xf] %vm406, %v1229
      %v1232 = vld [vmem:[%s417] sm:$0xe]
      %v1233 = vld [vmem:[%s417 + $0x4] sm:$0x1]
      %v1236 = vrot.slane %v1232, 5
      %v1237 = vrot.slane %v1236, 4
      %v1238 = vrot.slane %v1233, 5
      %v1239 = vsel %vm599, %v1237, %v1238
      %1241 = vst.msk [vmem:[#allocation2 + $0x24] sm:$0xf] %vm406, %v1239
      %v1242 = vld [vmem:[%s420] sm:$0xe]
      %v1243 = vld [vmem:[%s420 + $0x4] sm:$0x1]
      %v1246 = vrot.slane %v1242, 5
      %v1247 = vrot.slane %v1246, 4
      %v1248 = vrot.slane %v1243, 5
      %v1249 = vsel %vm599, %v1247, %v1248
      %1251 = vst.msk [vmem:[#allocation2 + $0x34] sm:$0xf] %vm406, %v1249
      %v1252 = vld [vmem:[%s423] sm:$0xe]
      %v1253 = vld [vmem:[%s423 + $0x4] sm:$0x1]
      %v1256 = vrot.slane %v1252, 5
      %v1257 = vrot.slane %v1256, 4
      %v1258 = vrot.slane %v1253, 5
      %v1259 = vsel %vm599, %v1257, %v1258
      %1261 = vst.msk [vmem:[#allocation2 + $0x44] sm:$0xf] %vm406, %v1259
      %v1262 = vld [vmem:[%s426] sm:$0xe]
      %v1263 = vld [vmem:[%s426 + $0x4] sm:$0x1]
      %v1266 = vrot.slane %v1262, 5
      %v1267 = vrot.slane %v1266, 4
      %v1268 = vrot.slane %v1263, 5
      %v1269 = vsel %vm599, %v1267, %v1268
      %1271 = vst.msk [vmem:[#allocation2 + $0x54] sm:$0xf] %vm406, %v1269
      %v1272 = vld [vmem:[%s736] sm:$0xe]
      %v1273 = vld [vmem:[%s736 + $0x4] sm:$0x1]
      %v1276 = vrot.slane %v1272, 5
      %v1277 = vrot.slane %v1276, 4
      %v1278 = vrot.slane %v1273, 5
      %v1279 = vsel %vm599, %v1277, %v1278
      %1281 = vst.msk [vmem:[#allocation2 + $0x64] sm:$0xf] %vm406, %v1279
      %v1282 = vld [vmem:[%s1044] sm:$0xe]
      %v1283 = vld [vmem:[%s1044 + $0x4] sm:$0x1]
      %v1286 = vrot.slane %v1282, 5
      %v1287 = vrot.slane %v1286, 4
      %v1288 = vrot.slane %v1283, 5
      %v1289 = vsel %vm599, %v1287, %v1288
      %1291 = vst.msk [vmem:[#allocation2 + $0x74] sm:$0xf] %vm406, %v1289
      %v1292 = vld [vmem:[%s373] sm:$0xf]
      %1294 = vrot.lane.b32.xlu0 %v1292, 16
      %v1295 = vpop.permute.xlu0 %1294
      %1297 = vst.msk [vmem:[#allocation2 + $0x4] sm:$0xf] %vm451, %v1295
      %s1298 = scalar_lea.vmem %s373, 8
      %v1299 = vld [vmem:[%s1298] sm:$0xf]
      %1301 = vrot.lane.b32.xlu0 %v1299, 16
      %v1302 = vpop.permute.xlu0 %1301
      %1304 = vst.msk [vmem:[#allocation2 + $0x14] sm:$0xf] %vm451, %v1302
      %s1305 = scalar_lea.vmem %s373, 16
      %v1306 = vld [vmem:[%s1305] sm:$0xf]
      %1308 = vrot.lane.b32.xlu0 %v1306, 16
      %v1309 = vpop.permute.xlu0 %1308
      %1311 = vst.msk [vmem:[#allocation2 + $0x24] sm:$0xf] %vm451, %v1309
      %s1312 = scalar_lea.vmem %s373, 24
      %v1313 = vld [vmem:[%s1312] sm:$0xf]
      %1315 = vrot.lane.b32.xlu0 %v1313, 16
      %v1316 = vpop.permute.xlu0 %1315
      %1318 = vst.msk [vmem:[#allocation2 + $0x34] sm:$0xf] %vm451, %v1316
      %s1319 = scalar_lea.vmem %s373, 32
      %v1320 = vld [vmem:[%s1319] sm:$0xf]
      %1322 = vrot.lane.b32.xlu0 %v1320, 16
      %v1323 = vpop.permute.xlu0 %1322
      %1325 = vst.msk [vmem:[#allocation2 + $0x44] sm:$0xf] %vm451, %v1323
      %s1326 = scalar_lea.vmem %s373, 40
      %v1327 = vld [vmem:[%s1326] sm:$0xf]
      %1329 = vrot.lane.b32.xlu0 %v1327, 16
      %v1330 = vpop.permute.xlu0 %1329
      %1332 = vst.msk [vmem:[#allocation2 + $0x54] sm:$0xf] %vm451, %v1330
      %s1333 = scalar_lea.vmem %s373, 48
      %v1334 = vld [vmem:[%s1333] sm:$0xf]
      %1336 = vrot.lane.b32.xlu0 %v1334, 16
      %v1337 = vpop.permute.xlu0 %1336
      %1339 = vst.msk [vmem:[#allocation2 + $0x64] sm:$0xf] %vm451, %v1337
      %s1340 = scalar_lea.vmem %s373, 56
      %v1341 = vld [vmem:[%s1340] sm:$0xf]
      %1343 = vrot.lane.b32.xlu0 %v1341, 16
      %v1344 = vpop.permute.xlu0 %1343
      %1346 = vst.msk [vmem:[#allocation2 + $0x74] sm:$0xf] %vm451, %v1344
      %v1347 = vld [vmem:[%s373] sm:$0xf]
      %v1348 = vld [vmem:[%s373 + $0x4] sm:$0x1]
      %v1350 = vshrl.u32 %v1347, 16
      %v1352 = vrot.slane %v1350, 4
      %v1353 = vshll.u32 %v1347, 16
      %v1355 = vrot.slane %v1353, 5
      %v1356 = vor.u32 %v1352, %v1355
      %v1357 = vrot.slane %v1356, 4
      %v1359 = vshll.u32 %v1348, 16
      %v1361 = vrot.slane %v1359, 5
      %v1362 = vsel %vm433, %v1357, %v1361
      %1363 = vrot.lane.b32.xlu0 %v1362, 32
      %v1364 = vpop.permute.xlu0 %1363
      %1366 = vst.msk [vmem:[#allocation2 + $0x4] sm:$0xf] %vm607, %v1364
      %v1367 = vld [vmem:[%s1298] sm:$0xf]
      %v1368 = vld [vmem:[%s1298 + $0x4] sm:$0x1]
      %v1370 = vshrl.u32 %v1367, 16
      %v1372 = vrot.slane %v1370, 4
      %v1373 = vshll.u32 %v1367, 16
      %v1375 = vrot.slane %v1373, 5
      %v1376 = vor.u32 %v1372, %v1375
      %v1377 = vrot.slane %v1376, 4
      %v1379 = vshll.u32 %v1368, 16
      %v1381 = vrot.slane %v1379, 5
      %v1382 = vsel %vm433, %v1377, %v1381
      %1383 = vrot.lane.b32.xlu0 %v1382, 32
      %v1384 = vpop.permute.xlu0 %1383
      %1386 = vst.msk [vmem:[#allocation2 + $0x14] sm:$0xf] %vm607, %v1384
      %v1387 = vld [vmem:[%s1305] sm:$0xf]
      %v1388 = vld [vmem:[%s1305 + $0x4] sm:$0x1]
      %v1390 = vshrl.u32 %v1387, 16
      %v1392 = vrot.slane %v1390, 4
      %v1393 = vshll.u32 %v1387, 16
      %v1395 = vrot.slane %v1393, 5
      %v1396 = vor.u32 %v1392, %v1395
      %v1397 = vrot.slane %v1396, 4
      %v1399 = vshll.u32 %v1388, 16
      %v1401 = vrot.slane %v1399, 5
      %v1402 = vsel %vm433, %v1397, %v1401
      %1403 = vrot.lane.b32.xlu0 %v1402, 32
      %v1404 = vpop.permute.xlu0 %1403
      %1406 = vst.msk [vmem:[#allocation2 + $0x24] sm:$0xf] %vm607, %v1404
      %v1407 = vld [vmem:[%s1312] sm:$0xf]
      %v1408 = vld [vmem:[%s1312 + $0x4] sm:$0x1]
      %v1410 = vshrl.u32 %v1407, 16
      %v1412 = vrot.slane %v1410, 4
      %v1413 = vshll.u32 %v1407, 16
      %v1415 = vrot.slane %v1413, 5
      %v1416 = vor.u32 %v1412, %v1415
      %v1417 = vrot.slane %v1416, 4
      %v1419 = vshll.u32 %v1408, 16
      %v1421 = vrot.slane %v1419, 5
      %v1422 = vsel %vm433, %v1417, %v1421
      %1423 = vrot.lane.b32.xlu0 %v1422, 32
      %v1424 = vpop.permute.xlu0 %1423
      %1426 = vst.msk [vmem:[#allocation2 + $0x34] sm:$0xf] %vm607, %v1424
      %v1427 = vld [vmem:[%s1319] sm:$0xf]
      %v1428 = vld [vmem:[%s1319 + $0x4] sm:$0x1]
      %v1430 = vshrl.u32 %v1427, 16
      %v1432 = vrot.slane %v1430, 4
      %v1433 = vshll.u32 %v1427, 16
      %v1435 = vrot.slane %v1433, 5
      %v1436 = vor.u32 %v1432, %v1435
      %v1437 = vrot.slane %v1436, 4
      %v1439 = vshll.u32 %v1428, 16
      %v1441 = vrot.slane %v1439, 5
      %v1442 = vsel %vm433, %v1437, %v1441
      %1443 = vrot.lane.b32.xlu0 %v1442, 32
      %v1444 = vpop.permute.xlu0 %1443
      %1446 = vst.msk [vmem:[#allocation2 + $0x44] sm:$0xf] %vm607, %v1444
      %v1447 = vld [vmem:[%s1326] sm:$0xf]
      %v1448 = vld [vmem:[%s1326 + $0x4] sm:$0x1]
      %v1450 = vshrl.u32 %v1447, 16
      %v1452 = vrot.slane %v1450, 4
      %v1453 = vshll.u32 %v1447, 16
      %v1455 = vrot.slane %v1453, 5
      %v1456 = vor.u32 %v1452, %v1455
      %v1457 = vrot.slane %v1456, 4
      %v1459 = vshll.u32 %v1448, 16
      %v1461 = vrot.slane %v1459, 5
      %v1462 = vsel %vm433, %v1457, %v1461
      %1463 = vrot.lane.b32.xlu0 %v1462, 32
      %v1464 = vpop.permute.xlu0 %1463
      %1466 = vst.msk [vmem:[#allocation2 + $0x54] sm:$0xf] %vm607, %v1464
      %v1467 = vld [vmem:[%s1333] sm:$0xf]
      %v1468 = vld [vmem:[%s1333 + $0x4] sm:$0x1]
      %v1470 = vshrl.u32 %v1467, 16
      %v1472 = vrot.slane %v1470, 4
      %v1473 = vshll.u32 %v1467, 16
      %v1475 = vrot.slane %v1473, 5
      %v1476 = vor.u32 %v1472, %v1475
      %v1477 = vrot.slane %v1476, 4
      %v1479 = vshll.u32 %v1468, 16
      %v1481 = vrot.slane %v1479, 5
      %v1482 = vsel %vm433, %v1477, %v1481
      %1483 = vrot.lane.b32.xlu0 %v1482, 32
      %v1484 = vpop.permute.xlu0 %1483
      %1486 = vst.msk [vmem:[#allocation2 + $0x64] sm:$0xf] %vm607, %v1484
      %v1487 = vld [vmem:[%s1340] sm:$0xf]
      %v1488 = vld [vmem:[%s1340 + $0x4] sm:$0x1]
      %v1490 = vshrl.u32 %v1487, 16
      %v1492 = vrot.slane %v1490, 4
      %v1493 = vshll.u32 %v1487, 16
      %v1495 = vrot.slane %v1493, 5
      %v1496 = vor.u32 %v1492, %v1495
      %v1497 = vrot.slane %v1496, 4
      %v1499 = vshll.u32 %v1488, 16
      %v1501 = vrot.slane %v1499, 5
      %v1502 = vsel %vm433, %v1497, %v1501
      %1503 = vrot.lane.b32.xlu0 %v1502, 32
      %v1504 = vpop.permute.xlu0 %1503
      %1506 = vst.msk [vmem:[#allocation2 + $0x74] sm:$0xf] %vm607, %v1504
      %v1507 = vld [vmem:[%s373] sm:$0xe]
      %v1508 = vld [vmem:[%s373 + $0x4] sm:$0x1]
      %v1511 = vrot.slane %v1507, 5
      %v1512 = vrot.slane %v1511, 4
      %v1513 = vrot.slane %v1508, 5
      %v1514 = vsel %vm599, %v1512, %v1513
      %1515 = vrot.lane.b32.xlu0 %v1514, 48
      %v1516 = vpop.permute.xlu0 %1515
      %1518 = vst.msk [vmem:[#allocation2 + $0x4] sm:$0xf] %vm698, %v1516
      %v1519 = vld [vmem:[%s1298] sm:$0xe]
      %v1520 = vld [vmem:[%s1298 + $0x4] sm:$0x1]
      %v1523 = vrot.slane %v1519, 5
      %v1524 = vrot.slane %v1523, 4
      %v1525 = vrot.slane %v1520, 5
      %v1526 = vsel %vm599, %v1524, %v1525
      %1527 = vrot.lane.b32.xlu0 %v1526, 48
      %v1528 = vpop.permute.xlu0 %1527
      %1530 = vst.msk [vmem:[#allocation2 + $0x14] sm:$0xf] %vm698, %v1528
      %v1531 = vld [vmem:[%s1305] sm:$0xe]
      %v1532 = vld [vmem:[%s1305 + $0x4] sm:$0x1]
      %v1535 = vrot.slane %v1531, 5
      %v1536 = vrot.slane %v1535, 4
      %v1537 = vrot.slane %v1532, 5
      %v1538 = vsel %vm599, %v1536, %v1537
      %1539 = vrot.lane.b32.xlu0 %v1538, 48
      %v1540 = vpop.permute.xlu0 %1539
      %1542 = vst.msk [vmem:[#allocation2 + $0x24] sm:$0xf] %vm698, %v1540
      %v1543 = vld [vmem:[%s1312] sm:$0xe]
      %v1544 = vld [vmem:[%s1312 + $0x4] sm:$0x1]
      %v1547 = vrot.slane %v1543, 5
      %v1548 = vrot.slane %v1547, 4
      %v1549 = vrot.slane %v1544, 5
      %v1550 = vsel %vm599, %v1548, %v1549
      %1551 = vrot.lane.b32.xlu0 %v1550, 48
      %v1552 = vpop.permute.xlu0 %1551
      %1554 = vst.msk [vmem:[#allocation2 + $0x34] sm:$0xf] %vm698, %v1552
      %v1555 = vld [vmem:[%s1319] sm:$0xe]
      %v1556 = vld [vmem:[%s1319 + $0x4] sm:$0x1]
      %v1559 = vrot.slane %v1555, 5
      %v1560 = vrot.slane %v1559, 4
      %v1561 = vrot.slane %v1556, 5
      %v1562 = vsel %vm599, %v1560, %v1561
      %1563 = vrot.lane.b32.xlu0 %v1562, 48
      %v1564 = vpop.permute.xlu0 %1563
      %1566 = vst.msk [vmem:[#allocation2 + $0x44] sm:$0xf] %vm698, %v1564
      %v1567 = vld [vmem:[%s1326] sm:$0xe]
      %v1568 = vld [vmem:[%s1326 + $0x4] sm:$0x1]
      %v1571 = vrot.slane %v1567, 5
      %v1572 = vrot.slane %v1571, 4
      %v1573 = vrot.slane %v1568, 5
      %v1574 = vsel %vm599, %v1572, %v1573
      %1575 = vrot.lane.b32.xlu0 %v1574, 48
      %v1576 = vpop.permute.xlu0 %1575
      %1578 = vst.msk [vmem:[#allocation2 + $0x54] sm:$0xf] %vm698, %v1576
      %v1579 = vld [vmem:[%s1333] sm:$0xe]
      %v1580 = vld [vmem:[%s1333 + $0x4] sm:$0x1]
      %v1583 = vrot.slane %v1579, 5
      %v1584 = vrot.slane %v1583, 4
      %v1585 = vrot.slane %v1580, 5
      %v1586 = vsel %vm599, %v1584, %v1585
      %1587 = vrot.lane.b32.xlu0 %v1586, 48
      %v1588 = vpop.permute.xlu0 %1587
      %1590 = vst.msk [vmem:[#allocation2 + $0x64] sm:$0xf] %vm698, %v1588
      %v1591 = vld [vmem:[%s1340] sm:$0xe]
      %v1592 = vld [vmem:[%s1340 + $0x4] sm:$0x1]
      %v1595 = vrot.slane %v1591, 5
      %v1596 = vrot.slane %v1595, 4
      %v1597 = vrot.slane %v1592, 5
      %v1598 = vsel %vm599, %v1596, %v1597
      %1599 = vrot.lane.b32.xlu0 %v1598, 48
      %v1600 = vpop.permute.xlu0 %1599
      %1602 = vst.msk [vmem:[#allocation2 + $0x74] sm:$0xf] %vm698, %v1600
      %v1603 = vld [vmem:[%s1298] sm:$0xf]
      %1605 = vrot.lane.b32.xlu0 %v1603, 64
      %v1606 = vpop.permute.xlu0 %1605
      %1608 = vst.msk [vmem:[#allocation2 + $0x4] sm:$0xf] %vm762, %v1606
      %v1609 = vld [vmem:[%s1305] sm:$0xf]
      %1611 = vrot.lane.b32.xlu0 %v1609, 64
      %v1612 = vpop.permute.xlu0 %1611
      %1614 = vst.msk [vmem:[#allocation2 + $0x14] sm:$0xf] %vm762, %v1612
      %v1615 = vld [vmem:[%s1312] sm:$0xf]
      %1617 = vrot.lane.b32.xlu0 %v1615, 64
      %v1618 = vpop.permute.xlu0 %1617
      %1620 = vst.msk [vmem:[#allocation2 + $0x24] sm:$0xf] %vm762, %v1618
      %v1621 = vld [vmem:[%s1319] sm:$0xf]
      %1623 = vrot.lane.b32.xlu0 %v1621, 64
      %v1624 = vpop.permute.xlu0 %1623
      %1626 = vst.msk [vmem:[#allocation2 + $0x34] sm:$0xf] %vm762, %v1624
      %v1627 = vld [vmem:[%s1326] sm:$0xf]
      %1629 = vrot.lane.b32.xlu0 %v1627, 64
      %v1630 = vpop.permute.xlu0 %1629
      %1632 = vst.msk [vmem:[#allocation2 + $0x44] sm:$0xf] %vm762, %v1630
      %v1633 = vld [vmem:[%s1333] sm:$0xf]
      %1635 = vrot.lane.b32.xlu0 %v1633, 64
      %v1636 = vpop.permute.xlu0 %1635
      %1638 = vst.msk [vmem:[#allocation2 + $0x54] sm:$0xf] %vm762, %v1636
      %v1639 = vld [vmem:[%s1340] sm:$0xf]
      %1641 = vrot.lane.b32.xlu0 %v1639, 64
      %v1642 = vpop.permute.xlu0 %1641
      %1644 = vst.msk [vmem:[#allocation2 + $0x64] sm:$0xf] %vm762, %v1642
      %s1645 = scalar_lea.vmem %s373, 64
      %v1646 = vld [vmem:[%s1645] sm:$0xf]
      %1648 = vrot.lane.b32.xlu0 %v1646, 64
      %v1649 = vpop.permute.xlu0 %1648
      %1651 = vst.msk [vmem:[#allocation2 + $0x74] sm:$0xf] %vm762, %v1649
      %v1652 = vld [vmem:[%s1298] sm:$0xf]
      %v1653 = vld [vmem:[%s1298 + $0x4] sm:$0x1]
      %v1655 = vshrl.u32 %v1652, 16
      %v1657 = vrot.slane %v1655, 4
      %v1658 = vshll.u32 %v1652, 16
      %v1660 = vrot.slane %v1658, 5
      %v1661 = vor.u32 %v1657, %v1660
      %v1662 = vrot.slane %v1661, 4
      %v1664 = vshll.u32 %v1653, 16
      %v1666 = vrot.slane %v1664, 5
      %v1667 = vsel %vm433, %v1662, %v1666
      %1668 = vrot.lane.b32.xlu0 %v1667, 80
      %v1669 = vpop.permute.xlu0 %1668
      %1671 = vst.msk [vmem:[#allocation2 + $0x4] sm:$0xf] %vm915, %v1669
      %v1672 = vld [vmem:[%s1305] sm:$0xf]
      %v1673 = vld [vmem:[%s1305 + $0x4] sm:$0x1]
      %v1675 = vshrl.u32 %v1672, 16
      %v1677 = vrot.slane %v1675, 4
      %v1678 = vshll.u32 %v1672, 16
      %v1680 = vrot.slane %v1678, 5
      %v1681 = vor.u32 %v1677, %v1680
      %v1682 = vrot.slane %v1681, 4
      %v1684 = vshll.u32 %v1673, 16
      %v1686 = vrot.slane %v1684, 5
      %v1687 = vsel %vm433, %v1682, %v1686
      %1688 = vrot.lane.b32.xlu0 %v1687, 80
      %v1689 = vpop.permute.xlu0 %1688
      %1691 = vst.msk [vmem:[#allocation2 + $0x14] sm:$0xf] %vm915, %v1689
      %v1692 = vld [vmem:[%s1312] sm:$0xf]
      %v1693 = vld [vmem:[%s1312 + $0x4] sm:$0x1]
      %v1695 = vshrl.u32 %v1692, 16
      %v1697 = vrot.slane %v1695, 4
      %v1698 = vshll.u32 %v1692, 16
      %v1700 = vrot.slane %v1698, 5
      %v1701 = vor.u32 %v1697, %v1700
      %v1702 = vrot.slane %v1701, 4
      %v1704 = vshll.u32 %v1693, 16
      %v1706 = vrot.slane %v1704, 5
      %v1707 = vsel %vm433, %v1702, %v1706
      %1708 = vrot.lane.b32.xlu0 %v1707, 80
      %v1709 = vpop.permute.xlu0 %1708
      %1711 = vst.msk [vmem:[#allocation2 + $0x24] sm:$0xf] %vm915, %v1709
      %v1712 = vld [vmem:[%s1319] sm:$0xf]
      %v1713 = vld [vmem:[%s1319 + $0x4] sm:$0x1]
      %v1715 = vshrl.u32 %v1712, 16
      %v1717 = vrot.slane %v1715, 4
      %v1718 = vshll.u32 %v1712, 16
      %v1720 = vrot.slane %v1718, 5
      %v1721 = vor.u32 %v1717, %v1720
      %v1722 = vrot.slane %v1721, 4
      %v1724 = vshll.u32 %v1713, 16
      %v1726 = vrot.slane %v1724, 5
      %v1727 = vsel %vm433, %v1722, %v1726
      %1728 = vrot.lane.b32.xlu0 %v1727, 80
      %v1729 = vpop.permute.xlu0 %1728
      %1731 = vst.msk [vmem:[#allocation2 + $0x34] sm:$0xf] %vm915, %v1729
      %v1732 = vld [vmem:[%s1326] sm:$0xf]
      %v1733 = vld [vmem:[%s1326 + $0x4] sm:$0x1]
      %v1735 = vshrl.u32 %v1732, 16
      %v1737 = vrot.slane %v1735, 4
      %v1738 = vshll.u32 %v1732, 16
      %v1740 = vrot.slane %v1738, 5
      %v1741 = vor.u32 %v1737, %v1740
      %v1742 = vrot.slane %v1741, 4
      %v1744 = vshll.u32 %v1733, 16
      %v1746 = vrot.slane %v1744, 5
      %v1747 = vsel %vm433, %v1742, %v1746
      %1748 = vrot.lane.b32.xlu0 %v1747, 80
      %v1749 = vpop.permute.xlu0 %1748
      %1751 = vst.msk [vmem:[#allocation2 + $0x44] sm:$0xf] %vm915, %v1749
      %v1752 = vld [vmem:[%s1333] sm:$0xf]
      %v1753 = vld [vmem:[%s1333 + $0x4] sm:$0x1]
      %v1755 = vshrl.u32 %v1752, 16
      %v1757 = vrot.slane %v1755, 4
      %v1758 = vshll.u32 %v1752, 16
      %v1760 = vrot.slane %v1758, 5
      %v1761 = vor.u32 %v1757, %v1760
      %v1762 = vrot.slane %v1761, 4
      %v1764 = vshll.u32 %v1753, 16
      %v1766 = vrot.slane %v1764, 5
      %v1767 = vsel %vm433, %v1762, %v1766
      %1768 = vrot.lane.b32.xlu0 %v1767, 80
      %v1769 = vpop.permute.xlu0 %1768
      %1771 = vst.msk [vmem:[#allocation2 + $0x54] sm:$0xf] %vm915, %v1769
      %v1772 = vld [vmem:[%s1340] sm:$0xf]
      %v1773 = vld [vmem:[%s1340 + $0x4] sm:$0x1]
      %v1775 = vshrl.u32 %v1772, 16
      %v1777 = vrot.slane %v1775, 4
      %v1778 = vshll.u32 %v1772, 16
      %v1780 = vrot.slane %v1778, 5
      %v1781 = vor.u32 %v1777, %v1780
      %v1782 = vrot.slane %v1781, 4
      %v1784 = vshll.u32 %v1773, 16
      %v1786 = vrot.slane %v1784, 5
      %v1787 = vsel %vm433, %v1782, %v1786
      %1788 = vrot.lane.b32.xlu0 %v1787, 80
      %v1789 = vpop.permute.xlu0 %1788
      %1791 = vst.msk [vmem:[#allocation2 + $0x64] sm:$0xf] %vm915, %v1789
      %v1792 = vld [vmem:[%s1645] sm:$0xf]
      %v1793 = vld [vmem:[%s1645 + $0x4] sm:$0x1]
      %v1795 = vshrl.u32 %v1792, 16
      %v1797 = vrot.slane %v1795, 4
      %v1798 = vshll.u32 %v1792, 16
      %v1800 = vrot.slane %v1798, 5
      %v1801 = vor.u32 %v1797, %v1800
      %v1802 = vrot.slane %v1801, 4
      %v1804 = vshll.u32 %v1793, 16
      %v1806 = vrot.slane %v1804, 5
      %v1807 = vsel %vm433, %v1802, %v1806
      %1808 = vrot.lane.b32.xlu0 %v1807, 80
      %v1809 = vpop.permute.xlu0 %1808
      %1811 = vst.msk [vmem:[#allocation2 + $0x74] sm:$0xf] %vm915, %v1809
      %v1812 = vld [vmem:[%s1298] sm:$0xe]
      %v1813 = vld [vmem:[%s1298 + $0x4] sm:$0x1]
      %v1816 = vrot.slane %v1812, 5
      %v1817 = vrot.slane %v1816, 4
      %v1818 = vrot.slane %v1813, 5
      %v1819 = vsel %vm599, %v1817, %v1818
      %1820 = vrot.lane.b32.xlu0 %v1819, 96
      %v1821 = vpop.permute.xlu0 %1820
      %1823 = vst.msk [vmem:[#allocation2 + $0x4] sm:$0xf] %vm1006, %v1821
      %v1824 = vld [vmem:[%s1305] sm:$0xe]
      %v1825 = vld [vmem:[%s1305 + $0x4] sm:$0x1]
      %v1828 = vrot.slane %v1824, 5
      %v1829 = vrot.slane %v1828, 4
      %v1830 = vrot.slane %v1825, 5
      %v1831 = vsel %vm599, %v1829, %v1830
      %1832 = vrot.lane.b32.xlu0 %v1831, 96
      %v1833 = vpop.permute.xlu0 %1832
      %1835 = vst.msk [vmem:[#allocation2 + $0x14] sm:$0xf] %vm1006, %v1833
      %v1836 = vld [vmem:[%s1312] sm:$0xe]
      %v1837 = vld [vmem:[%s1312 + $0x4] sm:$0x1]
      %v1840 = vrot.slane %v1836, 5
      %v1841 = vrot.slane %v1840, 4
      %v1842 = vrot.slane %v1837, 5
      %v1843 = vsel %vm599, %v1841, %v1842
      %1844 = vrot.lane.b32.xlu0 %v1843, 96
      %v1845 = vpop.permute.xlu0 %1844
      %1847 = vst.msk [vmem:[#allocation2 + $0x24] sm:$0xf] %vm1006, %v1845
      %v1848 = vld [vmem:[%s1319] sm:$0xe]
      %v1849 = vld [vmem:[%s1319 + $0x4] sm:$0x1]
      %v1852 = vrot.slane %v1848, 5
      %v1853 = vrot.slane %v1852, 4
      %v1854 = vrot.slane %v1849, 5
      %v1855 = vsel %vm599, %v1853, %v1854
      %1856 = vrot.lane.b32.xlu0 %v1855, 96
      %v1857 = vpop.permute.xlu0 %1856
      %1859 = vst.msk [vmem:[#allocation2 + $0x34] sm:$0xf] %vm1006, %v1857
      %v1860 = vld [vmem:[%s1326] sm:$0xe]
      %v1861 = vld [vmem:[%s1326 + $0x4] sm:$0x1]
      %v1864 = vrot.slane %v1860, 5
      %v1865 = vrot.slane %v1864, 4
      %v1866 = vrot.slane %v1861, 5
      %v1867 = vsel %vm599, %v1865, %v1866
      %1868 = vrot.lane.b32.xlu0 %v1867, 96
      %v1869 = vpop.permute.xlu0 %1868
      %1871 = vst.msk [vmem:[#allocation2 + $0x44] sm:$0xf] %vm1006, %v1869
      %v1872 = vld [vmem:[%s1333] sm:$0xe]
      %v1873 = vld [vmem:[%s1333 + $0x4] sm:$0x1]
      %v1876 = vrot.slane %v1872, 5
      %v1877 = vrot.slane %v1876, 4
      %v1878 = vrot.slane %v1873, 5
      %v1879 = vsel %vm599, %v1877, %v1878
      %1880 = vrot.lane.b32.xlu0 %v1879, 96
      %v1881 = vpop.permute.xlu0 %1880
      %1883 = vst.msk [vmem:[#allocation2 + $0x54] sm:$0xf] %vm1006, %v1881
      %v1884 = vld [vmem:[%s1340] sm:$0xe]
      %v1885 = vld [vmem:[%s1340 + $0x4] sm:$0x1]
      %v1888 = vrot.slane %v1884, 5
      %v1889 = vrot.slane %v1888, 4
      %v1890 = vrot.slane %v1885, 5
      %v1891 = vsel %vm599, %v1889, %v1890
      %1892 = vrot.lane.b32.xlu0 %v1891, 96
      %v1893 = vpop.permute.xlu0 %1892
      %1895 = vst.msk [vmem:[#allocation2 + $0x64] sm:$0xf] %vm1006, %v1893
      %v1896 = vld [vmem:[%s1645] sm:$0xe]
      %v1897 = vld [vmem:[%s1645 + $0x4] sm:$0x1]
      %v1900 = vrot.slane %v1896, 5
      %v1901 = vrot.slane %v1900, 4
      %v1902 = vrot.slane %v1897, 5
      %v1903 = vsel %vm599, %v1901, %v1902
      %1904 = vrot.lane.b32.xlu0 %v1903, 96
      %v1905 = vpop.permute.xlu0 %1904
      %1907 = vst.msk [vmem:[#allocation2 + $0x74] sm:$0xf] %vm1006, %v1905
      %v1908 = vld [vmem:[%s1305] sm:$0xf]
      %1910 = vrot.lane.b32.xlu0 %v1908, 112
      %v1911 = vpop.permute.xlu0 %1910
      %1913 = vst.msk [vmem:[#allocation2 + $0x4] sm:$0xf] %vm1070, %v1911
      %v1914 = vld [vmem:[%s1312] sm:$0xf]
      %1916 = vrot.lane.b32.xlu0 %v1914, 112
      %v1917 = vpop.permute.xlu0 %1916
      %1919 = vst.msk [vmem:[#allocation2 + $0x14] sm:$0xf] %vm1070, %v1917
      %v1920 = vld [vmem:[%s1319] sm:$0xf]
      %1922 = vrot.lane.b32.xlu0 %v1920, 112
      %v1923 = vpop.permute.xlu0 %1922
      %1925 = vst.msk [vmem:[#allocation2 + $0x24] sm:$0xf] %vm1070, %v1923
      %v1926 = vld [vmem:[%s1326] sm:$0xf]
      %1928 = vrot.lane.b32.xlu0 %v1926, 112
      %v1929 = vpop.permute.xlu0 %1928
      %1931 = vst.msk [vmem:[#allocation2 + $0x34] sm:$0xf] %vm1070, %v1929
      %v1932 = vld [vmem:[%s1333] sm:$0xf]
      %1934 = vrot.lane.b32.xlu0 %v1932, 112
      %v1935 = vpop.permute.xlu0 %1934
      %1937 = vst.msk [vmem:[#allocation2 + $0x44] sm:$0xf] %vm1070, %v1935
      %v1938 = vld [vmem:[%s1340] sm:$0xf]
      %1940 = vrot.lane.b32.xlu0 %v1938, 112
      %v1941 = vpop.permute.xlu0 %1940
      %1943 = vst.msk [vmem:[#allocation2 + $0x54] sm:$0xf] %vm1070, %v1941
      %v1944 = vld [vmem:[%s1645] sm:$0xf]
      %1946 = vrot.lane.b32.xlu0 %v1944, 112
      %v1947 = vpop.permute.xlu0 %1946
      %1949 = vst.msk [vmem:[#allocation2 + $0x64] sm:$0xf] %vm1070, %v1947
      %s1950 = scalar_lea.vmem %s373, 72
      %v1951 = vld [vmem:[%s1950] sm:$0xf]
      %1953 = vrot.lane.b32.xlu0 %v1951, 112
      %v1954 = vpop.permute.xlu0 %1953
      %1956 = vst.msk [vmem:[#allocation2 + $0x74] sm:$0xf] %vm1070, %v1954
      %v1957 = vld [vmem:[%s1305] sm:$0xf]
      %v1958 = vld [vmem:[%s1305 + $0x4] sm:$0x1]
      %v1960 = vshrl.u32 %v1957, 16
      %v1962 = vrot.slane %v1960, 4
      %v1963 = vshll.u32 %v1957, 16
      %v1965 = vrot.slane %v1963, 5
      %v1966 = vor.u32 %v1962, %v1965
      %v1967 = vrot.slane %v1966, 4
      %v1969 = vshll.u32 %v1958, 16
      %v1971 = vrot.slane %v1969, 5
      %v1972 = vsel %vm433, %v1967, %v1971
      %1974 = vst.msk [vmem:[#allocation2 + $0x8] sm:$0xf] %vm406, %v1972
      %v1975 = vld [vmem:[%s1312] sm:$0xf]
      %v1976 = vld [vmem:[%s1312 + $0x4] sm:$0x1]
      %v1978 = vshrl.u32 %v1975, 16
      %v1980 = vrot.slane %v1978, 4
      %v1981 = vshll.u32 %v1975, 16
      %v1983 = vrot.slane %v1981, 5
      %v1984 = vor.u32 %v1980, %v1983
      %v1985 = vrot.slane %v1984, 4
      %v1987 = vshll.u32 %v1976, 16
      %v1989 = vrot.slane %v1987, 5
      %v1990 = vsel %vm433, %v1985, %v1989
      %1992 = vst.msk [vmem:[#allocation2 + $0x18] sm:$0xf] %vm406, %v1990
      %v1993 = vld [vmem:[%s1319] sm:$0xf]
      %v1994 = vld [vmem:[%s1319 + $0x4] sm:$0x1]
      %v1996 = vshrl.u32 %v1993, 16
      %v1998 = vrot.slane %v1996, 4
      %v1999 = vshll.u32 %v1993, 16
      %v2001 = vrot.slane %v1999, 5
      %v2002 = vor.u32 %v1998, %v2001
      %v2003 = vrot.slane %v2002, 4
      %v2005 = vshll.u32 %v1994, 16
      %v2007 = vrot.slane %v2005, 5
      %v2008 = vsel %vm433, %v2003, %v2007
      %2010 = vst.msk [vmem:[#allocation2 + $0x28] sm:$0xf] %vm406, %v2008
      %v2011 = vld [vmem:[%s1326] sm:$0xf]
      %v2012 = vld [vmem:[%s1326 + $0x4] sm:$0x1]
      %v2014 = vshrl.u32 %v2011, 16
      %v2016 = vrot.slane %v2014, 4
      %v2017 = vshll.u32 %v2011, 16
      %v2019 = vrot.slane %v2017, 5
      %v2020 = vor.u32 %v2016, %v2019
      %v2021 = vrot.slane %v2020, 4
      %v2023 = vshll.u32 %v2012, 16
      %v2025 = vrot.slane %v2023, 5
      %v2026 = vsel %vm433, %v2021, %v2025
      %2028 = vst.msk [vmem:[#allocation2 + $0x38] sm:$0xf] %vm406, %v2026
      %v2029 = vld [vmem:[%s1333] sm:$0xf]
      %v2030 = vld [vmem:[%s1333 + $0x4] sm:$0x1]
      %v2032 = vshrl.u32 %v2029, 16
      %v2034 = vrot.slane %v2032, 4
      %v2035 = vshll.u32 %v2029, 16
      %v2037 = vrot.slane %v2035, 5
      %v2038 = vor.u32 %v2034, %v2037
      %v2039 = vrot.slane %v2038, 4
      %v2041 = vshll.u32 %v2030, 16
      %v2043 = vrot.slane %v2041, 5
      %v2044 = vsel %vm433, %v2039, %v2043
      %2046 = vst.msk [vmem:[#allocation2 + $0x48] sm:$0xf] %vm406, %v2044
      %v2047 = vld [vmem:[%s1340] sm:$0xf]
      %v2048 = vld [vmem:[%s1340 + $0x4] sm:$0x1]
      %v2050 = vshrl.u32 %v2047, 16
      %v2052 = vrot.slane %v2050, 4
      %v2053 = vshll.u32 %v2047, 16
      %v2055 = vrot.slane %v2053, 5
      %v2056 = vor.u32 %v2052, %v2055
      %v2057 = vrot.slane %v2056, 4
      %v2059 = vshll.u32 %v2048, 16
      %v2061 = vrot.slane %v2059, 5
      %v2062 = vsel %vm433, %v2057, %v2061
      %2064 = vst.msk [vmem:[#allocation2 + $0x58] sm:$0xf] %vm406, %v2062
      %v2065 = vld [vmem:[%s1645] sm:$0xf]
      %v2066 = vld [vmem:[%s1645 + $0x4] sm:$0x1]
      %v2068 = vshrl.u32 %v2065, 16
      %v2070 = vrot.slane %v2068, 4
      %v2071 = vshll.u32 %v2065, 16
      %v2073 = vrot.slane %v2071, 5
      %v2074 = vor.u32 %v2070, %v2073
      %v2075 = vrot.slane %v2074, 4
      %v2077 = vshll.u32 %v2066, 16
      %v2079 = vrot.slane %v2077, 5
      %v2080 = vsel %vm433, %v2075, %v2079
      %2082 = vst.msk [vmem:[#allocation2 + $0x68] sm:$0xf] %vm406, %v2080
      %v2083 = vld [vmem:[%s1950] sm:$0xf]
      %v2084 = vld [vmem:[%s1950 + $0x4] sm:$0x1]
      %v2086 = vshrl.u32 %v2083, 16
      %v2088 = vrot.slane %v2086, 4
      %v2089 = vshll.u32 %v2083, 16
      %v2091 = vrot.slane %v2089, 5
      %v2092 = vor.u32 %v2088, %v2091
      %v2093 = vrot.slane %v2092, 4
      %v2095 = vshll.u32 %v2084, 16
      %v2097 = vrot.slane %v2095, 5
      %v2098 = vsel %vm433, %v2093, %v2097
      %2100 = vst.msk [vmem:[#allocation2 + $0x78] sm:$0xf] %vm406, %v2098
      %v2101 = vld [vmem:[%s1305] sm:$0xe]
      %v2102 = vld [vmem:[%s1305 + $0x4] sm:$0x1]
      %v2105 = vrot.slane %v2101, 5
      %v2106 = vrot.slane %v2105, 4
      %v2107 = vrot.slane %v2102, 5
      %v2108 = vsel %vm599, %v2106, %v2107
      %2109 = vrot.lane.b32.xlu0 %v2108, 16
      %v2110 = vpop.permute.xlu0 %2109
      %2112 = vst.msk [vmem:[#allocation2 + $0x8] sm:$0xf] %vm451, %v2110
      %v2113 = vld [vmem:[%s1312] sm:$0xe]
      %v2114 = vld [vmem:[%s1312 + $0x4] sm:$0x1]
      %v2117 = vrot.slane %v2113, 5
      %v2118 = vrot.slane %v2117, 4
      %v2119 = vrot.slane %v2114, 5
      %v2120 = vsel %vm599, %v2118, %v2119
      %2121 = vrot.lane.b32.xlu0 %v2120, 16
      %v2122 = vpop.permute.xlu0 %2121
      %2124 = vst.msk [vmem:[#allocation2 + $0x18] sm:$0xf] %vm451, %v2122
      %v2125 = vld [vmem:[%s1319] sm:$0xe]
      %v2126 = vld [vmem:[%s1319 + $0x4] sm:$0x1]
      %v2129 = vrot.slane %v2125, 5
      %v2130 = vrot.slane %v2129, 4
      %v2131 = vrot.slane %v2126, 5
      %v2132 = vsel %vm599, %v2130, %v2131
      %2133 = vrot.lane.b32.xlu0 %v2132, 16
      %v2134 = vpop.permute.xlu0 %2133
      %2136 = vst.msk [vmem:[#allocation2 + $0x28] sm:$0xf] %vm451, %v2134
      %v2137 = vld [vmem:[%s1326] sm:$0xe]
      %v2138 = vld [vmem:[%s1326 + $0x4] sm:$0x1]
      %v2141 = vrot.slane %v2137, 5
      %v2142 = vrot.slane %v2141, 4
      %v2143 = vrot.slane %v2138, 5
      %v2144 = vsel %vm599, %v2142, %v2143
      %2145 = vrot.lane.b32.xlu0 %v2144, 16
      %v2146 = vpop.permute.xlu0 %2145
      %2148 = vst.msk [vmem:[#allocation2 + $0x38] sm:$0xf] %vm451, %v2146
      %v2149 = vld [vmem:[%s1333] sm:$0xe]
      %v2150 = vld [vmem:[%s1333 + $0x4] sm:$0x1]
      %v2153 = vrot.slane %v2149, 5
      %v2154 = vrot.slane %v2153, 4
      %v2155 = vrot.slane %v2150, 5
      %v2156 = vsel %vm599, %v2154, %v2155
      %2157 = vrot.lane.b32.xlu0 %v2156, 16
      %v2158 = vpop.permute.xlu0 %2157
      %2160 = vst.msk [vmem:[#allocation2 + $0x48] sm:$0xf] %vm451, %v2158
      %v2161 = vld [vmem:[%s1340] sm:$0xe]
      %v2162 = vld [vmem:[%s1340 + $0x4] sm:$0x1]
      %v2165 = vrot.slane %v2161, 5
      %v2166 = vrot.slane %v2165, 4
      %v2167 = vrot.slane %v2162, 5
      %v2168 = vsel %vm599, %v2166, %v2167
      %2169 = vrot.lane.b32.xlu0 %v2168, 16
      %v2170 = vpop.permute.xlu0 %2169
      %2172 = vst.msk [vmem:[#allocation2 + $0x58] sm:$0xf] %vm451, %v2170
      %v2173 = vld [vmem:[%s1645] sm:$0xe]
      %v2174 = vld [vmem:[%s1645 + $0x4] sm:$0x1]
      %v2177 = vrot.slane %v2173, 5
      %v2178 = vrot.slane %v2177, 4
      %v2179 = vrot.slane %v2174, 5
      %v2180 = vsel %vm599, %v2178, %v2179
      %2181 = vrot.lane.b32.xlu0 %v2180, 16
      %v2182 = vpop.permute.xlu0 %2181
      %2184 = vst.msk [vmem:[#allocation2 + $0x68] sm:$0xf] %vm451, %v2182
      %v2185 = vld [vmem:[%s1950] sm:$0xe]
      %v2186 = vld [vmem:[%s1950 + $0x4] sm:$0x1]
      %v2189 = vrot.slane %v2185, 5
      %v2190 = vrot.slane %v2189, 4
      %v2191 = vrot.slane %v2186, 5
      %v2192 = vsel %vm599, %v2190, %v2191
      %2193 = vrot.lane.b32.xlu0 %v2192, 16
      %v2194 = vpop.permute.xlu0 %2193
      %2196 = vst.msk [vmem:[#allocation2 + $0x78] sm:$0xf] %vm451, %v2194
      %v2197 = vld [vmem:[%s384] sm:$0xf]
      %2199 = vrot.lane.b32.xlu0 %v2197, 32
      %v2200 = vpop.permute.xlu0 %2199
      %2202 = vst.msk [vmem:[#allocation2 + $0x8] sm:$0xf] %vm607, %v2200
      %s2203 = scalar_lea.vmem %s384, 8
      %v2204 = vld [vmem:[%s2203] sm:$0xf]
      %2206 = vrot.lane.b32.xlu0 %v2204, 32
      %v2207 = vpop.permute.xlu0 %2206
      %2209 = vst.msk [vmem:[#allocation2 + $0x18] sm:$0xf] %vm607, %v2207
      %s2210 = scalar_lea.vmem %s384, 16
      %v2211 = vld [vmem:[%s2210] sm:$0xf]
      %2213 = vrot.lane.b32.xlu0 %v2211, 32
      %v2214 = vpop.permute.xlu0 %2213
      %2216 = vst.msk [vmem:[#allocation2 + $0x28] sm:$0xf] %vm607, %v2214
      %s2217 = scalar_lea.vmem %s384, 24
      %v2218 = vld [vmem:[%s2217] sm:$0xf]
      %2220 = vrot.lane.b32.xlu0 %v2218, 32
      %v2221 = vpop.permute.xlu0 %2220
      %2223 = vst.msk [vmem:[#allocation2 + $0x38] sm:$0xf] %vm607, %v2221
      %s2224 = scalar_lea.vmem %s384, 32
      %v2225 = vld [vmem:[%s2224] sm:$0xf]
      %2227 = vrot.lane.b32.xlu0 %v2225, 32
      %v2228 = vpop.permute.xlu0 %2227
      %2230 = vst.msk [vmem:[#allocation2 + $0x48] sm:$0xf] %vm607, %v2228
      %s2231 = scalar_lea.vmem %s384, 40
      %v2232 = vld [vmem:[%s2231] sm:$0xf]
      %2234 = vrot.lane.b32.xlu0 %v2232, 32
      %v2235 = vpop.permute.xlu0 %2234
      %2237 = vst.msk [vmem:[#allocation2 + $0x58] sm:$0xf] %vm607, %v2235
      %s2238 = scalar_lea.vmem %s384, 48
      %v2239 = vld [vmem:[%s2238] sm:$0xf]
      %2241 = vrot.lane.b32.xlu0 %v2239, 32
      %v2242 = vpop.permute.xlu0 %2241
      %2244 = vst.msk [vmem:[#allocation2 + $0x68] sm:$0xf] %vm607, %v2242
      %s2245 = scalar_lea.vmem %s384, 56
      %v2246 = vld [vmem:[%s2245] sm:$0xf]
      %2248 = vrot.lane.b32.xlu0 %v2246, 32
      %v2249 = vpop.permute.xlu0 %2248
      %2251 = vst.msk [vmem:[#allocation2 + $0x78] sm:$0xf] %vm607, %v2249
      %v2252 = vld [vmem:[%s384] sm:$0xf]
      %v2253 = vld [vmem:[%s384 + $0x4] sm:$0x1]
      %v2255 = vshrl.u32 %v2252, 16
      %v2257 = vrot.slane %v2255, 4
      %v2258 = vshll.u32 %v2252, 16
      %v2260 = vrot.slane %v2258, 5
      %v2261 = vor.u32 %v2257, %v2260
      %v2262 = vrot.slane %v2261, 4
      %v2264 = vshll.u32 %v2253, 16
      %v2266 = vrot.slane %v2264, 5
      %v2267 = vsel %vm433, %v2262, %v2266
      %2268 = vrot.lane.b32.xlu0 %v2267, 48
      %v2269 = vpop.permute.xlu0 %2268
      %2271 = vst.msk [vmem:[#allocation2 + $0x8] sm:$0xf] %vm698, %v2269
      %v2272 = vld [vmem:[%s2203] sm:$0xf]
      %v2273 = vld [vmem:[%s2203 + $0x4] sm:$0x1]
      %v2275 = vshrl.u32 %v2272, 16
      %v2277 = vrot.slane %v2275, 4
      %v2278 = vshll.u32 %v2272, 16
      %v2280 = vrot.slane %v2278, 5
      %v2281 = vor.u32 %v2277, %v2280
      %v2282 = vrot.slane %v2281, 4
      %v2284 = vshll.u32 %v2273, 16
      %v2286 = vrot.slane %v2284, 5
      %v2287 = vsel %vm433, %v2282, %v2286
      %2288 = vrot.lane.b32.xlu0 %v2287, 48
      %v2289 = vpop.permute.xlu0 %2288
      %2291 = vst.msk [vmem:[#allocation2 + $0x18] sm:$0xf] %vm698, %v2289
      %v2292 = vld [vmem:[%s2210] sm:$0xf]
      %v2293 = vld [vmem:[%s2210 + $0x4] sm:$0x1]
      %v2295 = vshrl.u32 %v2292, 16
      %v2297 = vrot.slane %v2295, 4
      %v2298 = vshll.u32 %v2292, 16
      %v2300 = vrot.slane %v2298, 5
      %v2301 = vor.u32 %v2297, %v2300
      %v2302 = vrot.slane %v2301, 4
      %v2304 = vshll.u32 %v2293, 16
      %v2306 = vrot.slane %v2304, 5
      %v2307 = vsel %vm433, %v2302, %v2306
      %2308 = vrot.lane.b32.xlu0 %v2307, 48
      %v2309 = vpop.permute.xlu0 %2308
      %2311 = vst.msk [vmem:[#allocation2 + $0x28] sm:$0xf] %vm698, %v2309
      %v2312 = vld [vmem:[%s2217] sm:$0xf]
      %v2313 = vld [vmem:[%s2217 + $0x4] sm:$0x1]
      %v2315 = vshrl.u32 %v2312, 16
      %v2317 = vrot.slane %v2315, 4
      %v2318 = vshll.u32 %v2312, 16
      %v2320 = vrot.slane %v2318, 5
      %v2321 = vor.u32 %v2317, %v2320
      %v2322 = vrot.slane %v2321, 4
      %v2324 = vshll.u32 %v2313, 16
      %v2326 = vrot.slane %v2324, 5
      %v2327 = vsel %vm433, %v2322, %v2326
      %2328 = vrot.lane.b32.xlu0 %v2327, 48
      %v2329 = vpop.permute.xlu0 %2328
      %2331 = vst.msk [vmem:[#allocation2 + $0x38] sm:$0xf] %vm698, %v2329
      %v2332 = vld [vmem:[%s2224] sm:$0xf]
      %v2333 = vld [vmem:[%s2224 + $0x4] sm:$0x1]
      %v2335 = vshrl.u32 %v2332, 16
      %v2337 = vrot.slane %v2335, 4
      %v2338 = vshll.u32 %v2332, 16
      %v2340 = vrot.slane %v2338, 5
      %v2341 = vor.u32 %v2337, %v2340
      %v2342 = vrot.slane %v2341, 4
      %v2344 = vshll.u32 %v2333, 16
      %v2346 = vrot.slane %v2344, 5
      %v2347 = vsel %vm433, %v2342, %v2346
      %2348 = vrot.lane.b32.xlu0 %v2347, 48
      %v2349 = vpop.permute.xlu0 %2348
      %2351 = vst.msk [vmem:[#allocation2 + $0x48] sm:$0xf] %vm698, %v2349
      %v2352 = vld [vmem:[%s2231] sm:$0xf]
      %v2353 = vld [vmem:[%s2231 + $0x4] sm:$0x1]
      %v2355 = vshrl.u32 %v2352, 16
      %v2357 = vrot.slane %v2355, 4
      %v2358 = vshll.u32 %v2352, 16
      %v2360 = vrot.slane %v2358, 5
      %v2361 = vor.u32 %v2357, %v2360
      %v2362 = vrot.slane %v2361, 4
      %v2364 = vshll.u32 %v2353, 16
      %v2366 = vrot.slane %v2364, 5
      %v2367 = vsel %vm433, %v2362, %v2366
      %2368 = vrot.lane.b32.xlu0 %v2367, 48
      %v2369 = vpop.permute.xlu0 %2368
      %2371 = vst.msk [vmem:[#allocation2 + $0x58] sm:$0xf] %vm698, %v2369
      %v2372 = vld [vmem:[%s2238] sm:$0xf]
      %v2373 = vld [vmem:[%s2238 + $0x4] sm:$0x1]
      %v2375 = vshrl.u32 %v2372, 16
      %v2377 = vrot.slane %v2375, 4
      %v2378 = vshll.u32 %v2372, 16
      %v2380 = vrot.slane %v2378, 5
      %v2381 = vor.u32 %v2377, %v2380
      %v2382 = vrot.slane %v2381, 4
      %v2384 = vshll.u32 %v2373, 16
      %v2386 = vrot.slane %v2384, 5
      %v2387 = vsel %vm433, %v2382, %v2386
      %2388 = vrot.lane.b32.xlu0 %v2387, 48
      %v2389 = vpop.permute.xlu0 %2388
      %2391 = vst.msk [vmem:[#allocation2 + $0x68] sm:$0xf] %vm698, %v2389
      %v2392 = vld [vmem:[%s2245] sm:$0xf]
      %v2393 = vld [vmem:[%s2245 + $0x4] sm:$0x1]
      %v2395 = vshrl.u32 %v2392, 16
      %v2397 = vrot.slane %v2395, 4
      %v2398 = vshll.u32 %v2392, 16
      %v2400 = vrot.slane %v2398, 5
      %v2401 = vor.u32 %v2397, %v2400
      %v2402 = vrot.slane %v2401, 4
      %v2404 = vshll.u32 %v2393, 16
      %v2406 = vrot.slane %v2404, 5
      %v2407 = vsel %vm433, %v2402, %v2406
      %2408 = vrot.lane.b32.xlu0 %v2407, 48
      %v2409 = vpop.permute.xlu0 %2408
      %2411 = vst.msk [vmem:[#allocation2 + $0x78] sm:$0xf] %vm698, %v2409
      %v2412 = vld [vmem:[%s384] sm:$0xe]
      %v2413 = vld [vmem:[%s384 + $0x4] sm:$0x1]
      %v2416 = vrot.slane %v2412, 5
      %v2417 = vrot.slane %v2416, 4
      %v2418 = vrot.slane %v2413, 5
      %v2419 = vsel %vm599, %v2417, %v2418
      %2420 = vrot.lane.b32.xlu0 %v2419, 64
      %v2421 = vpop.permute.xlu0 %2420
      %2423 = vst.msk [vmem:[#allocation2 + $0x8] sm:$0xf] %vm762, %v2421
      %v2424 = vld [vmem:[%s2203] sm:$0xe]
      %v2425 = vld [vmem:[%s2203 + $0x4] sm:$0x1]
      %v2428 = vrot.slane %v2424, 5
      %v2429 = vrot.slane %v2428, 4
      %v2430 = vrot.slane %v2425, 5
      %v2431 = vsel %vm599, %v2429, %v2430
      %2432 = vrot.lane.b32.xlu0 %v2431, 64
      %v2433 = vpop.permute.xlu0 %2432
      %2435 = vst.msk [vmem:[#allocation2 + $0x18] sm:$0xf] %vm762, %v2433
      %v2436 = vld [vmem:[%s2210] sm:$0xe]
      %v2437 = vld [vmem:[%s2210 + $0x4] sm:$0x1]
      %v2440 = vrot.slane %v2436, 5
      %v2441 = vrot.slane %v2440, 4
      %v2442 = vrot.slane %v2437, 5
      %v2443 = vsel %vm599, %v2441, %v2442
      %2444 = vrot.lane.b32.xlu0 %v2443, 64
      %v2445 = vpop.permute.xlu0 %2444
      %2447 = vst.msk [vmem:[#allocation2 + $0x28] sm:$0xf] %vm762, %v2445
      %v2448 = vld [vmem:[%s2217] sm:$0xe]
      %v2449 = vld [vmem:[%s2217 + $0x4] sm:$0x1]
      %v2452 = vrot.slane %v2448, 5
      %v2453 = vrot.slane %v2452, 4
      %v2454 = vrot.slane %v2449, 5
      %v2455 = vsel %vm599, %v2453, %v2454
      %2456 = vrot.lane.b32.xlu0 %v2455, 64
      %v2457 = vpop.permute.xlu0 %2456
      %2459 = vst.msk [vmem:[#allocation2 + $0x38] sm:$0xf] %vm762, %v2457
      %v2460 = vld [vmem:[%s2224] sm:$0xe]
      %v2461 = vld [vmem:[%s2224 + $0x4] sm:$0x1]
      %v2464 = vrot.slane %v2460, 5
      %v2465 = vrot.slane %v2464, 4
      %v2466 = vrot.slane %v2461, 5
      %v2467 = vsel %vm599, %v2465, %v2466
      %2468 = vrot.lane.b32.xlu0 %v2467, 64
      %v2469 = vpop.permute.xlu0 %2468
      %2471 = vst.msk [vmem:[#allocation2 + $0x48] sm:$0xf] %vm762, %v2469
      %v2472 = vld [vmem:[%s2231] sm:$0xe]
      %v2473 = vld [vmem:[%s2231 + $0x4] sm:$0x1]
      %v2476 = vrot.slane %v2472, 5
      %v2477 = vrot.slane %v2476, 4
      %v2478 = vrot.slane %v2473, 5
      %v2479 = vsel %vm599, %v2477, %v2478
      %2480 = vrot.lane.b32.xlu0 %v2479, 64
      %v2481 = vpop.permute.xlu0 %2480
      %2483 = vst.msk [vmem:[#allocation2 + $0x58] sm:$0xf] %vm762, %v2481
      %v2484 = vld [vmem:[%s2238] sm:$0xe]
      %v2485 = vld [vmem:[%s2238 + $0x4] sm:$0x1]
      %v2488 = vrot.slane %v2484, 5
      %v2489 = vrot.slane %v2488, 4
      %v2490 = vrot.slane %v2485, 5
      %v2491 = vsel %vm599, %v2489, %v2490
      %2492 = vrot.lane.b32.xlu0 %v2491, 64
      %v2493 = vpop.permute.xlu0 %2492
      %2495 = vst.msk [vmem:[#allocation2 + $0x68] sm:$0xf] %vm762, %v2493
      %v2496 = vld [vmem:[%s2245] sm:$0xe]
      %v2497 = vld [vmem:[%s2245 + $0x4] sm:$0x1]
      %v2500 = vrot.slane %v2496, 5
      %v2501 = vrot.slane %v2500, 4
      %v2502 = vrot.slane %v2497, 5
      %v2503 = vsel %vm599, %v2501, %v2502
      %2504 = vrot.lane.b32.xlu0 %v2503, 64
      %v2505 = vpop.permute.xlu0 %2504
      %2507 = vst.msk [vmem:[#allocation2 + $0x78] sm:$0xf] %vm762, %v2505
      %v2508 = vld [vmem:[%s2203] sm:$0xf]
      %2510 = vrot.lane.b32.xlu0 %v2508, 80
      %v2511 = vpop.permute.xlu0 %2510
      %2513 = vst.msk [vmem:[#allocation2 + $0x8] sm:$0xf] %vm915, %v2511
      %v2514 = vld [vmem:[%s2210] sm:$0xf]
      %2516 = vrot.lane.b32.xlu0 %v2514, 80
      %v2517 = vpop.permute.xlu0 %2516
      %2519 = vst.msk [vmem:[#allocation2 + $0x18] sm:$0xf] %vm915, %v2517
      %v2520 = vld [vmem:[%s2217] sm:$0xf]
      %2522 = vrot.lane.b32.xlu0 %v2520, 80
      %v2523 = vpop.permute.xlu0 %2522
      %2525 = vst.msk [vmem:[#allocation2 + $0x28] sm:$0xf] %vm915, %v2523
      %v2526 = vld [vmem:[%s2224] sm:$0xf]
      %2528 = vrot.lane.b32.xlu0 %v2526, 80
      %v2529 = vpop.permute.xlu0 %2528
      %2531 = vst.msk [vmem:[#allocation2 + $0x38] sm:$0xf] %vm915, %v2529
      %v2532 = vld [vmem:[%s2231] sm:$0xf]
      %2534 = vrot.lane.b32.xlu0 %v2532, 80
      %v2535 = vpop.permute.xlu0 %2534
      %2537 = vst.msk [vmem:[#allocation2 + $0x48] sm:$0xf] %vm915, %v2535
      %v2538 = vld [vmem:[%s2238] sm:$0xf]
      %2540 = vrot.lane.b32.xlu0 %v2538, 80
      %v2541 = vpop.permute.xlu0 %2540
      %2543 = vst.msk [vmem:[#allocation2 + $0x58] sm:$0xf] %vm915, %v2541
      %v2544 = vld [vmem:[%s2245] sm:$0xf]
      %2546 = vrot.lane.b32.xlu0 %v2544, 80
      %v2547 = vpop.permute.xlu0 %2546
      %2549 = vst.msk [vmem:[#allocation2 + $0x68] sm:$0xf] %vm915, %v2547
      %s2550 = scalar_lea.vmem %s384, 64
      %v2551 = vld [vmem:[%s2550] sm:$0xf]
      %2553 = vrot.lane.b32.xlu0 %v2551, 80
      %v2554 = vpop.permute.xlu0 %2553
      %2556 = vst.msk [vmem:[#allocation2 + $0x78] sm:$0xf] %vm915, %v2554
      %v2557 = vld [vmem:[%s2203] sm:$0xf]
      %v2558 = vld [vmem:[%s2203 + $0x4] sm:$0x1]
      %v2560 = vshrl.u32 %v2557, 16
      %v2562 = vrot.slane %v2560, 4
      %v2563 = vshll.u32 %v2557, 16
      %v2565 = vrot.slane %v2563, 5
      %v2566 = vor.u32 %v2562, %v2565
      %v2567 = vrot.slane %v2566, 4
      %v2569 = vshll.u32 %v2558, 16
      %v2571 = vrot.slane %v2569, 5
      %v2572 = vsel %vm433, %v2567, %v2571
      %2573 = vrot.lane.b32.xlu0 %v2572, 96
      %v2574 = vpop.permute.xlu0 %2573
      %2576 = vst.msk [vmem:[#allocation2 + $0x8] sm:$0xf] %vm1006, %v2574
      %v2577 = vld [vmem:[%s2210] sm:$0xf]
      %v2578 = vld [vmem:[%s2210 + $0x4] sm:$0x1]
      %v2580 = vshrl.u32 %v2577, 16
      %v2582 = vrot.slane %v2580, 4
      %v2583 = vshll.u32 %v2577, 16
      %v2585 = vrot.slane %v2583, 5
      %v2586 = vor.u32 %v2582, %v2585
      %v2587 = vrot.slane %v2586, 4
      %v2589 = vshll.u32 %v2578, 16
      %v2591 = vrot.slane %v2589, 5
      %v2592 = vsel %vm433, %v2587, %v2591
      %2593 = vrot.lane.b32.xlu0 %v2592, 96
      %v2594 = vpop.permute.xlu0 %2593
      %2596 = vst.msk [vmem:[#allocation2 + $0x18] sm:$0xf] %vm1006, %v2594
      %v2597 = vld [vmem:[%s2217] sm:$0xf]
      %v2598 = vld [vmem:[%s2217 + $0x4] sm:$0x1]
      %v2600 = vshrl.u32 %v2597, 16
      %v2602 = vrot.slane %v2600, 4
      %v2603 = vshll.u32 %v2597, 16
      %v2605 = vrot.slane %v2603, 5
      %v2606 = vor.u32 %v2602, %v2605
      %v2607 = vrot.slane %v2606, 4
      %v2609 = vshll.u32 %v2598, 16
      %v2611 = vrot.slane %v2609, 5
      %v2612 = vsel %vm433, %v2607, %v2611
      %2613 = vrot.lane.b32.xlu0 %v2612, 96
      %v2614 = vpop.permute.xlu0 %2613
      %2616 = vst.msk [vmem:[#allocation2 + $0x28] sm:$0xf] %vm1006, %v2614
      %v2617 = vld [vmem:[%s2224] sm:$0xf]
      %v2618 = vld [vmem:[%s2224 + $0x4] sm:$0x1]
      %v2620 = vshrl.u32 %v2617, 16
      %v2622 = vrot.slane %v2620, 4
      %v2623 = vshll.u32 %v2617, 16
      %v2625 = vrot.slane %v2623, 5
      %v2626 = vor.u32 %v2622, %v2625
      %v2627 = vrot.slane %v2626, 4
      %v2629 = vshll.u32 %v2618, 16
      %v2631 = vrot.slane %v2629, 5
      %v2632 = vsel %vm433, %v2627, %v2631
      %2633 = vrot.lane.b32.xlu0 %v2632, 96
      %v2634 = vpop.permute.xlu0 %2633
      %2636 = vst.msk [vmem:[#allocation2 + $0x38] sm:$0xf] %vm1006, %v2634
      %v2637 = vld [vmem:[%s2231] sm:$0xf]
      %v2638 = vld [vmem:[%s2231 + $0x4] sm:$0x1]
      %v2640 = vshrl.u32 %v2637, 16
      %v2642 = vrot.slane %v2640, 4
      %v2643 = vshll.u32 %v2637, 16
      %v2645 = vrot.slane %v2643, 5
      %v2646 = vor.u32 %v2642, %v2645
      %v2647 = vrot.slane %v2646, 4
      %v2649 = vshll.u32 %v2638, 16
      %v2651 = vrot.slane %v2649, 5
      %v2652 = vsel %vm433, %v2647, %v2651
      %2653 = vrot.lane.b32.xlu0 %v2652, 96
      %v2654 = vpop.permute.xlu0 %2653
      %2656 = vst.msk [vmem:[#allocation2 + $0x48] sm:$0xf] %vm1006, %v2654
      %v2657 = vld [vmem:[%s2238] sm:$0xf]
      %v2658 = vld [vmem:[%s2238 + $0x4] sm:$0x1]
      %v2660 = vshrl.u32 %v2657, 16
      %v2662 = vrot.slane %v2660, 4
      %v2663 = vshll.u32 %v2657, 16
      %v2665 = vrot.slane %v2663, 5
      %v2666 = vor.u32 %v2662, %v2665
      %v2667 = vrot.slane %v2666, 4
      %v2669 = vshll.u32 %v2658, 16
      %v2671 = vrot.slane %v2669, 5
      %v2672 = vsel %vm433, %v2667, %v2671
      %2673 = vrot.lane.b32.xlu0 %v2672, 96
      %v2674 = vpop.permute.xlu0 %2673
      %2676 = vst.msk [vmem:[#allocation2 + $0x58] sm:$0xf] %vm1006, %v2674
      %v2677 = vld [vmem:[%s2245] sm:$0xf]
      %v2678 = vld [vmem:[%s2245 + $0x4] sm:$0x1]
      %v2680 = vshrl.u32 %v2677, 16
      %v2682 = vrot.slane %v2680, 4
      %v2683 = vshll.u32 %v2677, 16
      %v2685 = vrot.slane %v2683, 5
      %v2686 = vor.u32 %v2682, %v2685
      %v2687 = vrot.slane %v2686, 4
      %v2689 = vshll.u32 %v2678, 16
      %v2691 = vrot.slane %v2689, 5
      %v2692 = vsel %vm433, %v2687, %v2691
      %2693 = vrot.lane.b32.xlu0 %v2692, 96
      %v2694 = vpop.permute.xlu0 %2693
      %2696 = vst.msk [vmem:[#allocation2 + $0x68] sm:$0xf] %vm1006, %v2694
      %v2697 = vld [vmem:[%s2550] sm:$0xf]
      %v2698 = vld [vmem:[%s2550 + $0x4] sm:$0x1]
      %v2700 = vshrl.u32 %v2697, 16
      %v2702 = vrot.slane %v2700, 4
      %v2703 = vshll.u32 %v2697, 16
      %v2705 = vrot.slane %v2703, 5
      %v2706 = vor.u32 %v2702, %v2705
      %v2707 = vrot.slane %v2706, 4
      %v2709 = vshll.u32 %v2698, 16
      %v2711 = vrot.slane %v2709, 5
      %v2712 = vsel %vm433, %v2707, %v2711
      %2713 = vrot.lane.b32.xlu0 %v2712, 96
      %v2714 = vpop.permute.xlu0 %2713
      %2716 = vst.msk [vmem:[#allocation2 + $0x78] sm:$0xf] %vm1006, %v2714
      %v2717 = vld [vmem:[%s2203] sm:$0xe]
      %v2718 = vld [vmem:[%s2203 + $0x4] sm:$0x1]
      %v2721 = vrot.slane %v2717, 5
      %v2722 = vrot.slane %v2721, 4
      %v2723 = vrot.slane %v2718, 5
      %v2724 = vsel %vm599, %v2722, %v2723
      %2725 = vrot.lane.b32.xlu0 %v2724, 112
      %v2726 = vpop.permute.xlu0 %2725
      %2728 = vst.msk [vmem:[#allocation2 + $0x8] sm:$0xf] %vm1070, %v2726
      %v2729 = vld [vmem:[%s2210] sm:$0xe]
      %v2730 = vld [vmem:[%s2210 + $0x4] sm:$0x1]
      %v2733 = vrot.slane %v2729, 5
      %v2734 = vrot.slane %v2733, 4
      %v2735 = vrot.slane %v2730, 5
      %v2736 = vsel %vm599, %v2734, %v2735
      %2737 = vrot.lane.b32.xlu0 %v2736, 112
      %v2738 = vpop.permute.xlu0 %2737
      %2740 = vst.msk [vmem:[#allocation2 + $0x18] sm:$0xf] %vm1070, %v2738
      %v2741 = vld [vmem:[%s2217] sm:$0xe]
      %v2742 = vld [vmem:[%s2217 + $0x4] sm:$0x1]
      %v2745 = vrot.slane %v2741, 5
      %v2746 = vrot.slane %v2745, 4
      %v2747 = vrot.slane %v2742, 5
      %v2748 = vsel %vm599, %v2746, %v2747
      %2749 = vrot.lane.b32.xlu0 %v2748, 112
      %v2750 = vpop.permute.xlu0 %2749
      %2752 = vst.msk [vmem:[#allocation2 + $0x28] sm:$0xf] %vm1070, %v2750
      %v2753 = vld [vmem:[%s2224] sm:$0xe]
      %v2754 = vld [vmem:[%s2224 + $0x4] sm:$0x1]
      %v2757 = vrot.slane %v2753, 5
      %v2758 = vrot.slane %v2757, 4
      %v2759 = vrot.slane %v2754, 5
      %v2760 = vsel %vm599, %v2758, %v2759
      %2761 = vrot.lane.b32.xlu0 %v2760, 112
      %v2762 = vpop.permute.xlu0 %2761
      %2764 = vst.msk [vmem:[#allocation2 + $0x38] sm:$0xf] %vm1070, %v2762
      %v2765 = vld [vmem:[%s2231] sm:$0xe]
      %v2766 = vld [vmem:[%s2231 + $0x4] sm:$0x1]
      %v2769 = vrot.slane %v2765, 5
      %v2770 = vrot.slane %v2769, 4
      %v2771 = vrot.slane %v2766, 5
      %v2772 = vsel %vm599, %v2770, %v2771
      %2773 = vrot.lane.b32.xlu0 %v2772, 112
      %v2774 = vpop.permute.xlu0 %2773
      %2776 = vst.msk [vmem:[#allocation2 + $0x48] sm:$0xf] %vm1070, %v2774
      %v2777 = vld [vmem:[%s2238] sm:$0xe]
      %v2778 = vld [vmem:[%s2238 + $0x4] sm:$0x1]
      %v2781 = vrot.slane %v2777, 5
      %v2782 = vrot.slane %v2781, 4
      %v2783 = vrot.slane %v2778, 5
      %v2784 = vsel %vm599, %v2782, %v2783
      %2785 = vrot.lane.b32.xlu0 %v2784, 112
      %v2786 = vpop.permute.xlu0 %2785
      %2788 = vst.msk [vmem:[#allocation2 + $0x58] sm:$0xf] %vm1070, %v2786
      %v2789 = vld [vmem:[%s2245] sm:$0xe]
      %v2790 = vld [vmem:[%s2245 + $0x4] sm:$0x1]
      %v2793 = vrot.slane %v2789, 5
      %v2794 = vrot.slane %v2793, 4
      %v2795 = vrot.slane %v2790, 5
      %v2796 = vsel %vm599, %v2794, %v2795
      %2797 = vrot.lane.b32.xlu0 %v2796, 112
      %v2798 = vpop.permute.xlu0 %2797
      %2800 = vst.msk [vmem:[#allocation2 + $0x68] sm:$0xf] %vm1070, %v2798
      %v2801 = vld [vmem:[%s2550] sm:$0xe]
      %v2802 = vld [vmem:[%s2550 + $0x4] sm:$0x1]
      %v2805 = vrot.slane %v2801, 5
      %v2806 = vrot.slane %v2805, 4
      %v2807 = vrot.slane %v2802, 5
      %v2808 = vsel %vm599, %v2806, %v2807
      %2809 = vrot.lane.b32.xlu0 %v2808, 112
      %v2810 = vpop.permute.xlu0 %2809
      %2812 = vst.msk [vmem:[#allocation2 + $0x78] sm:$0xf] %vm1070, %v2810
      %v2813 = vld [vmem:[%s2210] sm:$0xf]
      %2814 = vst.msk [vmem:[#allocation2 + $0xc] sm:$0xf] %vm406, %v2813
      %v2815 = vld [vmem:[%s2217] sm:$0xf]
      %2816 = vst.msk [vmem:[#allocation2 + $0x1c] sm:$0xf] %vm406, %v2815
      %v2817 = vld [vmem:[%s2224] sm:$0xf]
      %2818 = vst.msk [vmem:[#allocation2 + $0x2c] sm:$0xf] %vm406, %v2817
      %v2819 = vld [vmem:[%s2231] sm:$0xf]
      %2820 = vst.msk [vmem:[#allocation2 + $0x3c] sm:$0xf] %vm406, %v2819
      %v2821 = vld [vmem:[%s2238] sm:$0xf]
      %2822 = vst.msk [vmem:[#allocation2 + $0x4c] sm:$0xf] %vm406, %v2821
      %v2823 = vld [vmem:[%s2245] sm:$0xf]
      %2824 = vst.msk [vmem:[#allocation2 + $0x5c] sm:$0xf] %vm406, %v2823
      %v2825 = vld [vmem:[%s2550] sm:$0xf]
      %2826 = vst.msk [vmem:[#allocation2 + $0x6c] sm:$0xf] %vm406, %v2825
      %s2827 = scalar_lea.vmem %s384, 72
      %v2828 = vld [vmem:[%s2827] sm:$0xf]
      %2829 = vst.msk [vmem:[#allocation2 + $0x7c] sm:$0xf] %vm406, %v2828
      %v2830 = vld [vmem:[%s2210] sm:$0xf]
      %v2831 = vld [vmem:[%s2210 + $0x4] sm:$0x1]
      %v2833 = vshrl.u32 %v2830, 16
      %v2835 = vrot.slane %v2833, 4
      %v2836 = vshll.u32 %v2830, 16
      %v2838 = vrot.slane %v2836, 5
      %v2839 = vor.u32 %v2835, %v2838
      %v2840 = vrot.slane %v2839, 4
      %v2842 = vshll.u32 %v2831, 16
      %v2844 = vrot.slane %v2842, 5
      %v2845 = vsel %vm433, %v2840, %v2844
      %2846 = vrot.lane.b32.xlu0 %v2845, 16
      %v2847 = vpop.permute.xlu0 %2846
      %2849 = vst.msk [vmem:[#allocation2 + $0xc] sm:$0xf] %vm451, %v2847
      %v2850 = vld [vmem:[%s2217] sm:$0xf]
      %v2851 = vld [vmem:[%s2217 + $0x4] sm:$0x1]
      %v2853 = vshrl.u32 %v2850, 16
      %v2855 = vrot.slane %v2853, 4
      %v2856 = vshll.u32 %v2850, 16
      %v2858 = vrot.slane %v2856, 5
      %v2859 = vor.u32 %v2855, %v2858
      %v2860 = vrot.slane %v2859, 4
      %v2862 = vshll.u32 %v2851, 16
      %v2864 = vrot.slane %v2862, 5
      %v2865 = vsel %vm433, %v2860, %v2864
      %2866 = vrot.lane.b32.xlu0 %v2865, 16
      %v2867 = vpop.permute.xlu0 %2866
      %2869 = vst.msk [vmem:[#allocation2 + $0x1c] sm:$0xf] %vm451, %v2867
      %v2870 = vld [vmem:[%s2224] sm:$0xf]
      %v2871 = vld [vmem:[%s2224 + $0x4] sm:$0x1]
      %v2873 = vshrl.u32 %v2870, 16
      %v2875 = vrot.slane %v2873, 4
      %v2876 = vshll.u32 %v2870, 16
      %v2878 = vrot.slane %v2876, 5
      %v2879 = vor.u32 %v2875, %v2878
      %v2880 = vrot.slane %v2879, 4
      %v2882 = vshll.u32 %v2871, 16
      %v2884 = vrot.slane %v2882, 5
      %v2885 = vsel %vm433, %v2880, %v2884
      %2886 = vrot.lane.b32.xlu0 %v2885, 16
      %v2887 = vpop.permute.xlu0 %2886
      %2889 = vst.msk [vmem:[#allocation2 + $0x2c] sm:$0xf] %vm451, %v2887
      %v2890 = vld [vmem:[%s2231] sm:$0xf]
      %v2891 = vld [vmem:[%s2231 + $0x4] sm:$0x1]
      %v2893 = vshrl.u32 %v2890, 16
      %v2895 = vrot.slane %v2893, 4
      %v2896 = vshll.u32 %v2890, 16
      %v2898 = vrot.slane %v2896, 5
      %v2899 = vor.u32 %v2895, %v2898
      %v2900 = vrot.slane %v2899, 4
      %v2902 = vshll.u32 %v2891, 16
      %v2904 = vrot.slane %v2902, 5
      %v2905 = vsel %vm433, %v2900, %v2904
      %2906 = vrot.lane.b32.xlu0 %v2905, 16
      %v2907 = vpop.permute.xlu0 %2906
      %2909 = vst.msk [vmem:[#allocation2 + $0x3c] sm:$0xf] %vm451, %v2907
      %v2910 = vld [vmem:[%s2238] sm:$0xf]
      %v2911 = vld [vmem:[%s2238 + $0x4] sm:$0x1]
      %v2913 = vshrl.u32 %v2910, 16
      %v2915 = vrot.slane %v2913, 4
      %v2916 = vshll.u32 %v2910, 16
      %v2918 = vrot.slane %v2916, 5
      %v2919 = vor.u32 %v2915, %v2918
      %v2920 = vrot.slane %v2919, 4
      %v2922 = vshll.u32 %v2911, 16
      %v2924 = vrot.slane %v2922, 5
      %v2925 = vsel %vm433, %v2920, %v2924
      %2926 = vrot.lane.b32.xlu0 %v2925, 16
      %v2927 = vpop.permute.xlu0 %2926
      %2929 = vst.msk [vmem:[#allocation2 + $0x4c] sm:$0xf] %vm451, %v2927
      %v2930 = vld [vmem:[%s2245] sm:$0xf]
      %v2931 = vld [vmem:[%s2245 + $0x4] sm:$0x1]
      %v2933 = vshrl.u32 %v2930, 16
      %v2935 = vrot.slane %v2933, 4
      %v2936 = vshll.u32 %v2930, 16
      %v2938 = vrot.slane %v2936, 5
      %v2939 = vor.u32 %v2935, %v2938
      %v2940 = vrot.slane %v2939, 4
      %v2942 = vshll.u32 %v2931, 16
      %v2944 = vrot.slane %v2942, 5
      %v2945 = vsel %vm433, %v2940, %v2944
      %2946 = vrot.lane.b32.xlu0 %v2945, 16
      %v2947 = vpop.permute.xlu0 %2946
      %2949 = vst.msk [vmem:[#allocation2 + $0x5c] sm:$0xf] %vm451, %v2947
      %v2950 = vld [vmem:[%s2550] sm:$0xf]
      %v2951 = vld [vmem:[%s2550 + $0x4] sm:$0x1]
      %v2953 = vshrl.u32 %v2950, 16
      %v2955 = vrot.slane %v2953, 4
      %v2956 = vshll.u32 %v2950, 16
      %v2958 = vrot.slane %v2956, 5
      %v2959 = vor.u32 %v2955, %v2958
      %v2960 = vrot.slane %v2959, 4
      %v2962 = vshll.u32 %v2951, 16
      %v2964 = vrot.slane %v2962, 5
      %v2965 = vsel %vm433, %v2960, %v2964
      %2966 = vrot.lane.b32.xlu0 %v2965, 16
      %v2967 = vpop.permute.xlu0 %2966
      %2969 = vst.msk [vmem:[#allocation2 + $0x6c] sm:$0xf] %vm451, %v2967
      %v2970 = vld [vmem:[%s2827] sm:$0xf]
      %v2971 = vld [vmem:[%s2827 + $0x4] sm:$0x1]
      %v2973 = vshrl.u32 %v2970, 16
      %v2975 = vrot.slane %v2973, 4
      %v2976 = vshll.u32 %v2970, 16
      %v2978 = vrot.slane %v2976, 5
      %v2979 = vor.u32 %v2975, %v2978
      %v2980 = vrot.slane %v2979, 4
      %v2982 = vshll.u32 %v2971, 16
      %v2984 = vrot.slane %v2982, 5
      %v2985 = vsel %vm433, %v2980, %v2984
      %2986 = vrot.lane.b32.xlu0 %v2985, 16
      %v2987 = vpop.permute.xlu0 %2986
      %2989 = vst.msk [vmem:[#allocation2 + $0x7c] sm:$0xf] %vm451, %v2987
      %v2990 = vld [vmem:[%s2210] sm:$0xe]
      %v2991 = vld [vmem:[%s2210 + $0x4] sm:$0x1]
      %v2994 = vrot.slane %v2990, 5
      %v2995 = vrot.slane %v2994, 4
      %v2996 = vrot.slane %v2991, 5
      %v2997 = vsel %vm599, %v2995, %v2996
      %2998 = vrot.lane.b32.xlu0 %v2997, 32
      %v2999 = vpop.permute.xlu0 %2998
      %3001 = vst.msk [vmem:[#allocation2 + $0xc] sm:$0xf] %vm607, %v2999
      %v3002 = vld [vmem:[%s2217] sm:$0xe]
      %v3003 = vld [vmem:[%s2217 + $0x4] sm:$0x1]
      %v3006 = vrot.slane %v3002, 5
      %v3007 = vrot.slane %v3006, 4
      %v3008 = vrot.slane %v3003, 5
      %v3009 = vsel %vm599, %v3007, %v3008
      %3010 = vrot.lane.b32.xlu0 %v3009, 32
      %v3011 = vpop.permute.xlu0 %3010
      %3013 = vst.msk [vmem:[#allocation2 + $0x1c] sm:$0xf] %vm607, %v3011
      %v3014 = vld [vmem:[%s2224] sm:$0xe]
      %v3015 = vld [vmem:[%s2224 + $0x4] sm:$0x1]
      %v3018 = vrot.slane %v3014, 5
      %v3019 = vrot.slane %v3018, 4
      %v3020 = vrot.slane %v3015, 5
      %v3021 = vsel %vm599, %v3019, %v3020
      %3022 = vrot.lane.b32.xlu0 %v3021, 32
      %v3023 = vpop.permute.xlu0 %3022
      %3025 = vst.msk [vmem:[#allocation2 + $0x2c] sm:$0xf] %vm607, %v3023
      %v3026 = vld [vmem:[%s2231] sm:$0xe]
      %v3027 = vld [vmem:[%s2231 + $0x4] sm:$0x1]
      %v3030 = vrot.slane %v3026, 5
      %v3031 = vrot.slane %v3030, 4
      %v3032 = vrot.slane %v3027, 5
      %v3033 = vsel %vm599, %v3031, %v3032
      %3034 = vrot.lane.b32.xlu0 %v3033, 32
      %v3035 = vpop.permute.xlu0 %3034
      %3037 = vst.msk [vmem:[#allocation2 + $0x3c] sm:$0xf] %vm607, %v3035
      %v3038 = vld [vmem:[%s2238] sm:$0xe]
      %v3039 = vld [vmem:[%s2238 + $0x4] sm:$0x1]
      %v3042 = vrot.slane %v3038, 5
      %v3043 = vrot.slane %v3042, 4
      %v3044 = vrot.slane %v3039, 5
      %v3045 = vsel %vm599, %v3043, %v3044
      %3046 = vrot.lane.b32.xlu0 %v3045, 32
      %v3047 = vpop.permute.xlu0 %3046
      %3049 = vst.msk [vmem:[#allocation2 + $0x4c] sm:$0xf] %vm607, %v3047
      %v3050 = vld [vmem:[%s2245] sm:$0xe]
      %v3051 = vld [vmem:[%s2245 + $0x4] sm:$0x1]
      %v3054 = vrot.slane %v3050, 5
      %v3055 = vrot.slane %v3054, 4
      %v3056 = vrot.slane %v3051, 5
      %v3057 = vsel %vm599, %v3055, %v3056
      %3058 = vrot.lane.b32.xlu0 %v3057, 32
      %v3059 = vpop.permute.xlu0 %3058
      %3061 = vst.msk [vmem:[#allocation2 + $0x5c] sm:$0xf] %vm607, %v3059
      %v3062 = vld [vmem:[%s2550] sm:$0xe]
      %v3063 = vld [vmem:[%s2550 + $0x4] sm:$0x1]
      %v3066 = vrot.slane %v3062, 5
      %v3067 = vrot.slane %v3066, 4
      %v3068 = vrot.slane %v3063, 5
      %v3069 = vsel %vm599, %v3067, %v3068
      %3070 = vrot.lane.b32.xlu0 %v3069, 32
      %v3071 = vpop.permute.xlu0 %3070
      %3073 = vst.msk [vmem:[#allocation2 + $0x6c] sm:$0xf] %vm607, %v3071
      %v3074 = vld [vmem:[%s2827] sm:$0xe]
      %v3075 = vld [vmem:[%s2827 + $0x4] sm:$0x1]
      %v3078 = vrot.slane %v3074, 5
      %v3079 = vrot.slane %v3078, 4
      %v3080 = vrot.slane %v3075, 5
      %v3081 = vsel %vm599, %v3079, %v3080
      %3082 = vrot.lane.b32.xlu0 %v3081, 32
      %v3083 = vpop.permute.xlu0 %3082
      %3085 = vst.msk [vmem:[#allocation2 + $0x7c] sm:$0xf] %vm607, %v3083
      %v3086 = vld [vmem:[#allocation2] sm:$0xff]
      %v3087 = vld [vmem:[#allocation2 + $0x8] sm:$0xff]
      %v3088 = vld [vmem:[#allocation2 + $0x10] sm:$0xff]
      %v3089 = vld [vmem:[#allocation2 + $0x18] sm:$0xff]
      %v3090 = vld [vmem:[#allocation2 + $0x20] sm:$0xff]
      %v3091 = vld [vmem:[#allocation2 + $0x28] sm:$0xff]
      %v3092 = vld [vmem:[#allocation2 + $0x30] sm:$0xff]
      %v3093 = vld [vmem:[#allocation2 + $0x38] sm:$0xff]
      %v3094 = vld [vmem:[#allocation2 + $0x40] sm:$0xff]
      %v3095 = vld [vmem:[#allocation2 + $0x48] sm:$0xff]
      %v3096 = vld [vmem:[#allocation2 + $0x50] sm:$0xff]
      %v3097 = vld [vmem:[#allocation2 + $0x58] sm:$0xff]
      %v3098 = vld [vmem:[#allocation2 + $0x60] sm:$0xff]
      %v3099 = vld [vmem:[#allocation2 + $0x68] sm:$0xff]
      %v3100 = vld [vmem:[#allocation2 + $0x70] sm:$0xff]
      %v3101 = vld [vmem:[#allocation2 + $0x78] sm:$0xff]
      %v3102 = vld [vmem:[%s3] sm:$0xf]
      %v3103 = vld [vmem:[%s3 + $0x4] sm:$0xf]
      %v3104 = vld [vmem:[%s3 + $0x8] sm:$0xf]
      %v3105 = vld [vmem:[%s3 + $0xc] sm:$0xf]
      %v3106 = vld [vmem:[%s3 + $0x10] sm:$0xf]
      %v3107 = vld [vmem:[%s3 + $0x14] sm:$0xf]
      %v3108 = vld [vmem:[%s3 + $0x18] sm:$0xf]
      %v3109 = vld [vmem:[%s3 + $0x1c] sm:$0xf]
      %v3110 = vld [vmem:[%s3 + $0x20] sm:$0xf]
      %v3111 = vld [vmem:[%s3 + $0x24] sm:$0xf]
      %v3112 = vld [vmem:[%s3 + $0x28] sm:$0xf]
      %v3113 = vld [vmem:[%s3 + $0x2c] sm:$0xf]
      %v3114 = vld [vmem:[%s3 + $0x30] sm:$0xf]
      %v3115 = vld [vmem:[%s3 + $0x34] sm:$0xf]
      %v3116 = vld [vmem:[%s3 + $0x38] sm:$0xf]
      %v3117 = vld [vmem:[%s3 + $0x3c] sm:$0xf]
      %v3118 = vld [vmem:[%s3 + $0x40] sm:$0xf]
      %v3119 = vld [vmem:[%s3 + $0x44] sm:$0xf]
      %v3120 = vld [vmem:[%s3 + $0x48] sm:$0xf]
      %v3121 = vld [vmem:[%s3 + $0x4c] sm:$0xf]
      %v3122 = vld [vmem:[%s3 + $0x50] sm:$0xf]
      %v3123 = vld [vmem:[%s3 + $0x54] sm:$0xf]
      %v3124 = vld [vmem:[%s3 + $0x58] sm:$0xf]
      %v3125 = vld [vmem:[%s3 + $0x5c] sm:$0xf]
      %v3126 = vld [vmem:[%s3 + $0x60] sm:$0xf]
      %v3127 = vld [vmem:[%s3 + $0x64] sm:$0xf]
      %v3128 = vld [vmem:[%s3 + $0x68] sm:$0xf]
      %v3129 = vld [vmem:[%s3 + $0x6c] sm:$0xf]
      %v3130 = vld [vmem:[%s3 + $0x70] sm:$0xf]
      %v3131 = vld [vmem:[%s3 + $0x74] sm:$0xf]
      %v3132 = vld [vmem:[%s3 + $0x78] sm:$0xf]
      %v3133 = vld [vmem:[%s3 + $0x7c] sm:$0xf]
      %v3134 = vld [vmem:[%s3 + $0x80] sm:$0xf]
      %v3135 = vld [vmem:[%s3 + $0x84] sm:$0xf]
      %v3136 = vld [vmem:[%s3 + $0x88] sm:$0xf]
      %v3137 = vld [vmem:[%s3 + $0x8c] sm:$0xf]
      %v3138 = vld [vmem:[%s3 + $0x90] sm:$0xf]
      %v3139 = vld [vmem:[%s3 + $0x94] sm:$0xf]
      %v3140 = vld [vmem:[%s3 + $0x98] sm:$0xf]
      %v3141 = vld [vmem:[%s3 + $0x9c] sm:$0xf]
      %v3142 = vld [vmem:[%s3 + $0xa0] sm:$0xf]
      %v3143 = vld [vmem:[%s3 + $0xa4] sm:$0xf]
      %v3144 = vld [vmem:[%s3 + $0xa8] sm:$0xf]
      %v3145 = vld [vmem:[%s3 + $0xac] sm:$0xf]
      %v3146 = vld [vmem:[%s3 + $0xb0] sm:$0xf]
      %v3147 = vld [vmem:[%s3 + $0xb4] sm:$0xf]
      %v3148 = vld [vmem:[%s3 + $0xb8] sm:$0xf]
      %v3149 = vld [vmem:[%s3 + $0xbc] sm:$0xf]
      %v3150 = vld [vmem:[%s3 + $0xc0] sm:$0xf]
      %v3151 = vld [vmem:[%s3 + $0xc4] sm:$0xf]
      %v3152 = vld [vmem:[%s3 + $0xc8] sm:$0xf]
      %v3153 = vld [vmem:[%s3 + $0xcc] sm:$0xf]
      %v3154 = vld [vmem:[%s3 + $0xd0] sm:$0xf]
      %v3155 = vld [vmem:[%s3 + $0xd4] sm:$0xf]
      %v3156 = vld [vmem:[%s4] sm:$0x1]
      %v3158 = vperm.slane %v3156, 0
      %v3176 = vunpack.c.l.b16 %v3086
      %v3177 = vunpack.c.h.b16 %v3086
      %v3178 = vunpack.c.l.b16 %v3087
      %v3179 = vunpack.c.h.b16 %v3087
      %v3180 = vunpack.c.l.b16 %v3088
      %v3181 = vunpack.c.h.b16 %v3088
      %v3182 = vunpack.c.l.b16 %v3089
      %v3183 = vunpack.c.h.b16 %v3089
      %v3184 = vunpack.c.l.b16 %v3090
      %v3185 = vunpack.c.h.b16 %v3090
      %v3186 = vunpack.c.l.b16 %v3091
      %v3187 = vunpack.c.h.b16 %v3091
      %v3188 = vunpack.c.l.b16 %v3092
      %v3189 = vunpack.c.h.b16 %v3092
      %v3190 = vunpack.c.l.b16 %v3093
      %v3191 = vunpack.c.h.b16 %v3093
      %v3192 = vunpack.c.l.b16 %v3094
      %v3193 = vunpack.c.h.b16 %v3094
      %v3194 = vunpack.c.l.b16 %v3095
      %v3195 = vunpack.c.h.b16 %v3095
      %v3196 = vunpack.c.l.b16 %v3096
      %v3197 = vunpack.c.h.b16 %v3096
      %v3198 = vunpack.c.l.b16 %v3097
      %v3199 = vunpack.c.h.b16 %v3097
      %v3200 = vunpack.c.l.b16 %v3098
      %v3201 = vunpack.c.h.b16 %v3098
      %v3202 = vunpack.c.l.b16 %v3099
      %v3203 = vunpack.c.h.b16 %v3099
      %v3204 = vunpack.c.l.b16 %v3100
      %v3205 = vunpack.c.h.b16 %v3100
      %v3206 = vunpack.c.l.b16 %v3101
      %v3207 = vunpack.c.h.b16 %v3101
      %v3208 = vpack.c.b16 %v3180, %v3176
      %v3209 = vpack.c.b16 %v3181, %v3177
      %v3210 = vpack.c.b16 %v3182, %v3178
      %v3211 = vpack.c.b16 %v3183, %v3179
      %v3212 = vpack.c.b16 %v3188, %v3184
      %v3213 = vpack.c.b16 %v3189, %v3185
      %v3214 = vpack.c.b16 %v3190, %v3186
      %v3215 = vpack.c.b16 %v3191, %v3187
      %v3216 = vpack.c.b16 %v3196, %v3192
      %v3217 = vpack.c.b16 %v3197, %v3193
      %v3218 = vpack.c.b16 %v3198, %v3194
      %v3219 = vpack.c.b16 %v3199, %v3195
      %v3220 = vpack.c.b16 %v3204, %v3200
      %v3221 = vpack.c.b16 %v3205, %v3201
      %v3222 = vpack.c.b16 %v3206, %v3202
      %v3223 = vpack.c.b16 %v3207, %v3203
      %v3290 = vunpack.c.l.b16 %v3102
      %v3291 = vunpack.c.l.b16 %v3103
      %v3292 = vunpack.c.l.b16 %v3104
      %v3293 = vunpack.c.l.b16 %v3105
      %v3294 = vunpack.c.l.b16 %v3106
      %v3295 = vunpack.c.l.b16 %v3107
      %v3296 = vunpack.c.l.b16 %v3108
      %v3297 = vunpack.c.l.b16 %v3109
      %v3298 = vunpack.c.l.b16 %v3110
      %v3299 = vunpack.c.l.b16 %v3111
      %v3300 = vunpack.c.l.b16 %v3112
      %v3301 = vunpack.c.l.b16 %v3113
      %v3302 = vunpack.c.l.b16 %v3114
      %v3303 = vunpack.c.l.b16 %v3115
      %v3304 = vunpack.c.l.b16 %v3116
      %v3305 = vunpack.c.l.b16 %v3117
      %v3306 = vunpack.c.l.b16 %v3118
      %v3307 = vunpack.c.l.b16 %v3119
      %v3308 = vunpack.c.l.b16 %v3120
      %v3309 = vunpack.c.l.b16 %v3121
      %v3310 = vunpack.c.l.b16 %v3122
      %v3311 = vunpack.c.l.b16 %v3123
      %v3312 = vunpack.c.l.b16 %v3124
      %v3313 = vunpack.c.l.b16 %v3125
      %v3314 = vunpack.c.l.b16 %v3126
      %v3315 = vunpack.c.l.b16 %v3127
      %v3316 = vunpack.c.l.b16 %v3128
      %v3317 = vunpack.c.l.b16 %v3129
      %v3318 = vunpack.c.l.b16 %v3130
      %v3319 = vunpack.c.l.b16 %v3131
      %v3320 = vunpack.c.l.b16 %v3132
      %v3321 = vunpack.c.l.b16 %v3133
      %v3322 = vunpack.c.l.b16 %v3134
      %v3323 = vunpack.c.l.b16 %v3135
      %v3324 = vunpack.c.l.b16 %v3136
      %v3325 = vunpack.c.l.b16 %v3137
      %v3326 = vunpack.c.l.b16 %v3138
      %v3327 = vunpack.c.l.b16 %v3139
      %v3328 = vunpack.c.l.b16 %v3140
      %v3329 = vunpack.c.l.b16 %v3141
      %v3330 = vunpack.c.l.b16 %v3142
      %v3331 = vunpack.c.l.b16 %v3143
      %v3332 = vunpack.c.l.b16 %v3144
      %v3333 = vunpack.c.l.b16 %v3145
      %v3334 = vunpack.c.l.b16 %v3146
      %v3335 = vunpack.c.l.b16 %v3147
      %v3336 = vunpack.c.l.b16 %v3148
      %v3337 = vunpack.c.l.b16 %v3149
      %v3338 = vunpack.c.l.b16 %v3150
      %v3339 = vunpack.c.l.b16 %v3151
      %v3340 = vunpack.c.l.b16 %v3152
      %v3341 = vunpack.c.l.b16 %v3153
      %v3342 = vunpack.c.l.b16 %v3154
      %v3343 = vunpack.c.l.b16 %v3155
      %v3344 = vpack.c.b16 %v3291, %v3290
      %v3345 = vpack.c.b16 %v3293, %v3292
      %v3346 = vpack.c.b16 %v3295, %v3294
      %v3347 = vpack.c.b16 %v3297, %v3296
      %v3348 = vpack.c.b16 %v3299, %v3298
      %v3349 = vpack.c.b16 %v3301, %v3300
      %v3350 = vpack.c.b16 %v3303, %v3302
      %v3351 = vpack.c.b16 %v3305, %v3304
      %v3352 = vpack.c.b16 %v3307, %v3306
      %v3353 = vpack.c.b16 %v3309, %v3308
      %v3354 = vpack.c.b16 %v3311, %v3310
      %v3355 = vpack.c.b16 %v3313, %v3312
      %v3356 = vpack.c.b16 %v3315, %v3314
      %v3357 = vpack.c.b16 %v3317, %v3316
      %v3358 = vpack.c.b16 %v3319, %v3318
      %v3359 = vpack.c.b16 %v3321, %v3320
      %v3360 = vpack.c.b16 %v3323, %v3322
      %v3361 = vpack.c.b16 %v3325, %v3324
      %v3362 = vpack.c.b16 %v3327, %v3326
      %v3363 = vpack.c.b16 %v3329, %v3328
      %v3364 = vpack.c.b16 %v3331, %v3330
      %v3365 = vpack.c.b16 %v3333, %v3332
      %v3366 = vpack.c.b16 %v3335, %v3334
      %v3367 = vpack.c.b16 %v3337, %v3336
      %v3368 = vpack.c.b16 %v3339, %v3338
      %v3369 = vpack.c.b16 %v3341, %v3340
      %v3370 = vpack.c.b16 %v3343, %v3342
      %vm3398 = vcmask 392192
      %v3400 = vsel %vm3398, %v3211, 0
      %v3403 = vsel %vm3398, %v3215, 0
      %v3406 = vsel %vm3398, %v3219, 0
      %v3409 = vsel %vm3398, %v3223, 0
      %3411 = vmatpush.bf16.msra.mxu0 %v3351
      %3412 = vmatpush.bf16.msra.mxu0 %v3350
      %3413 = vmatpush.bf16.msra.mxu0 %v3349
      %3414 = vmatpush.bf16.msra.mxu0 %v3348
      %3415 = vmatpush.bf16.msra.mxu0 %v3347
      %3416 = vmatpush.bf16.msra.mxu0 %v3346
      %3417 = vmatpush.bf16.msra.mxu0 %v3345
      %3418 = vmatpush.bf16.msra.mxu0 %v3344
      %3419 = vmatmul.bf16.gmra.mxu0 %v3208
      %v3420 = vpop.f32.mrf.mxu0
      %v3421 = vadd.f32 %v3158, %v3420
      %v3422 = vpop.f32.mrf.mxu0
      %v3423 = vadd.f32 %v3158, %v3422
      %3424 = vmatmul.bf16.gmra.mxu0 %v3212
      %v3425 = vpop.f32.mrf.mxu0
      %v3426 = vadd.f32 %v3158, %v3425
      %v3427 = vpop.f32.mrf.mxu0
      %v3428 = vadd.f32 %v3158, %v3427
      %3429 = vmatmul.bf16.gmra.mxu0 %v3216
      %v3430 = vpop.f32.mrf.mxu0
      %v3431 = vadd.f32 %v3158, %v3430
      %v3432 = vpop.f32.mrf.mxu0
      %v3433 = vadd.f32 %v3158, %v3432
      %3434 = vmatmul.bf16.gmra.mxu0 %v3220
      %v3435 = vpop.f32.mrf.mxu0
      %v3436 = vadd.f32 %v3158, %v3435
      %v3437 = vpop.f32.mrf.mxu0
      %v3438 = vadd.f32 %v3158, %v3437
      %3439 = vdwg.mxu0
      %3440 = vmatpush.bf16.msra.mxu0 %v3359
      %3441 = vmatpush.bf16.msra.mxu0 %v3358
      %3442 = vmatpush.bf16.msra.mxu0 %v3357
      %3443 = vmatpush.bf16.msra.mxu0 %v3356
      %3444 = vmatpush.bf16.msra.mxu0 %v3355
      %3445 = vmatpush.bf16.msra.mxu0 %v3354
      %3446 = vmatpush.bf16.msra.mxu0 %v3353
      %3447 = vmatpush.bf16.msra.mxu0 %v3352
      %3448 = vmatmul.bf16.gmra.mxu0 %v3209
      %v3449 = vpop.f32.mrf.mxu0
      %v3450 = vadd.f32 %v3421, %v3449
      %v3451 = vpop.f32.mrf.mxu0
      %v3452 = vadd.f32 %v3423, %v3451
      %3453 = vmatmul.bf16.gmra.mxu0 %v3213
      %v3454 = vpop.f32.mrf.mxu0
      %v3455 = vadd.f32 %v3426, %v3454
      %v3456 = vpop.f32.mrf.mxu0
      %v3457 = vadd.f32 %v3428, %v3456
      %3458 = vmatmul.bf16.gmra.mxu0 %v3217
      %v3459 = vpop.f32.mrf.mxu0
      %v3460 = vadd.f32 %v3431, %v3459
      %v3461 = vpop.f32.mrf.mxu0
      %v3462 = vadd.f32 %v3433, %v3461
      %3463 = vmatmul.bf16.gmra.mxu0 %v3221
      %v3464 = vpop.f32.mrf.mxu0
      %v3465 = vadd.f32 %v3436, %v3464
      %v3466 = vpop.f32.mrf.mxu0
      %v3467 = vadd.f32 %v3438, %v3466
      %3468 = vdwg.mxu0
      %3469 = vmatpush.bf16.msra.mxu0 %v3367
      %3470 = vmatpush.bf16.msra.mxu0 %v3366
      %3471 = vmatpush.bf16.msra.mxu0 %v3365
      %3472 = vmatpush.bf16.msra.mxu0 %v3364
      %3473 = vmatpush.bf16.msra.mxu0 %v3363
      %3474 = vmatpush.bf16.msra.mxu0 %v3362
      %3475 = vmatpush.bf16.msra.mxu0 %v3361
      %3476 = vmatpush.bf16.msra.mxu0 %v3360
      %3477 = vmatmul.bf16.gmra.mxu0 %v3210
      %v3478 = vpop.f32.mrf.mxu0
      %v3479 = vadd.f32 %v3450, %v3478
      %v3480 = vpop.f32.mrf.mxu0
      %v3481 = vadd.f32 %v3452, %v3480
      %3482 = vmatmul.bf16.gmra.mxu0 %v3214
      %v3483 = vpop.f32.mrf.mxu0
      %v3484 = vadd.f32 %v3455, %v3483
      %v3485 = vpop.f32.mrf.mxu0
      %v3486 = vadd.f32 %v3457, %v3485
      %3487 = vmatmul.bf16.gmra.mxu0 %v3218
      %v3488 = vpop.f32.mrf.mxu0
      %v3489 = vadd.f32 %v3460, %v3488
      %v3490 = vpop.f32.mrf.mxu0
      %v3491 = vadd.f32 %v3462, %v3490
      %3492 = vmatmul.bf16.gmra.mxu0 %v3222
      %v3493 = vpop.f32.mrf.mxu0
      %v3494 = vadd.f32 %v3465, %v3493
      %v3495 = vpop.f32.mrf.mxu0
      %v3496 = vadd.f32 %v3467, %v3495
      %3497 = vdwg.mxu0
      %3498 = vmatpush.bf16.msra.mxu0 0
      %3499 = vmatpush.bf16.msra.mxu0 0
      %3500 = vmatpush.bf16.msra.mxu0 0
      %3501 = vmatpush.bf16.msra.mxu0 0
      %3502 = vmatpush.bf16.msra.mxu0 0
      %3503 = vmatpush.bf16.msra.mxu0 %v3370
      %3504 = vmatpush.bf16.msra.mxu0 %v3369
      %3505 = vmatpush.bf16.msra.mxu0 %v3368
      %3506 = vmatmul.bf16.gmra.mxu0 %v3400
      %v3507 = vpop.f32.mrf.mxu0
      %v3508 = vadd.f32 %v3479, %v3507
      %v3509 = vpop.f32.mrf.mxu0
      %v3510 = vadd.f32 %v3481, %v3509
      %3511 = vmatmul.bf16.gmra.mxu0 %v3403
      %v3512 = vpop.f32.mrf.mxu0
      %v3513 = vadd.f32 %v3484, %v3512
      %v3514 = vpop.f32.mrf.mxu0
      %v3515 = vadd.f32 %v3486, %v3514
      %3516 = vmatmul.bf16.gmra.mxu0 %v3406
      %v3517 = vpop.f32.mrf.mxu0
      %v3518 = vadd.f32 %v3489, %v3517
      %v3519 = vpop.f32.mrf.mxu0
      %v3520 = vadd.f32 %v3491, %v3519
      %3521 = vmatmul.bf16.gmra.mxu0 %v3409
      %v3522 = vpop.f32.mrf.mxu0
      %v3523 = vadd.f32 %v3494, %v3522
      %v3524 = vpop.f32.mrf.mxu0
      %v3525 = vadd.f32 %v3496, %v3524
      %3526 = vdwg.mxu0
      %v3527 = vmax.f32 %v3508, 0.0
      %v3528 = vmax.f32 %v3510, 0.0
      %v3529 = vmax.f32 %v3513, 0.0
      %v3530 = vmax.f32 %v3515, 0.0
      %v3531 = vmax.f32 %v3518, 0.0
      %v3532 = vmax.f32 %v3520, 0.0
      %v3533 = vmax.f32 %v3523, 0.0
      %v3534 = vmax.f32 %v3525, 0.0
      %v3535 = vld [vmem:[%s394] sm:$0xff]
      %v3536 = vld [vmem:[%s394 + $0x8] sm:$0xff]
      %v3537 = vld [vmem:[%s394 + $0x10] sm:$0xff]
      %v3538 = vld [vmem:[%s394 + $0x18] sm:$0xff]
      %v3539 = vld [vmem:[%s394 + $0x20] sm:$0xff]
      %v3540 = vld [vmem:[%s394 + $0x28] sm:$0xff]
      %v3541 = vld [vmem:[%s394 + $0x30] sm:$0xff]
      %v3542 = vld [vmem:[%s394 + $0x38] sm:$0xff]
      %3544 = vset.pattern.permute.xlu0 0
      %3545 = vperm.xlu0 %3544, %v3535
      %v3546 = vpop.permute.xlu0 %3545
      %3549 = vset.pattern.permute.xlu0 0
      %3550 = vperm.xlu0 %3549, %v3536
      %v3551 = vpop.permute.xlu0 %3550
      %3554 = vset.pattern.permute.xlu0 0
      %3555 = vperm.xlu0 %3554, %v3537
      %v3556 = vpop.permute.xlu0 %3555
      %3559 = vset.pattern.permute.xlu0 0
      %3560 = vperm.xlu0 %3559, %v3538
      %v3561 = vpop.permute.xlu0 %3560
      %3564 = vset.pattern.permute.xlu0 0
      %3565 = vperm.xlu0 %3564, %v3539
      %v3566 = vpop.permute.xlu0 %3565
      %3569 = vset.pattern.permute.xlu0 0
      %3570 = vperm.xlu0 %3569, %v3540
      %v3571 = vpop.permute.xlu0 %3570
      %3574 = vset.pattern.permute.xlu0 0
      %3575 = vperm.xlu0 %3574, %v3541
      %v3576 = vpop.permute.xlu0 %3575
      %3579 = vset.pattern.permute.xlu0 0
      %3580 = vperm.xlu0 %3579, %v3542
      %v3581 = vpop.permute.xlu0 %3580
      %v3583 = vmul.f32 %v3527, %v3546
      %v3584 = vmul.f32 %v3528, %v3551
      %v3585 = vmul.f32 %v3529, %v3556
      %v3586 = vmul.f32 %v3530, %v3561
      %v3587 = vmul.f32 %v3531, %v3566
      %v3588 = vmul.f32 %v3532, %v3571
      %v3589 = vmul.f32 %v3533, %v3576
      %v3590 = vmul.f32 %v3534, %v3581
      %v3591 = vpack.c.bf16 %v3583, %v3583
      %v3592 = vpack.c.bf16 %v3584, %v3584
      %v3593 = vpack.c.bf16 %v3585, %v3585
      %v3594 = vpack.c.bf16 %v3586, %v3586
      %v3595 = vpack.c.bf16 %v3587, %v3587
      %v3596 = vpack.c.bf16 %v3588, %v3588
      %v3597 = vpack.c.bf16 %v3589, %v3589
      %v3598 = vpack.c.bf16 %v3590, %v3590
      %vm3599 = vcmask 257024
      %3600 = vst.msk [vmem:[%s403] sm:$0xf] %vm3599, %v3591
      %3601 = vst.msk [vmem:[%s403 + $0x4] sm:$0xf] %vm3599, %v3592
      %3602 = vst.msk [vmem:[%s403 + $0x8] sm:$0xf] %vm3599, %v3593
      %3603 = vst.msk [vmem:[%s403 + $0xc] sm:$0xf] %vm3599, %v3594
      %3604 = vst.msk [vmem:[%s403 + $0x10] sm:$0xf] %vm3599, %v3595
      %3605 = vst.msk [vmem:[%s403 + $0x14] sm:$0xf] %vm3599, %v3596
      %3606 = vst.msk [vmem:[%s403 + $0x18] sm:$0xf] %vm3599, %v3597
      %3607 = vst.msk [vmem:[%s403 + $0x1c] sm:$0xf] %vm3599, %v3598
      %p3608 = scmp.lt.s32.totalorder %s21, 1
      %s3609 = scalar_select %p3608, %s21, 1
      %p3610 = scmp.lt.s32.totalorder %s22, 5
      %s3611 = scalar_select %p3610, %s22, 5
      %s3612 = smul.addr %s3611, 8
      %s3613 = smul.addr %s3609, 48
      %s3614 = sadd.s32 %s3612, %s3613
      %s3615 = smul.addr %s3614, 4
      %s3616 = scalar_lea.vmem %s6, %s3615
      // Predicated region
      $region45: #{tpu_custom_call.1} parent=43 // pred_check
        %p3617 = pneg %p207
      $region46: #{tpu_custom_call.1} parent=43 // pred_check_branch
        %3619 = sbr.rel (%p3617) target = $region48
      $region47: #{tpu_custom_call.1} parent=43 // pred_region
        _
      $region48: #{tpu_custom_call.1} parent=43 // pred_fallthru
        _
    $region44: #{tpu_custom_call.1} parent=5 // pred_fallthru
      _
    %p3620 = scmp.le.s32.totalorder 2, %s12
    // Predicated region
    $region49: #{tpu_custom_call.1} parent=5 // pred_check
      %p3621 = pneg %p3620
    $region50: #{tpu_custom_call.1} parent=5 // pred_check_branch
      %3623 = sbr.rel (%p3621) target = $region52
    $region51: #{tpu_custom_call.1} parent=5 // pred_region
      %s3624 = ssub.s32 %s12, 2
      // Predicated region
      $region53: #{tpu_custom_call.1} parent=51 // pred_check
        %p3625 = pneg %p213
      $region54: #{tpu_custom_call.1} parent=51 // pred_check_branch
        %3627 = sbr.rel (%p3625) target = $region56
      $region55: #{tpu_custom_call.1} parent=51 // pred_region
        %p3628 = scmp.lt.s32.totalorder %s23, 1
        %s3629 = scalar_select %p3628, %s23, 1
        %p3630 = scmp.lt.s32.totalorder %s24, 5
        %s3631 = scalar_select %p3630, %s24, 5
        %s3632 = smul.addr %s3631, 8
        %s3633 = smul.addr %s3629, 48
        %s3634 = sadd.s32 %s3632, %s3633
        %s3635 = smul.addr %s3634, 4
        %s3636 = scalar_lea.vmem %s6, %s3635
      $region56: #{tpu_custom_call.1} parent=51 // pred_fallthru
        _
    $region52: #{tpu_custom_call.1} parent=5 // pred_fallthru
      _
  $region6: #{tpu_custom_call.1} parent=0 // loop_footer
    %s16 = sadd.s32 1, %s12
  $region7: #{tpu_custom_call.1} parent=0 // loop_footer_branch
    %11 = sbr.rel target = $region3
  $region8: #{tpu_custom_call.1} parent=0 // loop_exit
    _

</llo_original>
